<compile_context>
chip_gen: v5e
topology: v5e:2x2
jax: 0.10.0
libtpu: 0.0.40
codegen_flags: <defaults>
</compile_context>

<pallas_src>
import jax
import jax.numpy as jnp
from jax.experimental import pallas as pl
from jax.experimental.pallas import tpu as pltpu

DISCRET_FEATS = 30


def _round_up(x, m):
    return ((x + m - 1) // m) * m


# ------------------------------- Pallas kernel ------------------------------
def _make_fused_mlp_kernel(k_in):
    """Fused 4-layer MLP on one (TM, k_in) row tile; writes a (TM, 480) tile."""
    rank1 = k_in <= 16  # static, baked at trace time

    def kernel(x_ref, w1_ref, b1_ref, w2_ref, b2_ref,
               w3_ref, b3_ref, w4_ref, b4_ref, o_ref):
        x = x_ref[...]                                            # (TM, k_in) f32
        if rank1:
            # Layer 1 as k_in rank-1 VPU updates in f32: avoids padding the
            # tiny contraction dim up to the MXU tile and is negligible next
            # to the layer 2-4 matmuls.
            h = b1_ref[...] + x[:, 0:1] * w1_ref[0:1, :]
            for k in range(1, k_in):
                h = h + x[:, k:k + 1] * w1_ref[k:k + 1, :]
        else:
            h = jnp.dot(x, w1_ref[...],
                        preferred_element_type=jnp.float32) + b1_ref[...]
        h = jnp.maximum(h, 0.0).astype(jnp.bfloat16)              # (TM, 256)
        h = jnp.dot(h, w2_ref[...],
                    preferred_element_type=jnp.float32) + b2_ref[...]
        h = jnp.maximum(h, 0.0).astype(jnp.bfloat16)              # (TM, 512)
        h = jnp.dot(h, w3_ref[...],
                    preferred_element_type=jnp.float32) + b3_ref[...]
        h = jnp.maximum(h, 0.0).astype(jnp.bfloat16)              # (TM, 512)
        y = jnp.dot(h, w4_ref[...],
                    preferred_element_type=jnp.float32) + b4_ref[...]
        o_ref[...] = y.astype(o_ref.dtype)                        # (TM, 480) f32

    return kernel


# ------------------------------ parameters ----------------------------------
def init_decoder_params(key, in_channel):
    """PyTorch-style uniform(-1/sqrt(fan_in), 1/sqrt(fan_in)) init, f32, (in,out)."""
    dims = [in_channel, 256, 512, 512, 4 * 4 * DISCRET_FEATS]
    keys = jax.random.split(key, len(dims) - 1)
    params = []
    for i, k in enumerate(keys):
        fan_in = dims[i]
        bound = 1.0 / (fan_in ** 0.5)
        kw, kb = jax.random.split(k)
        w = jax.random.uniform(kw, (dims[i], dims[i + 1]), jnp.float32, -bound, bound)
        b = jax.random.uniform(kb, (dims[i + 1],), jnp.float32, -bound, bound)
        params.append((w, b))
    return params


def prepare_params(params):
    """One-time dtype prep: layer-1 weight stays f32 (tiny, used on the VPU);
    layers 2-4 weights in bf16 (MXU-native); all biases f32 as (1, N) rows.
    No padding of any dimension -- the kernel works on the true shapes."""
    (w1, b1), (w2, b2), (w3, b3), (w4, b4) = params
    return dict(
        k_in=w1.shape[0], out_dim=w4.shape[1],
        w1=w1.astype(jnp.float32),   b1=b1.reshape(1, -1).astype(jnp.float32),
        w2=w2.astype(jnp.bfloat16),  b2=b2.reshape(1, -1).astype(jnp.float32),
        w3=w3.astype(jnp.bfloat16),  b3=b3.reshape(1, -1).astype(jnp.float32),
        w4=w4.astype(jnp.bfloat16),  b4=b4.reshape(1, -1).astype(jnp.float32),
    )


# ------------------------------ pallas wrapper -------------------------------
def _choose_tiling(m):
    """Return (tm, m_pad).

    * M <= 2048: single grid step (TM = M rounded to the 8-sublane tile) --
      one launch, no per-step pipeline overhead, fits comfortably in VMEM on
      every generation (<= ~25 MiB including live intermediates).
    * M >  2048: ~1024-row tiles (>= 2 steps for DMA/compute overlap, >= 85%
      of roofline, safe within v7x's 64 MiB VMEM), with minimal row padding.
    """
    if m <= 2048:
        m_pad = _round_up(m, 8)
        return m_pad, m_pad
    n_steps = -(-m // 1024)
    tm = _round_up(-(-m // n_steps), 8)
    return tm, n_steps * tm


def mlp_pallas(pp, x):
    """x: (M, k_in) f32 -> (M, 480) f32 through the fused 4-layer MLP."""
    m, k = x.shape
    assert k == pp["k_in"], (k, pp["k_in"])
    out_dim = pp["out_dim"]                    # 480 = 4*4*30
    d1 = pp["w2"].shape[0]                     # 256
    d2 = pp["w3"].shape[0]                     # 512
    d3 = pp["w4"].shape[0]                     # 512

    tm, m_pad = _choose_tiling(m)
    if m_pad != m:
        # Padded rows produce ReLU(bias)-derived garbage; sliced off below.
        x = jnp.pad(x, ((0, m_pad - m), (0, 0)))

    grid = (m_pad // tm,)
    row = lambda i: (i, 0)       # row-tiled over the grid
    const = lambda i: (0, 0)     # grid-invariant: weights/biases stay VMEM-resident

    flops = 2 * m_pad * (k * d1 + d1 * d2 + d2 * d3 + d3 * out_dim)
    weight_bytes = (k * d1 * 4 + d1 * d2 * 2 + d2 * d3 * 2 + d3 * out_dim * 2
                    + (d1 + d2 + d3 + out_dim) * 4)
    bytes_accessed = m_pad * (k * 4 + out_dim * 4) + weight_bytes

    out = pl.pallas_call(
        _make_fused_mlp_kernel(k),
        out_shape=jax.ShapeDtypeStruct((m_pad, out_dim), jnp.float32),
        grid=grid,
        in_specs=[
            pl.BlockSpec((tm, k), row),
            pl.BlockSpec((k, d1), const),       pl.BlockSpec((1, d1), const),
            pl.BlockSpec((d1, d2), const),      pl.BlockSpec((1, d2), const),
            pl.BlockSpec((d2, d3), const),      pl.BlockSpec((1, d3), const),
            pl.BlockSpec((d3, out_dim), const), pl.BlockSpec((1, out_dim), const),
        ],
        out_specs=pl.BlockSpec((tm, out_dim), row),
        compiler_params=pltpu.CompilerParams(
            dimension_semantics=("parallel",),
            vmem_limit_bytes=48 * 1024 * 1024),
        cost_estimate=pl.CostEstimate(
            flops=flops, transcendentals=0, bytes_accessed=bytes_accessed),
    )(x, pp["w1"], pp["b1"], pp["w2"], pp["b2"],
      pp["w3"], pp["b3"], pp["w4"], pp["b4"])

    if m_pad != m:
        out = out[:m]            # row slice only; columns are already exact (480)
    return out


# ------------------------------ forward pass ---------------------------------
def independent_decoder_forward(pp, x_nchw):
    b, f, h, w = x_nchw.shape
    rows = jnp.transpose(x_nchw, (0, 2, 3, 1)).reshape(b * h * w, f)
    y = mlp_pallas(pp, rows)                                   # (B*H*W, 4*4*30)
    y = y.reshape(b, h, w, DISCRET_FEATS, 4, 4)
    y = jnp.transpose(y, (0, 3, 1, 4, 2, 5))                   # (B,30,H,4,W,4)
    return y.reshape(b, DISCRET_FEATS, h * 4, w * 4)


# ------------------------------ pure-JAX reference ---------------------------
def independent_decoder_ref(params, x_nchw):
    b, f, h, w = x_nchw.shape
    y = jnp.transpose(x_nchw, (0, 2, 3, 1)).reshape(b * h * w, f)
    n_layers = len(params)
    for i, (wgt, bias) in enumerate(params):
        y = y @ wgt + bias
        if i < n_layers - 1:
            y = jax.nn.relu(y)
    y = y.reshape(b, h, w, DISCRET_FEATS, 4, 4)
    y = jnp.transpose(y, (0, 3, 1, 4, 2, 5))
    return y.reshape(b, DISCRET_FEATS, h * 4, w * 4)


if __name__ == "__main__":
    key = jax.random.PRNGKey(0)
    k_param, k_x = jax.random.split(key)

    B, in_channel, H, W = 2, 4, 16, 16
    params = init_decoder_params(k_param, in_channel)
    pp = prepare_params(params)
    x = jax.random.normal(k_x, (B, in_channel, H, W), jnp.float32)

    out = independent_decoder_forward(pp, x)
    out = jax.block_until_ready(out)

    ref = independent_decoder_ref(params, x)
    assert out.shape == (B, DISCRET_FEATS, H * 4, W * 4), out.shape
    # Layer 1 is f32; layers 2-4 use bf16 MXU operands with f32 accumulation,
    # hence a relaxed tolerance vs the all-f32 reference.
    max_err = float(jnp.max(jnp.abs(out - ref)))
    assert jnp.allclose(out, ref, atol=3e-2, rtol=3e-2), max_err
    print("KERNEL_OK")
</pallas_src>

<mosaic_0001>
module attributes {stable_mosaic.version = 11 : i64} {
  func.func @kernel(%arg0: i32, %arg1: memref<512x4xf32, #tpu.memory_space<vmem>>, %arg2: memref<4x256xf32, #tpu.memory_space<vmem>>, %arg3: memref<1x256xf32, #tpu.memory_space<vmem>>, %arg4: memref<256x512xbf16, #tpu.memory_space<vmem>>, %arg5: memref<1x512xf32, #tpu.memory_space<vmem>>, %arg6: memref<512x512xbf16, #tpu.memory_space<vmem>>, %arg7: memref<1x512xf32, #tpu.memory_space<vmem>>, %arg8: memref<512x480xbf16, #tpu.memory_space<vmem>>, %arg9: memref<1x480xf32, #tpu.memory_space<vmem>>, %arg10: memref<512x480xf32, #tpu.memory_space<vmem>>) attributes {dimension_semantics = [#tpu.dimension_semantics<parallel>], iteration_bounds = array<i64: 1>, scalar_prefetch = 0 : i64, scratch_operands = 0 : i64, tpu.core_type = #tpu.core_type<tc>, window_params = [{transform_indices = @transform_0, window_bounds = array<i64: 512, 4>}, {pipeline_mode = #tpu.pipeline_mode<synchronous>, transform_indices = @transform_1, window_bounds = array<i64: 4, 256>}, {pipeline_mode = #tpu.pipeline_mode<synchronous>, transform_indices = @transform_2, window_bounds = array<i64: 1, 256>}, {pipeline_mode = #tpu.pipeline_mode<synchronous>, transform_indices = @transform_3, window_bounds = array<i64: 256, 512>}, {pipeline_mode = #tpu.pipeline_mode<synchronous>, transform_indices = @transform_4, window_bounds = array<i64: 1, 512>}, {pipeline_mode = #tpu.pipeline_mode<synchronous>, transform_indices = @transform_5, window_bounds = array<i64: 512, 512>}, {pipeline_mode = #tpu.pipeline_mode<synchronous>, transform_indices = @transform_6, window_bounds = array<i64: 1, 512>}, {pipeline_mode = #tpu.pipeline_mode<synchronous>, transform_indices = @transform_7, window_bounds = array<i64: 512, 480>}, {pipeline_mode = #tpu.pipeline_mode<synchronous>, transform_indices = @transform_8, window_bounds = array<i64: 1, 480>}, {transform_indices = @transform_9, window_bounds = array<i64: 512, 480>}]} {
    %c0 = arith.constant 0 : index
    %c0_0 = arith.constant 0 : index
    %0 = vector.load %arg1[%c0, %c0_0] : memref<512x4xf32, #tpu.memory_space<vmem>>, vector<512x4xf32>
    %c0_1 = arith.constant 0 : index
    %c0_2 = arith.constant 0 : index
    %1 = vector.load %arg3[%c0_1, %c0_2] : memref<1x256xf32, #tpu.memory_space<vmem>>, vector<1x256xf32>
    %2 = vector.extract_strided_slice %0 {offsets = [0, 0], sizes = [512, 1], strides = [1, 1]} : vector<512x4xf32> to vector<512x1xf32>
    %c0_3 = arith.constant 0 : index
    %c0_4 = arith.constant 0 : index
    %3 = vector.load %arg2[%c0_3, %c0_4] : memref<4x256xf32, #tpu.memory_space<vmem>>, vector<1x256xf32>
    %4 = vector.broadcast %2 : vector<512x1xf32> to vector<512x256xf32>
    %5 = vector.broadcast %3 : vector<1x256xf32> to vector<512x256xf32>
    %6 = arith.mulf %4, %5 : vector<512x256xf32>
    %7 = vector.broadcast %1 : vector<1x256xf32> to vector<512x256xf32>
    %8 = arith.addf %7, %6 : vector<512x256xf32>
    %9 = vector.extract_strided_slice %0 {offsets = [0, 1], sizes = [512, 1], strides = [1, 1]} : vector<512x4xf32> to vector<512x1xf32>
    %c1 = arith.constant 1 : index
    %c0_5 = arith.constant 0 : index
    %10 = vector.load %arg2[%c1, %c0_5] : memref<4x256xf32, #tpu.memory_space<vmem>>, vector<1x256xf32>
    %11 = vector.broadcast %9 : vector<512x1xf32> to vector<512x256xf32>
    %12 = vector.broadcast %10 : vector<1x256xf32> to vector<512x256xf32>
    %13 = arith.mulf %11, %12 : vector<512x256xf32>
    %14 = arith.addf %8, %13 : vector<512x256xf32>
    %15 = vector.extract_strided_slice %0 {offsets = [0, 2], sizes = [512, 1], strides = [1, 1]} : vector<512x4xf32> to vector<512x1xf32>
    %c2 = arith.constant 2 : index
    %c0_6 = arith.constant 0 : index
    %16 = vector.load %arg2[%c2, %c0_6] : memref<4x256xf32, #tpu.memory_space<vmem>>, vector<1x256xf32>
    %17 = vector.broadcast %15 : vector<512x1xf32> to vector<512x256xf32>
    %18 = vector.broadcast %16 : vector<1x256xf32> to vector<512x256xf32>
    %19 = arith.mulf %17, %18 : vector<512x256xf32>
    %20 = arith.addf %14, %19 : vector<512x256xf32>
    %21 = vector.extract_strided_slice %0 {offsets = [0, 3], sizes = [512, 1], strides = [1, 1]} : vector<512x4xf32> to vector<512x1xf32>
    %c3 = arith.constant 3 : index
    %c0_7 = arith.constant 0 : index
    %22 = vector.load %arg2[%c3, %c0_7] : memref<4x256xf32, #tpu.memory_space<vmem>>, vector<1x256xf32>
    %23 = vector.broadcast %21 : vector<512x1xf32> to vector<512x256xf32>
    %24 = vector.broadcast %22 : vector<1x256xf32> to vector<512x256xf32>
    %25 = arith.mulf %23, %24 : vector<512x256xf32>
    %26 = arith.addf %20, %25 : vector<512x256xf32>
    %cst = arith.constant 0.000000e+00 : f32
    %27 = vector.broadcast %cst : f32 to vector<512x256xf32>
    %28 = arith.maximumf %26, %27 : vector<512x256xf32>
    %29 = arith.truncf %28 : vector<512x256xf32> to vector<512x256xbf16>
    %c0_8 = arith.constant 0 : index
    %c0_9 = arith.constant 0 : index
    %30 = vector.load %arg4[%c0_8, %c0_9] : memref<256x512xbf16, #tpu.memory_space<vmem>>, vector<256x512xbf16>
    %cst_10 = arith.constant dense<0.000000e+00> : vector<512x512xf32>
    %31 = tpu.matmul %29, %30, %cst_10 {dimension_numbers = #tpu.dot_dimension_numbers<[1], [0], [0], [1], [0, 0, 1, 1], [], []>} : vector<512x256xbf16>, vector<256x512xbf16>, vector<512x512xf32> -> vector<512x512xf32>
    %c0_11 = arith.constant 0 : index
    %c0_12 = arith.constant 0 : index
    %32 = vector.load %arg5[%c0_11, %c0_12] : memref<1x512xf32, #tpu.memory_space<vmem>>, vector<1x512xf32>
    %33 = vector.broadcast %32 : vector<1x512xf32> to vector<512x512xf32>
    %34 = arith.addf %31, %33 : vector<512x512xf32>
    %cst_13 = arith.constant 0.000000e+00 : f32
    %35 = vector.broadcast %cst_13 : f32 to vector<512x512xf32>
    %36 = arith.maximumf %34, %35 : vector<512x512xf32>
    %37 = arith.truncf %36 : vector<512x512xf32> to vector<512x512xbf16>
    %c0_14 = arith.constant 0 : index
    %c0_15 = arith.constant 0 : index
    %38 = vector.load %arg6[%c0_14, %c0_15] : memref<512x512xbf16, #tpu.memory_space<vmem>>, vector<512x512xbf16>
    %cst_16 = arith.constant dense<0.000000e+00> : vector<512x512xf32>
    %39 = tpu.matmul %37, %38, %cst_16 {dimension_numbers = #tpu.dot_dimension_numbers<[1], [0], [0], [1], [0, 0, 1, 1], [], []>} : vector<512x512xbf16>, vector<512x512xbf16>, vector<512x512xf32> -> vector<512x512xf32>
    %c0_17 = arith.constant 0 : index
    %c0_18 = arith.constant 0 : index
    %40 = vector.load %arg7[%c0_17, %c0_18] : memref<1x512xf32, #tpu.memory_space<vmem>>, vector<1x512xf32>
    %41 = vector.broadcast %40 : vector<1x512xf32> to vector<512x512xf32>
    %42 = arith.addf %39, %41 : vector<512x512xf32>
    %cst_19 = arith.constant 0.000000e+00 : f32
    %43 = vector.broadcast %cst_19 : f32 to vector<512x512xf32>
    %44 = arith.maximumf %42, %43 : vector<512x512xf32>
    %45 = arith.truncf %44 : vector<512x512xf32> to vector<512x512xbf16>
    %c0_20 = arith.constant 0 : index
    %c0_21 = arith.constant 0 : index
    %46 = vector.load %arg8[%c0_20, %c0_21] : memref<512x480xbf16, #tpu.memory_space<vmem>>, vector<512x480xbf16>
    %cst_22 = arith.constant dense<0.000000e+00> : vector<512x480xf32>
    %47 = tpu.matmul %45, %46, %cst_22 {dimension_numbers = #tpu.dot_dimension_numbers<[1], [0], [0], [1], [0, 0, 1, 1], [], []>} : vector<512x512xbf16>, vector<512x480xbf16>, vector<512x480xf32> -> vector<512x480xf32>
    %c0_23 = arith.constant 0 : index
    %c0_24 = arith.constant 0 : index
    %48 = vector.load %arg9[%c0_23, %c0_24] : memref<1x480xf32, #tpu.memory_space<vmem>>, vector<1x480xf32>
    %49 = vector.broadcast %48 : vector<1x480xf32> to vector<512x480xf32>
    %50 = arith.addf %47, %49 : vector<512x480xf32>
    %c0_25 = arith.constant 0 : index
    %c0_26 = arith.constant 0 : index
    %51 = vector.load %arg10[%c0_25, %c0_26] : memref<512x480xf32, #tpu.memory_space<vmem>>, vector<512x480xf32>
    tpu.vector_store %arg10[%c0_25, %c0_26], %50 {strides = array<i32>} : memref<512x480xf32, #tpu.memory_space<vmem>>, vector<512x480xf32>,
    return
  }
  func.func @transform_0(%arg0: i32) -> (i32, i32) {
    %c0_i32 = arith.constant 0 : i32
    %c0_i32_0 = arith.constant 0 : i32
    return %arg0, %c0_i32 : i32, i32
  }
  func.func @transform_1(%arg0: i32) -> (i32, i32) {
    %c0_i32 = arith.constant 0 : i32
    %c0_i32_0 = arith.constant 0 : i32
    %c0_i32_1 = arith.constant 0 : i32
    return %c0_i32, %c0_i32_0 : i32, i32
  }
  func.func @transform_2(%arg0: i32) -> (i32, i32) {
    %c0_i32 = arith.constant 0 : i32
    %c0_i32_0 = arith.constant 0 : i32
    %c0_i32_1 = arith.constant 0 : i32
    return %c0_i32, %c0_i32_0 : i32, i32
  }
  func.func @transform_3(%arg0: i32) -> (i32, i32) {
    %c0_i32 = arith.constant 0 : i32
    %c0_i32_0 = arith.constant 0 : i32
    %c0_i32_1 = arith.constant 0 : i32
    return %c0_i32, %c0_i32_0 : i32, i32
  }
  func.func @transform_4(%arg0: i32) -> (i32, i32) {
    %c0_i32 = arith.constant 0 : i32
    %c0_i32_0 = arith.constant 0 : i32
    %c0_i32_1 = arith.constant 0 : i32
    return %c0_i32, %c0_i32_0 : i32, i32
  }
  func.func @transform_5(%arg0: i32) -> (i32, i32) {
    %c0_i32 = arith.constant 0 : i32
    %c0_i32_0 = arith.constant 0 : i32
    %c0_i32_1 = arith.constant 0 : i32
    return %c0_i32, %c0_i32_0 : i32, i32
  }
  func.func @transform_6(%arg0: i32) -> (i32, i32) {
    %c0_i32 = arith.constant 0 : i32
    %c0_i32_0 = arith.constant 0 : i32
    %c0_i32_1 = arith.constant 0 : i32
    return %c0_i32, %c0_i32_0 : i32, i32
  }
  func.func @transform_7(%arg0: i32) -> (i32, i32) {
    %c0_i32 = arith.constant 0 : i32
    %c0_i32_0 = arith.constant 0 : i32
    %c0_i32_1 = arith.constant 0 : i32
    return %c0_i32, %c0_i32_0 : i32, i32
  }
  func.func @transform_8(%arg0: i32) -> (i32, i32) {
    %c0_i32 = arith.constant 0 : i32
    %c0_i32_0 = arith.constant 0 : i32
    %c0_i32_1 = arith.constant 0 : i32
    return %c0_i32, %c0_i32_0 : i32, i32
  }
  func.func @transform_9(%arg0: i32) -> (i32, i32) {
    %c0_i32 = arith.constant 0 : i32
    %c0_i32_0 = arith.constant 0 : i32
    return %arg0, %c0_i32 : i32, i32
  }
}

</mosaic_0001>

<llo_original>
// kernel: tpu_custom_call.1
$region0: #{tpu_custom_call.1}
  #allocation0 [shape = 'u32[]', space=smem, size = 0x4, offset = 0x4, fixed_abs, tag = 'smem constant byte address 0x4 - core index']
  #allocation1 [shape = 'u32[72,128]{1,0:T(1,128)}', space=vmem, size = 0x9000, scoped, tag = 'internal scratch']
  %s0 = inlined_call_operand.vmem [shape: f32[512,4], index: 0, kind: input, shape index: {}]
  %s1 = inlined_call_operand.vmem [shape: f32[4,256], index: 1, kind: input, shape index: {}]
  %s2 = inlined_call_operand.vmem [shape: f32[1,256], index: 2, kind: input, shape index: {}]
  %s3 = inlined_call_operand.vmem [shape: bf16[256,512], index: 3, kind: input, shape index: {}]
  %s4 = inlined_call_operand.vmem [shape: f32[1,512], index: 4, kind: input, shape index: {}]
  %s5 = inlined_call_operand.vmem [shape: bf16[512,512], index: 5, kind: input, shape index: {}]
  %s6 = inlined_call_operand.vmem [shape: f32[1,512], index: 6, kind: input, shape index: {}]
  %s7 = inlined_call_operand.vmem [shape: bf16[512,480], index: 7, kind: input, shape index: {}]
  %s8 = inlined_call_operand.vmem [shape: f32[1,480], index: 8, kind: input, shape index: {}]
  %s9 = inlined_call_operand.vmem [shape: f32[512,480], index: 9, kind: output, shape index: {}]
  %s10 = sld [smem:[#allocation0]]
  $region46: #{tpu_custom_call.1} parent=0
    _
  %s12 = ssub.s32 1, %s10
  %s13 = scalar_select 0, %s12, %s10
  // Predicated region
  $region2: #{tpu_custom_call.1} parent=0 // pred_check
    _
  $region3: #{tpu_custom_call.1} parent=0 // pred_check_branch
    %15 = sbr.rel (0) target = $region5
  $region4: #{tpu_custom_call.1} parent=0 // pred_region
    _
  $region5: #{tpu_custom_call.1} parent=0 // pred_fallthru
    _
  // Predicated region
  $region6: #{tpu_custom_call.1} parent=0 // pred_check
    _
  $region7: #{tpu_custom_call.1} parent=0 // pred_check_branch
    %17 = sbr.rel (0) target = $region9
  $region8: #{tpu_custom_call.1} parent=0 // pred_region
    _
  $region9: #{tpu_custom_call.1} parent=0 // pred_fallthru
    _
  // Predicated region
  $region10: #{tpu_custom_call.1} parent=0 // pred_check
    _
  $region11: #{tpu_custom_call.1} parent=0 // pred_check_branch
    %19 = sbr.rel (0) target = $region13
  $region12: #{tpu_custom_call.1} parent=0 // pred_region
    _
  $region13: #{tpu_custom_call.1} parent=0 // pred_fallthru
    _
  // Predicated region
  $region14: #{tpu_custom_call.1} parent=0 // pred_check
    _
  $region15: #{tpu_custom_call.1} parent=0 // pred_check_branch
    %21 = sbr.rel (0) target = $region17
  $region16: #{tpu_custom_call.1} parent=0 // pred_region
    _
  $region17: #{tpu_custom_call.1} parent=0 // pred_fallthru
    _
  // Predicated region
  $region18: #{tpu_custom_call.1} parent=0 // pred_check
    _
  $region19: #{tpu_custom_call.1} parent=0 // pred_check_branch
    %23 = sbr.rel (0) target = $region21
  $region20: #{tpu_custom_call.1} parent=0 // pred_region
    _
  $region21: #{tpu_custom_call.1} parent=0 // pred_fallthru
    _
  // Predicated region
  $region22: #{tpu_custom_call.1} parent=0 // pred_check
    _
  $region23: #{tpu_custom_call.1} parent=0 // pred_check_branch
    %25 = sbr.rel (0) target = $region25
  $region24: #{tpu_custom_call.1} parent=0 // pred_region
    _
  $region25: #{tpu_custom_call.1} parent=0 // pred_fallthru
    _
  // Predicated region
  $region26: #{tpu_custom_call.1} parent=0 // pred_check
    _
  $region27: #{tpu_custom_call.1} parent=0 // pred_check_branch
    %27 = sbr.rel (0) target = $region29
  $region28: #{tpu_custom_call.1} parent=0 // pred_region
    _
  $region29: #{tpu_custom_call.1} parent=0 // pred_fallthru
    _
  // Predicated region
  $region30: #{tpu_custom_call.1} parent=0 // pred_check
    _
  $region31: #{tpu_custom_call.1} parent=0 // pred_check_branch
    %29 = sbr.rel (0) target = $region33
  $region32: #{tpu_custom_call.1} parent=0 // pred_region
    _
  $region33: #{tpu_custom_call.1} parent=0 // pred_fallthru
    _
  // Predicated region
  $region34: #{tpu_custom_call.1} parent=0 // pred_check
    _
  $region35: #{tpu_custom_call.1} parent=0 // pred_check_branch
    %31 = sbr.rel (0) target = $region37
  $region36: #{tpu_custom_call.1} parent=0 // pred_region
    _
  $region37: #{tpu_custom_call.1} parent=0 // pred_fallthru
    _
  %v32 = vld [vmem:[%s0] sm:$0xff]
  %v33 = vld [vmem:[%s0 + $0x8] sm:$0xff]
  %v34 = vld [vmem:[%s0 + $0x10] sm:$0xff]
  %v35 = vld [vmem:[%s0 + $0x18] sm:$0xff]
  %v36 = vld [vmem:[%s0 + $0x20] sm:$0xff]
  %v37 = vld [vmem:[%s0 + $0x28] sm:$0xff]
  %v38 = vld [vmem:[%s0 + $0x30] sm:$0xff]
  %v39 = vld [vmem:[%s0 + $0x38] sm:$0xff]
  %v40 = vld [vmem:[%s0 + $0x40] sm:$0xff]
  %v41 = vld [vmem:[%s0 + $0x48] sm:$0xff]
  %v42 = vld [vmem:[%s0 + $0x50] sm:$0xff]
  %v43 = vld [vmem:[%s0 + $0x58] sm:$0xff]
  %v44 = vld [vmem:[%s0 + $0x60] sm:$0xff]
  %v45 = vld [vmem:[%s0 + $0x68] sm:$0xff]
  %v46 = vld [vmem:[%s0 + $0x70] sm:$0xff]
  %v47 = vld [vmem:[%s0 + $0x78] sm:$0xff]
  %v48 = vld [vmem:[%s0 + $0x80] sm:$0xff]
  %v49 = vld [vmem:[%s0 + $0x88] sm:$0xff]
  %v50 = vld [vmem:[%s0 + $0x90] sm:$0xff]
  %v51 = vld [vmem:[%s0 + $0x98] sm:$0xff]
  %v52 = vld [vmem:[%s0 + $0xa0] sm:$0xff]
  %v53 = vld [vmem:[%s0 + $0xa8] sm:$0xff]
  %v54 = vld [vmem:[%s0 + $0xb0] sm:$0xff]
  %v55 = vld [vmem:[%s0 + $0xb8] sm:$0xff]
  %v56 = vld [vmem:[%s0 + $0xc0] sm:$0xff]
  %v57 = vld [vmem:[%s0 + $0xc8] sm:$0xff]
  %v58 = vld [vmem:[%s0 + $0xd0] sm:$0xff]
  %v59 = vld [vmem:[%s0 + $0xd8] sm:$0xff]
  %v60 = vld [vmem:[%s0 + $0xe0] sm:$0xff]
  %v61 = vld [vmem:[%s0 + $0xe8] sm:$0xff]
  %v62 = vld [vmem:[%s0 + $0xf0] sm:$0xff]
  %v63 = vld [vmem:[%s0 + $0xf8] sm:$0xff]
  %v64 = vld [vmem:[%s0 + $0x100] sm:$0xff]
  %v65 = vld [vmem:[%s0 + $0x108] sm:$0xff]
  %v66 = vld [vmem:[%s0 + $0x110] sm:$0xff]
  %v67 = vld [vmem:[%s0 + $0x118] sm:$0xff]
  %v68 = vld [vmem:[%s0 + $0x120] sm:$0xff]
  %v69 = vld [vmem:[%s0 + $0x128] sm:$0xff]
  %v70 = vld [vmem:[%s0 + $0x130] sm:$0xff]
  %v71 = vld [vmem:[%s0 + $0x138] sm:$0xff]
  %v72 = vld [vmem:[%s0 + $0x140] sm:$0xff]
  %v73 = vld [vmem:[%s0 + $0x148] sm:$0xff]
  %v74 = vld [vmem:[%s0 + $0x150] sm:$0xff]
  %v75 = vld [vmem:[%s0 + $0x158] sm:$0xff]
  %v76 = vld [vmem:[%s0 + $0x160] sm:$0xff]
  %v77 = vld [vmem:[%s0 + $0x168] sm:$0xff]
  %v78 = vld [vmem:[%s0 + $0x170] sm:$0xff]
  %v79 = vld [vmem:[%s0 + $0x178] sm:$0xff]
  %v80 = vld [vmem:[%s0 + $0x180] sm:$0xff]
  %v81 = vld [vmem:[%s0 + $0x188] sm:$0xff]
  %v82 = vld [vmem:[%s0 + $0x190] sm:$0xff]
  %v83 = vld [vmem:[%s0 + $0x198] sm:$0xff]
  %v84 = vld [vmem:[%s0 + $0x1a0] sm:$0xff]
  %v85 = vld [vmem:[%s0 + $0x1a8] sm:$0xff]
  %v86 = vld [vmem:[%s0 + $0x1b0] sm:$0xff]
  %v87 = vld [vmem:[%s0 + $0x1b8] sm:$0xff]
  %v88 = vld [vmem:[%s0 + $0x1c0] sm:$0xff]
  %v89 = vld [vmem:[%s0 + $0x1c8] sm:$0xff]
  %v90 = vld [vmem:[%s0 + $0x1d0] sm:$0xff]
  %v91 = vld [vmem:[%s0 + $0x1d8] sm:$0xff]
  %v92 = vld [vmem:[%s0 + $0x1e0] sm:$0xff]
  %v93 = vld [vmem:[%s0 + $0x1e8] sm:$0xff]
  %v94 = vld [vmem:[%s0 + $0x1f0] sm:$0xff]
  %v95 = vld [vmem:[%s0 + $0x1f8] sm:$0xff]
  %v96 = vld [vmem:[%s2] sm:$0x3]
  %v97 = vld [vmem:[%s1] ss:$4 sm:$0x3]
  %99 = vset.pattern.permute.xlu0 0
  %100 = vperm.xlu0 %99, %v32
  %v101 = vpop.permute.xlu0 %100
  %104 = vset.pattern.permute.xlu0 0
  %105 = vperm.xlu0 %104, %v33
  %v106 = vpop.permute.xlu0 %105
  %109 = vset.pattern.permute.xlu0 0
  %110 = vperm.xlu0 %109, %v34
  %v111 = vpop.permute.xlu0 %110
  %114 = vset.pattern.permute.xlu0 0
  %115 = vperm.xlu0 %114, %v35
  %v116 = vpop.permute.xlu0 %115
  %119 = vset.pattern.permute.xlu0 0
  %120 = vperm.xlu0 %119, %v36
  %v121 = vpop.permute.xlu0 %120
  %124 = vset.pattern.permute.xlu0 0
  %125 = vperm.xlu0 %124, %v37
  %v126 = vpop.permute.xlu0 %125
  %129 = vset.pattern.permute.xlu0 0
  %130 = vperm.xlu0 %129, %v38
  %v131 = vpop.permute.xlu0 %130
  %134 = vset.pattern.permute.xlu0 0
  %135 = vperm.xlu0 %134, %v39
  %v136 = vpop.permute.xlu0 %135
  %139 = vset.pattern.permute.xlu0 0
  %140 = vperm.xlu0 %139, %v40
  %v141 = vpop.permute.xlu0 %140
  %144 = vset.pattern.permute.xlu0 0
  %145 = vperm.xlu0 %144, %v41
  %v146 = vpop.permute.xlu0 %145
  %149 = vset.pattern.permute.xlu0 0
  %150 = vperm.xlu0 %149, %v42
  %v151 = vpop.permute.xlu0 %150
  %154 = vset.pattern.permute.xlu0 0
  %155 = vperm.xlu0 %154, %v43
  %v156 = vpop.permute.xlu0 %155
  %159 = vset.pattern.permute.xlu0 0
  %160 = vperm.xlu0 %159, %v44
  %v161 = vpop.permute.xlu0 %160
  %164 = vset.pattern.permute.xlu0 0
  %165 = vperm.xlu0 %164, %v45
  %v166 = vpop.permute.xlu0 %165
  %169 = vset.pattern.permute.xlu0 0
  %170 = vperm.xlu0 %169, %v46
  %v171 = vpop.permute.xlu0 %170
  %174 = vset.pattern.permute.xlu0 0
  %175 = vperm.xlu0 %174, %v47
  %v176 = vpop.permute.xlu0 %175
  %179 = vset.pattern.permute.xlu0 0
  %180 = vperm.xlu0 %179, %v48
  %v181 = vpop.permute.xlu0 %180
  %184 = vset.pattern.permute.xlu0 0
  %185 = vperm.xlu0 %184, %v49
  %v186 = vpop.permute.xlu0 %185
  %189 = vset.pattern.permute.xlu0 0
  %190 = vperm.xlu0 %189, %v50
  %v191 = vpop.permute.xlu0 %190
  %194 = vset.pattern.permute.xlu0 0
  %195 = vperm.xlu0 %194, %v51
  %v196 = vpop.permute.xlu0 %195
  %199 = vset.pattern.permute.xlu0 0
  %200 = vperm.xlu0 %199, %v52
  %v201 = vpop.permute.xlu0 %200
  %204 = vset.pattern.permute.xlu0 0
  %205 = vperm.xlu0 %204, %v53
  %v206 = vpop.permute.xlu0 %205
  %209 = vset.pattern.permute.xlu0 0
  %210 = vperm.xlu0 %209, %v54
  %v211 = vpop.permute.xlu0 %210
  %214 = vset.pattern.permute.xlu0 0
  %215 = vperm.xlu0 %214, %v55
  %v216 = vpop.permute.xlu0 %215
  %219 = vset.pattern.permute.xlu0 0
  %220 = vperm.xlu0 %219, %v56
  %v221 = vpop.permute.xlu0 %220
  %224 = vset.pattern.permute.xlu0 0
  %225 = vperm.xlu0 %224, %v57
  %v226 = vpop.permute.xlu0 %225
  %229 = vset.pattern.permute.xlu0 0
  %230 = vperm.xlu0 %229, %v58
  %v231 = vpop.permute.xlu0 %230
  %234 = vset.pattern.permute.xlu0 0
  %235 = vperm.xlu0 %234, %v59
  %v236 = vpop.permute.xlu0 %235
  %239 = vset.pattern.permute.xlu0 0
  %240 = vperm.xlu0 %239, %v60
  %v241 = vpop.permute.xlu0 %240
  %244 = vset.pattern.permute.xlu0 0
  %245 = vperm.xlu0 %244, %v61
  %v246 = vpop.permute.xlu0 %245
  %249 = vset.pattern.permute.xlu0 0
  %250 = vperm.xlu0 %249, %v62
  %v251 = vpop.permute.xlu0 %250
  %254 = vset.pattern.permute.xlu0 0
  %255 = vperm.xlu0 %254, %v63
  %v256 = vpop.permute.xlu0 %255
  %259 = vset.pattern.permute.xlu0 0
  %260 = vperm.xlu0 %259, %v64
  %v261 = vpop.permute.xlu0 %260
  %264 = vset.pattern.permute.xlu0 0
  %265 = vperm.xlu0 %264, %v65
  %v266 = vpop.permute.xlu0 %265
  %269 = vset.pattern.permute.xlu0 0
  %270 = vperm.xlu0 %269, %v66
  %v271 = vpop.permute.xlu0 %270
  %274 = vset.pattern.permute.xlu0 0
  %275 = vperm.xlu0 %274, %v67
  %v276 = vpop.permute.xlu0 %275
  %279 = vset.pattern.permute.xlu0 0
  %280 = vperm.xlu0 %279, %v68
  %v281 = vpop.permute.xlu0 %280
  %284 = vset.pattern.permute.xlu0 0
  %285 = vperm.xlu0 %284, %v69
  %v286 = vpop.permute.xlu0 %285
  %289 = vset.pattern.permute.xlu0 0
  %290 = vperm.xlu0 %289, %v70
  %v291 = vpop.permute.xlu0 %290
  %294 = vset.pattern.permute.xlu0 0
  %295 = vperm.xlu0 %294, %v71
  %v296 = vpop.permute.xlu0 %295
  %299 = vset.pattern.permute.xlu0 0
  %300 = vperm.xlu0 %299, %v72
  %v301 = vpop.permute.xlu0 %300
  %304 = vset.pattern.permute.xlu0 0
  %305 = vperm.xlu0 %304, %v73
  %v306 = vpop.permute.xlu0 %305
  %309 = vset.pattern.permute.xlu0 0
  %310 = vperm.xlu0 %309, %v74
  %v311 = vpop.permute.xlu0 %310
  %314 = vset.pattern.permute.xlu0 0
  %315 = vperm.xlu0 %314, %v75
  %v316 = vpop.permute.xlu0 %315
  %319 = vset.pattern.permute.xlu0 0
  %320 = vperm.xlu0 %319, %v76
  %v321 = vpop.permute.xlu0 %320
  %324 = vset.pattern.permute.xlu0 0
  %325 = vperm.xlu0 %324, %v77
  %v326 = vpop.permute.xlu0 %325
  %329 = vset.pattern.permute.xlu0 0
  %330 = vperm.xlu0 %329, %v78
  %v331 = vpop.permute.xlu0 %330
  %334 = vset.pattern.permute.xlu0 0
  %335 = vperm.xlu0 %334, %v79
  %v336 = vpop.permute.xlu0 %335
  %339 = vset.pattern.permute.xlu0 0
  %340 = vperm.xlu0 %339, %v80
  %v341 = vpop.permute.xlu0 %340
  %344 = vset.pattern.permute.xlu0 0
  %345 = vperm.xlu0 %344, %v81
  %v346 = vpop.permute.xlu0 %345
  %349 = vset.pattern.permute.xlu0 0
  %350 = vperm.xlu0 %349, %v82
  %v351 = vpop.permute.xlu0 %350
  %354 = vset.pattern.permute.xlu0 0
  %355 = vperm.xlu0 %354, %v83
  %v356 = vpop.permute.xlu0 %355
  %359 = vset.pattern.permute.xlu0 0
  %360 = vperm.xlu0 %359, %v84
  %v361 = vpop.permute.xlu0 %360
  %364 = vset.pattern.permute.xlu0 0
  %365 = vperm.xlu0 %364, %v85
  %v366 = vpop.permute.xlu0 %365
  %369 = vset.pattern.permute.xlu0 0
  %370 = vperm.xlu0 %369, %v86
  %v371 = vpop.permute.xlu0 %370
  %374 = vset.pattern.permute.xlu0 0
  %375 = vperm.xlu0 %374, %v87
  %v376 = vpop.permute.xlu0 %375
  %379 = vset.pattern.permute.xlu0 0
  %380 = vperm.xlu0 %379, %v88
  %v381 = vpop.permute.xlu0 %380
  %384 = vset.pattern.permute.xlu0 0
  %385 = vperm.xlu0 %384, %v89
  %v386 = vpop.permute.xlu0 %385
  %389 = vset.pattern.permute.xlu0 0
  %390 = vperm.xlu0 %389, %v90
  %v391 = vpop.permute.xlu0 %390
  %394 = vset.pattern.permute.xlu0 0
  %395 = vperm.xlu0 %394, %v91
  %v396 = vpop.permute.xlu0 %395
  %399 = vset.pattern.permute.xlu0 0
  %400 = vperm.xlu0 %399, %v92
  %v401 = vpop.permute.xlu0 %400
  %404 = vset.pattern.permute.xlu0 0
  %405 = vperm.xlu0 %404, %v93
  %v406 = vpop.permute.xlu0 %405
  %409 = vset.pattern.permute.xlu0 0
  %410 = vperm.xlu0 %409, %v94
  %v411 = vpop.permute.xlu0 %410
  %414 = vset.pattern.permute.xlu0 0
  %415 = vperm.xlu0 %414, %v95
  %v416 = vpop.permute.xlu0 %415
  %v419 = vperm.slane %v97, 0
  %v420 = vperm.slane %v97, 1
  %v423 = vmul.f32 %v101, %v419
  %v424 = vmul.f32 %v101, %v420
  %v425 = vmul.f32 %v106, %v419
  %v426 = vmul.f32 %v106, %v420
  %v427 = vmul.f32 %v111, %v419
  %v428 = vmul.f32 %v111, %v420
  %v429 = vmul.f32 %v116, %v419
  %v430 = vmul.f32 %v116, %v420
  %v431 = vmul.f32 %v121, %v419
  %v432 = vmul.f32 %v121, %v420
  %v433 = vmul.f32 %v126, %v419
  %v434 = vmul.f32 %v126, %v420
  %v435 = vmul.f32 %v131, %v419
  %v436 = vmul.f32 %v131, %v420
  %v437 = vmul.f32 %v136, %v419
  %v438 = vmul.f32 %v136, %v420
  %v439 = vmul.f32 %v141, %v419
  %v440 = vmul.f32 %v141, %v420
  %v441 = vmul.f32 %v146, %v419
  %v442 = vmul.f32 %v146, %v420
  %v443 = vmul.f32 %v151, %v419
  %v444 = vmul.f32 %v151, %v420
  %v445 = vmul.f32 %v156, %v419
  %v446 = vmul.f32 %v156, %v420
  %v447 = vmul.f32 %v161, %v419
  %v448 = vmul.f32 %v161, %v420
  %v449 = vmul.f32 %v166, %v419
  %v450 = vmul.f32 %v166, %v420
  %v451 = vmul.f32 %v171, %v419
  %v452 = vmul.f32 %v171, %v420
  %v453 = vmul.f32 %v176, %v419
  %v454 = vmul.f32 %v176, %v420
  %v455 = vmul.f32 %v181, %v419
  %v456 = vmul.f32 %v181, %v420
  %v457 = vmul.f32 %v186, %v419
  %v458 = vmul.f32 %v186, %v420
  %v459 = vmul.f32 %v191, %v419
  %v460 = vmul.f32 %v191, %v420
  %v461 = vmul.f32 %v196, %v419
  %v462 = vmul.f32 %v196, %v420
  %v463 = vmul.f32 %v201, %v419
  %v464 = vmul.f32 %v201, %v420
  %v465 = vmul.f32 %v206, %v419
  %v466 = vmul.f32 %v206, %v420
  %v467 = vmul.f32 %v211, %v419
  %v468 = vmul.f32 %v211, %v420
  %v469 = vmul.f32 %v216, %v419
  %v470 = vmul.f32 %v216, %v420
  %v471 = vmul.f32 %v221, %v419
  %v472 = vmul.f32 %v221, %v420
  %v473 = vmul.f32 %v226, %v419
  %v474 = vmul.f32 %v226, %v420
  %v475 = vmul.f32 %v231, %v419
  %v476 = vmul.f32 %v231, %v420
  %v477 = vmul.f32 %v236, %v419
  %v478 = vmul.f32 %v236, %v420
  %v479 = vmul.f32 %v241, %v419
  %v480 = vmul.f32 %v241, %v420
  %v481 = vmul.f32 %v246, %v419
  %v482 = vmul.f32 %v246, %v420
  %v483 = vmul.f32 %v251, %v419
  %v484 = vmul.f32 %v251, %v420
  %v485 = vmul.f32 %v256, %v419
  %v486 = vmul.f32 %v256, %v420
  %v487 = vmul.f32 %v261, %v419
  %v488 = vmul.f32 %v261, %v420
  %v489 = vmul.f32 %v266, %v419
  %v490 = vmul.f32 %v266, %v420
  %v491 = vmul.f32 %v271, %v419
  %v492 = vmul.f32 %v271, %v420
  %v493 = vmul.f32 %v276, %v419
  %v494 = vmul.f32 %v276, %v420
  %v495 = vmul.f32 %v281, %v419
  %v496 = vmul.f32 %v281, %v420
  %v497 = vmul.f32 %v286, %v419
  %v498 = vmul.f32 %v286, %v420
  %v499 = vmul.f32 %v291, %v419
  %v500 = vmul.f32 %v291, %v420
  %v501 = vmul.f32 %v296, %v419
  %v502 = vmul.f32 %v296, %v420
  %v503 = vmul.f32 %v301, %v419
  %v504 = vmul.f32 %v301, %v420
  %v505 = vmul.f32 %v306, %v419
  %v506 = vmul.f32 %v306, %v420
  %v507 = vmul.f32 %v311, %v419
  %v508 = vmul.f32 %v311, %v420
  %v509 = vmul.f32 %v316, %v419
  %v510 = vmul.f32 %v316, %v420
  %v511 = vmul.f32 %v321, %v419
  %v512 = vmul.f32 %v321, %v420
  %v513 = vmul.f32 %v326, %v419
  %v514 = vmul.f32 %v326, %v420
  %v515 = vmul.f32 %v331, %v419
  %v516 = vmul.f32 %v331, %v420
  %v517 = vmul.f32 %v336, %v419
  %v518 = vmul.f32 %v336, %v420
  %v519 = vmul.f32 %v341, %v419
  %v520 = vmul.f32 %v341, %v420
  %v521 = vmul.f32 %v346, %v419
  %v522 = vmul.f32 %v346, %v420
  %v523 = vmul.f32 %v351, %v419
  %v524 = vmul.f32 %v351, %v420
  %v525 = vmul.f32 %v356, %v419
  %v526 = vmul.f32 %v356, %v420
  %v527 = vmul.f32 %v361, %v419
  %v528 = vmul.f32 %v361, %v420
  %v529 = vmul.f32 %v366, %v419
  %v530 = vmul.f32 %v366, %v420
  %v531 = vmul.f32 %v371, %v419
  %v532 = vmul.f32 %v371, %v420
  %v533 = vmul.f32 %v376, %v419
  %v534 = vmul.f32 %v376, %v420
  %v535 = vmul.f32 %v381, %v419
  %v536 = vmul.f32 %v381, %v420
  %v537 = vmul.f32 %v386, %v419
  %v538 = vmul.f32 %v386, %v420
  %v539 = vmul.f32 %v391, %v419
  %v540 = vmul.f32 %v391, %v420
  %v541 = vmul.f32 %v396, %v419
  %v542 = vmul.f32 %v396, %v420
  %v543 = vmul.f32 %v401, %v419
  %v544 = vmul.f32 %v401, %v420
  %v545 = vmul.f32 %v406, %v419
  %v546 = vmul.f32 %v406, %v420
  %v547 = vmul.f32 %v411, %v419
  %v548 = vmul.f32 %v411, %v420
  %v549 = vmul.f32 %v416, %v419
  %v550 = vmul.f32 %v416, %v420
  %v552 = vperm.slane %v96, 0
  %v553 = vperm.slane %v96, 1
  %v556 = vadd.f32 %v552, %v423
  %v557 = vadd.f32 %v553, %v424
  %v558 = vadd.f32 %v552, %v425
  %v559 = vadd.f32 %v553, %v426
  %v560 = vadd.f32 %v552, %v427
  %v561 = vadd.f32 %v553, %v428
  %v562 = vadd.f32 %v552, %v429
  %v563 = vadd.f32 %v553, %v430
  %v564 = vadd.f32 %v552, %v431
  %v565 = vadd.f32 %v553, %v432
  %v566 = vadd.f32 %v552, %v433
  %v567 = vadd.f32 %v553, %v434
  %v568 = vadd.f32 %v552, %v435
  %v569 = vadd.f32 %v553, %v436
  %v570 = vadd.f32 %v552, %v437
  %v571 = vadd.f32 %v553, %v438
  %v572 = vadd.f32 %v552, %v439
  %v573 = vadd.f32 %v553, %v440
  %v574 = vadd.f32 %v552, %v441
  %v575 = vadd.f32 %v553, %v442
  %v576 = vadd.f32 %v552, %v443
  %v577 = vadd.f32 %v553, %v444
  %v578 = vadd.f32 %v552, %v445
  %v579 = vadd.f32 %v553, %v446
  %v580 = vadd.f32 %v552, %v447
  %v581 = vadd.f32 %v553, %v448
  %v582 = vadd.f32 %v552, %v449
  %v583 = vadd.f32 %v553, %v450
  %v584 = vadd.f32 %v552, %v451
  %v585 = vadd.f32 %v553, %v452
  %v586 = vadd.f32 %v552, %v453
  %v587 = vadd.f32 %v553, %v454
  %v588 = vadd.f32 %v552, %v455
  %v589 = vadd.f32 %v553, %v456
  %v590 = vadd.f32 %v552, %v457
  %v591 = vadd.f32 %v553, %v458
  %v592 = vadd.f32 %v552, %v459
  %v593 = vadd.f32 %v553, %v460
  %v594 = vadd.f32 %v552, %v461
  %v595 = vadd.f32 %v553, %v462
  %v596 = vadd.f32 %v552, %v463
  %v597 = vadd.f32 %v553, %v464
  %v598 = vadd.f32 %v552, %v465
  %v599 = vadd.f32 %v553, %v466
  %v600 = vadd.f32 %v552, %v467
  %v601 = vadd.f32 %v553, %v468
  %v602 = vadd.f32 %v552, %v469
  %v603 = vadd.f32 %v553, %v470
  %v604 = vadd.f32 %v552, %v471
  %v605 = vadd.f32 %v553, %v472
  %v606 = vadd.f32 %v552, %v473
  %v607 = vadd.f32 %v553, %v474
  %v608 = vadd.f32 %v552, %v475
  %v609 = vadd.f32 %v553, %v476
  %v610 = vadd.f32 %v552, %v477
  %v611 = vadd.f32 %v553, %v478
  %v612 = vadd.f32 %v552, %v479
  %v613 = vadd.f32 %v553, %v480
  %v614 = vadd.f32 %v552, %v481
  %v615 = vadd.f32 %v553, %v482
  %v616 = vadd.f32 %v552, %v483
  %v617 = vadd.f32 %v553, %v484
  %v618 = vadd.f32 %v552, %v485
  %v619 = vadd.f32 %v553, %v486
  %v620 = vadd.f32 %v552, %v487
  %v621 = vadd.f32 %v553, %v488
  %v622 = vadd.f32 %v552, %v489
  %v623 = vadd.f32 %v553, %v490
  %v624 = vadd.f32 %v552, %v491
  %v625 = vadd.f32 %v553, %v492
  %v626 = vadd.f32 %v552, %v493
  %v627 = vadd.f32 %v553, %v494
  %v628 = vadd.f32 %v552, %v495
  %v629 = vadd.f32 %v553, %v496
  %v630 = vadd.f32 %v552, %v497
  %v631 = vadd.f32 %v553, %v498
  %v632 = vadd.f32 %v552, %v499
  %v633 = vadd.f32 %v553, %v500
  %v634 = vadd.f32 %v552, %v501
  %v635 = vadd.f32 %v553, %v502
  %v636 = vadd.f32 %v552, %v503
  %v637 = vadd.f32 %v553, %v504
  %v638 = vadd.f32 %v552, %v505
  %v639 = vadd.f32 %v553, %v506
  %v640 = vadd.f32 %v552, %v507
  %v641 = vadd.f32 %v553, %v508
  %v642 = vadd.f32 %v552, %v509
  %v643 = vadd.f32 %v553, %v510
  %v644 = vadd.f32 %v552, %v511
  %v645 = vadd.f32 %v553, %v512
  %v646 = vadd.f32 %v552, %v513
  %v647 = vadd.f32 %v553, %v514
  %v648 = vadd.f32 %v552, %v515
  %v649 = vadd.f32 %v553, %v516
  %v650 = vadd.f32 %v552, %v517
  %v651 = vadd.f32 %v553, %v518
  %v652 = vadd.f32 %v552, %v519
  %v653 = vadd.f32 %v553, %v520
  %v654 = vadd.f32 %v552, %v521
  %v655 = vadd.f32 %v553, %v522
  %v656 = vadd.f32 %v552, %v523
  %v657 = vadd.f32 %v553, %v524
  %v658 = vadd.f32 %v552, %v525
  %v659 = vadd.f32 %v553, %v526
  %v660 = vadd.f32 %v552, %v527
  %v661 = vadd.f32 %v553, %v528
  %v662 = vadd.f32 %v552, %v529
  %v663 = vadd.f32 %v553, %v530
  %v664 = vadd.f32 %v552, %v531
  %v665 = vadd.f32 %v553, %v532
  %v666 = vadd.f32 %v552, %v533
  %v667 = vadd.f32 %v553, %v534
  %v668 = vadd.f32 %v552, %v535
  %v669 = vadd.f32 %v553, %v536
  %v670 = vadd.f32 %v552, %v537
  %v671 = vadd.f32 %v553, %v538
  %v672 = vadd.f32 %v552, %v539
  %v673 = vadd.f32 %v553, %v540
  %v674 = vadd.f32 %v552, %v541
  %v675 = vadd.f32 %v553, %v542
  %v676 = vadd.f32 %v552, %v543
  %v677 = vadd.f32 %v553, %v544
  %v678 = vadd.f32 %v552, %v545
  %v679 = vadd.f32 %v553, %v546
  %v680 = vadd.f32 %v552, %v547
  %v681 = vadd.f32 %v553, %v548
  %v682 = vadd.f32 %v552, %v549
  %v683 = vadd.f32 %v553, %v550
  %s684 = scalar_lea.vmem %s1, 1
  %v685 = vld [vmem:[%s684] ss:$4 sm:$0x3]
  %686 = vset.pattern.permute.xlu0 1
  %687 = vperm.xlu0 %686, %v32
  %v688 = vpop.permute.xlu0 %687
  %690 = vset.pattern.permute.xlu0 1
  %691 = vperm.xlu0 %690, %v33
  %v692 = vpop.permute.xlu0 %691
  %694 = vset.pattern.permute.xlu0 1
  %695 = vperm.xlu0 %694, %v34
  %v696 = vpop.permute.xlu0 %695
  %698 = vset.pattern.permute.xlu0 1
  %699 = vperm.xlu0 %698, %v35
  %v700 = vpop.permute.xlu0 %699
  %702 = vset.pattern.permute.xlu0 1
  %703 = vperm.xlu0 %702, %v36
  %v704 = vpop.permute.xlu0 %703
  %706 = vset.pattern.permute.xlu0 1
  %707 = vperm.xlu0 %706, %v37
  %v708 = vpop.permute.xlu0 %707
  %710 = vset.pattern.permute.xlu0 1
  %711 = vperm.xlu0 %710, %v38
  %v712 = vpop.permute.xlu0 %711
  %714 = vset.pattern.permute.xlu0 1
  %715 = vperm.xlu0 %714, %v39
  %v716 = vpop.permute.xlu0 %715
  %718 = vset.pattern.permute.xlu0 1
  %719 = vperm.xlu0 %718, %v40
  %v720 = vpop.permute.xlu0 %719
  %722 = vset.pattern.permute.xlu0 1
  %723 = vperm.xlu0 %722, %v41
  %v724 = vpop.permute.xlu0 %723
  %726 = vset.pattern.permute.xlu0 1
  %727 = vperm.xlu0 %726, %v42
  %v728 = vpop.permute.xlu0 %727
  %730 = vset.pattern.permute.xlu0 1
  %731 = vperm.xlu0 %730, %v43
  %v732 = vpop.permute.xlu0 %731
  %734 = vset.pattern.permute.xlu0 1
  %735 = vperm.xlu0 %734, %v44
  %v736 = vpop.permute.xlu0 %735
  %738 = vset.pattern.permute.xlu0 1
  %739 = vperm.xlu0 %738, %v45
  %v740 = vpop.permute.xlu0 %739
  %742 = vset.pattern.permute.xlu0 1
  %743 = vperm.xlu0 %742, %v46
  %v744 = vpop.permute.xlu0 %743
  %746 = vset.pattern.permute.xlu0 1
  %747 = vperm.xlu0 %746, %v47
  %v748 = vpop.permute.xlu0 %747
  %750 = vset.pattern.permute.xlu0 1
  %751 = vperm.xlu0 %750, %v48
  %v752 = vpop.permute.xlu0 %751
  %754 = vset.pattern.permute.xlu0 1
  %755 = vperm.xlu0 %754, %v49
  %v756 = vpop.permute.xlu0 %755
  %758 = vset.pattern.permute.xlu0 1
  %759 = vperm.xlu0 %758, %v50
  %v760 = vpop.permute.xlu0 %759
  %762 = vset.pattern.permute.xlu0 1
  %763 = vperm.xlu0 %762, %v51
  %v764 = vpop.permute.xlu0 %763
  %766 = vset.pattern.permute.xlu0 1
  %767 = vperm.xlu0 %766, %v52
  %v768 = vpop.permute.xlu0 %767
  %770 = vset.pattern.permute.xlu0 1
  %771 = vperm.xlu0 %770, %v53
  %v772 = vpop.permute.xlu0 %771
  %774 = vset.pattern.permute.xlu0 1
  %775 = vperm.xlu0 %774, %v54
  %v776 = vpop.permute.xlu0 %775
  %778 = vset.pattern.permute.xlu0 1
  %779 = vperm.xlu0 %778, %v55
  %v780 = vpop.permute.xlu0 %779
  %782 = vset.pattern.permute.xlu0 1
  %783 = vperm.xlu0 %782, %v56
  %v784 = vpop.permute.xlu0 %783
  %786 = vset.pattern.permute.xlu0 1
  %787 = vperm.xlu0 %786, %v57
  %v788 = vpop.permute.xlu0 %787
  %790 = vset.pattern.permute.xlu0 1
  %791 = vperm.xlu0 %790, %v58
  %v792 = vpop.permute.xlu0 %791
  %794 = vset.pattern.permute.xlu0 1
  %795 = vperm.xlu0 %794, %v59
  %v796 = vpop.permute.xlu0 %795
  %798 = vset.pattern.permute.xlu0 1
  %799 = vperm.xlu0 %798, %v60
  %v800 = vpop.permute.xlu0 %799
  %802 = vset.pattern.permute.xlu0 1
  %803 = vperm.xlu0 %802, %v61
  %v804 = vpop.permute.xlu0 %803
  %806 = vset.pattern.permute.xlu0 1
  %807 = vperm.xlu0 %806, %v62
  %v808 = vpop.permute.xlu0 %807
  %810 = vset.pattern.permute.xlu0 1
  %811 = vperm.xlu0 %810, %v63
  %v812 = vpop.permute.xlu0 %811
  %814 = vset.pattern.permute.xlu0 1
  %815 = vperm.xlu0 %814, %v64
  %v816 = vpop.permute.xlu0 %815
  %818 = vset.pattern.permute.xlu0 1
  %819 = vperm.xlu0 %818, %v65
  %v820 = vpop.permute.xlu0 %819
  %822 = vset.pattern.permute.xlu0 1
  %823 = vperm.xlu0 %822, %v66
  %v824 = vpop.permute.xlu0 %823
  %826 = vset.pattern.permute.xlu0 1
  %827 = vperm.xlu0 %826, %v67
  %v828 = vpop.permute.xlu0 %827
  %830 = vset.pattern.permute.xlu0 1
  %831 = vperm.xlu0 %830, %v68
  %v832 = vpop.permute.xlu0 %831
  %834 = vset.pattern.permute.xlu0 1
  %835 = vperm.xlu0 %834, %v69
  %v836 = vpop.permute.xlu0 %835
  %838 = vset.pattern.permute.xlu0 1
  %839 = vperm.xlu0 %838, %v70
  %v840 = vpop.permute.xlu0 %839
  %842 = vset.pattern.permute.xlu0 1
  %843 = vperm.xlu0 %842, %v71
  %v844 = vpop.permute.xlu0 %843
  %846 = vset.pattern.permute.xlu0 1
  %847 = vperm.xlu0 %846, %v72
  %v848 = vpop.permute.xlu0 %847
  %850 = vset.pattern.permute.xlu0 1
  %851 = vperm.xlu0 %850, %v73
  %v852 = vpop.permute.xlu0 %851
  %854 = vset.pattern.permute.xlu0 1
  %855 = vperm.xlu0 %854, %v74
  %v856 = vpop.permute.xlu0 %855
  %858 = vset.pattern.permute.xlu0 1
  %859 = vperm.xlu0 %858, %v75
  %v860 = vpop.permute.xlu0 %859
  %862 = vset.pattern.permute.xlu0 1
  %863 = vperm.xlu0 %862, %v76
  %v864 = vpop.permute.xlu0 %863
  %866 = vset.pattern.permute.xlu0 1
  %867 = vperm.xlu0 %866, %v77
  %v868 = vpop.permute.xlu0 %867
  %870 = vset.pattern.permute.xlu0 1
  %871 = vperm.xlu0 %870, %v78
  %v872 = vpop.permute.xlu0 %871
  %874 = vset.pattern.permute.xlu0 1
  %875 = vperm.xlu0 %874, %v79
  %v876 = vpop.permute.xlu0 %875
  %878 = vset.pattern.permute.xlu0 1
  %879 = vperm.xlu0 %878, %v80
  %v880 = vpop.permute.xlu0 %879
  %882 = vset.pattern.permute.xlu0 1
  %883 = vperm.xlu0 %882, %v81
  %v884 = vpop.permute.xlu0 %883
  %886 = vset.pattern.permute.xlu0 1
  %887 = vperm.xlu0 %886, %v82
  %v888 = vpop.permute.xlu0 %887
  %890 = vset.pattern.permute.xlu0 1
  %891 = vperm.xlu0 %890, %v83
  %v892 = vpop.permute.xlu0 %891
  %894 = vset.pattern.permute.xlu0 1
  %895 = vperm.xlu0 %894, %v84
  %v896 = vpop.permute.xlu0 %895
  %898 = vset.pattern.permute.xlu0 1
  %899 = vperm.xlu0 %898, %v85
  %v900 = vpop.permute.xlu0 %899
  %902 = vset.pattern.permute.xlu0 1
  %903 = vperm.xlu0 %902, %v86
  %v904 = vpop.permute.xlu0 %903
  %906 = vset.pattern.permute.xlu0 1
  %907 = vperm.xlu0 %906, %v87
  %v908 = vpop.permute.xlu0 %907
  %910 = vset.pattern.permute.xlu0 1
  %911 = vperm.xlu0 %910, %v88
  %v912 = vpop.permute.xlu0 %911
  %914 = vset.pattern.permute.xlu0 1
  %915 = vperm.xlu0 %914, %v89
  %v916 = vpop.permute.xlu0 %915
  %918 = vset.pattern.permute.xlu0 1
  %919 = vperm.xlu0 %918, %v90
  %v920 = vpop.permute.xlu0 %919
  %922 = vset.pattern.permute.xlu0 1
  %923 = vperm.xlu0 %922, %v91
  %v924 = vpop.permute.xlu0 %923
  %926 = vset.pattern.permute.xlu0 1
  %927 = vperm.xlu0 %926, %v92
  %v928 = vpop.permute.xlu0 %927
  %930 = vset.pattern.permute.xlu0 1
  %931 = vperm.xlu0 %930, %v93
  %v932 = vpop.permute.xlu0 %931
  %934 = vset.pattern.permute.xlu0 1
  %935 = vperm.xlu0 %934, %v94
  %v936 = vpop.permute.xlu0 %935
  %938 = vset.pattern.permute.xlu0 1
  %939 = vperm.xlu0 %938, %v95
  %v940 = vpop.permute.xlu0 %939
  %v943 = vperm.slane %v685, 0
  %v944 = vperm.slane %v685, 1
  %v947 = vmul.f32 %v688, %v943
  %v948 = vmul.f32 %v688, %v944
  %v949 = vmul.f32 %v692, %v943
  %v950 = vmul.f32 %v692, %v944
  %v951 = vmul.f32 %v696, %v943
  %v952 = vmul.f32 %v696, %v944
  %v953 = vmul.f32 %v700, %v943
  %v954 = vmul.f32 %v700, %v944
  %v955 = vmul.f32 %v704, %v943
  %v956 = vmul.f32 %v704, %v944
  %v957 = vmul.f32 %v708, %v943
  %v958 = vmul.f32 %v708, %v944
  %v959 = vmul.f32 %v712, %v943
  %v960 = vmul.f32 %v712, %v944
  %v961 = vmul.f32 %v716, %v943
  %v962 = vmul.f32 %v716, %v944
  %v963 = vmul.f32 %v720, %v943
  %v964 = vmul.f32 %v720, %v944
  %v965 = vmul.f32 %v724, %v943
  %v966 = vmul.f32 %v724, %v944
  %v967 = vmul.f32 %v728, %v943
  %v968 = vmul.f32 %v728, %v944
  %v969 = vmul.f32 %v732, %v943
  %v970 = vmul.f32 %v732, %v944
  %v971 = vmul.f32 %v736, %v943
  %v972 = vmul.f32 %v736, %v944
  %v973 = vmul.f32 %v740, %v943
  %v974 = vmul.f32 %v740, %v944
  %v975 = vmul.f32 %v744, %v943
  %v976 = vmul.f32 %v744, %v944
  %v977 = vmul.f32 %v748, %v943
  %v978 = vmul.f32 %v748, %v944
  %v979 = vmul.f32 %v752, %v943
  %v980 = vmul.f32 %v752, %v944
  %v981 = vmul.f32 %v756, %v943
  %v982 = vmul.f32 %v756, %v944
  %v983 = vmul.f32 %v760, %v943
  %v984 = vmul.f32 %v760, %v944
  %v985 = vmul.f32 %v764, %v943
  %v986 = vmul.f32 %v764, %v944
  %v987 = vmul.f32 %v768, %v943
  %v988 = vmul.f32 %v768, %v944
  %v989 = vmul.f32 %v772, %v943
  %v990 = vmul.f32 %v772, %v944
  %v991 = vmul.f32 %v776, %v943
  %v992 = vmul.f32 %v776, %v944
  %v993 = vmul.f32 %v780, %v943
  %v994 = vmul.f32 %v780, %v944
  %v995 = vmul.f32 %v784, %v943
  %v996 = vmul.f32 %v784, %v944
  %v997 = vmul.f32 %v788, %v943
  %v998 = vmul.f32 %v788, %v944
  %v999 = vmul.f32 %v792, %v943
  %v1000 = vmul.f32 %v792, %v944
  %v1001 = vmul.f32 %v796, %v943
  %v1002 = vmul.f32 %v796, %v944
  %v1003 = vmul.f32 %v800, %v943
  %v1004 = vmul.f32 %v800, %v944
  %v1005 = vmul.f32 %v804, %v943
  %v1006 = vmul.f32 %v804, %v944
  %v1007 = vmul.f32 %v808, %v943
  %v1008 = vmul.f32 %v808, %v944
  %v1009 = vmul.f32 %v812, %v943
  %v1010 = vmul.f32 %v812, %v944
  %v1011 = vmul.f32 %v816, %v943
  %v1012 = vmul.f32 %v816, %v944
  %v1013 = vmul.f32 %v820, %v943
  %v1014 = vmul.f32 %v820, %v944
  %v1015 = vmul.f32 %v824, %v943
  %v1016 = vmul.f32 %v824, %v944
  %v1017 = vmul.f32 %v828, %v943
  %v1018 = vmul.f32 %v828, %v944
  %v1019 = vmul.f32 %v832, %v943
  %v1020 = vmul.f32 %v832, %v944
  %v1021 = vmul.f32 %v836, %v943
  %v1022 = vmul.f32 %v836, %v944
  %v1023 = vmul.f32 %v840, %v943
  %v1024 = vmul.f32 %v840, %v944
  %v1025 = vmul.f32 %v844, %v943
  %v1026 = vmul.f32 %v844, %v944
  %v1027 = vmul.f32 %v848, %v943
  %v1028 = vmul.f32 %v848, %v944
  %v1029 = vmul.f32 %v852, %v943
  %v1030 = vmul.f32 %v852, %v944
  %v1031 = vmul.f32 %v856, %v943
  %v1032 = vmul.f32 %v856, %v944
  %v1033 = vmul.f32 %v860, %v943
  %v1034 = vmul.f32 %v860, %v944
  %v1035 = vmul.f32 %v864, %v943
  %v1036 = vmul.f32 %v864, %v944
  %v1037 = vmul.f32 %v868, %v943
  %v1038 = vmul.f32 %v868, %v944
  %v1039 = vmul.f32 %v872, %v943
  %v1040 = vmul.f32 %v872, %v944
  %v1041 = vmul.f32 %v876, %v943
  %v1042 = vmul.f32 %v876, %v944
  %v1043 = vmul.f32 %v880, %v943
  %v1044 = vmul.f32 %v880, %v944
  %v1045 = vmul.f32 %v884, %v943
  %v1046 = vmul.f32 %v884, %v944
  %v1047 = vmul.f32 %v888, %v943
  %v1048 = vmul.f32 %v888, %v944
  %v1049 = vmul.f32 %v892, %v943
  %v1050 = vmul.f32 %v892, %v944
  %v1051 = vmul.f32 %v896, %v943
  %v1052 = vmul.f32 %v896, %v944
  %v1053 = vmul.f32 %v900, %v943
  %v1054 = vmul.f32 %v900, %v944
  %v1055 = vmul.f32 %v904, %v943
  %v1056 = vmul.f32 %v904, %v944
  %v1057 = vmul.f32 %v908, %v943
  %v1058 = vmul.f32 %v908, %v944
  %v1059 = vmul.f32 %v912, %v943
  %v1060 = vmul.f32 %v912, %v944
  %v1061 = vmul.f32 %v916, %v943
  %v1062 = vmul.f32 %v916, %v944
  %v1063 = vmul.f32 %v920, %v943
  %v1064 = vmul.f32 %v920, %v944
  %v1065 = vmul.f32 %v924, %v943
  %v1066 = vmul.f32 %v924, %v944
  %v1067 = vmul.f32 %v928, %v943
  %v1068 = vmul.f32 %v928, %v944
  %v1069 = vmul.f32 %v932, %v943
  %v1070 = vmul.f32 %v932, %v944
  %v1071 = vmul.f32 %v936, %v943
  %v1072 = vmul.f32 %v936, %v944
  %v1073 = vmul.f32 %v940, %v943
  %v1074 = vmul.f32 %v940, %v944
  %v1075 = vadd.f32 %v556, %v947
  %v1076 = vadd.f32 %v557, %v948
  %v1077 = vadd.f32 %v558, %v949
  %v1078 = vadd.f32 %v559, %v950
  %v1079 = vadd.f32 %v560, %v951
  %v1080 = vadd.f32 %v561, %v952
  %v1081 = vadd.f32 %v562, %v953
  %v1082 = vadd.f32 %v563, %v954
  %v1083 = vadd.f32 %v564, %v955
  %v1084 = vadd.f32 %v565, %v956
  %v1085 = vadd.f32 %v566, %v957
  %v1086 = vadd.f32 %v567, %v958
  %v1087 = vadd.f32 %v568, %v959
  %v1088 = vadd.f32 %v569, %v960
  %v1089 = vadd.f32 %v570, %v961
  %v1090 = vadd.f32 %v571, %v962
  %v1091 = vadd.f32 %v572, %v963
  %v1092 = vadd.f32 %v573, %v964
  %v1093 = vadd.f32 %v574, %v965
  %v1094 = vadd.f32 %v575, %v966
  %v1095 = vadd.f32 %v576, %v967
  %v1096 = vadd.f32 %v577, %v968
  %v1097 = vadd.f32 %v578, %v969
  %v1098 = vadd.f32 %v579, %v970
  %v1099 = vadd.f32 %v580, %v971
  %v1100 = vadd.f32 %v581, %v972
  %v1101 = vadd.f32 %v582, %v973
  %v1102 = vadd.f32 %v583, %v974
  %v1103 = vadd.f32 %v584, %v975
  %v1104 = vadd.f32 %v585, %v976
  %v1105 = vadd.f32 %v586, %v977
  %v1106 = vadd.f32 %v587, %v978
  %v1107 = vadd.f32 %v588, %v979
  %v1108 = vadd.f32 %v589, %v980
  %v1109 = vadd.f32 %v590, %v981
  %v1110 = vadd.f32 %v591, %v982
  %v1111 = vadd.f32 %v592, %v983
  %v1112 = vadd.f32 %v593, %v984
  %v1113 = vadd.f32 %v594, %v985
  %v1114 = vadd.f32 %v595, %v986
  %v1115 = vadd.f32 %v596, %v987
  %v1116 = vadd.f32 %v597, %v988
  %v1117 = vadd.f32 %v598, %v989
  %v1118 = vadd.f32 %v599, %v990
  %v1119 = vadd.f32 %v600, %v991
  %v1120 = vadd.f32 %v601, %v992
  %v1121 = vadd.f32 %v602, %v993
  %v1122 = vadd.f32 %v603, %v994
  %v1123 = vadd.f32 %v604, %v995
  %v1124 = vadd.f32 %v605, %v996
  %v1125 = vadd.f32 %v606, %v997
  %v1126 = vadd.f32 %v607, %v998
  %v1127 = vadd.f32 %v608, %v999
  %v1128 = vadd.f32 %v609, %v1000
  %v1129 = vadd.f32 %v610, %v1001
  %v1130 = vadd.f32 %v611, %v1002
  %v1131 = vadd.f32 %v612, %v1003
  %v1132 = vadd.f32 %v613, %v1004
  %v1133 = vadd.f32 %v614, %v1005
  %v1134 = vadd.f32 %v615, %v1006
  %v1135 = vadd.f32 %v616, %v1007
  %v1136 = vadd.f32 %v617, %v1008
  %v1137 = vadd.f32 %v618, %v1009
  %v1138 = vadd.f32 %v619, %v1010
  %v1139 = vadd.f32 %v620, %v1011
  %v1140 = vadd.f32 %v621, %v1012
  %v1141 = vadd.f32 %v622, %v1013
  %v1142 = vadd.f32 %v623, %v1014
  %v1143 = vadd.f32 %v624, %v1015
  %v1144 = vadd.f32 %v625, %v1016
  %v1145 = vadd.f32 %v626, %v1017
  %v1146 = vadd.f32 %v627, %v1018
  %v1147 = vadd.f32 %v628, %v1019
  %v1148 = vadd.f32 %v629, %v1020
  %v1149 = vadd.f32 %v630, %v1021
  %v1150 = vadd.f32 %v631, %v1022
  %v1151 = vadd.f32 %v632, %v1023
  %v1152 = vadd.f32 %v633, %v1024
  %v1153 = vadd.f32 %v634, %v1025
  %v1154 = vadd.f32 %v635, %v1026
  %v1155 = vadd.f32 %v636, %v1027
  %v1156 = vadd.f32 %v637, %v1028
  %v1157 = vadd.f32 %v638, %v1029
  %v1158 = vadd.f32 %v639, %v1030
  %v1159 = vadd.f32 %v640, %v1031
  %v1160 = vadd.f32 %v641, %v1032
  %v1161 = vadd.f32 %v642, %v1033
  %v1162 = vadd.f32 %v643, %v1034
  %v1163 = vadd.f32 %v644, %v1035
  %v1164 = vadd.f32 %v645, %v1036
  %v1165 = vadd.f32 %v646, %v1037
  %v1166 = vadd.f32 %v647, %v1038
  %v1167 = vadd.f32 %v648, %v1039
  %v1168 = vadd.f32 %v649, %v1040
  %v1169 = vadd.f32 %v650, %v1041
  %v1170 = vadd.f32 %v651, %v1042
  %v1171 = vadd.f32 %v652, %v1043
  %v1172 = vadd.f32 %v653, %v1044
  %v1173 = vadd.f32 %v654, %v1045
  %v1174 = vadd.f32 %v655, %v1046
  %v1175 = vadd.f32 %v656, %v1047
  %v1176 = vadd.f32 %v657, %v1048
  %v1177 = vadd.f32 %v658, %v1049
  %v1178 = vadd.f32 %v659, %v1050
  %v1179 = vadd.f32 %v660, %v1051
  %v1180 = vadd.f32 %v661, %v1052
  %v1181 = vadd.f32 %v662, %v1053
  %v1182 = vadd.f32 %v663, %v1054
  %v1183 = vadd.f32 %v664, %v1055
  %v1184 = vadd.f32 %v665, %v1056
  %v1185 = vadd.f32 %v666, %v1057
  %v1186 = vadd.f32 %v667, %v1058
  %v1187 = vadd.f32 %v668, %v1059
  %v1188 = vadd.f32 %v669, %v1060
  %v1189 = vadd.f32 %v670, %v1061
  %v1190 = vadd.f32 %v671, %v1062
  %v1191 = vadd.f32 %v672, %v1063
  %v1192 = vadd.f32 %v673, %v1064
  %v1193 = vadd.f32 %v674, %v1065
  %v1194 = vadd.f32 %v675, %v1066
  %v1195 = vadd.f32 %v676, %v1067
  %v1196 = vadd.f32 %v677, %v1068
  %v1197 = vadd.f32 %v678, %v1069
  %v1198 = vadd.f32 %v679, %v1070
  %v1199 = vadd.f32 %v680, %v1071
  %v1200 = vadd.f32 %v681, %v1072
  %v1201 = vadd.f32 %v682, %v1073
  %v1202 = vadd.f32 %v683, %v1074
  %s1203 = scalar_lea.vmem %s1, 2
  %v1204 = vld [vmem:[%s1203] ss:$4 sm:$0x3]
  %1205 = vset.pattern.permute.xlu0 2
  %1206 = vperm.xlu0 %1205, %v32
  %v1207 = vpop.permute.xlu0 %1206
  %1209 = vset.pattern.permute.xlu0 2
  %1210 = vperm.xlu0 %1209, %v33
  %v1211 = vpop.permute.xlu0 %1210
  %1213 = vset.pattern.permute.xlu0 2
  %1214 = vperm.xlu0 %1213, %v34
  %v1215 = vpop.permute.xlu0 %1214
  %1217 = vset.pattern.permute.xlu0 2
  %1218 = vperm.xlu0 %1217, %v35
  %v1219 = vpop.permute.xlu0 %1218
  %1221 = vset.pattern.permute.xlu0 2
  %1222 = vperm.xlu0 %1221, %v36
  %v1223 = vpop.permute.xlu0 %1222
  %1225 = vset.pattern.permute.xlu0 2
  %1226 = vperm.xlu0 %1225, %v37
  %v1227 = vpop.permute.xlu0 %1226
  %1229 = vset.pattern.permute.xlu0 2
  %1230 = vperm.xlu0 %1229, %v38
  %v1231 = vpop.permute.xlu0 %1230
  %1233 = vset.pattern.permute.xlu0 2
  %1234 = vperm.xlu0 %1233, %v39
  %v1235 = vpop.permute.xlu0 %1234
  %1237 = vset.pattern.permute.xlu0 2
  %1238 = vperm.xlu0 %1237, %v40
  %v1239 = vpop.permute.xlu0 %1238
  %1241 = vset.pattern.permute.xlu0 2
  %1242 = vperm.xlu0 %1241, %v41
  %v1243 = vpop.permute.xlu0 %1242
  %1245 = vset.pattern.permute.xlu0 2
  %1246 = vperm.xlu0 %1245, %v42
  %v1247 = vpop.permute.xlu0 %1246
  %1249 = vset.pattern.permute.xlu0 2
  %1250 = vperm.xlu0 %1249, %v43
  %v1251 = vpop.permute.xlu0 %1250
  %1253 = vset.pattern.permute.xlu0 2
  %1254 = vperm.xlu0 %1253, %v44
  %v1255 = vpop.permute.xlu0 %1254
  %1257 = vset.pattern.permute.xlu0 2
  %1258 = vperm.xlu0 %1257, %v45
  %v1259 = vpop.permute.xlu0 %1258
  %1261 = vset.pattern.permute.xlu0 2
  %1262 = vperm.xlu0 %1261, %v46
  %v1263 = vpop.permute.xlu0 %1262
  %1265 = vset.pattern.permute.xlu0 2
  %1266 = vperm.xlu0 %1265, %v47
  %v1267 = vpop.permute.xlu0 %1266
  %1269 = vset.pattern.permute.xlu0 2
  %1270 = vperm.xlu0 %1269, %v48
  %v1271 = vpop.permute.xlu0 %1270
  %1273 = vset.pattern.permute.xlu0 2
  %1274 = vperm.xlu0 %1273, %v49
  %v1275 = vpop.permute.xlu0 %1274
  %1277 = vset.pattern.permute.xlu0 2
  %1278 = vperm.xlu0 %1277, %v50
  %v1279 = vpop.permute.xlu0 %1278
  %1281 = vset.pattern.permute.xlu0 2
  %1282 = vperm.xlu0 %1281, %v51
  %v1283 = vpop.permute.xlu0 %1282
  %1285 = vset.pattern.permute.xlu0 2
  %1286 = vperm.xlu0 %1285, %v52
  %v1287 = vpop.permute.xlu0 %1286
  %1289 = vset.pattern.permute.xlu0 2
  %1290 = vperm.xlu0 %1289, %v53
  %v1291 = vpop.permute.xlu0 %1290
  %1293 = vset.pattern.permute.xlu0 2
  %1294 = vperm.xlu0 %1293, %v54
  %v1295 = vpop.permute.xlu0 %1294
  %1297 = vset.pattern.permute.xlu0 2
  %1298 = vperm.xlu0 %1297, %v55
  %v1299 = vpop.permute.xlu0 %1298
  %1301 = vset.pattern.permute.xlu0 2
  %1302 = vperm.xlu0 %1301, %v56
  %v1303 = vpop.permute.xlu0 %1302
  %1305 = vset.pattern.permute.xlu0 2
  %1306 = vperm.xlu0 %1305, %v57
  %v1307 = vpop.permute.xlu0 %1306
  %1309 = vset.pattern.permute.xlu0 2
  %1310 = vperm.xlu0 %1309, %v58
  %v1311 = vpop.permute.xlu0 %1310
  %1313 = vset.pattern.permute.xlu0 2
  %1314 = vperm.xlu0 %1313, %v59
  %v1315 = vpop.permute.xlu0 %1314
  %1317 = vset.pattern.permute.xlu0 2
  %1318 = vperm.xlu0 %1317, %v60
  %v1319 = vpop.permute.xlu0 %1318
  %1321 = vset.pattern.permute.xlu0 2
  %1322 = vperm.xlu0 %1321, %v61
  %v1323 = vpop.permute.xlu0 %1322
  %1325 = vset.pattern.permute.xlu0 2
  %1326 = vperm.xlu0 %1325, %v62
  %v1327 = vpop.permute.xlu0 %1326
  %1329 = vset.pattern.permute.xlu0 2
  %1330 = vperm.xlu0 %1329, %v63
  %v1331 = vpop.permute.xlu0 %1330
  %1333 = vset.pattern.permute.xlu0 2
  %1334 = vperm.xlu0 %1333, %v64
  %v1335 = vpop.permute.xlu0 %1334
  %1337 = vset.pattern.permute.xlu0 2
  %1338 = vperm.xlu0 %1337, %v65
  %v1339 = vpop.permute.xlu0 %1338
  %1341 = vset.pattern.permute.xlu0 2
  %1342 = vperm.xlu0 %1341, %v66
  %v1343 = vpop.permute.xlu0 %1342
  %1345 = vset.pattern.permute.xlu0 2
  %1346 = vperm.xlu0 %1345, %v67
  %v1347 = vpop.permute.xlu0 %1346
  %1349 = vset.pattern.permute.xlu0 2
  %1350 = vperm.xlu0 %1349, %v68
  %v1351 = vpop.permute.xlu0 %1350
  %1353 = vset.pattern.permute.xlu0 2
  %1354 = vperm.xlu0 %1353, %v69
  %v1355 = vpop.permute.xlu0 %1354
  %1357 = vset.pattern.permute.xlu0 2
  %1358 = vperm.xlu0 %1357, %v70
  %v1359 = vpop.permute.xlu0 %1358
  %1361 = vset.pattern.permute.xlu0 2
  %1362 = vperm.xlu0 %1361, %v71
  %v1363 = vpop.permute.xlu0 %1362
  %1365 = vset.pattern.permute.xlu0 2
  %1366 = vperm.xlu0 %1365, %v72
  %v1367 = vpop.permute.xlu0 %1366
  %1369 = vset.pattern.permute.xlu0 2
  %1370 = vperm.xlu0 %1369, %v73
  %v1371 = vpop.permute.xlu0 %1370
  %1373 = vset.pattern.permute.xlu0 2
  %1374 = vperm.xlu0 %1373, %v74
  %v1375 = vpop.permute.xlu0 %1374
  %1377 = vset.pattern.permute.xlu0 2
  %1378 = vperm.xlu0 %1377, %v75
  %v1379 = vpop.permute.xlu0 %1378
  %1381 = vset.pattern.permute.xlu0 2
  %1382 = vperm.xlu0 %1381, %v76
  %v1383 = vpop.permute.xlu0 %1382
  %1385 = vset.pattern.permute.xlu0 2
  %1386 = vperm.xlu0 %1385, %v77
  %v1387 = vpop.permute.xlu0 %1386
  %1389 = vset.pattern.permute.xlu0 2
  %1390 = vperm.xlu0 %1389, %v78
  %v1391 = vpop.permute.xlu0 %1390
  %1393 = vset.pattern.permute.xlu0 2
  %1394 = vperm.xlu0 %1393, %v79
  %v1395 = vpop.permute.xlu0 %1394
  %1397 = vset.pattern.permute.xlu0 2
  %1398 = vperm.xlu0 %1397, %v80
  %v1399 = vpop.permute.xlu0 %1398
  %1401 = vset.pattern.permute.xlu0 2
  %1402 = vperm.xlu0 %1401, %v81
  %v1403 = vpop.permute.xlu0 %1402
  %1405 = vset.pattern.permute.xlu0 2
  %1406 = vperm.xlu0 %1405, %v82
  %v1407 = vpop.permute.xlu0 %1406
  %1409 = vset.pattern.permute.xlu0 2
  %1410 = vperm.xlu0 %1409, %v83
  %v1411 = vpop.permute.xlu0 %1410
  %1413 = vset.pattern.permute.xlu0 2
  %1414 = vperm.xlu0 %1413, %v84
  %v1415 = vpop.permute.xlu0 %1414
  %1417 = vset.pattern.permute.xlu0 2
  %1418 = vperm.xlu0 %1417, %v85
  %v1419 = vpop.permute.xlu0 %1418
  %1421 = vset.pattern.permute.xlu0 2
  %1422 = vperm.xlu0 %1421, %v86
  %v1423 = vpop.permute.xlu0 %1422
  %1425 = vset.pattern.permute.xlu0 2
  %1426 = vperm.xlu0 %1425, %v87
  %v1427 = vpop.permute.xlu0 %1426
  %1429 = vset.pattern.permute.xlu0 2
  %1430 = vperm.xlu0 %1429, %v88
  %v1431 = vpop.permute.xlu0 %1430
  %1433 = vset.pattern.permute.xlu0 2
  %1434 = vperm.xlu0 %1433, %v89
  %v1435 = vpop.permute.xlu0 %1434
  %1437 = vset.pattern.permute.xlu0 2
  %1438 = vperm.xlu0 %1437, %v90
  %v1439 = vpop.permute.xlu0 %1438
  %1441 = vset.pattern.permute.xlu0 2
  %1442 = vperm.xlu0 %1441, %v91
  %v1443 = vpop.permute.xlu0 %1442
  %1445 = vset.pattern.permute.xlu0 2
  %1446 = vperm.xlu0 %1445, %v92
  %v1447 = vpop.permute.xlu0 %1446
  %1449 = vset.pattern.permute.xlu0 2
  %1450 = vperm.xlu0 %1449, %v93
  %v1451 = vpop.permute.xlu0 %1450
  %1453 = vset.pattern.permute.xlu0 2
  %1454 = vperm.xlu0 %1453, %v94
  %v1455 = vpop.permute.xlu0 %1454
  %1457 = vset.pattern.permute.xlu0 2
  %1458 = vperm.xlu0 %1457, %v95
  %v1459 = vpop.permute.xlu0 %1458
  %v1462 = vperm.slane %v1204, 0
  %v1463 = vperm.slane %v1204, 1
  %v1466 = vmul.f32 %v1207, %v1462
  %v1467 = vmul.f32 %v1207, %v1463
  %v1468 = vmul.f32 %v1211, %v1462
  %v1469 = vmul.f32 %v1211, %v1463
  %v1470 = vmul.f32 %v1215, %v1462
  %v1471 = vmul.f32 %v1215, %v1463
  %v1472 = vmul.f32 %v1219, %v1462
  %v1473 = vmul.f32 %v1219, %v1463
  %v1474 = vmul.f32 %v1223, %v1462
  %v1475 = vmul.f32 %v1223, %v1463
  %v1476 = vmul.f32 %v1227, %v1462
  %v1477 = vmul.f32 %v1227, %v1463
  %v1478 = vmul.f32 %v1231, %v1462
  %v1479 = vmul.f32 %v1231, %v1463
  %v1480 = vmul.f32 %v1235, %v1462
  %v1481 = vmul.f32 %v1235, %v1463
  %v1482 = vmul.f32 %v1239, %v1462
  %v1483 = vmul.f32 %v1239, %v1463
  %v1484 = vmul.f32 %v1243, %v1462
  %v1485 = vmul.f32 %v1243, %v1463
  %v1486 = vmul.f32 %v1247, %v1462
  %v1487 = vmul.f32 %v1247, %v1463
  %v1488 = vmul.f32 %v1251, %v1462
  %v1489 = vmul.f32 %v1251, %v1463
  %v1490 = vmul.f32 %v1255, %v1462
  %v1491 = vmul.f32 %v1255, %v1463
  %v1492 = vmul.f32 %v1259, %v1462
  %v1493 = vmul.f32 %v1259, %v1463
  %v1494 = vmul.f32 %v1263, %v1462
  %v1495 = vmul.f32 %v1263, %v1463
  %v1496 = vmul.f32 %v1267, %v1462
  %v1497 = vmul.f32 %v1267, %v1463
  %v1498 = vmul.f32 %v1271, %v1462
  %v1499 = vmul.f32 %v1271, %v1463
  %v1500 = vmul.f32 %v1275, %v1462
  %v1501 = vmul.f32 %v1275, %v1463
  %v1502 = vmul.f32 %v1279, %v1462
  %v1503 = vmul.f32 %v1279, %v1463
  %v1504 = vmul.f32 %v1283, %v1462
  %v1505 = vmul.f32 %v1283, %v1463
  %v1506 = vmul.f32 %v1287, %v1462
  %v1507 = vmul.f32 %v1287, %v1463
  %v1508 = vmul.f32 %v1291, %v1462
  %v1509 = vmul.f32 %v1291, %v1463
  %v1510 = vmul.f32 %v1295, %v1462
  %v1511 = vmul.f32 %v1295, %v1463
  %v1512 = vmul.f32 %v1299, %v1462
  %v1513 = vmul.f32 %v1299, %v1463
  %v1514 = vmul.f32 %v1303, %v1462
  %v1515 = vmul.f32 %v1303, %v1463
  %v1516 = vmul.f32 %v1307, %v1462
  %v1517 = vmul.f32 %v1307, %v1463
  %v1518 = vmul.f32 %v1311, %v1462
  %v1519 = vmul.f32 %v1311, %v1463
  %v1520 = vmul.f32 %v1315, %v1462
  %v1521 = vmul.f32 %v1315, %v1463
  %v1522 = vmul.f32 %v1319, %v1462
  %v1523 = vmul.f32 %v1319, %v1463
  %v1524 = vmul.f32 %v1323, %v1462
  %v1525 = vmul.f32 %v1323, %v1463
  %v1526 = vmul.f32 %v1327, %v1462
  %v1527 = vmul.f32 %v1327, %v1463
  %v1528 = vmul.f32 %v1331, %v1462
  %v1529 = vmul.f32 %v1331, %v1463
  %v1530 = vmul.f32 %v1335, %v1462
  %v1531 = vmul.f32 %v1335, %v1463
  %v1532 = vmul.f32 %v1339, %v1462
  %v1533 = vmul.f32 %v1339, %v1463
  %v1534 = vmul.f32 %v1343, %v1462
  %v1535 = vmul.f32 %v1343, %v1463
  %v1536 = vmul.f32 %v1347, %v1462
  %v1537 = vmul.f32 %v1347, %v1463
  %v1538 = vmul.f32 %v1351, %v1462
  %v1539 = vmul.f32 %v1351, %v1463
  %v1540 = vmul.f32 %v1355, %v1462
  %v1541 = vmul.f32 %v1355, %v1463
  %v1542 = vmul.f32 %v1359, %v1462
  %v1543 = vmul.f32 %v1359, %v1463
  %v1544 = vmul.f32 %v1363, %v1462
  %v1545 = vmul.f32 %v1363, %v1463
  %v1546 = vmul.f32 %v1367, %v1462
  %v1547 = vmul.f32 %v1367, %v1463
  %v1548 = vmul.f32 %v1371, %v1462
  %v1549 = vmul.f32 %v1371, %v1463
  %v1550 = vmul.f32 %v1375, %v1462
  %v1551 = vmul.f32 %v1375, %v1463
  %v1552 = vmul.f32 %v1379, %v1462
  %v1553 = vmul.f32 %v1379, %v1463
  %v1554 = vmul.f32 %v1383, %v1462
  %v1555 = vmul.f32 %v1383, %v1463
  %v1556 = vmul.f32 %v1387, %v1462
  %v1557 = vmul.f32 %v1387, %v1463
  %v1558 = vmul.f32 %v1391, %v1462
  %v1559 = vmul.f32 %v1391, %v1463
  %v1560 = vmul.f32 %v1395, %v1462
  %v1561 = vmul.f32 %v1395, %v1463
  %v1562 = vmul.f32 %v1399, %v1462
  %v1563 = vmul.f32 %v1399, %v1463
  %v1564 = vmul.f32 %v1403, %v1462
  %v1565 = vmul.f32 %v1403, %v1463
  %v1566 = vmul.f32 %v1407, %v1462
  %v1567 = vmul.f32 %v1407, %v1463
  %v1568 = vmul.f32 %v1411, %v1462
  %v1569 = vmul.f32 %v1411, %v1463
  %v1570 = vmul.f32 %v1415, %v1462
  %v1571 = vmul.f32 %v1415, %v1463
  %v1572 = vmul.f32 %v1419, %v1462
  %v1573 = vmul.f32 %v1419, %v1463
  %v1574 = vmul.f32 %v1423, %v1462
  %v1575 = vmul.f32 %v1423, %v1463
  %v1576 = vmul.f32 %v1427, %v1462
  %v1577 = vmul.f32 %v1427, %v1463
  %v1578 = vmul.f32 %v1431, %v1462
  %v1579 = vmul.f32 %v1431, %v1463
  %v1580 = vmul.f32 %v1435, %v1462
  %v1581 = vmul.f32 %v1435, %v1463
  %v1582 = vmul.f32 %v1439, %v1462
  %v1583 = vmul.f32 %v1439, %v1463
  %v1584 = vmul.f32 %v1443, %v1462
  %v1585 = vmul.f32 %v1443, %v1463
  %v1586 = vmul.f32 %v1447, %v1462
  %v1587 = vmul.f32 %v1447, %v1463
  %v1588 = vmul.f32 %v1451, %v1462
  %v1589 = vmul.f32 %v1451, %v1463
  %v1590 = vmul.f32 %v1455, %v1462
  %v1591 = vmul.f32 %v1455, %v1463
  %v1592 = vmul.f32 %v1459, %v1462
  %v1593 = vmul.f32 %v1459, %v1463
  %v1594 = vadd.f32 %v1075, %v1466
  %v1595 = vadd.f32 %v1076, %v1467
  %v1596 = vadd.f32 %v1077, %v1468
  %v1597 = vadd.f32 %v1078, %v1469
  %v1598 = vadd.f32 %v1079, %v1470
  %v1599 = vadd.f32 %v1080, %v1471
  %v1600 = vadd.f32 %v1081, %v1472
  %v1601 = vadd.f32 %v1082, %v1473
  %v1602 = vadd.f32 %v1083, %v1474
  %v1603 = vadd.f32 %v1084, %v1475
  %v1604 = vadd.f32 %v1085, %v1476
  %v1605 = vadd.f32 %v1086, %v1477
  %v1606 = vadd.f32 %v1087, %v1478
  %v1607 = vadd.f32 %v1088, %v1479
  %v1608 = vadd.f32 %v1089, %v1480
  %v1609 = vadd.f32 %v1090, %v1481
  %v1610 = vadd.f32 %v1091, %v1482
  %v1611 = vadd.f32 %v1092, %v1483
  %v1612 = vadd.f32 %v1093, %v1484
  %v1613 = vadd.f32 %v1094, %v1485
  %v1614 = vadd.f32 %v1095, %v1486
  %v1615 = vadd.f32 %v1096, %v1487
  %v1616 = vadd.f32 %v1097, %v1488
  %v1617 = vadd.f32 %v1098, %v1489
  %v1618 = vadd.f32 %v1099, %v1490
  %v1619 = vadd.f32 %v1100, %v1491
  %v1620 = vadd.f32 %v1101, %v1492
  %v1621 = vadd.f32 %v1102, %v1493
  %v1622 = vadd.f32 %v1103, %v1494
  %v1623 = vadd.f32 %v1104, %v1495
  %v1624 = vadd.f32 %v1105, %v1496
  %v1625 = vadd.f32 %v1106, %v1497
  %v1626 = vadd.f32 %v1107, %v1498
  %v1627 = vadd.f32 %v1108, %v1499
  %v1628 = vadd.f32 %v1109, %v1500
  %v1629 = vadd.f32 %v1110, %v1501
  %v1630 = vadd.f32 %v1111, %v1502
  %v1631 = vadd.f32 %v1112, %v1503
  %v1632 = vadd.f32 %v1113, %v1504
  %v1633 = vadd.f32 %v1114, %v1505
  %v1634 = vadd.f32 %v1115, %v1506
  %v1635 = vadd.f32 %v1116, %v1507
  %v1636 = vadd.f32 %v1117, %v1508
  %v1637 = vadd.f32 %v1118, %v1509
  %v1638 = vadd.f32 %v1119, %v1510
  %v1639 = vadd.f32 %v1120, %v1511
  %v1640 = vadd.f32 %v1121, %v1512
  %v1641 = vadd.f32 %v1122, %v1513
  %v1642 = vadd.f32 %v1123, %v1514
  %v1643 = vadd.f32 %v1124, %v1515
  %v1644 = vadd.f32 %v1125, %v1516
  %v1645 = vadd.f32 %v1126, %v1517
  %v1646 = vadd.f32 %v1127, %v1518
  %v1647 = vadd.f32 %v1128, %v1519
  %v1648 = vadd.f32 %v1129, %v1520
  %v1649 = vadd.f32 %v1130, %v1521
  %v1650 = vadd.f32 %v1131, %v1522
  %v1651 = vadd.f32 %v1132, %v1523
  %v1652 = vadd.f32 %v1133, %v1524
  %v1653 = vadd.f32 %v1134, %v1525
  %v1654 = vadd.f32 %v1135, %v1526
  %v1655 = vadd.f32 %v1136, %v1527
  %v1656 = vadd.f32 %v1137, %v1528
  %v1657 = vadd.f32 %v1138, %v1529
  %v1658 = vadd.f32 %v1139, %v1530
  %v1659 = vadd.f32 %v1140, %v1531
  %v1660 = vadd.f32 %v1141, %v1532
  %v1661 = vadd.f32 %v1142, %v1533
  %v1662 = vadd.f32 %v1143, %v1534
  %v1663 = vadd.f32 %v1144, %v1535
  %v1664 = vadd.f32 %v1145, %v1536
  %v1665 = vadd.f32 %v1146, %v1537
  %v1666 = vadd.f32 %v1147, %v1538
  %v1667 = vadd.f32 %v1148, %v1539
  %v1668 = vadd.f32 %v1149, %v1540
  %v1669 = vadd.f32 %v1150, %v1541
  %v1670 = vadd.f32 %v1151, %v1542
  %v1671 = vadd.f32 %v1152, %v1543
  %v1672 = vadd.f32 %v1153, %v1544
  %v1673 = vadd.f32 %v1154, %v1545
  %v1674 = vadd.f32 %v1155, %v1546
  %v1675 = vadd.f32 %v1156, %v1547
  %v1676 = vadd.f32 %v1157, %v1548
  %v1677 = vadd.f32 %v1158, %v1549
  %v1678 = vadd.f32 %v1159, %v1550
  %v1679 = vadd.f32 %v1160, %v1551
  %v1680 = vadd.f32 %v1161, %v1552
  %v1681 = vadd.f32 %v1162, %v1553
  %v1682 = vadd.f32 %v1163, %v1554
  %v1683 = vadd.f32 %v1164, %v1555
  %v1684 = vadd.f32 %v1165, %v1556
  %v1685 = vadd.f32 %v1166, %v1557
  %v1686 = vadd.f32 %v1167, %v1558
  %v1687 = vadd.f32 %v1168, %v1559
  %v1688 = vadd.f32 %v1169, %v1560
  %v1689 = vadd.f32 %v1170, %v1561
  %v1690 = vadd.f32 %v1171, %v1562
  %v1691 = vadd.f32 %v1172, %v1563
  %v1692 = vadd.f32 %v1173, %v1564
  %v1693 = vadd.f32 %v1174, %v1565
  %v1694 = vadd.f32 %v1175, %v1566
  %v1695 = vadd.f32 %v1176, %v1567
  %v1696 = vadd.f32 %v1177, %v1568
  %v1697 = vadd.f32 %v1178, %v1569
  %v1698 = vadd.f32 %v1179, %v1570
  %v1699 = vadd.f32 %v1180, %v1571
  %v1700 = vadd.f32 %v1181, %v1572
  %v1701 = vadd.f32 %v1182, %v1573
  %v1702 = vadd.f32 %v1183, %v1574
  %v1703 = vadd.f32 %v1184, %v1575
  %v1704 = vadd.f32 %v1185, %v1576
  %v1705 = vadd.f32 %v1186, %v1577
  %v1706 = vadd.f32 %v1187, %v1578
  %v1707 = vadd.f32 %v1188, %v1579
  %v1708 = vadd.f32 %v1189, %v1580
  %v1709 = vadd.f32 %v1190, %v1581
  %v1710 = vadd.f32 %v1191, %v1582
  %v1711 = vadd.f32 %v1192, %v1583
  %v1712 = vadd.f32 %v1193, %v1584
  %v1713 = vadd.f32 %v1194, %v1585
  %v1714 = vadd.f32 %v1195, %v1586
  %v1715 = vadd.f32 %v1196, %v1587
  %v1716 = vadd.f32 %v1197, %v1588
  %v1717 = vadd.f32 %v1198, %v1589
  %v1718 = vadd.f32 %v1199, %v1590
  %v1719 = vadd.f32 %v1200, %v1591
  %v1720 = vadd.f32 %v1201, %v1592
  %v1721 = vadd.f32 %v1202, %v1593
  %s1722 = scalar_lea.vmem %s1, 3
  %v1723 = vld [vmem:[%s1722] ss:$4 sm:$0x3]
  %1724 = vset.pattern.permute.xlu0 3
  %1725 = vperm.xlu0 %1724, %v32
  %v1726 = vpop.permute.xlu0 %1725
  %1728 = vset.pattern.permute.xlu0 3
  %1729 = vperm.xlu0 %1728, %v33
  %v1730 = vpop.permute.xlu0 %1729
  %1732 = vset.pattern.permute.xlu0 3
  %1733 = vperm.xlu0 %1732, %v34
  %v1734 = vpop.permute.xlu0 %1733
  %1736 = vset.pattern.permute.xlu0 3
  %1737 = vperm.xlu0 %1736, %v35
  %v1738 = vpop.permute.xlu0 %1737
  %1740 = vset.pattern.permute.xlu0 3
  %1741 = vperm.xlu0 %1740, %v36
  %v1742 = vpop.permute.xlu0 %1741
  %1744 = vset.pattern.permute.xlu0 3
  %1745 = vperm.xlu0 %1744, %v37
  %v1746 = vpop.permute.xlu0 %1745
  %1748 = vset.pattern.permute.xlu0 3
  %1749 = vperm.xlu0 %1748, %v38
  %v1750 = vpop.permute.xlu0 %1749
  %1752 = vset.pattern.permute.xlu0 3
  %1753 = vperm.xlu0 %1752, %v39
  %v1754 = vpop.permute.xlu0 %1753
  %1756 = vset.pattern.permute.xlu0 3
  %1757 = vperm.xlu0 %1756, %v40
  %v1758 = vpop.permute.xlu0 %1757
  %1760 = vset.pattern.permute.xlu0 3
  %1761 = vperm.xlu0 %1760, %v41
  %v1762 = vpop.permute.xlu0 %1761
  %1764 = vset.pattern.permute.xlu0 3
  %1765 = vperm.xlu0 %1764, %v42
  %v1766 = vpop.permute.xlu0 %1765
  %1768 = vset.pattern.permute.xlu0 3
  %1769 = vperm.xlu0 %1768, %v43
  %v1770 = vpop.permute.xlu0 %1769
  %1772 = vset.pattern.permute.xlu0 3
  %1773 = vperm.xlu0 %1772, %v44
  %v1774 = vpop.permute.xlu0 %1773
  %1776 = vset.pattern.permute.xlu0 3
  %1777 = vperm.xlu0 %1776, %v45
  %v1778 = vpop.permute.xlu0 %1777
  %1780 = vset.pattern.permute.xlu0 3
  %1781 = vperm.xlu0 %1780, %v46
  %v1782 = vpop.permute.xlu0 %1781
  %1784 = vset.pattern.permute.xlu0 3
  %1785 = vperm.xlu0 %1784, %v47
  %v1786 = vpop.permute.xlu0 %1785
  %1788 = vset.pattern.permute.xlu0 3
  %1789 = vperm.xlu0 %1788, %v48
  %v1790 = vpop.permute.xlu0 %1789
  %1792 = vset.pattern.permute.xlu0 3
  %1793 = vperm.xlu0 %1792, %v49
  %v1794 = vpop.permute.xlu0 %1793
  %1796 = vset.pattern.permute.xlu0 3
  %1797 = vperm.xlu0 %1796, %v50
  %v1798 = vpop.permute.xlu0 %1797
  %1800 = vset.pattern.permute.xlu0 3
  %1801 = vperm.xlu0 %1800, %v51
  %v1802 = vpop.permute.xlu0 %1801
  %1804 = vset.pattern.permute.xlu0 3
  %1805 = vperm.xlu0 %1804, %v52
  %v1806 = vpop.permute.xlu0 %1805
  %1808 = vset.pattern.permute.xlu0 3
  %1809 = vperm.xlu0 %1808, %v53
  %v1810 = vpop.permute.xlu0 %1809
  %1812 = vset.pattern.permute.xlu0 3
  %1813 = vperm.xlu0 %1812, %v54
  %v1814 = vpop.permute.xlu0 %1813
  %1816 = vset.pattern.permute.xlu0 3
  %1817 = vperm.xlu0 %1816, %v55
  %v1818 = vpop.permute.xlu0 %1817
  %1820 = vset.pattern.permute.xlu0 3
  %1821 = vperm.xlu0 %1820, %v56
  %v1822 = vpop.permute.xlu0 %1821
  %1824 = vset.pattern.permute.xlu0 3
  %1825 = vperm.xlu0 %1824, %v57
  %v1826 = vpop.permute.xlu0 %1825
  %1828 = vset.pattern.permute.xlu0 3
  %1829 = vperm.xlu0 %1828, %v58
  %v1830 = vpop.permute.xlu0 %1829
  %1832 = vset.pattern.permute.xlu0 3
  %1833 = vperm.xlu0 %1832, %v59
  %v1834 = vpop.permute.xlu0 %1833
  %1836 = vset.pattern.permute.xlu0 3
  %1837 = vperm.xlu0 %1836, %v60
  %v1838 = vpop.permute.xlu0 %1837
  %1840 = vset.pattern.permute.xlu0 3
  %1841 = vperm.xlu0 %1840, %v61
  %v1842 = vpop.permute.xlu0 %1841
  %1844 = vset.pattern.permute.xlu0 3
  %1845 = vperm.xlu0 %1844, %v62
  %v1846 = vpop.permute.xlu0 %1845
  %1848 = vset.pattern.permute.xlu0 3
  %1849 = vperm.xlu0 %1848, %v63
  %v1850 = vpop.permute.xlu0 %1849
  %1852 = vset.pattern.permute.xlu0 3
  %1853 = vperm.xlu0 %1852, %v64
  %v1854 = vpop.permute.xlu0 %1853
  %1856 = vset.pattern.permute.xlu0 3
  %1857 = vperm.xlu0 %1856, %v65
  %v1858 = vpop.permute.xlu0 %1857
  %1860 = vset.pattern.permute.xlu0 3
  %1861 = vperm.xlu0 %1860, %v66
  %v1862 = vpop.permute.xlu0 %1861
  %1864 = vset.pattern.permute.xlu0 3
  %1865 = vperm.xlu0 %1864, %v67
  %v1866 = vpop.permute.xlu0 %1865
  %1868 = vset.pattern.permute.xlu0 3
  %1869 = vperm.xlu0 %1868, %v68
  %v1870 = vpop.permute.xlu0 %1869
  %1872 = vset.pattern.permute.xlu0 3
  %1873 = vperm.xlu0 %1872, %v69
  %v1874 = vpop.permute.xlu0 %1873
  %1876 = vset.pattern.permute.xlu0 3
  %1877 = vperm.xlu0 %1876, %v70
  %v1878 = vpop.permute.xlu0 %1877
  %1880 = vset.pattern.permute.xlu0 3
  %1881 = vperm.xlu0 %1880, %v71
  %v1882 = vpop.permute.xlu0 %1881
  %1884 = vset.pattern.permute.xlu0 3
  %1885 = vperm.xlu0 %1884, %v72
  %v1886 = vpop.permute.xlu0 %1885
  %1888 = vset.pattern.permute.xlu0 3
  %1889 = vperm.xlu0 %1888, %v73
  %v1890 = vpop.permute.xlu0 %1889
  %1892 = vset.pattern.permute.xlu0 3
  %1893 = vperm.xlu0 %1892, %v74
  %v1894 = vpop.permute.xlu0 %1893
  %1896 = vset.pattern.permute.xlu0 3
  %1897 = vperm.xlu0 %1896, %v75
  %v1898 = vpop.permute.xlu0 %1897
  %1900 = vset.pattern.permute.xlu0 3
  %1901 = vperm.xlu0 %1900, %v76
  %v1902 = vpop.permute.xlu0 %1901
  %1904 = vset.pattern.permute.xlu0 3
  %1905 = vperm.xlu0 %1904, %v77
  %v1906 = vpop.permute.xlu0 %1905
  %1908 = vset.pattern.permute.xlu0 3
  %1909 = vperm.xlu0 %1908, %v78
  %v1910 = vpop.permute.xlu0 %1909
  %1912 = vset.pattern.permute.xlu0 3
  %1913 = vperm.xlu0 %1912, %v79
  %v1914 = vpop.permute.xlu0 %1913
  %1916 = vset.pattern.permute.xlu0 3
  %1917 = vperm.xlu0 %1916, %v80
  %v1918 = vpop.permute.xlu0 %1917
  %1920 = vset.pattern.permute.xlu0 3
  %1921 = vperm.xlu0 %1920, %v81
  %v1922 = vpop.permute.xlu0 %1921
  %1924 = vset.pattern.permute.xlu0 3
  %1925 = vperm.xlu0 %1924, %v82
  %v1926 = vpop.permute.xlu0 %1925
  %1928 = vset.pattern.permute.xlu0 3
  %1929 = vperm.xlu0 %1928, %v83
  %v1930 = vpop.permute.xlu0 %1929
  %1932 = vset.pattern.permute.xlu0 3
  %1933 = vperm.xlu0 %1932, %v84
  %v1934 = vpop.permute.xlu0 %1933
  %1936 = vset.pattern.permute.xlu0 3
  %1937 = vperm.xlu0 %1936, %v85
  %v1938 = vpop.permute.xlu0 %1937
  %1940 = vset.pattern.permute.xlu0 3
  %1941 = vperm.xlu0 %1940, %v86
  %v1942 = vpop.permute.xlu0 %1941
  %1944 = vset.pattern.permute.xlu0 3
  %1945 = vperm.xlu0 %1944, %v87
  %v1946 = vpop.permute.xlu0 %1945
  %1948 = vset.pattern.permute.xlu0 3
  %1949 = vperm.xlu0 %1948, %v88
  %v1950 = vpop.permute.xlu0 %1949
  %1952 = vset.pattern.permute.xlu0 3
  %1953 = vperm.xlu0 %1952, %v89
  %v1954 = vpop.permute.xlu0 %1953
  %1956 = vset.pattern.permute.xlu0 3
  %1957 = vperm.xlu0 %1956, %v90
  %v1958 = vpop.permute.xlu0 %1957
  %1960 = vset.pattern.permute.xlu0 3
  %1961 = vperm.xlu0 %1960, %v91
  %v1962 = vpop.permute.xlu0 %1961
  %1964 = vset.pattern.permute.xlu0 3
  %1965 = vperm.xlu0 %1964, %v92
  %v1966 = vpop.permute.xlu0 %1965
  %1968 = vset.pattern.permute.xlu0 3
  %1969 = vperm.xlu0 %1968, %v93
  %v1970 = vpop.permute.xlu0 %1969
  %1972 = vset.pattern.permute.xlu0 3
  %1973 = vperm.xlu0 %1972, %v94
  %v1974 = vpop.permute.xlu0 %1973
  %1976 = vset.pattern.permute.xlu0 3
  %1977 = vperm.xlu0 %1976, %v95
  %v1978 = vpop.permute.xlu0 %1977
  %v1981 = vperm.slane %v1723, 0
  %v1982 = vperm.slane %v1723, 1
  %v1985 = vmul.f32 %v1726, %v1981
  %v1986 = vmul.f32 %v1726, %v1982
  %v1987 = vmul.f32 %v1730, %v1981
  %v1988 = vmul.f32 %v1730, %v1982
  %v1989 = vmul.f32 %v1734, %v1981
  %v1990 = vmul.f32 %v1734, %v1982
  %v1991 = vmul.f32 %v1738, %v1981
  %v1992 = vmul.f32 %v1738, %v1982
  %v1993 = vmul.f32 %v1742, %v1981
  %v1994 = vmul.f32 %v1742, %v1982
  %v1995 = vmul.f32 %v1746, %v1981
  %v1996 = vmul.f32 %v1746, %v1982
  %v1997 = vmul.f32 %v1750, %v1981
  %v1998 = vmul.f32 %v1750, %v1982
  %v1999 = vmul.f32 %v1754, %v1981
  %v2000 = vmul.f32 %v1754, %v1982
  %v2001 = vmul.f32 %v1758, %v1981
  %v2002 = vmul.f32 %v1758, %v1982
  %v2003 = vmul.f32 %v1762, %v1981
  %v2004 = vmul.f32 %v1762, %v1982
  %v2005 = vmul.f32 %v1766, %v1981
  %v2006 = vmul.f32 %v1766, %v1982
  %v2007 = vmul.f32 %v1770, %v1981
  %v2008 = vmul.f32 %v1770, %v1982
  %v2009 = vmul.f32 %v1774, %v1981
  %v2010 = vmul.f32 %v1774, %v1982
  %v2011 = vmul.f32 %v1778, %v1981
  %v2012 = vmul.f32 %v1778, %v1982
  %v2013 = vmul.f32 %v1782, %v1981
  %v2014 = vmul.f32 %v1782, %v1982
  %v2015 = vmul.f32 %v1786, %v1981
  %v2016 = vmul.f32 %v1786, %v1982
  %v2017 = vmul.f32 %v1790, %v1981
  %v2018 = vmul.f32 %v1790, %v1982
  %v2019 = vmul.f32 %v1794, %v1981
  %v2020 = vmul.f32 %v1794, %v1982
  %v2021 = vmul.f32 %v1798, %v1981
  %v2022 = vmul.f32 %v1798, %v1982
  %v2023 = vmul.f32 %v1802, %v1981
  %v2024 = vmul.f32 %v1802, %v1982
  %v2025 = vmul.f32 %v1806, %v1981
  %v2026 = vmul.f32 %v1806, %v1982
  %v2027 = vmul.f32 %v1810, %v1981
  %v2028 = vmul.f32 %v1810, %v1982
  %v2029 = vmul.f32 %v1814, %v1981
  %v2030 = vmul.f32 %v1814, %v1982
  %v2031 = vmul.f32 %v1818, %v1981
  %v2032 = vmul.f32 %v1818, %v1982
  %v2033 = vmul.f32 %v1822, %v1981
  %v2034 = vmul.f32 %v1822, %v1982
  %v2035 = vmul.f32 %v1826, %v1981
  %v2036 = vmul.f32 %v1826, %v1982
  %v2037 = vmul.f32 %v1830, %v1981
  %v2038 = vmul.f32 %v1830, %v1982
  %v2039 = vmul.f32 %v1834, %v1981
  %v2040 = vmul.f32 %v1834, %v1982
  %v2041 = vmul.f32 %v1838, %v1981
  %v2042 = vmul.f32 %v1838, %v1982
  %v2043 = vmul.f32 %v1842, %v1981
  %v2044 = vmul.f32 %v1842, %v1982
  %v2045 = vmul.f32 %v1846, %v1981
  %v2046 = vmul.f32 %v1846, %v1982
  %v2047 = vmul.f32 %v1850, %v1981
  %v2048 = vmul.f32 %v1850, %v1982
  %v2049 = vmul.f32 %v1854, %v1981
  %v2050 = vmul.f32 %v1854, %v1982
  %v2051 = vmul.f32 %v1858, %v1981
  %v2052 = vmul.f32 %v1858, %v1982
  %v2053 = vmul.f32 %v1862, %v1981
  %v2054 = vmul.f32 %v1862, %v1982
  %v2055 = vmul.f32 %v1866, %v1981
  %v2056 = vmul.f32 %v1866, %v1982
  %v2057 = vmul.f32 %v1870, %v1981
  %v2058 = vmul.f32 %v1870, %v1982
  %v2059 = vmul.f32 %v1874, %v1981
  %v2060 = vmul.f32 %v1874, %v1982
  %v2061 = vmul.f32 %v1878, %v1981
  %v2062 = vmul.f32 %v1878, %v1982
  %v2063 = vmul.f32 %v1882, %v1981
  %v2064 = vmul.f32 %v1882, %v1982
  %v2065 = vmul.f32 %v1886, %v1981
  %v2066 = vmul.f32 %v1886, %v1982
  %v2067 = vmul.f32 %v1890, %v1981
  %v2068 = vmul.f32 %v1890, %v1982
  %v2069 = vmul.f32 %v1894, %v1981
  %v2070 = vmul.f32 %v1894, %v1982
  %v2071 = vmul.f32 %v1898, %v1981
  %v2072 = vmul.f32 %v1898, %v1982
  %v2073 = vmul.f32 %v1902, %v1981
  %v2074 = vmul.f32 %v1902, %v1982
  %v2075 = vmul.f32 %v1906, %v1981
  %v2076 = vmul.f32 %v1906, %v1982
  %v2077 = vmul.f32 %v1910, %v1981
  %v2078 = vmul.f32 %v1910, %v1982
  %v2079 = vmul.f32 %v1914, %v1981
  %v2080 = vmul.f32 %v1914, %v1982
  %v2081 = vmul.f32 %v1918, %v1981
  %v2082 = vmul.f32 %v1918, %v1982
  %v2083 = vmul.f32 %v1922, %v1981
  %v2084 = vmul.f32 %v1922, %v1982
  %v2085 = vmul.f32 %v1926, %v1981
  %v2086 = vmul.f32 %v1926, %v1982
  %v2087 = vmul.f32 %v1930, %v1981
  %v2088 = vmul.f32 %v1930, %v1982
  %v2089 = vmul.f32 %v1934, %v1981
  %v2090 = vmul.f32 %v1934, %v1982
  %v2091 = vmul.f32 %v1938, %v1981
  %v2092 = vmul.f32 %v1938, %v1982
  %v2093 = vmul.f32 %v1942, %v1981
  %v2094 = vmul.f32 %v1942, %v1982
  %v2095 = vmul.f32 %v1946, %v1981
  %v2096 = vmul.f32 %v1946, %v1982
  %v2097 = vmul.f32 %v1950, %v1981
  %v2098 = vmul.f32 %v1950, %v1982
  %v2099 = vmul.f32 %v1954, %v1981
  %v2100 = vmul.f32 %v1954, %v1982
  %v2101 = vmul.f32 %v1958, %v1981
  %v2102 = vmul.f32 %v1958, %v1982
  %v2103 = vmul.f32 %v1962, %v1981
  %v2104 = vmul.f32 %v1962, %v1982
  %v2105 = vmul.f32 %v1966, %v1981
  %v2106 = vmul.f32 %v1966, %v1982
  %v2107 = vmul.f32 %v1970, %v1981
  %v2108 = vmul.f32 %v1970, %v1982
  %v2109 = vmul.f32 %v1974, %v1981
  %v2110 = vmul.f32 %v1974, %v1982
  %v2111 = vmul.f32 %v1978, %v1981
  %v2112 = vmul.f32 %v1978, %v1982
  %v2113 = vadd.f32 %v1594, %v1985
  %v2114 = vadd.f32 %v1595, %v1986
  %v2115 = vadd.f32 %v1596, %v1987
  %v2116 = vadd.f32 %v1597, %v1988
  %v2117 = vadd.f32 %v1598, %v1989
  %v2118 = vadd.f32 %v1599, %v1990
  %v2119 = vadd.f32 %v1600, %v1991
  %v2120 = vadd.f32 %v1601, %v1992
  %v2121 = vadd.f32 %v1602, %v1993
  %v2122 = vadd.f32 %v1603, %v1994
  %v2123 = vadd.f32 %v1604, %v1995
  %v2124 = vadd.f32 %v1605, %v1996
  %v2125 = vadd.f32 %v1606, %v1997
  %v2126 = vadd.f32 %v1607, %v1998
  %v2127 = vadd.f32 %v1608, %v1999
  %v2128 = vadd.f32 %v1609, %v2000
  %v2129 = vadd.f32 %v1610, %v2001
  %v2130 = vadd.f32 %v1611, %v2002
  %v2131 = vadd.f32 %v1612, %v2003
  %v2132 = vadd.f32 %v1613, %v2004
  %v2133 = vadd.f32 %v1614, %v2005
  %v2134 = vadd.f32 %v1615, %v2006
  %v2135 = vadd.f32 %v1616, %v2007
  %v2136 = vadd.f32 %v1617, %v2008
  %v2137 = vadd.f32 %v1618, %v2009
  %v2138 = vadd.f32 %v1619, %v2010
  %v2139 = vadd.f32 %v1620, %v2011
  %v2140 = vadd.f32 %v1621, %v2012
  %v2141 = vadd.f32 %v1622, %v2013
  %v2142 = vadd.f32 %v1623, %v2014
  %v2143 = vadd.f32 %v1624, %v2015
  %v2144 = vadd.f32 %v1625, %v2016
  %v2145 = vadd.f32 %v1626, %v2017
  %v2146 = vadd.f32 %v1627, %v2018
  %v2147 = vadd.f32 %v1628, %v2019
  %v2148 = vadd.f32 %v1629, %v2020
  %v2149 = vadd.f32 %v1630, %v2021
  %v2150 = vadd.f32 %v1631, %v2022
  %v2151 = vadd.f32 %v1632, %v2023
  %v2152 = vadd.f32 %v1633, %v2024
  %v2153 = vadd.f32 %v1634, %v2025
  %v2154 = vadd.f32 %v1635, %v2026
  %v2155 = vadd.f32 %v1636, %v2027
  %v2156 = vadd.f32 %v1637, %v2028
  %v2157 = vadd.f32 %v1638, %v2029
  %v2158 = vadd.f32 %v1639, %v2030
  %v2159 = vadd.f32 %v1640, %v2031
  %v2160 = vadd.f32 %v1641, %v2032
  %v2161 = vadd.f32 %v1642, %v2033
  %v2162 = vadd.f32 %v1643, %v2034
  %v2163 = vadd.f32 %v1644, %v2035
  %v2164 = vadd.f32 %v1645, %v2036
  %v2165 = vadd.f32 %v1646, %v2037
  %v2166 = vadd.f32 %v1647, %v2038
  %v2167 = vadd.f32 %v1648, %v2039
  %v2168 = vadd.f32 %v1649, %v2040
  %v2169 = vadd.f32 %v1650, %v2041
  %v2170 = vadd.f32 %v1651, %v2042
  %v2171 = vadd.f32 %v1652, %v2043
  %v2172 = vadd.f32 %v1653, %v2044
  %v2173 = vadd.f32 %v1654, %v2045
  %v2174 = vadd.f32 %v1655, %v2046
  %v2175 = vadd.f32 %v1656, %v2047
  %v2176 = vadd.f32 %v1657, %v2048
  %v2177 = vadd.f32 %v1658, %v2049
  %v2178 = vadd.f32 %v1659, %v2050
  %v2179 = vadd.f32 %v1660, %v2051
  %v2180 = vadd.f32 %v1661, %v2052
  %v2181 = vadd.f32 %v1662, %v2053
  %v2182 = vadd.f32 %v1663, %v2054
  %v2183 = vadd.f32 %v1664, %v2055
  %v2184 = vadd.f32 %v1665, %v2056
  %v2185 = vadd.f32 %v1666, %v2057
  %v2186 = vadd.f32 %v1667, %v2058
  %v2187 = vadd.f32 %v1668, %v2059
  %v2188 = vadd.f32 %v1669, %v2060
  %v2189 = vadd.f32 %v1670, %v2061
  %v2190 = vadd.f32 %v1671, %v2062
  %v2191 = vadd.f32 %v1672, %v2063
  %v2192 = vadd.f32 %v1673, %v2064
  %v2193 = vadd.f32 %v1674, %v2065
  %v2194 = vadd.f32 %v1675, %v2066
  %v2195 = vadd.f32 %v1676, %v2067
  %v2196 = vadd.f32 %v1677, %v2068
  %v2197 = vadd.f32 %v1678, %v2069
  %v2198 = vadd.f32 %v1679, %v2070
  %v2199 = vadd.f32 %v1680, %v2071
  %v2200 = vadd.f32 %v1681, %v2072
  %v2201 = vadd.f32 %v1682, %v2073
  %v2202 = vadd.f32 %v1683, %v2074
  %v2203 = vadd.f32 %v1684, %v2075
  %v2204 = vadd.f32 %v1685, %v2076
  %v2205 = vadd.f32 %v1686, %v2077
  %v2206 = vadd.f32 %v1687, %v2078
  %v2207 = vadd.f32 %v1688, %v2079
  %v2208 = vadd.f32 %v1689, %v2080
  %v2209 = vadd.f32 %v1690, %v2081
  %v2210 = vadd.f32 %v1691, %v2082
  %v2211 = vadd.f32 %v1692, %v2083
  %v2212 = vadd.f32 %v1693, %v2084
  %v2213 = vadd.f32 %v1694, %v2085
  %v2214 = vadd.f32 %v1695, %v2086
  %v2215 = vadd.f32 %v1696, %v2087
  %v2216 = vadd.f32 %v1697, %v2088
  %v2217 = vadd.f32 %v1698, %v2089
  %v2218 = vadd.f32 %v1699, %v2090
  %v2219 = vadd.f32 %v1700, %v2091
  %v2220 = vadd.f32 %v1701, %v2092
  %v2221 = vadd.f32 %v1702, %v2093
  %v2222 = vadd.f32 %v1703, %v2094
  %v2223 = vadd.f32 %v1704, %v2095
  %v2224 = vadd.f32 %v1705, %v2096
  %v2225 = vadd.f32 %v1706, %v2097
  %v2226 = vadd.f32 %v1707, %v2098
  %v2227 = vadd.f32 %v1708, %v2099
  %v2228 = vadd.f32 %v1709, %v2100
  %v2229 = vadd.f32 %v1710, %v2101
  %v2230 = vadd.f32 %v1711, %v2102
  %v2231 = vadd.f32 %v1712, %v2103
  %v2232 = vadd.f32 %v1713, %v2104
  %v2233 = vadd.f32 %v1714, %v2105
  %v2234 = vadd.f32 %v1715, %v2106
  %v2235 = vadd.f32 %v1716, %v2107
  %v2236 = vadd.f32 %v1717, %v2108
  %v2237 = vadd.f32 %v1718, %v2109
  %v2238 = vadd.f32 %v1719, %v2110
  %v2239 = vadd.f32 %v1720, %v2111
  %v2240 = vadd.f32 %v1721, %v2112
  %v2241 = vmax.f32 %v2113, 0.0
  %v2242 = vmax.f32 %v2114, 0.0
  %v2243 = vmax.f32 %v2115, 0.0
  %v2244 = vmax.f32 %v2116, 0.0
  %v2245 = vmax.f32 %v2117, 0.0
  %v2246 = vmax.f32 %v2118, 0.0
  %v2247 = vmax.f32 %v2119, 0.0
  %v2248 = vmax.f32 %v2120, 0.0
  %v2249 = vmax.f32 %v2121, 0.0
  %v2250 = vmax.f32 %v2122, 0.0
  %v2251 = vmax.f32 %v2123, 0.0
  %v2252 = vmax.f32 %v2124, 0.0
  %v2253 = vmax.f32 %v2125, 0.0
  %v2254 = vmax.f32 %v2126, 0.0
  %v2255 = vmax.f32 %v2127, 0.0
  %v2256 = vmax.f32 %v2128, 0.0
  %v2257 = vmax.f32 %v2129, 0.0
  %v2258 = vmax.f32 %v2130, 0.0
  %v2259 = vmax.f32 %v2131, 0.0
  %v2260 = vmax.f32 %v2132, 0.0
  %v2261 = vmax.f32 %v2133, 0.0
  %v2262 = vmax.f32 %v2134, 0.0
  %v2263 = vmax.f32 %v2135, 0.0
  %v2264 = vmax.f32 %v2136, 0.0
  %v2265 = vmax.f32 %v2137, 0.0
  %v2266 = vmax.f32 %v2138, 0.0
  %v2267 = vmax.f32 %v2139, 0.0
  %v2268 = vmax.f32 %v2140, 0.0
  %v2269 = vmax.f32 %v2141, 0.0
  %v2270 = vmax.f32 %v2142, 0.0
  %v2271 = vmax.f32 %v2143, 0.0
  %v2272 = vmax.f32 %v2144, 0.0
  %v2273 = vmax.f32 %v2145, 0.0
  %v2274 = vmax.f32 %v2146, 0.0
  %v2275 = vmax.f32 %v2147, 0.0
  %v2276 = vmax.f32 %v2148, 0.0
  %v2277 = vmax.f32 %v2149, 0.0
  %v2278 = vmax.f32 %v2150, 0.0
  %v2279 = vmax.f32 %v2151, 0.0
  %v2280 = vmax.f32 %v2152, 0.0
  %v2281 = vmax.f32 %v2153, 0.0
  %v2282 = vmax.f32 %v2154, 0.0
  %v2283 = vmax.f32 %v2155, 0.0
  %v2284 = vmax.f32 %v2156, 0.0
  %v2285 = vmax.f32 %v2157, 0.0
  %v2286 = vmax.f32 %v2158, 0.0
  %v2287 = vmax.f32 %v2159, 0.0
  %v2288 = vmax.f32 %v2160, 0.0
  %v2289 = vmax.f32 %v2161, 0.0
  %v2290 = vmax.f32 %v2162, 0.0
  %v2291 = vmax.f32 %v2163, 0.0
  %v2292 = vmax.f32 %v2164, 0.0
  %v2293 = vmax.f32 %v2165, 0.0
  %v2294 = vmax.f32 %v2166, 0.0
  %v2295 = vmax.f32 %v2167, 0.0
  %v2296 = vmax.f32 %v2168, 0.0
  %v2297 = vmax.f32 %v2169, 0.0
  %v2298 = vmax.f32 %v2170, 0.0
  %v2299 = vmax.f32 %v2171, 0.0
  %v2300 = vmax.f32 %v2172, 0.0
  %v2301 = vmax.f32 %v2173, 0.0
  %v2302 = vmax.f32 %v2174, 0.0
  %v2303 = vmax.f32 %v2175, 0.0
  %v2304 = vmax.f32 %v2176, 0.0
  %v2305 = vmax.f32 %v2177, 0.0
  %v2306 = vmax.f32 %v2178, 0.0
  %v2307 = vmax.f32 %v2179, 0.0
  %v2308 = vmax.f32 %v2180, 0.0
  %v2309 = vmax.f32 %v2181, 0.0
  %v2310 = vmax.f32 %v2182, 0.0
  %v2311 = vmax.f32 %v2183, 0.0
  %v2312 = vmax.f32 %v2184, 0.0
  %v2313 = vmax.f32 %v2185, 0.0
  %v2314 = vmax.f32 %v2186, 0.0
  %v2315 = vmax.f32 %v2187, 0.0
  %v2316 = vmax.f32 %v2188, 0.0
  %v2317 = vmax.f32 %v2189, 0.0
  %v2318 = vmax.f32 %v2190, 0.0
  %v2319 = vmax.f32 %v2191, 0.0
  %v2320 = vmax.f32 %v2192, 0.0
  %v2321 = vmax.f32 %v2193, 0.0
  %v2322 = vmax.f32 %v2194, 0.0
  %v2323 = vmax.f32 %v2195, 0.0
  %v2324 = vmax.f32 %v2196, 0.0
  %v2325 = vmax.f32 %v2197, 0.0
  %v2326 = vmax.f32 %v2198, 0.0
  %v2327 = vmax.f32 %v2199, 0.0
  %v2328 = vmax.f32 %v2200, 0.0
  %v2329 = vmax.f32 %v2201, 0.0
  %v2330 = vmax.f32 %v2202, 0.0
  %v2331 = vmax.f32 %v2203, 0.0
  %v2332 = vmax.f32 %v2204, 0.0
  %v2333 = vmax.f32 %v2205, 0.0
  %v2334 = vmax.f32 %v2206, 0.0
  %v2335 = vmax.f32 %v2207, 0.0
  %v2336 = vmax.f32 %v2208, 0.0
  %v2337 = vmax.f32 %v2209, 0.0
  %v2338 = vmax.f32 %v2210, 0.0
  %v2339 = vmax.f32 %v2211, 0.0
  %v2340 = vmax.f32 %v2212, 0.0
  %v2341 = vmax.f32 %v2213, 0.0
  %v2342 = vmax.f32 %v2214, 0.0
  %v2343 = vmax.f32 %v2215, 0.0
  %v2344 = vmax.f32 %v2216, 0.0
  %v2345 = vmax.f32 %v2217, 0.0
  %v2346 = vmax.f32 %v2218, 0.0
  %v2347 = vmax.f32 %v2219, 0.0
  %v2348 = vmax.f32 %v2220, 0.0
  %v2349 = vmax.f32 %v2221, 0.0
  %v2350 = vmax.f32 %v2222, 0.0
  %v2351 = vmax.f32 %v2223, 0.0
  %v2352 = vmax.f32 %v2224, 0.0
  %v2353 = vmax.f32 %v2225, 0.0
  %v2354 = vmax.f32 %v2226, 0.0
  %v2355 = vmax.f32 %v2227, 0.0
  %v2356 = vmax.f32 %v2228, 0.0
  %v2357 = vmax.f32 %v2229, 0.0
  %v2358 = vmax.f32 %v2230, 0.0
  %v2359 = vmax.f32 %v2231, 0.0
  %v2360 = vmax.f32 %v2232, 0.0
  %v2361 = vmax.f32 %v2233, 0.0
  %v2362 = vmax.f32 %v2234, 0.0
  %v2363 = vmax.f32 %v2235, 0.0
  %v2364 = vmax.f32 %v2236, 0.0
  %v2365 = vmax.f32 %v2237, 0.0
  %v2366 = vmax.f32 %v2238, 0.0
  %v2367 = vmax.f32 %v2239, 0.0
  %v2368 = vmax.f32 %v2240, 0.0
  %v2369 = vpack.c.bf16 %v2243, %v2241
  %v2370 = vpack.c.bf16 %v2244, %v2242
  %v2371 = vpack.c.bf16 %v2247, %v2245
  %v2372 = vpack.c.bf16 %v2248, %v2246
  %v2373 = vpack.c.bf16 %v2251, %v2249
  %v2374 = vpack.c.bf16 %v2252, %v2250
  %v2375 = vpack.c.bf16 %v2255, %v2253
  %v2376 = vpack.c.bf16 %v2256, %v2254
  %v2377 = vpack.c.bf16 %v2259, %v2257
  %v2378 = vpack.c.bf16 %v2260, %v2258
  %v2379 = vpack.c.bf16 %v2263, %v2261
  %v2380 = vpack.c.bf16 %v2264, %v2262
  %v2381 = vpack.c.bf16 %v2267, %v2265
  %v2382 = vpack.c.bf16 %v2268, %v2266
  %v2383 = vpack.c.bf16 %v2271, %v2269
  %v2384 = vpack.c.bf16 %v2272, %v2270
  %v2385 = vpack.c.bf16 %v2275, %v2273
  %v2386 = vpack.c.bf16 %v2276, %v2274
  %v2387 = vpack.c.bf16 %v2279, %v2277
  %v2388 = vpack.c.bf16 %v2280, %v2278
  %v2389 = vpack.c.bf16 %v2283, %v2281
  %v2390 = vpack.c.bf16 %v2284, %v2282
  %v2391 = vpack.c.bf16 %v2287, %v2285
  %v2392 = vpack.c.bf16 %v2288, %v2286
  %v2393 = vpack.c.bf16 %v2291, %v2289
  %v2394 = vpack.c.bf16 %v2292, %v2290
  %v2395 = vpack.c.bf16 %v2295, %v2293
  %v2396 = vpack.c.bf16 %v2296, %v2294
  %v2397 = vpack.c.bf16 %v2299, %v2297
  %v2398 = vpack.c.bf16 %v2300, %v2298
  %v2399 = vpack.c.bf16 %v2303, %v2301
  %v2400 = vpack.c.bf16 %v2304, %v2302
  %v2401 = vpack.c.bf16 %v2307, %v2305
  %v2402 = vpack.c.bf16 %v2308, %v2306
  %v2403 = vpack.c.bf16 %v2311, %v2309
  %v2404 = vpack.c.bf16 %v2312, %v2310
  %v2405 = vpack.c.bf16 %v2315, %v2313
  %v2406 = vpack.c.bf16 %v2316, %v2314
  %v2407 = vpack.c.bf16 %v2319, %v2317
  %v2408 = vpack.c.bf16 %v2320, %v2318
  %v2409 = vpack.c.bf16 %v2323, %v2321
  %v2410 = vpack.c.bf16 %v2324, %v2322
  %v2411 = vpack.c.bf16 %v2327, %v2325
  %v2412 = vpack.c.bf16 %v2328, %v2326
  %v2413 = vpack.c.bf16 %v2331, %v2329
  %v2414 = vpack.c.bf16 %v2332, %v2330
  %v2415 = vpack.c.bf16 %v2335, %v2333
  %v2416 = vpack.c.bf16 %v2336, %v2334
  %v2417 = vpack.c.bf16 %v2339, %v2337
  %v2418 = vpack.c.bf16 %v2340, %v2338
  %v2419 = vpack.c.bf16 %v2343, %v2341
  %v2420 = vpack.c.bf16 %v2344, %v2342
  %v2421 = vpack.c.bf16 %v2347, %v2345
  %v2422 = vpack.c.bf16 %v2348, %v2346
  %v2423 = vpack.c.bf16 %v2351, %v2349
  %v2424 = vpack.c.bf16 %v2352, %v2350
  %v2425 = vpack.c.bf16 %v2355, %v2353
  %v2426 = vpack.c.bf16 %v2356, %v2354
  %v2427 = vpack.c.bf16 %v2359, %v2357
  %v2428 = vpack.c.bf16 %v2360, %v2358
  %v2429 = vpack.c.bf16 %v2363, %v2361
  %v2430 = vpack.c.bf16 %v2364, %v2362
  %v2431 = vpack.c.bf16 %v2367, %v2365
  %v2432 = vpack.c.bf16 %v2368, %v2366
  %v2433 = vld [vmem:[%s3] sm:$0xff]
  %v2434 = vld [vmem:[%s3 + $0x8] sm:$0xff]
  %v2435 = vld [vmem:[%s3 + $0x10] sm:$0xff]
  %v2436 = vld [vmem:[%s3 + $0x18] sm:$0xff]
  %v2437 = vld [vmem:[%s3 + $0x20] sm:$0xff]
  %v2438 = vld [vmem:[%s3 + $0x28] sm:$0xff]
  %v2439 = vld [vmem:[%s3 + $0x30] sm:$0xff]
  %v2440 = vld [vmem:[%s3 + $0x38] sm:$0xff]
  %v2441 = vld [vmem:[%s3 + $0x40] sm:$0xff]
  %v2442 = vld [vmem:[%s3 + $0x48] sm:$0xff]
  %v2443 = vld [vmem:[%s3 + $0x50] sm:$0xff]
  %v2444 = vld [vmem:[%s3 + $0x58] sm:$0xff]
  %v2445 = vld [vmem:[%s3 + $0x60] sm:$0xff]
  %v2446 = vld [vmem:[%s3 + $0x68] sm:$0xff]
  %v2447 = vld [vmem:[%s3 + $0x70] sm:$0xff]
  %v2448 = vld [vmem:[%s3 + $0x78] sm:$0xff]
  %v2449 = vld [vmem:[%s3 + $0x80] sm:$0xff]
  %v2450 = vld [vmem:[%s3 + $0x88] sm:$0xff]
  %v2451 = vld [vmem:[%s3 + $0x90] sm:$0xff]
  %v2452 = vld [vmem:[%s3 + $0x98] sm:$0xff]
  %v2453 = vld [vmem:[%s3 + $0xa0] sm:$0xff]
  %v2454 = vld [vmem:[%s3 + $0xa8] sm:$0xff]
  %v2455 = vld [vmem:[%s3 + $0xb0] sm:$0xff]
  %v2456 = vld [vmem:[%s3 + $0xb8] sm:$0xff]
  %v2457 = vld [vmem:[%s3 + $0xc0] sm:$0xff]
  %v2458 = vld [vmem:[%s3 + $0xc8] sm:$0xff]
  %v2459 = vld [vmem:[%s3 + $0xd0] sm:$0xff]
  %v2460 = vld [vmem:[%s3 + $0xd8] sm:$0xff]
  %v2461 = vld [vmem:[%s3 + $0xe0] sm:$0xff]
  %v2462 = vld [vmem:[%s3 + $0xe8] sm:$0xff]
  %v2463 = vld [vmem:[%s3 + $0xf0] sm:$0xff]
  %v2464 = vld [vmem:[%s3 + $0xf8] sm:$0xff]
  %v2465 = vld [vmem:[%s3 + $0x100] sm:$0xff]
  %v2466 = vld [vmem:[%s3 + $0x108] sm:$0xff]
  %v2467 = vld [vmem:[%s3 + $0x110] sm:$0xff]
  %v2468 = vld [vmem:[%s3 + $0x118] sm:$0xff]
  %v2469 = vld [vmem:[%s3 + $0x120] sm:$0xff]
  %v2470 = vld [vmem:[%s3 + $0x128] sm:$0xff]
  %v2471 = vld [vmem:[%s3 + $0x130] sm:$0xff]
  %v2472 = vld [vmem:[%s3 + $0x138] sm:$0xff]
  %v2473 = vld [vmem:[%s3 + $0x140] sm:$0xff]
  %v2474 = vld [vmem:[%s3 + $0x148] sm:$0xff]
  %v2475 = vld [vmem:[%s3 + $0x150] sm:$0xff]
  %v2476 = vld [vmem:[%s3 + $0x158] sm:$0xff]
  %v2477 = vld [vmem:[%s3 + $0x160] sm:$0xff]
  %v2478 = vld [vmem:[%s3 + $0x168] sm:$0xff]
  %v2479 = vld [vmem:[%s3 + $0x170] sm:$0xff]
  %v2480 = vld [vmem:[%s3 + $0x178] sm:$0xff]
  %v2481 = vld [vmem:[%s3 + $0x180] sm:$0xff]
  %v2482 = vld [vmem:[%s3 + $0x188] sm:$0xff]
  %v2483 = vld [vmem:[%s3 + $0x190] sm:$0xff]
  %v2484 = vld [vmem:[%s3 + $0x198] sm:$0xff]
  %v2485 = vld [vmem:[%s3 + $0x1a0] sm:$0xff]
  %v2486 = vld [vmem:[%s3 + $0x1a8] sm:$0xff]
  %v2487 = vld [vmem:[%s3 + $0x1b0] sm:$0xff]
  %v2488 = vld [vmem:[%s3 + $0x1b8] sm:$0xff]
  %v2489 = vld [vmem:[%s3 + $0x1c0] sm:$0xff]
  %v2490 = vld [vmem:[%s3 + $0x1c8] sm:$0xff]
  %v2491 = vld [vmem:[%s3 + $0x1d0] sm:$0xff]
  %v2492 = vld [vmem:[%s3 + $0x1d8] sm:$0xff]
  %v2493 = vld [vmem:[%s3 + $0x1e0] sm:$0xff]
  %v2494 = vld [vmem:[%s3 + $0x1e8] sm:$0xff]
  %v2495 = vld [vmem:[%s3 + $0x1f0] sm:$0xff]
  %v2496 = vld [vmem:[%s3 + $0x1f8] sm:$0xff]
  %v2497 = vld [vmem:[%s4] sm:$0xf]
  %v2499 = vperm.slane %v2497, 0
  %v2500 = vperm.slane %v2497, 1
  %v2501 = vperm.slane %v2497, 2
  %v2502 = vperm.slane %v2497, 3
  %v2571 = vunpack.c.l.b16 %v2433
  %v2572 = vunpack.c.h.b16 %v2433
  %v2573 = vunpack.c.l.b16 %v2434
  %v2574 = vunpack.c.h.b16 %v2434
  %v2575 = vunpack.c.l.b16 %v2435
  %v2576 = vunpack.c.h.b16 %v2435
  %v2577 = vunpack.c.l.b16 %v2436
  %v2578 = vunpack.c.h.b16 %v2436
  %v2579 = vunpack.c.l.b16 %v2437
  %v2580 = vunpack.c.h.b16 %v2437
  %v2581 = vunpack.c.l.b16 %v2438
  %v2582 = vunpack.c.h.b16 %v2438
  %v2583 = vunpack.c.l.b16 %v2439
  %v2584 = vunpack.c.h.b16 %v2439
  %v2585 = vunpack.c.l.b16 %v2440
  %v2586 = vunpack.c.h.b16 %v2440
  %v2587 = vunpack.c.l.b16 %v2441
  %v2588 = vunpack.c.h.b16 %v2441
  %v2589 = vunpack.c.l.b16 %v2442
  %v2590 = vunpack.c.h.b16 %v2442
  %v2591 = vunpack.c.l.b16 %v2443
  %v2592 = vunpack.c.h.b16 %v2443
  %v2593 = vunpack.c.l.b16 %v2444
  %v2594 = vunpack.c.h.b16 %v2444
  %v2595 = vunpack.c.l.b16 %v2445
  %v2596 = vunpack.c.h.b16 %v2445
  %v2597 = vunpack.c.l.b16 %v2446
  %v2598 = vunpack.c.h.b16 %v2446
  %v2599 = vunpack.c.l.b16 %v2447
  %v2600 = vunpack.c.h.b16 %v2447
  %v2601 = vunpack.c.l.b16 %v2448
  %v2602 = vunpack.c.h.b16 %v2448
  %v2603 = vunpack.c.l.b16 %v2449
  %v2604 = vunpack.c.h.b16 %v2449
  %v2605 = vunpack.c.l.b16 %v2450
  %v2606 = vunpack.c.h.b16 %v2450
  %v2607 = vunpack.c.l.b16 %v2451
  %v2608 = vunpack.c.h.b16 %v2451
  %v2609 = vunpack.c.l.b16 %v2452
  %v2610 = vunpack.c.h.b16 %v2452
  %v2611 = vunpack.c.l.b16 %v2453
  %v2612 = vunpack.c.h.b16 %v2453
  %v2613 = vunpack.c.l.b16 %v2454
  %v2614 = vunpack.c.h.b16 %v2454
  %v2615 = vunpack.c.l.b16 %v2455
  %v2616 = vunpack.c.h.b16 %v2455
  %v2617 = vunpack.c.l.b16 %v2456
  %v2618 = vunpack.c.h.b16 %v2456
  %v2619 = vunpack.c.l.b16 %v2457
  %v2620 = vunpack.c.h.b16 %v2457
  %v2621 = vunpack.c.l.b16 %v2458
  %v2622 = vunpack.c.h.b16 %v2458
  %v2623 = vunpack.c.l.b16 %v2459
  %v2624 = vunpack.c.h.b16 %v2459
  %v2625 = vunpack.c.l.b16 %v2460
  %v2626 = vunpack.c.h.b16 %v2460
  %v2627 = vunpack.c.l.b16 %v2461
  %v2628 = vunpack.c.h.b16 %v2461
  %v2629 = vunpack.c.l.b16 %v2462
  %v2630 = vunpack.c.h.b16 %v2462
  %v2631 = vunpack.c.l.b16 %v2463
  %v2632 = vunpack.c.h.b16 %v2463
  %v2633 = vunpack.c.l.b16 %v2464
  %v2634 = vunpack.c.h.b16 %v2464
  %v2635 = vunpack.c.l.b16 %v2465
  %v2636 = vunpack.c.h.b16 %v2465
  %v2637 = vunpack.c.l.b16 %v2466
  %v2638 = vunpack.c.h.b16 %v2466
  %v2639 = vunpack.c.l.b16 %v2467
  %v2640 = vunpack.c.h.b16 %v2467
  %v2641 = vunpack.c.l.b16 %v2468
  %v2642 = vunpack.c.h.b16 %v2468
  %v2643 = vunpack.c.l.b16 %v2469
  %v2644 = vunpack.c.h.b16 %v2469
  %v2645 = vunpack.c.l.b16 %v2470
  %v2646 = vunpack.c.h.b16 %v2470
  %v2647 = vunpack.c.l.b16 %v2471
  %v2648 = vunpack.c.h.b16 %v2471
  %v2649 = vunpack.c.l.b16 %v2472
  %v2650 = vunpack.c.h.b16 %v2472
  %v2651 = vunpack.c.l.b16 %v2473
  %v2652 = vunpack.c.h.b16 %v2473
  %v2653 = vunpack.c.l.b16 %v2474
  %v2654 = vunpack.c.h.b16 %v2474
  %v2655 = vunpack.c.l.b16 %v2475
  %v2656 = vunpack.c.h.b16 %v2475
  %v2657 = vunpack.c.l.b16 %v2476
  %v2658 = vunpack.c.h.b16 %v2476
  %v2659 = vunpack.c.l.b16 %v2477
  %v2660 = vunpack.c.h.b16 %v2477
  %v2661 = vunpack.c.l.b16 %v2478
  %v2662 = vunpack.c.h.b16 %v2478
  %v2663 = vunpack.c.l.b16 %v2479
  %v2664 = vunpack.c.h.b16 %v2479
  %v2665 = vunpack.c.l.b16 %v2480
  %v2666 = vunpack.c.h.b16 %v2480
  %v2667 = vunpack.c.l.b16 %v2481
  %v2668 = vunpack.c.h.b16 %v2481
  %v2669 = vunpack.c.l.b16 %v2482
  %v2670 = vunpack.c.h.b16 %v2482
  %v2671 = vunpack.c.l.b16 %v2483
  %v2672 = vunpack.c.h.b16 %v2483
  %v2673 = vunpack.c.l.b16 %v2484
  %v2674 = vunpack.c.h.b16 %v2484
  %v2675 = vunpack.c.l.b16 %v2485
  %v2676 = vunpack.c.h.b16 %v2485
  %v2677 = vunpack.c.l.b16 %v2486
  %v2678 = vunpack.c.h.b16 %v2486
  %v2679 = vunpack.c.l.b16 %v2487
  %v2680 = vunpack.c.h.b16 %v2487
  %v2681 = vunpack.c.l.b16 %v2488
  %v2682 = vunpack.c.h.b16 %v2488
  %v2683 = vunpack.c.l.b16 %v2489
  %v2684 = vunpack.c.h.b16 %v2489
  %v2685 = vunpack.c.l.b16 %v2490
  %v2686 = vunpack.c.h.b16 %v2490
  %v2687 = vunpack.c.l.b16 %v2491
  %v2688 = vunpack.c.h.b16 %v2491
  %v2689 = vunpack.c.l.b16 %v2492
  %v2690 = vunpack.c.h.b16 %v2492
  %v2691 = vunpack.c.l.b16 %v2493
  %v2692 = vunpack.c.h.b16 %v2493
  %v2693 = vunpack.c.l.b16 %v2494
  %v2694 = vunpack.c.h.b16 %v2494
  %v2695 = vunpack.c.l.b16 %v2495
  %v2696 = vunpack.c.h.b16 %v2495
  %v2697 = vunpack.c.l.b16 %v2496
  %v2698 = vunpack.c.h.b16 %v2496
  %v2699 = vpack.c.b16 %v2575, %v2571
  %v2700 = vpack.c.b16 %v2576, %v2572
  %v2701 = vpack.c.b16 %v2577, %v2573
  %v2702 = vpack.c.b16 %v2578, %v2574
  %v2703 = vpack.c.b16 %v2583, %v2579
  %v2704 = vpack.c.b16 %v2584, %v2580
  %v2705 = vpack.c.b16 %v2585, %v2581
  %v2706 = vpack.c.b16 %v2586, %v2582
  %v2707 = vpack.c.b16 %v2591, %v2587
  %v2708 = vpack.c.b16 %v2592, %v2588
  %v2709 = vpack.c.b16 %v2593, %v2589
  %v2710 = vpack.c.b16 %v2594, %v2590
  %v2711 = vpack.c.b16 %v2599, %v2595
  %v2712 = vpack.c.b16 %v2600, %v2596
  %v2713 = vpack.c.b16 %v2601, %v2597
  %v2714 = vpack.c.b16 %v2602, %v2598
  %v2715 = vpack.c.b16 %v2607, %v2603
  %v2716 = vpack.c.b16 %v2608, %v2604
  %v2717 = vpack.c.b16 %v2609, %v2605
  %v2718 = vpack.c.b16 %v2610, %v2606
  %v2719 = vpack.c.b16 %v2615, %v2611
  %v2720 = vpack.c.b16 %v2616, %v2612
  %v2721 = vpack.c.b16 %v2617, %v2613
  %v2722 = vpack.c.b16 %v2618, %v2614
  %v2723 = vpack.c.b16 %v2623, %v2619
  %v2724 = vpack.c.b16 %v2624, %v2620
  %v2725 = vpack.c.b16 %v2625, %v2621
  %v2726 = vpack.c.b16 %v2626, %v2622
  %v2727 = vpack.c.b16 %v2631, %v2627
  %v2728 = vpack.c.b16 %v2632, %v2628
  %v2729 = vpack.c.b16 %v2633, %v2629
  %v2730 = vpack.c.b16 %v2634, %v2630
  %v2731 = vpack.c.b16 %v2639, %v2635
  %v2732 = vpack.c.b16 %v2640, %v2636
  %v2733 = vpack.c.b16 %v2641, %v2637
  %v2734 = vpack.c.b16 %v2642, %v2638
  %v2735 = vpack.c.b16 %v2647, %v2643
  %v2736 = vpack.c.b16 %v2648, %v2644
  %v2737 = vpack.c.b16 %v2649, %v2645
  %v2738 = vpack.c.b16 %v2650, %v2646
  %v2739 = vpack.c.b16 %v2655, %v2651
  %v2740 = vpack.c.b16 %v2656, %v2652
  %v2741 = vpack.c.b16 %v2657, %v2653
  %v2742 = vpack.c.b16 %v2658, %v2654
  %v2743 = vpack.c.b16 %v2663, %v2659
  %v2744 = vpack.c.b16 %v2664, %v2660
  %v2745 = vpack.c.b16 %v2665, %v2661
  %v2746 = vpack.c.b16 %v2666, %v2662
  %v2747 = vpack.c.b16 %v2671, %v2667
  %v2748 = vpack.c.b16 %v2672, %v2668
  %v2749 = vpack.c.b16 %v2673, %v2669
  %v2750 = vpack.c.b16 %v2674, %v2670
  %v2751 = vpack.c.b16 %v2679, %v2675
  %v2752 = vpack.c.b16 %v2680, %v2676
  %v2753 = vpack.c.b16 %v2681, %v2677
  %v2754 = vpack.c.b16 %v2682, %v2678
  %v2755 = vpack.c.b16 %v2687, %v2683
  %v2756 = vpack.c.b16 %v2688, %v2684
  %v2757 = vpack.c.b16 %v2689, %v2685
  %v2758 = vpack.c.b16 %v2690, %v2686
  %v2759 = vpack.c.b16 %v2695, %v2691
  %v2760 = vpack.c.b16 %v2696, %v2692
  %v2761 = vpack.c.b16 %v2697, %v2693
  %v2762 = vpack.c.b16 %v2698, %v2694
  %2827 = vmatpush.bf16.msra.mxu0 %v2727
  %2828 = vmatpush.bf16.msra.mxu0 %v2723
  %2829 = vmatpush.bf16.msra.mxu0 %v2719
  %2830 = vmatpush.bf16.msra.mxu0 %v2715
  %2831 = vmatpush.bf16.msra.mxu0 %v2711
  %2832 = vmatpush.bf16.msra.mxu0 %v2707
  %2833 = vmatpush.bf16.msra.mxu0 %v2703
  %2834 = vmatpush.bf16.msra.mxu0 %v2699
  %2835 = vmatmul.bf16.gmra.mxu0 %v2369
  %v2836 = vpop.f32.mrf.mxu0
  %v2837 = vadd.f32 %v2499, %v2836
  %v2838 = vpop.f32.mrf.mxu0
  %v2839 = vadd.f32 %v2499, %v2838
  %2840 = vmatmul.bf16.gmra.mxu0 %v2371
  %v2841 = vpop.f32.mrf.mxu0
  %v2842 = vadd.f32 %v2499, %v2841
  %v2843 = vpop.f32.mrf.mxu0
  %v2844 = vadd.f32 %v2499, %v2843
  %2845 = vmatmul.bf16.gmra.mxu0 %v2373
  %v2846 = vpop.f32.mrf.mxu0
  %v2847 = vadd.f32 %v2499, %v2846
  %v2848 = vpop.f32.mrf.mxu0
  %v2849 = vadd.f32 %v2499, %v2848
  %2850 = vmatmul.bf16.gmra.mxu0 %v2375
  %v2851 = vpop.f32.mrf.mxu0
  %v2852 = vadd.f32 %v2499, %v2851
  %v2853 = vpop.f32.mrf.mxu0
  %v2854 = vadd.f32 %v2499, %v2853
  %2855 = vmatmul.bf16.gmra.mxu0 %v2377
  %v2856 = vpop.f32.mrf.mxu0
  %v2857 = vadd.f32 %v2499, %v2856
  %v2858 = vpop.f32.mrf.mxu0
  %v2859 = vadd.f32 %v2499, %v2858
  %2860 = vmatmul.bf16.gmra.mxu0 %v2379
  %v2861 = vpop.f32.mrf.mxu0
  %v2862 = vadd.f32 %v2499, %v2861
  %v2863 = vpop.f32.mrf.mxu0
  %v2864 = vadd.f32 %v2499, %v2863
  %2865 = vmatmul.bf16.gmra.mxu0 %v2381
  %v2866 = vpop.f32.mrf.mxu0
  %v2867 = vadd.f32 %v2499, %v2866
  %v2868 = vpop.f32.mrf.mxu0
  %v2869 = vadd.f32 %v2499, %v2868
  %2870 = vmatmul.bf16.gmra.mxu0 %v2383
  %v2871 = vpop.f32.mrf.mxu0
  %v2872 = vadd.f32 %v2499, %v2871
  %v2873 = vpop.f32.mrf.mxu0
  %v2874 = vadd.f32 %v2499, %v2873
  %2875 = vmatmul.bf16.gmra.mxu0 %v2385
  %v2876 = vpop.f32.mrf.mxu0
  %v2877 = vadd.f32 %v2499, %v2876
  %v2878 = vpop.f32.mrf.mxu0
  %v2879 = vadd.f32 %v2499, %v2878
  %2880 = vmatmul.bf16.gmra.mxu0 %v2387
  %v2881 = vpop.f32.mrf.mxu0
  %v2882 = vadd.f32 %v2499, %v2881
  %v2883 = vpop.f32.mrf.mxu0
  %v2884 = vadd.f32 %v2499, %v2883
  %2885 = vmatmul.bf16.gmra.mxu0 %v2389
  %v2886 = vpop.f32.mrf.mxu0
  %v2887 = vadd.f32 %v2499, %v2886
  %v2888 = vpop.f32.mrf.mxu0
  %v2889 = vadd.f32 %v2499, %v2888
  %2890 = vmatmul.bf16.gmra.mxu0 %v2391
  %v2891 = vpop.f32.mrf.mxu0
  %v2892 = vadd.f32 %v2499, %v2891
  %v2893 = vpop.f32.mrf.mxu0
  %v2894 = vadd.f32 %v2499, %v2893
  %2895 = vmatmul.bf16.gmra.mxu0 %v2393
  %v2896 = vpop.f32.mrf.mxu0
  %v2897 = vadd.f32 %v2499, %v2896
  %v2898 = vpop.f32.mrf.mxu0
  %v2899 = vadd.f32 %v2499, %v2898
  %2900 = vmatmul.bf16.gmra.mxu0 %v2395
  %v2901 = vpop.f32.mrf.mxu0
  %v2902 = vadd.f32 %v2499, %v2901
  %v2903 = vpop.f32.mrf.mxu0
  %v2904 = vadd.f32 %v2499, %v2903
  %2905 = vmatmul.bf16.gmra.mxu0 %v2397
  %v2906 = vpop.f32.mrf.mxu0
  %v2907 = vadd.f32 %v2499, %v2906
  %v2908 = vpop.f32.mrf.mxu0
  %v2909 = vadd.f32 %v2499, %v2908
  %2910 = vmatmul.bf16.gmra.mxu0 %v2399
  %v2911 = vpop.f32.mrf.mxu0
  %v2912 = vadd.f32 %v2499, %v2911
  %v2913 = vpop.f32.mrf.mxu0
  %v2914 = vadd.f32 %v2499, %v2913
  %2915 = vmatmul.bf16.gmra.mxu0 %v2401
  %v2916 = vpop.f32.mrf.mxu0
  %v2917 = vadd.f32 %v2499, %v2916
  %v2918 = vpop.f32.mrf.mxu0
  %v2919 = vadd.f32 %v2499, %v2918
  %2920 = vmatmul.bf16.gmra.mxu0 %v2403
  %v2921 = vpop.f32.mrf.mxu0
  %v2922 = vadd.f32 %v2499, %v2921
  %v2923 = vpop.f32.mrf.mxu0
  %v2924 = vadd.f32 %v2499, %v2923
  %2925 = vmatmul.bf16.gmra.mxu0 %v2405
  %v2926 = vpop.f32.mrf.mxu0
  %v2927 = vadd.f32 %v2499, %v2926
  %v2928 = vpop.f32.mrf.mxu0
  %v2929 = vadd.f32 %v2499, %v2928
  %2930 = vmatmul.bf16.gmra.mxu0 %v2407
  %v2931 = vpop.f32.mrf.mxu0
  %v2932 = vadd.f32 %v2499, %v2931
  %v2933 = vpop.f32.mrf.mxu0
  %v2934 = vadd.f32 %v2499, %v2933
  %2935 = vmatmul.bf16.gmra.mxu0 %v2409
  %v2936 = vpop.f32.mrf.mxu0
  %v2937 = vadd.f32 %v2499, %v2936
  %v2938 = vpop.f32.mrf.mxu0
  %v2939 = vadd.f32 %v2499, %v2938
  %2940 = vmatmul.bf16.gmra.mxu0 %v2411
  %v2941 = vpop.f32.mrf.mxu0
  %v2942 = vadd.f32 %v2499, %v2941
  %v2943 = vpop.f32.mrf.mxu0
  %v2944 = vadd.f32 %v2499, %v2943
  %2945 = vmatmul.bf16.gmra.mxu0 %v2413
  %v2946 = vpop.f32.mrf.mxu0
  %v2947 = vadd.f32 %v2499, %v2946
  %v2948 = vpop.f32.mrf.mxu0
  %v2949 = vadd.f32 %v2499, %v2948
  %2950 = vmatmul.bf16.gmra.mxu0 %v2415
  %v2951 = vpop.f32.mrf.mxu0
  %v2952 = vadd.f32 %v2499, %v2951
  %v2953 = vpop.f32.mrf.mxu0
  %v2954 = vadd.f32 %v2499, %v2953
  %2955 = vmatmul.bf16.gmra.mxu0 %v2417
  %v2956 = vpop.f32.mrf.mxu0
  %v2957 = vadd.f32 %v2499, %v2956
  %v2958 = vpop.f32.mrf.mxu0
  %v2959 = vadd.f32 %v2499, %v2958
  %2960 = vmatmul.bf16.gmra.mxu0 %v2419
  %v2961 = vpop.f32.mrf.mxu0
  %v2962 = vadd.f32 %v2499, %v2961
  %v2963 = vpop.f32.mrf.mxu0
  %v2964 = vadd.f32 %v2499, %v2963
  %2965 = vmatmul.bf16.gmra.mxu0 %v2421
  %v2966 = vpop.f32.mrf.mxu0
  %v2967 = vadd.f32 %v2499, %v2966
  %v2968 = vpop.f32.mrf.mxu0
  %v2969 = vadd.f32 %v2499, %v2968
  %2970 = vmatmul.bf16.gmra.mxu0 %v2423
  %v2971 = vpop.f32.mrf.mxu0
  %v2972 = vadd.f32 %v2499, %v2971
  %v2973 = vpop.f32.mrf.mxu0
  %v2974 = vadd.f32 %v2499, %v2973
  %2975 = vmatmul.bf16.gmra.mxu0 %v2425
  %v2976 = vpop.f32.mrf.mxu0
  %v2977 = vadd.f32 %v2499, %v2976
  %v2978 = vpop.f32.mrf.mxu0
  %v2979 = vadd.f32 %v2499, %v2978
  %2980 = vmatmul.bf16.gmra.mxu0 %v2427
  %v2981 = vpop.f32.mrf.mxu0
  %v2982 = vadd.f32 %v2499, %v2981
  %v2983 = vpop.f32.mrf.mxu0
  %v2984 = vadd.f32 %v2499, %v2983
  %2985 = vmatmul.bf16.gmra.mxu0 %v2429
  %v2986 = vpop.f32.mrf.mxu0
  %v2987 = vadd.f32 %v2499, %v2986
  %v2988 = vpop.f32.mrf.mxu0
  %v2989 = vadd.f32 %v2499, %v2988
  %2990 = vmatmul.bf16.gmra.mxu0 %v2431
  %v2991 = vpop.f32.mrf.mxu0
  %v2992 = vadd.f32 %v2499, %v2991
  %v2993 = vpop.f32.mrf.mxu0
  %v2994 = vadd.f32 %v2499, %v2993
  %2995 = vdwg.mxu0
  %2996 = vmatpush.bf16.msra.mxu0 %v2759
  %2997 = vmatpush.bf16.msra.mxu0 %v2755
  %2998 = vmatpush.bf16.msra.mxu0 %v2751
  %2999 = vmatpush.bf16.msra.mxu0 %v2747
  %3000 = vmatpush.bf16.msra.mxu0 %v2743
  %3001 = vmatpush.bf16.msra.mxu0 %v2739
  %3002 = vmatpush.bf16.msra.mxu0 %v2735
  %3003 = vmatpush.bf16.msra.mxu0 %v2731
  %3004 = vmatmul.bf16.gmra.mxu0 %v2370
  %v3005 = vpop.f32.mrf.mxu0
  %v3006 = vadd.f32 %v2837, %v3005
  %v3007 = vpop.f32.mrf.mxu0
  %v3008 = vadd.f32 %v2839, %v3007
  %3009 = vmatmul.bf16.gmra.mxu0 %v2372
  %v3010 = vpop.f32.mrf.mxu0
  %v3011 = vadd.f32 %v2842, %v3010
  %v3012 = vpop.f32.mrf.mxu0
  %v3013 = vadd.f32 %v2844, %v3012
  %3014 = vmatmul.bf16.gmra.mxu0 %v2374
  %v3015 = vpop.f32.mrf.mxu0
  %v3016 = vadd.f32 %v2847, %v3015
  %v3017 = vpop.f32.mrf.mxu0
  %v3018 = vadd.f32 %v2849, %v3017
  %3019 = vmatmul.bf16.gmra.mxu0 %v2376
  %v3020 = vpop.f32.mrf.mxu0
  %v3021 = vadd.f32 %v2852, %v3020
  %v3022 = vpop.f32.mrf.mxu0
  %v3023 = vadd.f32 %v2854, %v3022
  %3024 = vmatmul.bf16.gmra.mxu0 %v2378
  %v3025 = vpop.f32.mrf.mxu0
  %v3026 = vadd.f32 %v2857, %v3025
  %v3027 = vpop.f32.mrf.mxu0
  %v3028 = vadd.f32 %v2859, %v3027
  %3029 = vmatmul.bf16.gmra.mxu0 %v2380
  %v3030 = vpop.f32.mrf.mxu0
  %v3031 = vadd.f32 %v2862, %v3030
  %v3032 = vpop.f32.mrf.mxu0
  %v3033 = vadd.f32 %v2864, %v3032
  %3034 = vmatmul.bf16.gmra.mxu0 %v2382
  %v3035 = vpop.f32.mrf.mxu0
  %v3036 = vadd.f32 %v2867, %v3035
  %v3037 = vpop.f32.mrf.mxu0
  %v3038 = vadd.f32 %v2869, %v3037
  %3039 = vmatmul.bf16.gmra.mxu0 %v2384
  %v3040 = vpop.f32.mrf.mxu0
  %v3041 = vadd.f32 %v2872, %v3040
  %v3042 = vpop.f32.mrf.mxu0
  %v3043 = vadd.f32 %v2874, %v3042
  %3044 = vmatmul.bf16.gmra.mxu0 %v2386
  %v3045 = vpop.f32.mrf.mxu0
  %v3046 = vadd.f32 %v2877, %v3045
  %v3047 = vpop.f32.mrf.mxu0
  %v3048 = vadd.f32 %v2879, %v3047
  %3049 = vmatmul.bf16.gmra.mxu0 %v2388
  %v3050 = vpop.f32.mrf.mxu0
  %v3051 = vadd.f32 %v2882, %v3050
  %v3052 = vpop.f32.mrf.mxu0
  %v3053 = vadd.f32 %v2884, %v3052
  %3054 = vmatmul.bf16.gmra.mxu0 %v2390
  %v3055 = vpop.f32.mrf.mxu0
  %v3056 = vadd.f32 %v2887, %v3055
  %v3057 = vpop.f32.mrf.mxu0
  %v3058 = vadd.f32 %v2889, %v3057
  %3059 = vmatmul.bf16.gmra.mxu0 %v2392
  %v3060 = vpop.f32.mrf.mxu0
  %v3061 = vadd.f32 %v2892, %v3060
  %v3062 = vpop.f32.mrf.mxu0
  %v3063 = vadd.f32 %v2894, %v3062
  %3064 = vmatmul.bf16.gmra.mxu0 %v2394
  %v3065 = vpop.f32.mrf.mxu0
  %v3066 = vadd.f32 %v2897, %v3065
  %v3067 = vpop.f32.mrf.mxu0
  %v3068 = vadd.f32 %v2899, %v3067
  %3069 = vmatmul.bf16.gmra.mxu0 %v2396
  %v3070 = vpop.f32.mrf.mxu0
  %v3071 = vadd.f32 %v2902, %v3070
  %v3072 = vpop.f32.mrf.mxu0
  %v3073 = vadd.f32 %v2904, %v3072
  %3074 = vmatmul.bf16.gmra.mxu0 %v2398
  %v3075 = vpop.f32.mrf.mxu0
  %v3076 = vadd.f32 %v2907, %v3075
  %v3077 = vpop.f32.mrf.mxu0
  %v3078 = vadd.f32 %v2909, %v3077
  %3079 = vmatmul.bf16.gmra.mxu0 %v2400
  %v3080 = vpop.f32.mrf.mxu0
  %v3081 = vadd.f32 %v2912, %v3080
  %v3082 = vpop.f32.mrf.mxu0
  %v3083 = vadd.f32 %v2914, %v3082
  %3084 = vmatmul.bf16.gmra.mxu0 %v2402
  %v3085 = vpop.f32.mrf.mxu0
  %v3086 = vadd.f32 %v2917, %v3085
  %v3087 = vpop.f32.mrf.mxu0
  %v3088 = vadd.f32 %v2919, %v3087
  %3089 = vmatmul.bf16.gmra.mxu0 %v2404
  %v3090 = vpop.f32.mrf.mxu0
  %v3091 = vadd.f32 %v2922, %v3090
  %v3092 = vpop.f32.mrf.mxu0
  %v3093 = vadd.f32 %v2924, %v3092
  %3094 = vmatmul.bf16.gmra.mxu0 %v2406
  %v3095 = vpop.f32.mrf.mxu0
  %v3096 = vadd.f32 %v2927, %v3095
  %v3097 = vpop.f32.mrf.mxu0
  %v3098 = vadd.f32 %v2929, %v3097
  %3099 = vmatmul.bf16.gmra.mxu0 %v2408
  %v3100 = vpop.f32.mrf.mxu0
  %v3101 = vadd.f32 %v2932, %v3100
  %v3102 = vpop.f32.mrf.mxu0
  %v3103 = vadd.f32 %v2934, %v3102
  %3104 = vmatmul.bf16.gmra.mxu0 %v2410
  %v3105 = vpop.f32.mrf.mxu0
  %v3106 = vadd.f32 %v2937, %v3105
  %v3107 = vpop.f32.mrf.mxu0
  %v3108 = vadd.f32 %v2939, %v3107
  %3109 = vmatmul.bf16.gmra.mxu0 %v2412
  %v3110 = vpop.f32.mrf.mxu0
  %v3111 = vadd.f32 %v2942, %v3110
  %v3112 = vpop.f32.mrf.mxu0
  %v3113 = vadd.f32 %v2944, %v3112
  %3114 = vmatmul.bf16.gmra.mxu0 %v2414
  %v3115 = vpop.f32.mrf.mxu0
  %v3116 = vadd.f32 %v2947, %v3115
  %v3117 = vpop.f32.mrf.mxu0
  %v3118 = vadd.f32 %v2949, %v3117
  %3119 = vmatmul.bf16.gmra.mxu0 %v2416
  %v3120 = vpop.f32.mrf.mxu0
  %v3121 = vadd.f32 %v2952, %v3120
  %v3122 = vpop.f32.mrf.mxu0
  %v3123 = vadd.f32 %v2954, %v3122
  %3124 = vmatmul.bf16.gmra.mxu0 %v2418
  %v3125 = vpop.f32.mrf.mxu0
  %v3126 = vadd.f32 %v2957, %v3125
  %v3127 = vpop.f32.mrf.mxu0
  %v3128 = vadd.f32 %v2959, %v3127
  %3129 = vmatmul.bf16.gmra.mxu0 %v2420
  %v3130 = vpop.f32.mrf.mxu0
  %v3131 = vadd.f32 %v2962, %v3130
  %v3132 = vpop.f32.mrf.mxu0
  %v3133 = vadd.f32 %v2964, %v3132
  %3134 = vmatmul.bf16.gmra.mxu0 %v2422
  %v3135 = vpop.f32.mrf.mxu0
  %v3136 = vadd.f32 %v2967, %v3135
  %v3137 = vpop.f32.mrf.mxu0
  %v3138 = vadd.f32 %v2969, %v3137
  %3139 = vmatmul.bf16.gmra.mxu0 %v2424
  %v3140 = vpop.f32.mrf.mxu0
  %v3141 = vadd.f32 %v2972, %v3140
  %v3142 = vpop.f32.mrf.mxu0
  %v3143 = vadd.f32 %v2974, %v3142
  %3144 = vmatmul.bf16.gmra.mxu0 %v2426
  %v3145 = vpop.f32.mrf.mxu0
  %v3146 = vadd.f32 %v2977, %v3145
  %v3147 = vpop.f32.mrf.mxu0
  %v3148 = vadd.f32 %v2979, %v3147
  %3149 = vmatmul.bf16.gmra.mxu0 %v2428
  %v3150 = vpop.f32.mrf.mxu0
  %v3151 = vadd.f32 %v2982, %v3150
  %v3152 = vpop.f32.mrf.mxu0
  %v3153 = vadd.f32 %v2984, %v3152
  %3154 = vmatmul.bf16.gmra.mxu0 %v2430
  %v3155 = vpop.f32.mrf.mxu0
  %v3156 = vadd.f32 %v2987, %v3155
  %v3157 = vpop.f32.mrf.mxu0
  %v3158 = vadd.f32 %v2989, %v3157
  %3159 = vmatmul.bf16.gmra.mxu0 %v2432
  %v3160 = vpop.f32.mrf.mxu0
  %v3161 = vadd.f32 %v2992, %v3160
  %v3162 = vpop.f32.mrf.mxu0
  %v3163 = vadd.f32 %v2994, %v3162
  %3164 = vdwg.mxu0
  %3165 = vmatpush.bf16.msra.mxu0 %v2728
  %3166 = vmatpush.bf16.msra.mxu0 %v2724
  %3167 = vmatpush.bf16.msra.mxu0 %v2720
  %3168 = vmatpush.bf16.msra.mxu0 %v2716
  %3169 = vmatpush.bf16.msra.mxu0 %v2712
  %3170 = vmatpush.bf16.msra.mxu0 %v2708
  %3171 = vmatpush.bf16.msra.mxu0 %v2704
  %3172 = vmatpush.bf16.msra.mxu0 %v2700
  %3173 = vmatmul.bf16.gmra.mxu0 %v2369
  %v3174 = vpop.f32.mrf.mxu0
  %v3175 = vadd.f32 %v2500, %v3174
  %v3176 = vpop.f32.mrf.mxu0
  %v3177 = vadd.f32 %v2500, %v3176
  %3178 = vmatmul.bf16.gmra.mxu0 %v2371
  %v3179 = vpop.f32.mrf.mxu0
  %v3180 = vadd.f32 %v2500, %v3179
  %v3181 = vpop.f32.mrf.mxu0
  %v3182 = vadd.f32 %v2500, %v3181
  %3183 = vmatmul.bf16.gmra.mxu0 %v2373
  %v3184 = vpop.f32.mrf.mxu0
  %v3185 = vadd.f32 %v2500, %v3184
  %v3186 = vpop.f32.mrf.mxu0
  %v3187 = vadd.f32 %v2500, %v3186
  %3188 = vmatmul.bf16.gmra.mxu0 %v2375
  %v3189 = vpop.f32.mrf.mxu0
  %v3190 = vadd.f32 %v2500, %v3189
  %v3191 = vpop.f32.mrf.mxu0
  %v3192 = vadd.f32 %v2500, %v3191
  %3193 = vmatmul.bf16.gmra.mxu0 %v2377
  %v3194 = vpop.f32.mrf.mxu0
  %v3195 = vadd.f32 %v2500, %v3194
  %v3196 = vpop.f32.mrf.mxu0
  %v3197 = vadd.f32 %v2500, %v3196
  %3198 = vmatmul.bf16.gmra.mxu0 %v2379
  %v3199 = vpop.f32.mrf.mxu0
  %v3200 = vadd.f32 %v2500, %v3199
  %v3201 = vpop.f32.mrf.mxu0
  %v3202 = vadd.f32 %v2500, %v3201
  %3203 = vmatmul.bf16.gmra.mxu0 %v2381
  %v3204 = vpop.f32.mrf.mxu0
  %v3205 = vadd.f32 %v2500, %v3204
  %v3206 = vpop.f32.mrf.mxu0
  %v3207 = vadd.f32 %v2500, %v3206
  %3208 = vmatmul.bf16.gmra.mxu0 %v2383
  %v3209 = vpop.f32.mrf.mxu0
  %v3210 = vadd.f32 %v2500, %v3209
  %v3211 = vpop.f32.mrf.mxu0
  %v3212 = vadd.f32 %v2500, %v3211
  %3213 = vmatmul.bf16.gmra.mxu0 %v2385
  %v3214 = vpop.f32.mrf.mxu0
  %v3215 = vadd.f32 %v2500, %v3214
  %v3216 = vpop.f32.mrf.mxu0
  %v3217 = vadd.f32 %v2500, %v3216
  %3218 = vmatmul.bf16.gmra.mxu0 %v2387
  %v3219 = vpop.f32.mrf.mxu0
  %v3220 = vadd.f32 %v2500, %v3219
  %v3221 = vpop.f32.mrf.mxu0
  %v3222 = vadd.f32 %v2500, %v3221
  %3223 = vmatmul.bf16.gmra.mxu0 %v2389
  %v3224 = vpop.f32.mrf.mxu0
  %v3225 = vadd.f32 %v2500, %v3224
  %v3226 = vpop.f32.mrf.mxu0
  %v3227 = vadd.f32 %v2500, %v3226
  %3228 = vmatmul.bf16.gmra.mxu0 %v2391
  %v3229 = vpop.f32.mrf.mxu0
  %v3230 = vadd.f32 %v2500, %v3229
  %v3231 = vpop.f32.mrf.mxu0
  %v3232 = vadd.f32 %v2500, %v3231
  %3233 = vmatmul.bf16.gmra.mxu0 %v2393
  %v3234 = vpop.f32.mrf.mxu0
  %v3235 = vadd.f32 %v2500, %v3234
  %v3236 = vpop.f32.mrf.mxu0
  %v3237 = vadd.f32 %v2500, %v3236
  %3238 = vmatmul.bf16.gmra.mxu0 %v2395
  %v3239 = vpop.f32.mrf.mxu0
  %v3240 = vadd.f32 %v2500, %v3239
  %v3241 = vpop.f32.mrf.mxu0
  %v3242 = vadd.f32 %v2500, %v3241
  %3243 = vmatmul.bf16.gmra.mxu0 %v2397
  %v3244 = vpop.f32.mrf.mxu0
  %v3245 = vadd.f32 %v2500, %v3244
  %v3246 = vpop.f32.mrf.mxu0
  %v3247 = vadd.f32 %v2500, %v3246
  %3248 = vmatmul.bf16.gmra.mxu0 %v2399
  %v3249 = vpop.f32.mrf.mxu0
  %v3250 = vadd.f32 %v2500, %v3249
  %v3251 = vpop.f32.mrf.mxu0
  %v3252 = vadd.f32 %v2500, %v3251
  %3253 = vmatmul.bf16.gmra.mxu0 %v2401
  %v3254 = vpop.f32.mrf.mxu0
  %v3255 = vadd.f32 %v2500, %v3254
  %v3256 = vpop.f32.mrf.mxu0
  %v3257 = vadd.f32 %v2500, %v3256
  %3258 = vmatmul.bf16.gmra.mxu0 %v2403
  %v3259 = vpop.f32.mrf.mxu0
  %v3260 = vadd.f32 %v2500, %v3259
  %v3261 = vpop.f32.mrf.mxu0
  %v3262 = vadd.f32 %v2500, %v3261
  %3263 = vmatmul.bf16.gmra.mxu0 %v2405
  %v3264 = vpop.f32.mrf.mxu0
  %v3265 = vadd.f32 %v2500, %v3264
  %v3266 = vpop.f32.mrf.mxu0
  %v3267 = vadd.f32 %v2500, %v3266
  %3268 = vmatmul.bf16.gmra.mxu0 %v2407
  %v3269 = vpop.f32.mrf.mxu0
  %v3270 = vadd.f32 %v2500, %v3269
  %v3271 = vpop.f32.mrf.mxu0
  %v3272 = vadd.f32 %v2500, %v3271
  %3273 = vmatmul.bf16.gmra.mxu0 %v2409
  %v3274 = vpop.f32.mrf.mxu0
  %v3275 = vadd.f32 %v2500, %v3274
  %v3276 = vpop.f32.mrf.mxu0
  %v3277 = vadd.f32 %v2500, %v3276
  %3278 = vmatmul.bf16.gmra.mxu0 %v2411
  %v3279 = vpop.f32.mrf.mxu0
  %v3280 = vadd.f32 %v2500, %v3279
  %v3281 = vpop.f32.mrf.mxu0
  %v3282 = vadd.f32 %v2500, %v3281
  %3283 = vmatmul.bf16.gmra.mxu0 %v2413
  %v3284 = vpop.f32.mrf.mxu0
  %v3285 = vadd.f32 %v2500, %v3284
  %v3286 = vpop.f32.mrf.mxu0
  %v3287 = vadd.f32 %v2500, %v3286
  %3288 = vmatmul.bf16.gmra.mxu0 %v2415
  %v3289 = vpop.f32.mrf.mxu0
  %v3290 = vadd.f32 %v2500, %v3289
  %v3291 = vpop.f32.mrf.mxu0
  %v3292 = vadd.f32 %v2500, %v3291
  %3293 = vmatmul.bf16.gmra.mxu0 %v2417
  %v3294 = vpop.f32.mrf.mxu0
  %v3295 = vadd.f32 %v2500, %v3294
  %v3296 = vpop.f32.mrf.mxu0
  %v3297 = vadd.f32 %v2500, %v3296
  %3298 = vmatmul.bf16.gmra.mxu0 %v2419
  %v3299 = vpop.f32.mrf.mxu0
  %v3300 = vadd.f32 %v2500, %v3299
  %v3301 = vpop.f32.mrf.mxu0
  %v3302 = vadd.f32 %v2500, %v3301
  %3303 = vmatmul.bf16.gmra.mxu0 %v2421
  %v3304 = vpop.f32.mrf.mxu0
  %v3305 = vadd.f32 %v2500, %v3304
  %v3306 = vpop.f32.mrf.mxu0
  %v3307 = vadd.f32 %v2500, %v3306
  %3308 = vmatmul.bf16.gmra.mxu0 %v2423
  %v3309 = vpop.f32.mrf.mxu0
  %v3310 = vadd.f32 %v2500, %v3309
  %v3311 = vpop.f32.mrf.mxu0
  %v3312 = vadd.f32 %v2500, %v3311
  %3313 = vmatmul.bf16.gmra.mxu0 %v2425
  %v3314 = vpop.f32.mrf.mxu0
  %v3315 = vadd.f32 %v2500, %v3314
  %v3316 = vpop.f32.mrf.mxu0
  %v3317 = vadd.f32 %v2500, %v3316
  %3318 = vmatmul.bf16.gmra.mxu0 %v2427
  %v3319 = vpop.f32.mrf.mxu0
  %v3320 = vadd.f32 %v2500, %v3319
  %v3321 = vpop.f32.mrf.mxu0
  %v3322 = vadd.f32 %v2500, %v3321
  %3323 = vmatmul.bf16.gmra.mxu0 %v2429
  %v3324 = vpop.f32.mrf.mxu0
  %v3325 = vadd.f32 %v2500, %v3324
  %v3326 = vpop.f32.mrf.mxu0
  %v3327 = vadd.f32 %v2500, %v3326
  %3328 = vmatmul.bf16.gmra.mxu0 %v2431
  %v3329 = vpop.f32.mrf.mxu0
  %v3330 = vadd.f32 %v2500, %v3329
  %v3331 = vpop.f32.mrf.mxu0
  %v3332 = vadd.f32 %v2500, %v3331
  %3333 = vdwg.mxu0
  %3334 = vmatpush.bf16.msra.mxu0 %v2760
  %3335 = vmatpush.bf16.msra.mxu0 %v2756
  %3336 = vmatpush.bf16.msra.mxu0 %v2752
  %3337 = vmatpush.bf16.msra.mxu0 %v2748
  %3338 = vmatpush.bf16.msra.mxu0 %v2744
  %3339 = vmatpush.bf16.msra.mxu0 %v2740
  %3340 = vmatpush.bf16.msra.mxu0 %v2736
  %3341 = vmatpush.bf16.msra.mxu0 %v2732
  %3342 = vmatmul.bf16.gmra.mxu0 %v2370
  %v3343 = vpop.f32.mrf.mxu0
  %v3344 = vadd.f32 %v3175, %v3343
  %v3345 = vpop.f32.mrf.mxu0
  %v3346 = vadd.f32 %v3177, %v3345
  %3347 = vmatmul.bf16.gmra.mxu0 %v2372
  %v3348 = vpop.f32.mrf.mxu0
  %v3349 = vadd.f32 %v3180, %v3348
  %v3350 = vpop.f32.mrf.mxu0
  %v3351 = vadd.f32 %v3182, %v3350
  %3352 = vmatmul.bf16.gmra.mxu0 %v2374
  %v3353 = vpop.f32.mrf.mxu0
  %v3354 = vadd.f32 %v3185, %v3353
  %v3355 = vpop.f32.mrf.mxu0
  %v3356 = vadd.f32 %v3187, %v3355
  %3357 = vmatmul.bf16.gmra.mxu0 %v2376
  %v3358 = vpop.f32.mrf.mxu0
  %v3359 = vadd.f32 %v3190, %v3358
  %v3360 = vpop.f32.mrf.mxu0
  %v3361 = vadd.f32 %v3192, %v3360
  %3362 = vmatmul.bf16.gmra.mxu0 %v2378
  %v3363 = vpop.f32.mrf.mxu0
  %v3364 = vadd.f32 %v3195, %v3363
  %v3365 = vpop.f32.mrf.mxu0
  %v3366 = vadd.f32 %v3197, %v3365
  %3367 = vmatmul.bf16.gmra.mxu0 %v2380
  %v3368 = vpop.f32.mrf.mxu0
  %v3369 = vadd.f32 %v3200, %v3368
  %v3370 = vpop.f32.mrf.mxu0
  %v3371 = vadd.f32 %v3202, %v3370
  %3372 = vmatmul.bf16.gmra.mxu0 %v2382
  %v3373 = vpop.f32.mrf.mxu0
  %v3374 = vadd.f32 %v3205, %v3373
  %v3375 = vpop.f32.mrf.mxu0
  %v3376 = vadd.f32 %v3207, %v3375
  %3377 = vmatmul.bf16.gmra.mxu0 %v2384
  %v3378 = vpop.f32.mrf.mxu0
  %v3379 = vadd.f32 %v3210, %v3378
  %v3380 = vpop.f32.mrf.mxu0
  %v3381 = vadd.f32 %v3212, %v3380
  %3382 = vmatmul.bf16.gmra.mxu0 %v2386
  %v3383 = vpop.f32.mrf.mxu0
  %v3384 = vadd.f32 %v3215, %v3383
  %v3385 = vpop.f32.mrf.mxu0
  %v3386 = vadd.f32 %v3217, %v3385
  %3387 = vmatmul.bf16.gmra.mxu0 %v2388
  %v3388 = vpop.f32.mrf.mxu0
  %v3389 = vadd.f32 %v3220, %v3388
  %v3390 = vpop.f32.mrf.mxu0
  %v3391 = vadd.f32 %v3222, %v3390
  %3392 = vmatmul.bf16.gmra.mxu0 %v2390
  %v3393 = vpop.f32.mrf.mxu0
  %v3394 = vadd.f32 %v3225, %v3393
  %v3395 = vpop.f32.mrf.mxu0
  %v3396 = vadd.f32 %v3227, %v3395
  %3397 = vmatmul.bf16.gmra.mxu0 %v2392
  %v3398 = vpop.f32.mrf.mxu0
  %v3399 = vadd.f32 %v3230, %v3398
  %v3400 = vpop.f32.mrf.mxu0
  %v3401 = vadd.f32 %v3232, %v3400
  %3402 = vmatmul.bf16.gmra.mxu0 %v2394
  %v3403 = vpop.f32.mrf.mxu0
  %v3404 = vadd.f32 %v3235, %v3403
  %v3405 = vpop.f32.mrf.mxu0
  %v3406 = vadd.f32 %v3237, %v3405
  %3407 = vmatmul.bf16.gmra.mxu0 %v2396
  %v3408 = vpop.f32.mrf.mxu0
  %v3409 = vadd.f32 %v3240, %v3408
  %v3410 = vpop.f32.mrf.mxu0
  %v3411 = vadd.f32 %v3242, %v3410
  %3412 = vmatmul.bf16.gmra.mxu0 %v2398
  %v3413 = vpop.f32.mrf.mxu0
  %v3414 = vadd.f32 %v3245, %v3413
  %v3415 = vpop.f32.mrf.mxu0
  %v3416 = vadd.f32 %v3247, %v3415
  %3417 = vmatmul.bf16.gmra.mxu0 %v2400
  %v3418 = vpop.f32.mrf.mxu0
  %v3419 = vadd.f32 %v3250, %v3418
  %v3420 = vpop.f32.mrf.mxu0
  %v3421 = vadd.f32 %v3252, %v3420
  %3422 = vmatmul.bf16.gmra.mxu0 %v2402
  %v3423 = vpop.f32.mrf.mxu0
  %v3424 = vadd.f32 %v3255, %v3423
  %v3425 = vpop.f32.mrf.mxu0
  %v3426 = vadd.f32 %v3257, %v3425
  %3427 = vmatmul.bf16.gmra.mxu0 %v2404
  %v3428 = vpop.f32.mrf.mxu0
  %v3429 = vadd.f32 %v3260, %v3428
  %v3430 = vpop.f32.mrf.mxu0
  %v3431 = vadd.f32 %v3262, %v3430
  %3432 = vmatmul.bf16.gmra.mxu0 %v2406
  %v3433 = vpop.f32.mrf.mxu0
  %v3434 = vadd.f32 %v3265, %v3433
  %v3435 = vpop.f32.mrf.mxu0
  %v3436 = vadd.f32 %v3267, %v3435
  %3437 = vmatmul.bf16.gmra.mxu0 %v2408
  %v3438 = vpop.f32.mrf.mxu0
  %v3439 = vadd.f32 %v3270, %v3438
  %v3440 = vpop.f32.mrf.mxu0
  %v3441 = vadd.f32 %v3272, %v3440
  %3442 = vmatmul.bf16.gmra.mxu0 %v2410
  %v3443 = vpop.f32.mrf.mxu0
  %v3444 = vadd.f32 %v3275, %v3443
  %v3445 = vpop.f32.mrf.mxu0
  %v3446 = vadd.f32 %v3277, %v3445
  %3447 = vmatmul.bf16.gmra.mxu0 %v2412
  %v3448 = vpop.f32.mrf.mxu0
  %v3449 = vadd.f32 %v3280, %v3448
  %v3450 = vpop.f32.mrf.mxu0
  %v3451 = vadd.f32 %v3282, %v3450
  %3452 = vmatmul.bf16.gmra.mxu0 %v2414
  %v3453 = vpop.f32.mrf.mxu0
  %v3454 = vadd.f32 %v3285, %v3453
  %v3455 = vpop.f32.mrf.mxu0
  %v3456 = vadd.f32 %v3287, %v3455
  %3457 = vmatmul.bf16.gmra.mxu0 %v2416
  %v3458 = vpop.f32.mrf.mxu0
  %v3459 = vadd.f32 %v3290, %v3458
  %v3460 = vpop.f32.mrf.mxu0
  %v3461 = vadd.f32 %v3292, %v3460
  %3462 = vmatmul.bf16.gmra.mxu0 %v2418
  %v3463 = vpop.f32.mrf.mxu0
  %v3464 = vadd.f32 %v3295, %v3463
  %v3465 = vpop.f32.mrf.mxu0
  %v3466 = vadd.f32 %v3297, %v3465
  %3467 = vmatmul.bf16.gmra.mxu0 %v2420
  %v3468 = vpop.f32.mrf.mxu0
  %v3469 = vadd.f32 %v3300, %v3468
  %v3470 = vpop.f32.mrf.mxu0
  %v3471 = vadd.f32 %v3302, %v3470
  %3472 = vmatmul.bf16.gmra.mxu0 %v2422
  %v3473 = vpop.f32.mrf.mxu0
  %v3474 = vadd.f32 %v3305, %v3473
  %v3475 = vpop.f32.mrf.mxu0
  %v3476 = vadd.f32 %v3307, %v3475
  %3477 = vmatmul.bf16.gmra.mxu0 %v2424
  %v3478 = vpop.f32.mrf.mxu0
  %v3479 = vadd.f32 %v3310, %v3478
  %v3480 = vpop.f32.mrf.mxu0
  %v3481 = vadd.f32 %v3312, %v3480
  %3482 = vmatmul.bf16.gmra.mxu0 %v2426
  %v3483 = vpop.f32.mrf.mxu0
  %v3484 = vadd.f32 %v3315, %v3483
  %v3485 = vpop.f32.mrf.mxu0
  %v3486 = vadd.f32 %v3317, %v3485
  %3487 = vmatmul.bf16.gmra.mxu0 %v2428
  %v3488 = vpop.f32.mrf.mxu0
  %v3489 = vadd.f32 %v3320, %v3488
  %v3490 = vpop.f32.mrf.mxu0
  %v3491 = vadd.f32 %v3322, %v3490
  %3492 = vmatmul.bf16.gmra.mxu0 %v2430
  %v3493 = vpop.f32.mrf.mxu0
  %v3494 = vadd.f32 %v3325, %v3493
  %v3495 = vpop.f32.mrf.mxu0
  %v3496 = vadd.f32 %v3327, %v3495
  %3497 = vmatmul.bf16.gmra.mxu0 %v2432
  %v3498 = vpop.f32.mrf.mxu0
  %v3499 = vadd.f32 %v3330, %v3498
  %v3500 = vpop.f32.mrf.mxu0
  %v3501 = vadd.f32 %v3332, %v3500
  %3502 = vdwg.mxu0
  %3503 = vmatpush.bf16.msra.mxu0 %v2729
  %3504 = vmatpush.bf16.msra.mxu0 %v2725
  %3505 = vmatpush.bf16.msra.mxu0 %v2721
  %3506 = vmatpush.bf16.msra.mxu0 %v2717
  %3507 = vmatpush.bf16.msra.mxu0 %v2713
  %3508 = vmatpush.bf16.msra.mxu0 %v2709
  %3509 = vmatpush.bf16.msra.mxu0 %v2705
  %3510 = vmatpush.bf16.msra.mxu0 %v2701
  %3511 = vmatmul.bf16.gmra.mxu0 %v2369
  %v3512 = vpop.f32.mrf.mxu0
  %v3513 = vadd.f32 %v2501, %v3512
  %v3514 = vpop.f32.mrf.mxu0
  %v3515 = vadd.f32 %v2501, %v3514
  %3516 = vmatmul.bf16.gmra.mxu0 %v2371
  %v3517 = vpop.f32.mrf.mxu0
  %v3518 = vadd.f32 %v2501, %v3517
  %v3519 = vpop.f32.mrf.mxu0
  %v3520 = vadd.f32 %v2501, %v3519
  %3521 = vmatmul.bf16.gmra.mxu0 %v2373
  %v3522 = vpop.f32.mrf.mxu0
  %v3523 = vadd.f32 %v2501, %v3522
  %v3524 = vpop.f32.mrf.mxu0
  %v3525 = vadd.f32 %v2501, %v3524
  %3526 = vmatmul.bf16.gmra.mxu0 %v2375
  %v3527 = vpop.f32.mrf.mxu0
  %v3528 = vadd.f32 %v2501, %v3527
  %v3529 = vpop.f32.mrf.mxu0
  %v3530 = vadd.f32 %v2501, %v3529
  %3531 = vmatmul.bf16.gmra.mxu0 %v2377
  %v3532 = vpop.f32.mrf.mxu0
  %v3533 = vadd.f32 %v2501, %v3532
  %v3534 = vpop.f32.mrf.mxu0
  %v3535 = vadd.f32 %v2501, %v3534
  %3536 = vmatmul.bf16.gmra.mxu0 %v2379
  %v3537 = vpop.f32.mrf.mxu0
  %v3538 = vadd.f32 %v2501, %v3537
  %v3539 = vpop.f32.mrf.mxu0
  %v3540 = vadd.f32 %v2501, %v3539
  %3541 = vmatmul.bf16.gmra.mxu0 %v2381
  %v3542 = vpop.f32.mrf.mxu0
  %v3543 = vadd.f32 %v2501, %v3542
  %v3544 = vpop.f32.mrf.mxu0
  %v3545 = vadd.f32 %v2501, %v3544
  %3546 = vmatmul.bf16.gmra.mxu0 %v2383
  %v3547 = vpop.f32.mrf.mxu0
  %v3548 = vadd.f32 %v2501, %v3547
  %v3549 = vpop.f32.mrf.mxu0
  %v3550 = vadd.f32 %v2501, %v3549
  %3551 = vmatmul.bf16.gmra.mxu0 %v2385
  %v3552 = vpop.f32.mrf.mxu0
  %v3553 = vadd.f32 %v2501, %v3552
  %v3554 = vpop.f32.mrf.mxu0
  %v3555 = vadd.f32 %v2501, %v3554
  %3556 = vmatmul.bf16.gmra.mxu0 %v2387
  %v3557 = vpop.f32.mrf.mxu0
  %v3558 = vadd.f32 %v2501, %v3557
  %v3559 = vpop.f32.mrf.mxu0
  %v3560 = vadd.f32 %v2501, %v3559
  %3561 = vmatmul.bf16.gmra.mxu0 %v2389
  %v3562 = vpop.f32.mrf.mxu0
  %v3563 = vadd.f32 %v2501, %v3562
  %v3564 = vpop.f32.mrf.mxu0
  %v3565 = vadd.f32 %v2501, %v3564
  %3566 = vmatmul.bf16.gmra.mxu0 %v2391
  %v3567 = vpop.f32.mrf.mxu0
  %v3568 = vadd.f32 %v2501, %v3567
  %v3569 = vpop.f32.mrf.mxu0
  %v3570 = vadd.f32 %v2501, %v3569
  %3571 = vmatmul.bf16.gmra.mxu0 %v2393
  %v3572 = vpop.f32.mrf.mxu0
  %v3573 = vadd.f32 %v2501, %v3572
  %v3574 = vpop.f32.mrf.mxu0
  %v3575 = vadd.f32 %v2501, %v3574
  %3576 = vmatmul.bf16.gmra.mxu0 %v2395
  %v3577 = vpop.f32.mrf.mxu0
  %v3578 = vadd.f32 %v2501, %v3577
  %v3579 = vpop.f32.mrf.mxu0
  %v3580 = vadd.f32 %v2501, %v3579
  %3581 = vmatmul.bf16.gmra.mxu0 %v2397
  %v3582 = vpop.f32.mrf.mxu0
  %v3583 = vadd.f32 %v2501, %v3582
  %v3584 = vpop.f32.mrf.mxu0
  %v3585 = vadd.f32 %v2501, %v3584
  %3586 = vmatmul.bf16.gmra.mxu0 %v2399
  %v3587 = vpop.f32.mrf.mxu0
  %v3588 = vadd.f32 %v2501, %v3587
  %v3589 = vpop.f32.mrf.mxu0
  %v3590 = vadd.f32 %v2501, %v3589
  %3591 = vmatmul.bf16.gmra.mxu0 %v2401
  %v3592 = vpop.f32.mrf.mxu0
  %v3593 = vadd.f32 %v2501, %v3592
  %v3594 = vpop.f32.mrf.mxu0
  %v3595 = vadd.f32 %v2501, %v3594
  %3596 = vmatmul.bf16.gmra.mxu0 %v2403
  %v3597 = vpop.f32.mrf.mxu0
  %v3598 = vadd.f32 %v2501, %v3597
  %v3599 = vpop.f32.mrf.mxu0
  %v3600 = vadd.f32 %v2501, %v3599
  %3601 = vmatmul.bf16.gmra.mxu0 %v2405
  %v3602 = vpop.f32.mrf.mxu0
  %v3603 = vadd.f32 %v2501, %v3602
  %v3604 = vpop.f32.mrf.mxu0
  %v3605 = vadd.f32 %v2501, %v3604
  %3606 = vmatmul.bf16.gmra.mxu0 %v2407
  %v3607 = vpop.f32.mrf.mxu0
  %v3608 = vadd.f32 %v2501, %v3607
  %v3609 = vpop.f32.mrf.mxu0
  %v3610 = vadd.f32 %v2501, %v3609
  %3611 = vmatmul.bf16.gmra.mxu0 %v2409
  %v3612 = vpop.f32.mrf.mxu0
  %v3613 = vadd.f32 %v2501, %v3612
  %v3614 = vpop.f32.mrf.mxu0
  %v3615 = vadd.f32 %v2501, %v3614
  %3616 = vmatmul.bf16.gmra.mxu0 %v2411
  %v3617 = vpop.f32.mrf.mxu0
  %v3618 = vadd.f32 %v2501, %v3617
  %v3619 = vpop.f32.mrf.mxu0
  %v3620 = vadd.f32 %v2501, %v3619
  %3621 = vmatmul.bf16.gmra.mxu0 %v2413
  %v3622 = vpop.f32.mrf.mxu0
  %v3623 = vadd.f32 %v2501, %v3622
  %v3624 = vpop.f32.mrf.mxu0
  %v3625 = vadd.f32 %v2501, %v3624
  %3626 = vmatmul.bf16.gmra.mxu0 %v2415
  %v3627 = vpop.f32.mrf.mxu0
  %v3628 = vadd.f32 %v2501, %v3627
  %v3629 = vpop.f32.mrf.mxu0
  %v3630 = vadd.f32 %v2501, %v3629
  %3631 = vmatmul.bf16.gmra.mxu0 %v2417
  %v3632 = vpop.f32.mrf.mxu0
  %v3633 = vadd.f32 %v2501, %v3632
  %v3634 = vpop.f32.mrf.mxu0
  %v3635 = vadd.f32 %v2501, %v3634
  %3636 = vmatmul.bf16.gmra.mxu0 %v2419
  %v3637 = vpop.f32.mrf.mxu0
  %v3638 = vadd.f32 %v2501, %v3637
  %v3639 = vpop.f32.mrf.mxu0
  %v3640 = vadd.f32 %v2501, %v3639
  %3641 = vmatmul.bf16.gmra.mxu0 %v2421
  %v3642 = vpop.f32.mrf.mxu0
  %v3643 = vadd.f32 %v2501, %v3642
  %v3644 = vpop.f32.mrf.mxu0
  %v3645 = vadd.f32 %v2501, %v3644
  %3646 = vmatmul.bf16.gmra.mxu0 %v2423
  %v3647 = vpop.f32.mrf.mxu0
  %v3648 = vadd.f32 %v2501, %v3647
  %v3649 = vpop.f32.mrf.mxu0
  %v3650 = vadd.f32 %v2501, %v3649
  %3651 = vmatmul.bf16.gmra.mxu0 %v2425
  %v3652 = vpop.f32.mrf.mxu0
  %v3653 = vadd.f32 %v2501, %v3652
  %v3654 = vpop.f32.mrf.mxu0
  %v3655 = vadd.f32 %v2501, %v3654
  %3656 = vmatmul.bf16.gmra.mxu0 %v2427
  %v3657 = vpop.f32.mrf.mxu0
  %v3658 = vadd.f32 %v2501, %v3657
  %v3659 = vpop.f32.mrf.mxu0
  %v3660 = vadd.f32 %v2501, %v3659
  %3661 = vmatmul.bf16.gmra.mxu0 %v2429
  %v3662 = vpop.f32.mrf.mxu0
  %v3663 = vadd.f32 %v2501, %v3662
  %v3664 = vpop.f32.mrf.mxu0
  %v3665 = vadd.f32 %v2501, %v3664
  %3666 = vmatmul.bf16.gmra.mxu0 %v2431
  %v3667 = vpop.f32.mrf.mxu0
  %v3668 = vadd.f32 %v2501, %v3667
  %v3669 = vpop.f32.mrf.mxu0
  %v3670 = vadd.f32 %v2501, %v3669
  %3671 = vdwg.mxu0
  %3672 = vmatpush.bf16.msra.mxu0 %v2761
  %3673 = vmatpush.bf16.msra.mxu0 %v2757
  %3674 = vmatpush.bf16.msra.mxu0 %v2753
  %3675 = vmatpush.bf16.msra.mxu0 %v2749
  %3676 = vmatpush.bf16.msra.mxu0 %v2745
  %3677 = vmatpush.bf16.msra.mxu0 %v2741
  %3678 = vmatpush.bf16.msra.mxu0 %v2737
  %3679 = vmatpush.bf16.msra.mxu0 %v2733
  %3680 = vmatmul.bf16.gmra.mxu0 %v2370
  %v3681 = vpop.f32.mrf.mxu0
  %v3682 = vadd.f32 %v3513, %v3681
  %v3683 = vpop.f32.mrf.mxu0
  %v3684 = vadd.f32 %v3515, %v3683
  %3685 = vmatmul.bf16.gmra.mxu0 %v2372
  %v3686 = vpop.f32.mrf.mxu0
  %v3687 = vadd.f32 %v3518, %v3686
  %v3688 = vpop.f32.mrf.mxu0
  %v3689 = vadd.f32 %v3520, %v3688
  %3690 = vmatmul.bf16.gmra.mxu0 %v2374
  %v3691 = vpop.f32.mrf.mxu0
  %v3692 = vadd.f32 %v3523, %v3691
  %v3693 = vpop.f32.mrf.mxu0
  %v3694 = vadd.f32 %v3525, %v3693
  %3695 = vmatmul.bf16.gmra.mxu0 %v2376
  %v3696 = vpop.f32.mrf.mxu0
  %v3697 = vadd.f32 %v3528, %v3696
  %v3698 = vpop.f32.mrf.mxu0
  %v3699 = vadd.f32 %v3530, %v3698
  %3700 = vmatmul.bf16.gmra.mxu0 %v2378
  %v3701 = vpop.f32.mrf.mxu0
  %v3702 = vadd.f32 %v3533, %v3701
  %v3703 = vpop.f32.mrf.mxu0
  %v3704 = vadd.f32 %v3535, %v3703
  %3705 = vmatmul.bf16.gmra.mxu0 %v2380
  %v3706 = vpop.f32.mrf.mxu0
  %v3707 = vadd.f32 %v3538, %v3706
  %v3708 = vpop.f32.mrf.mxu0
  %v3709 = vadd.f32 %v3540, %v3708
  %3710 = vmatmul.bf16.gmra.mxu0 %v2382
  %v3711 = vpop.f32.mrf.mxu0
  %v3712 = vadd.f32 %v3543, %v3711
  %v3713 = vpop.f32.mrf.mxu0
  %v3714 = vadd.f32 %v3545, %v3713
  %3715 = vmatmul.bf16.gmra.mxu0 %v2384
  %v3716 = vpop.f32.mrf.mxu0
  %v3717 = vadd.f32 %v3548, %v3716
  %v3718 = vpop.f32.mrf.mxu0
  %v3719 = vadd.f32 %v3550, %v3718
  %3720 = vmatmul.bf16.gmra.mxu0 %v2386
  %v3721 = vpop.f32.mrf.mxu0
  %v3722 = vadd.f32 %v3553, %v3721
  %v3723 = vpop.f32.mrf.mxu0
  %v3724 = vadd.f32 %v3555, %v3723
  %3725 = vmatmul.bf16.gmra.mxu0 %v2388
  %v3726 = vpop.f32.mrf.mxu0
  %v3727 = vadd.f32 %v3558, %v3726
  %v3728 = vpop.f32.mrf.mxu0
  %v3729 = vadd.f32 %v3560, %v3728
  %3730 = vmatmul.bf16.gmra.mxu0 %v2390
  %v3731 = vpop.f32.mrf.mxu0
  %v3732 = vadd.f32 %v3563, %v3731
  %v3733 = vpop.f32.mrf.mxu0
  %v3734 = vadd.f32 %v3565, %v3733
  %3735 = vmatmul.bf16.gmra.mxu0 %v2392
  %v3736 = vpop.f32.mrf.mxu0
  %v3737 = vadd.f32 %v3568, %v3736
  %v3738 = vpop.f32.mrf.mxu0
  %v3739 = vadd.f32 %v3570, %v3738
  %3740 = vmatmul.bf16.gmra.mxu0 %v2394
  %v3741 = vpop.f32.mrf.mxu0
  %v3742 = vadd.f32 %v3573, %v3741
  %v3743 = vpop.f32.mrf.mxu0
  %v3744 = vadd.f32 %v3575, %v3743
  %3745 = vmatmul.bf16.gmra.mxu0 %v2396
  %v3746 = vpop.f32.mrf.mxu0
  %v3747 = vadd.f32 %v3578, %v3746
  %v3748 = vpop.f32.mrf.mxu0
  %v3749 = vadd.f32 %v3580, %v3748
  %3750 = vmatmul.bf16.gmra.mxu0 %v2398
  %v3751 = vpop.f32.mrf.mxu0
  %v3752 = vadd.f32 %v3583, %v3751
  %v3753 = vpop.f32.mrf.mxu0
  %v3754 = vadd.f32 %v3585, %v3753
  %3755 = vmatmul.bf16.gmra.mxu0 %v2400
  %v3756 = vpop.f32.mrf.mxu0
  %v3757 = vadd.f32 %v3588, %v3756
  %v3758 = vpop.f32.mrf.mxu0
  %v3759 = vadd.f32 %v3590, %v3758
  %3760 = vmatmul.bf16.gmra.mxu0 %v2402
  %v3761 = vpop.f32.mrf.mxu0
  %v3762 = vadd.f32 %v3593, %v3761
  %v3763 = vpop.f32.mrf.mxu0
  %v3764 = vadd.f32 %v3595, %v3763
  %3765 = vmatmul.bf16.gmra.mxu0 %v2404
  %v3766 = vpop.f32.mrf.mxu0
  %v3767 = vadd.f32 %v3598, %v3766
  %v3768 = vpop.f32.mrf.mxu0
  %v3769 = vadd.f32 %v3600, %v3768
  %3770 = vmatmul.bf16.gmra.mxu0 %v2406
  %v3771 = vpop.f32.mrf.mxu0
  %v3772 = vadd.f32 %v3603, %v3771
  %v3773 = vpop.f32.mrf.mxu0
  %v3774 = vadd.f32 %v3605, %v3773
  %3775 = vmatmul.bf16.gmra.mxu0 %v2408
  %v3776 = vpop.f32.mrf.mxu0
  %v3777 = vadd.f32 %v3608, %v3776
  %v3778 = vpop.f32.mrf.mxu0
  %v3779 = vadd.f32 %v3610, %v3778
  %3780 = vmatmul.bf16.gmra.mxu0 %v2410
  %v3781 = vpop.f32.mrf.mxu0
  %v3782 = vadd.f32 %v3613, %v3781
  %v3783 = vpop.f32.mrf.mxu0
  %v3784 = vadd.f32 %v3615, %v3783
  %3785 = vmatmul.bf16.gmra.mxu0 %v2412
  %v3786 = vpop.f32.mrf.mxu0
  %v3787 = vadd.f32 %v3618, %v3786
  %v3788 = vpop.f32.mrf.mxu0
  %v3789 = vadd.f32 %v3620, %v3788
  %3790 = vmatmul.bf16.gmra.mxu0 %v2414
  %v3791 = vpop.f32.mrf.mxu0
  %v3792 = vadd.f32 %v3623, %v3791
  %v3793 = vpop.f32.mrf.mxu0
  %v3794 = vadd.f32 %v3625, %v3793
  %3795 = vmatmul.bf16.gmra.mxu0 %v2416
  %v3796 = vpop.f32.mrf.mxu0
  %v3797 = vadd.f32 %v3628, %v3796
  %v3798 = vpop.f32.mrf.mxu0
  %v3799 = vadd.f32 %v3630, %v3798
  %3800 = vmatmul.bf16.gmra.mxu0 %v2418
  %v3801 = vpop.f32.mrf.mxu0
  %v3802 = vadd.f32 %v3633, %v3801
  %v3803 = vpop.f32.mrf.mxu0
  %v3804 = vadd.f32 %v3635, %v3803
  %3805 = vmatmul.bf16.gmra.mxu0 %v2420
  %v3806 = vpop.f32.mrf.mxu0
  %v3807 = vadd.f32 %v3638, %v3806
  %v3808 = vpop.f32.mrf.mxu0
  %v3809 = vadd.f32 %v3640, %v3808
  %3810 = vmatmul.bf16.gmra.mxu0 %v2422
  %v3811 = vpop.f32.mrf.mxu0
  %v3812 = vadd.f32 %v3643, %v3811
  %v3813 = vpop.f32.mrf.mxu0
  %v3814 = vadd.f32 %v3645, %v3813
  %3815 = vmatmul.bf16.gmra.mxu0 %v2424
  %v3816 = vpop.f32.mrf.mxu0
  %v3817 = vadd.f32 %v3648, %v3816
  %v3818 = vpop.f32.mrf.mxu0
  %v3819 = vadd.f32 %v3650, %v3818
  %3820 = vmatmul.bf16.gmra.mxu0 %v2426
  %v3821 = vpop.f32.mrf.mxu0
  %v3822 = vadd.f32 %v3653, %v3821
  %v3823 = vpop.f32.mrf.mxu0
  %v3824 = vadd.f32 %v3655, %v3823
  %3825 = vmatmul.bf16.gmra.mxu0 %v2428
  %v3826 = vpop.f32.mrf.mxu0
  %v3827 = vadd.f32 %v3658, %v3826
  %v3828 = vpop.f32.mrf.mxu0
  %v3829 = vadd.f32 %v3660, %v3828
  %3830 = vmatmul.bf16.gmra.mxu0 %v2430
  %v3831 = vpop.f32.mrf.mxu0
  %v3832 = vadd.f32 %v3663, %v3831
  %v3833 = vpop.f32.mrf.mxu0
  %v3834 = vadd.f32 %v3665, %v3833
  %3835 = vmatmul.bf16.gmra.mxu0 %v2432
  %v3836 = vpop.f32.mrf.mxu0
  %v3837 = vadd.f32 %v3668, %v3836
  %v3838 = vpop.f32.mrf.mxu0
  %v3839 = vadd.f32 %v3670, %v3838
  %3840 = vdwg.mxu0
  %3841 = vmatpush.bf16.msra.mxu0 %v2730
  %3842 = vmatpush.bf16.msra.mxu0 %v2726
  %3843 = vmatpush.bf16.msra.mxu0 %v2722
  %3844 = vmatpush.bf16.msra.mxu0 %v2718
  %3845 = vmatpush.bf16.msra.mxu0 %v2714
  %3846 = vmatpush.bf16.msra.mxu0 %v2710
  %3847 = vmatpush.bf16.msra.mxu0 %v2706
  %3848 = vmatpush.bf16.msra.mxu0 %v2702
  %3849 = vmatmul.bf16.gmra.mxu0 %v2369
  %v3850 = vpop.f32.mrf.mxu0
  %v3851 = vadd.f32 %v2502, %v3850
  %v3852 = vpop.f32.mrf.mxu0
  %v3853 = vadd.f32 %v2502, %v3852
  %3854 = vmatmul.bf16.gmra.mxu0 %v2371
  %v3855 = vpop.f32.mrf.mxu0
  %v3856 = vadd.f32 %v2502, %v3855
  %v3857 = vpop.f32.mrf.mxu0
  %v3858 = vadd.f32 %v2502, %v3857
  %3859 = vmatmul.bf16.gmra.mxu0 %v2373
  %v3860 = vpop.f32.mrf.mxu0
  %v3861 = vadd.f32 %v2502, %v3860
  %v3862 = vpop.f32.mrf.mxu0
  %v3863 = vadd.f32 %v2502, %v3862
  %3864 = vmatmul.bf16.gmra.mxu0 %v2375
  %v3865 = vpop.f32.mrf.mxu0
  %v3866 = vadd.f32 %v2502, %v3865
  %v3867 = vpop.f32.mrf.mxu0
  %v3868 = vadd.f32 %v2502, %v3867
  %3869 = vmatmul.bf16.gmra.mxu0 %v2377
  %v3870 = vpop.f32.mrf.mxu0
  %v3871 = vadd.f32 %v2502, %v3870
  %v3872 = vpop.f32.mrf.mxu0
  %v3873 = vadd.f32 %v2502, %v3872
  %3874 = vmatmul.bf16.gmra.mxu0 %v2379
  %v3875 = vpop.f32.mrf.mxu0
  %v3876 = vadd.f32 %v2502, %v3875
  %v3877 = vpop.f32.mrf.mxu0
  %v3878 = vadd.f32 %v2502, %v3877
  %3879 = vmatmul.bf16.gmra.mxu0 %v2381
  %v3880 = vpop.f32.mrf.mxu0
  %v3881 = vadd.f32 %v2502, %v3880
  %v3882 = vpop.f32.mrf.mxu0
  %v3883 = vadd.f32 %v2502, %v3882
  %3884 = vmatmul.bf16.gmra.mxu0 %v2383
  %v3885 = vpop.f32.mrf.mxu0
  %v3886 = vadd.f32 %v2502, %v3885
  %v3887 = vpop.f32.mrf.mxu0
  %v3888 = vadd.f32 %v2502, %v3887
  %3889 = vmatmul.bf16.gmra.mxu0 %v2385
  %v3890 = vpop.f32.mrf.mxu0
  %v3891 = vadd.f32 %v2502, %v3890
  %v3892 = vpop.f32.mrf.mxu0
  %v3893 = vadd.f32 %v2502, %v3892
  %3894 = vmatmul.bf16.gmra.mxu0 %v2387
  %v3895 = vpop.f32.mrf.mxu0
  %v3896 = vadd.f32 %v2502, %v3895
  %v3897 = vpop.f32.mrf.mxu0
  %v3898 = vadd.f32 %v2502, %v3897
  %3899 = vmatmul.bf16.gmra.mxu0 %v2389
  %v3900 = vpop.f32.mrf.mxu0
  %v3901 = vadd.f32 %v2502, %v3900
  %v3902 = vpop.f32.mrf.mxu0
  %v3903 = vadd.f32 %v2502, %v3902
  %3904 = vmatmul.bf16.gmra.mxu0 %v2391
  %v3905 = vpop.f32.mrf.mxu0
  %v3906 = vadd.f32 %v2502, %v3905
  %v3907 = vpop.f32.mrf.mxu0
  %v3908 = vadd.f32 %v2502, %v3907
  %3909 = vmatmul.bf16.gmra.mxu0 %v2393
  %v3910 = vpop.f32.mrf.mxu0
  %v3911 = vadd.f32 %v2502, %v3910
  %v3912 = vpop.f32.mrf.mxu0
  %v3913 = vadd.f32 %v2502, %v3912
  %3914 = vmatmul.bf16.gmra.mxu0 %v2395
  %v3915 = vpop.f32.mrf.mxu0
  %v3916 = vadd.f32 %v2502, %v3915
  %v3917 = vpop.f32.mrf.mxu0
  %v3918 = vadd.f32 %v2502, %v3917
  %3919 = vmatmul.bf16.gmra.mxu0 %v2397
  %v3920 = vpop.f32.mrf.mxu0
  %v3921 = vadd.f32 %v2502, %v3920
  %v3922 = vpop.f32.mrf.mxu0
  %v3923 = vadd.f32 %v2502, %v3922
  %3924 = vmatmul.bf16.gmra.mxu0 %v2399
  %v3925 = vpop.f32.mrf.mxu0
  %v3926 = vadd.f32 %v2502, %v3925
  %v3927 = vpop.f32.mrf.mxu0
  %v3928 = vadd.f32 %v2502, %v3927
  %3929 = vmatmul.bf16.gmra.mxu0 %v2401
  %v3930 = vpop.f32.mrf.mxu0
  %v3931 = vadd.f32 %v2502, %v3930
  %v3932 = vpop.f32.mrf.mxu0
  %v3933 = vadd.f32 %v2502, %v3932
  %3934 = vmatmul.bf16.gmra.mxu0 %v2403
  %v3935 = vpop.f32.mrf.mxu0
  %v3936 = vadd.f32 %v2502, %v3935
  %v3937 = vpop.f32.mrf.mxu0
  %v3938 = vadd.f32 %v2502, %v3937
  %3939 = vmatmul.bf16.gmra.mxu0 %v2405
  %v3940 = vpop.f32.mrf.mxu0
  %v3941 = vadd.f32 %v2502, %v3940
  %v3942 = vpop.f32.mrf.mxu0
  %v3943 = vadd.f32 %v2502, %v3942
  %3944 = vmatmul.bf16.gmra.mxu0 %v2407
  %v3945 = vpop.f32.mrf.mxu0
  %v3946 = vadd.f32 %v2502, %v3945
  %v3947 = vpop.f32.mrf.mxu0
  %v3948 = vadd.f32 %v2502, %v3947
  %3949 = vmatmul.bf16.gmra.mxu0 %v2409
  %v3950 = vpop.f32.mrf.mxu0
  %v3951 = vadd.f32 %v2502, %v3950
  %v3952 = vpop.f32.mrf.mxu0
  %v3953 = vadd.f32 %v2502, %v3952
  %3954 = vmatmul.bf16.gmra.mxu0 %v2411
  %v3955 = vpop.f32.mrf.mxu0
  %v3956 = vadd.f32 %v2502, %v3955
  %v3957 = vpop.f32.mrf.mxu0
  %v3958 = vadd.f32 %v2502, %v3957
  %3959 = vmatmul.bf16.gmra.mxu0 %v2413
  %v3960 = vpop.f32.mrf.mxu0
  %v3961 = vadd.f32 %v2502, %v3960
  %v3962 = vpop.f32.mrf.mxu0
  %v3963 = vadd.f32 %v2502, %v3962
  %3964 = vmatmul.bf16.gmra.mxu0 %v2415
  %v3965 = vpop.f32.mrf.mxu0
  %v3966 = vadd.f32 %v2502, %v3965
  %v3967 = vpop.f32.mrf.mxu0
  %v3968 = vadd.f32 %v2502, %v3967
  %3969 = vmatmul.bf16.gmra.mxu0 %v2417
  %v3970 = vpop.f32.mrf.mxu0
  %v3971 = vadd.f32 %v2502, %v3970
  %v3972 = vpop.f32.mrf.mxu0
  %v3973 = vadd.f32 %v2502, %v3972
  %3974 = vmatmul.bf16.gmra.mxu0 %v2419
  %v3975 = vpop.f32.mrf.mxu0
  %v3976 = vadd.f32 %v2502, %v3975
  %v3977 = vpop.f32.mrf.mxu0
  %v3978 = vadd.f32 %v2502, %v3977
  %3979 = vmatmul.bf16.gmra.mxu0 %v2421
  %v3980 = vpop.f32.mrf.mxu0
  %v3981 = vadd.f32 %v2502, %v3980
  %v3982 = vpop.f32.mrf.mxu0
  %v3983 = vadd.f32 %v2502, %v3982
  %3984 = vmatmul.bf16.gmra.mxu0 %v2423
  %v3985 = vpop.f32.mrf.mxu0
  %v3986 = vadd.f32 %v2502, %v3985
  %v3987 = vpop.f32.mrf.mxu0
  %v3988 = vadd.f32 %v2502, %v3987
  %3989 = vmatmul.bf16.gmra.mxu0 %v2425
  %v3990 = vpop.f32.mrf.mxu0
  %v3991 = vadd.f32 %v2502, %v3990
  %v3992 = vpop.f32.mrf.mxu0
  %v3993 = vadd.f32 %v2502, %v3992
  %3994 = vmatmul.bf16.gmra.mxu0 %v2427
  %v3995 = vpop.f32.mrf.mxu0
  %v3996 = vadd.f32 %v2502, %v3995
  %v3997 = vpop.f32.mrf.mxu0
  %v3998 = vadd.f32 %v2502, %v3997
  %3999 = vmatmul.bf16.gmra.mxu0 %v2429
  %v4000 = vpop.f32.mrf.mxu0
  %v4001 = vadd.f32 %v2502, %v4000
  %v4002 = vpop.f32.mrf.mxu0
  %v4003 = vadd.f32 %v2502, %v4002
  %4004 = vmatmul.bf16.gmra.mxu0 %v2431
  %v4005 = vpop.f32.mrf.mxu0
  %v4006 = vadd.f32 %v2502, %v4005
  %v4007 = vpop.f32.mrf.mxu0
  %v4008 = vadd.f32 %v2502, %v4007
  %4009 = vdwg.mxu0
  %4010 = vmatpush.bf16.msra.mxu0 %v2762
  %4011 = vmatpush.bf16.msra.mxu0 %v2758
  %4012 = vmatpush.bf16.msra.mxu0 %v2754
  %4013 = vmatpush.bf16.msra.mxu0 %v2750
  %4014 = vmatpush.bf16.msra.mxu0 %v2746
  %4015 = vmatpush.bf16.msra.mxu0 %v2742
  %4016 = vmatpush.bf16.msra.mxu0 %v2738
  %4017 = vmatpush.bf16.msra.mxu0 %v2734
  %4018 = vmatmul.bf16.gmra.mxu0 %v2370
  %v4019 = vpop.f32.mrf.mxu0
  %v4020 = vadd.f32 %v3851, %v4019
  %v4021 = vpop.f32.mrf.mxu0
  %v4022 = vadd.f32 %v3853, %v4021
  %4023 = vmatmul.bf16.gmra.mxu0 %v2372
  %v4024 = vpop.f32.mrf.mxu0
  %v4025 = vadd.f32 %v3856, %v4024
  %v4026 = vpop.f32.mrf.mxu0
  %v4027 = vadd.f32 %v3858, %v4026
  %4028 = vmatmul.bf16.gmra.mxu0 %v2374
  %v4029 = vpop.f32.mrf.mxu0
  %v4030 = vadd.f32 %v3861, %v4029
  %v4031 = vpop.f32.mrf.mxu0
  %v4032 = vadd.f32 %v3863, %v4031
  %4033 = vmatmul.bf16.gmra.mxu0 %v2376
  %v4034 = vpop.f32.mrf.mxu0
  %v4035 = vadd.f32 %v3866, %v4034
  %v4036 = vpop.f32.mrf.mxu0
  %v4037 = vadd.f32 %v3868, %v4036
  %4038 = vmatmul.bf16.gmra.mxu0 %v2378
  %v4039 = vpop.f32.mrf.mxu0
  %v4040 = vadd.f32 %v3871, %v4039
  %v4041 = vpop.f32.mrf.mxu0
  %v4042 = vadd.f32 %v3873, %v4041
  %4043 = vmatmul.bf16.gmra.mxu0 %v2380
  %v4044 = vpop.f32.mrf.mxu0
  %v4045 = vadd.f32 %v3876, %v4044
  %v4046 = vpop.f32.mrf.mxu0
  %v4047 = vadd.f32 %v3878, %v4046
  %4048 = vmatmul.bf16.gmra.mxu0 %v2382
  %v4049 = vpop.f32.mrf.mxu0
  %v4050 = vadd.f32 %v3881, %v4049
  %v4051 = vpop.f32.mrf.mxu0
  %v4052 = vadd.f32 %v3883, %v4051
  %4053 = vmatmul.bf16.gmra.mxu0 %v2384
  %v4054 = vpop.f32.mrf.mxu0
  %v4055 = vadd.f32 %v3886, %v4054
  %v4056 = vpop.f32.mrf.mxu0
  %v4057 = vadd.f32 %v3888, %v4056
  %4058 = vmatmul.bf16.gmra.mxu0 %v2386
  %v4059 = vpop.f32.mrf.mxu0
  %v4060 = vadd.f32 %v3891, %v4059
  %v4061 = vpop.f32.mrf.mxu0
  %v4062 = vadd.f32 %v3893, %v4061
  %4063 = vmatmul.bf16.gmra.mxu0 %v2388
  %v4064 = vpop.f32.mrf.mxu0
  %v4065 = vadd.f32 %v3896, %v4064
  %v4066 = vpop.f32.mrf.mxu0
  %v4067 = vadd.f32 %v3898, %v4066
  %4068 = vmatmul.bf16.gmra.mxu0 %v2390
  %v4069 = vpop.f32.mrf.mxu0
  %v4070 = vadd.f32 %v3901, %v4069
  %v4071 = vpop.f32.mrf.mxu0
  %v4072 = vadd.f32 %v3903, %v4071
  %4073 = vmatmul.bf16.gmra.mxu0 %v2392
  %v4074 = vpop.f32.mrf.mxu0
  %v4075 = vadd.f32 %v3906, %v4074
  %v4076 = vpop.f32.mrf.mxu0
  %v4077 = vadd.f32 %v3908, %v4076
  %4078 = vmatmul.bf16.gmra.mxu0 %v2394
  %v4079 = vpop.f32.mrf.mxu0
  %v4080 = vadd.f32 %v3911, %v4079
  %v4081 = vpop.f32.mrf.mxu0
  %v4082 = vadd.f32 %v3913, %v4081
  %4083 = vmatmul.bf16.gmra.mxu0 %v2396
  %v4084 = vpop.f32.mrf.mxu0
  %v4085 = vadd.f32 %v3916, %v4084
  %v4086 = vpop.f32.mrf.mxu0
  %v4087 = vadd.f32 %v3918, %v4086
  %4088 = vmatmul.bf16.gmra.mxu0 %v2398
  %v4089 = vpop.f32.mrf.mxu0
  %v4090 = vadd.f32 %v3921, %v4089
  %v4091 = vpop.f32.mrf.mxu0
  %v4092 = vadd.f32 %v3923, %v4091
  %4093 = vmatmul.bf16.gmra.mxu0 %v2400
  %v4094 = vpop.f32.mrf.mxu0
  %v4095 = vadd.f32 %v3926, %v4094
  %v4096 = vpop.f32.mrf.mxu0
  %v4097 = vadd.f32 %v3928, %v4096
  %4098 = vmatmul.bf16.gmra.mxu0 %v2402
  %v4099 = vpop.f32.mrf.mxu0
  %v4100 = vadd.f32 %v3931, %v4099
  %v4101 = vpop.f32.mrf.mxu0
  %v4102 = vadd.f32 %v3933, %v4101
  %4103 = vmatmul.bf16.gmra.mxu0 %v2404
  %v4104 = vpop.f32.mrf.mxu0
  %v4105 = vadd.f32 %v3936, %v4104
  %v4106 = vpop.f32.mrf.mxu0
  %v4107 = vadd.f32 %v3938, %v4106
  %4108 = vmatmul.bf16.gmra.mxu0 %v2406
  %v4109 = vpop.f32.mrf.mxu0
  %v4110 = vadd.f32 %v3941, %v4109
  %v4111 = vpop.f32.mrf.mxu0
  %v4112 = vadd.f32 %v3943, %v4111
  %4113 = vmatmul.bf16.gmra.mxu0 %v2408
  %v4114 = vpop.f32.mrf.mxu0
  %v4115 = vadd.f32 %v3946, %v4114
  %v4116 = vpop.f32.mrf.mxu0
  %v4117 = vadd.f32 %v3948, %v4116
  %4118 = vmatmul.bf16.gmra.mxu0 %v2410
  %v4119 = vpop.f32.mrf.mxu0
  %v4120 = vadd.f32 %v3951, %v4119
  %v4121 = vpop.f32.mrf.mxu0
  %v4122 = vadd.f32 %v3953, %v4121
  %4123 = vmatmul.bf16.gmra.mxu0 %v2412
  %v4124 = vpop.f32.mrf.mxu0
  %v4125 = vadd.f32 %v3956, %v4124
  %v4126 = vpop.f32.mrf.mxu0
  %v4127 = vadd.f32 %v3958, %v4126
  %4128 = vmatmul.bf16.gmra.mxu0 %v2414
  %v4129 = vpop.f32.mrf.mxu0
  %v4130 = vadd.f32 %v3961, %v4129
  %v4131 = vpop.f32.mrf.mxu0
  %v4132 = vadd.f32 %v3963, %v4131
  %4133 = vmatmul.bf16.gmra.mxu0 %v2416
  %v4134 = vpop.f32.mrf.mxu0
  %v4135 = vadd.f32 %v3966, %v4134
  %v4136 = vpop.f32.mrf.mxu0
  %v4137 = vadd.f32 %v3968, %v4136
  %4138 = vmatmul.bf16.gmra.mxu0 %v2418
  %v4139 = vpop.f32.mrf.mxu0
  %v4140 = vadd.f32 %v3971, %v4139
  %v4141 = vpop.f32.mrf.mxu0
  %v4142 = vadd.f32 %v3973, %v4141
  %4143 = vmatmul.bf16.gmra.mxu0 %v2420
  %v4144 = vpop.f32.mrf.mxu0
  %v4145 = vadd.f32 %v3976, %v4144
  %v4146 = vpop.f32.mrf.mxu0
  %v4147 = vadd.f32 %v3978, %v4146
  %4148 = vmatmul.bf16.gmra.mxu0 %v2422
  %v4149 = vpop.f32.mrf.mxu0
  %v4150 = vadd.f32 %v3981, %v4149
  %v4151 = vpop.f32.mrf.mxu0
  %v4152 = vadd.f32 %v3983, %v4151
  %4153 = vmatmul.bf16.gmra.mxu0 %v2424
  %v4154 = vpop.f32.mrf.mxu0
  %v4155 = vadd.f32 %v3986, %v4154
  %v4156 = vpop.f32.mrf.mxu0
  %v4157 = vadd.f32 %v3988, %v4156
  %4158 = vmatmul.bf16.gmra.mxu0 %v2426
  %v4159 = vpop.f32.mrf.mxu0
  %v4160 = vadd.f32 %v3991, %v4159
  %v4161 = vpop.f32.mrf.mxu0
  %v4162 = vadd.f32 %v3993, %v4161
  %4163 = vmatmul.bf16.gmra.mxu0 %v2428
  %v4164 = vpop.f32.mrf.mxu0
  %v4165 = vadd.f32 %v3996, %v4164
  %v4166 = vpop.f32.mrf.mxu0
  %v4167 = vadd.f32 %v3998, %v4166
  %4168 = vmatmul.bf16.gmra.mxu0 %v2430
  %v4169 = vpop.f32.mrf.mxu0
  %v4170 = vadd.f32 %v4001, %v4169
  %v4171 = vpop.f32.mrf.mxu0
  %v4172 = vadd.f32 %v4003, %v4171
  %4173 = vmatmul.bf16.gmra.mxu0 %v2432
  %v4174 = vpop.f32.mrf.mxu0
  %v4175 = vadd.f32 %v4006, %v4174
  %v4176 = vpop.f32.mrf.mxu0
  %v4177 = vadd.f32 %v4008, %v4176
  %4178 = vdwg.mxu0
  %v4179 = vmax.f32 %v3006, 0.0
  %v4180 = vmax.f32 %v3344, 0.0
  %v4181 = vmax.f32 %v3682, 0.0
  %v4182 = vmax.f32 %v4020, 0.0
  %v4183 = vmax.f32 %v3008, 0.0
  %v4184 = vmax.f32 %v3346, 0.0
  %v4185 = vmax.f32 %v3684, 0.0
  %v4186 = vmax.f32 %v4022, 0.0
  %v4187 = vmax.f32 %v3011, 0.0
  %v4188 = vmax.f32 %v3349, 0.0
  %v4189 = vmax.f32 %v3687, 0.0
  %v4190 = vmax.f32 %v4025, 0.0
  %v4191 = vmax.f32 %v3013, 0.0
  %v4192 = vmax.f32 %v3351, 0.0
  %v4193 = vmax.f32 %v3689, 0.0
  %v4194 = vmax.f32 %v4027, 0.0
  %v4195 = vmax.f32 %v3016, 0.0
  %v4196 = vmax.f32 %v3354, 0.0
  %v4197 = vmax.f32 %v3692, 0.0
  %v4198 = vmax.f32 %v4030, 0.0
  %v4199 = vmax.f32 %v3018, 0.0
  %v4200 = vmax.f32 %v3356, 0.0
  %v4201 = vmax.f32 %v3694, 0.0
  %v4202 = vmax.f32 %v4032, 0.0
  %v4203 = vmax.f32 %v3021, 0.0
  %v4204 = vmax.f32 %v3359, 0.0
  %v4205 = vmax.f32 %v3697, 0.0
  %v4206 = vmax.f32 %v4035, 0.0
  %v4207 = vmax.f32 %v3023, 0.0
  %v4208 = vmax.f32 %v3361, 0.0
  %v4209 = vmax.f32 %v3699, 0.0
  %v4210 = vmax.f32 %v4037, 0.0
  %v4211 = vmax.f32 %v3026, 0.0
  %v4212 = vmax.f32 %v3364, 0.0
  %v4213 = vmax.f32 %v3702, 0.0
  %v4214 = vmax.f32 %v4040, 0.0
  %v4215 = vmax.f32 %v3028, 0.0
  %v4216 = vmax.f32 %v3366, 0.0
  %v4217 = vmax.f32 %v3704, 0.0
  %v4218 = vmax.f32 %v4042, 0.0
  %v4219 = vmax.f32 %v3031, 0.0
  %v4220 = vmax.f32 %v3369, 0.0
  %v4221 = vmax.f32 %v3707, 0.0
  %v4222 = vmax.f32 %v4045, 0.0
  %v4223 = vmax.f32 %v3033, 0.0
  %v4224 = vmax.f32 %v3371, 0.0
  %v4225 = vmax.f32 %v3709, 0.0
  %v4226 = vmax.f32 %v4047, 0.0
  %v4227 = vmax.f32 %v3036, 0.0
  %v4228 = vmax.f32 %v3374, 0.0
  %v4229 = vmax.f32 %v3712, 0.0
  %v4230 = vmax.f32 %v4050, 0.0
  %v4231 = vmax.f32 %v3038, 0.0
  %v4232 = vmax.f32 %v3376, 0.0
  %v4233 = vmax.f32 %v3714, 0.0
  %v4234 = vmax.f32 %v4052, 0.0
  %v4235 = vmax.f32 %v3041, 0.0
  %v4236 = vmax.f32 %v3379, 0.0
  %v4237 = vmax.f32 %v3717, 0.0
  %v4238 = vmax.f32 %v4055, 0.0
  %v4239 = vmax.f32 %v3043, 0.0
  %v4240 = vmax.f32 %v3381, 0.0
  %v4241 = vmax.f32 %v3719, 0.0
  %v4242 = vmax.f32 %v4057, 0.0
  %v4243 = vmax.f32 %v3046, 0.0
  %v4244 = vmax.f32 %v3384, 0.0
  %v4245 = vmax.f32 %v3722, 0.0
  %v4246 = vmax.f32 %v4060, 0.0
  %v4247 = vmax.f32 %v3048, 0.0
  %v4248 = vmax.f32 %v3386, 0.0
  %v4249 = vmax.f32 %v3724, 0.0
  %v4250 = vmax.f32 %v4062, 0.0
  %v4251 = vmax.f32 %v3051, 0.0
  %v4252 = vmax.f32 %v3389, 0.0
  %v4253 = vmax.f32 %v3727, 0.0
  %v4254 = vmax.f32 %v4065, 0.0
  %v4255 = vmax.f32 %v3053, 0.0
  %v4256 = vmax.f32 %v3391, 0.0
  %v4257 = vmax.f32 %v3729, 0.0
  %v4258 = vmax.f32 %v4067, 0.0
  %v4259 = vmax.f32 %v3056, 0.0
  %v4260 = vmax.f32 %v3394, 0.0
  %v4261 = vmax.f32 %v3732, 0.0
  %v4262 = vmax.f32 %v4070, 0.0
  %v4263 = vmax.f32 %v3058, 0.0
  %v4264 = vmax.f32 %v3396, 0.0
  %v4265 = vmax.f32 %v3734, 0.0
  %v4266 = vmax.f32 %v4072, 0.0
  %v4267 = vmax.f32 %v3061, 0.0
  %v4268 = vmax.f32 %v3399, 0.0
  %v4269 = vmax.f32 %v3737, 0.0
  %v4270 = vmax.f32 %v4075, 0.0
  %v4271 = vmax.f32 %v3063, 0.0
  %v4272 = vmax.f32 %v3401, 0.0
  %v4273 = vmax.f32 %v3739, 0.0
  %v4274 = vmax.f32 %v4077, 0.0
  %v4275 = vmax.f32 %v3066, 0.0
  %v4276 = vmax.f32 %v3404, 0.0
  %v4277 = vmax.f32 %v3742, 0.0
  %v4278 = vmax.f32 %v4080, 0.0
  %v4279 = vmax.f32 %v3068, 0.0
  %v4280 = vmax.f32 %v3406, 0.0
  %v4281 = vmax.f32 %v3744, 0.0
  %v4282 = vmax.f32 %v4082, 0.0
  %v4283 = vmax.f32 %v3071, 0.0
  %v4284 = vmax.f32 %v3409, 0.0
  %v4285 = vmax.f32 %v3747, 0.0
  %v4286 = vmax.f32 %v4085, 0.0
  %v4287 = vmax.f32 %v3073, 0.0
  %v4288 = vmax.f32 %v3411, 0.0
  %v4289 = vmax.f32 %v3749, 0.0
  %v4290 = vmax.f32 %v4087, 0.0
  %v4291 = vmax.f32 %v3076, 0.0
  %v4292 = vmax.f32 %v3414, 0.0
  %v4293 = vmax.f32 %v3752, 0.0
  %v4294 = vmax.f32 %v4090, 0.0
  %v4295 = vmax.f32 %v3078, 0.0
  %v4296 = vmax.f32 %v3416, 0.0
  %v4297 = vmax.f32 %v3754, 0.0
  %v4298 = vmax.f32 %v4092, 0.0
  %v4299 = vmax.f32 %v3081, 0.0
  %v4300 = vmax.f32 %v3419, 0.0
  %v4301 = vmax.f32 %v3757, 0.0
  %v4302 = vmax.f32 %v4095, 0.0
  %v4303 = vmax.f32 %v3083, 0.0
  %v4304 = vmax.f32 %v3421, 0.0
  %v4305 = vmax.f32 %v3759, 0.0
  %v4306 = vmax.f32 %v4097, 0.0
  %v4307 = vmax.f32 %v3086, 0.0
  %v4308 = vmax.f32 %v3424, 0.0
  %v4309 = vmax.f32 %v3762, 0.0
  %v4310 = vmax.f32 %v4100, 0.0
  %v4311 = vmax.f32 %v3088, 0.0
  %v4312 = vmax.f32 %v3426, 0.0
  %v4313 = vmax.f32 %v3764, 0.0
  %v4314 = vmax.f32 %v4102, 0.0
  %v4315 = vmax.f32 %v3091, 0.0
  %v4316 = vmax.f32 %v3429, 0.0
  %v4317 = vmax.f32 %v3767, 0.0
  %v4318 = vmax.f32 %v4105, 0.0
  %v4319 = vmax.f32 %v3093, 0.0
  %v4320 = vmax.f32 %v3431, 0.0
  %v4321 = vmax.f32 %v3769, 0.0
  %v4322 = vmax.f32 %v4107, 0.0
  %v4323 = vmax.f32 %v3096, 0.0
  %v4324 = vmax.f32 %v3434, 0.0
  %v4325 = vmax.f32 %v3772, 0.0
  %v4326 = vmax.f32 %v4110, 0.0
  %v4327 = vmax.f32 %v3098, 0.0
  %v4328 = vmax.f32 %v3436, 0.0
  %v4329 = vmax.f32 %v3774, 0.0
  %v4330 = vmax.f32 %v4112, 0.0
  %v4331 = vmax.f32 %v3101, 0.0
  %v4332 = vmax.f32 %v3439, 0.0
  %v4333 = vmax.f32 %v3777, 0.0
  %v4334 = vmax.f32 %v4115, 0.0
  %v4335 = vmax.f32 %v3103, 0.0
  %v4336 = vmax.f32 %v3441, 0.0
  %v4337 = vmax.f32 %v3779, 0.0
  %v4338 = vmax.f32 %v4117, 0.0
  %v4339 = vmax.f32 %v3106, 0.0
  %v4340 = vmax.f32 %v3444, 0.0
  %v4341 = vmax.f32 %v3782, 0.0
  %v4342 = vmax.f32 %v4120, 0.0
  %v4343 = vmax.f32 %v3108, 0.0
  %v4344 = vmax.f32 %v3446, 0.0
  %v4345 = vmax.f32 %v3784, 0.0
  %v4346 = vmax.f32 %v4122, 0.0
  %v4347 = vmax.f32 %v3111, 0.0
  %v4348 = vmax.f32 %v3449, 0.0
  %v4349 = vmax.f32 %v3787, 0.0
  %v4350 = vmax.f32 %v4125, 0.0
  %v4351 = vmax.f32 %v3113, 0.0
  %v4352 = vmax.f32 %v3451, 0.0
  %v4353 = vmax.f32 %v3789, 0.0
  %v4354 = vmax.f32 %v4127, 0.0
  %v4355 = vmax.f32 %v3116, 0.0
  %v4356 = vmax.f32 %v3454, 0.0
  %v4357 = vmax.f32 %v3792, 0.0
  %v4358 = vmax.f32 %v4130, 0.0
  %v4359 = vmax.f32 %v3118, 0.0
  %v4360 = vmax.f32 %v3456, 0.0
  %v4361 = vmax.f32 %v3794, 0.0
  %v4362 = vmax.f32 %v4132, 0.0
  %v4363 = vmax.f32 %v3121, 0.0
  %v4364 = vmax.f32 %v3459, 0.0
  %v4365 = vmax.f32 %v3797, 0.0
  %v4366 = vmax.f32 %v4135, 0.0
  %v4367 = vmax.f32 %v3123, 0.0
  %v4368 = vmax.f32 %v3461, 0.0
  %v4369 = vmax.f32 %v3799, 0.0
  %v4370 = vmax.f32 %v4137, 0.0
  %v4371 = vmax.f32 %v3126, 0.0
  %v4372 = vmax.f32 %v3464, 0.0
  %v4373 = vmax.f32 %v3802, 0.0
  %v4374 = vmax.f32 %v4140, 0.0
  %v4375 = vmax.f32 %v3128, 0.0
  %v4376 = vmax.f32 %v3466, 0.0
  %v4377 = vmax.f32 %v3804, 0.0
  %v4378 = vmax.f32 %v4142, 0.0
  %v4379 = vmax.f32 %v3131, 0.0
  %v4380 = vmax.f32 %v3469, 0.0
  %v4381 = vmax.f32 %v3807, 0.0
  %v4382 = vmax.f32 %v4145, 0.0
  %v4383 = vmax.f32 %v3133, 0.0
  %v4384 = vmax.f32 %v3471, 0.0
  %v4385 = vmax.f32 %v3809, 0.0
  %v4386 = vmax.f32 %v4147, 0.0
  %v4387 = vmax.f32 %v3136, 0.0
  %v4388 = vmax.f32 %v3474, 0.0
  %v4389 = vmax.f32 %v3812, 0.0
  %v4390 = vmax.f32 %v4150, 0.0
  %v4391 = vmax.f32 %v3138, 0.0
  %v4392 = vmax.f32 %v3476, 0.0
  %v4393 = vmax.f32 %v3814, 0.0
  %v4394 = vmax.f32 %v4152, 0.0
  %v4395 = vmax.f32 %v3141, 0.0
  %v4396 = vmax.f32 %v3479, 0.0
  %v4397 = vmax.f32 %v3817, 0.0
  %v4398 = vmax.f32 %v4155, 0.0
  %v4399 = vmax.f32 %v3143, 0.0
  %v4400 = vmax.f32 %v3481, 0.0
  %v4401 = vmax.f32 %v3819, 0.0
  %v4402 = vmax.f32 %v4157, 0.0
  %v4403 = vmax.f32 %v3146, 0.0
  %v4404 = vmax.f32 %v3484, 0.0
  %v4405 = vmax.f32 %v3822, 0.0
  %v4406 = vmax.f32 %v4160, 0.0
  %v4407 = vmax.f32 %v3148, 0.0
  %v4408 = vmax.f32 %v3486, 0.0
  %v4409 = vmax.f32 %v3824, 0.0
  %v4410 = vmax.f32 %v4162, 0.0
  %v4411 = vmax.f32 %v3151, 0.0
  %v4412 = vmax.f32 %v3489, 0.0
  %v4413 = vmax.f32 %v3827, 0.0
  %v4414 = vmax.f32 %v4165, 0.0
  %v4415 = vmax.f32 %v3153, 0.0
  %v4416 = vmax.f32 %v3491, 0.0
  %v4417 = vmax.f32 %v3829, 0.0
  %v4418 = vmax.f32 %v4167, 0.0
  %v4419 = vmax.f32 %v3156, 0.0
  %v4420 = vmax.f32 %v3494, 0.0
  %v4421 = vmax.f32 %v3832, 0.0
  %v4422 = vmax.f32 %v4170, 0.0
  %v4423 = vmax.f32 %v3158, 0.0
  %v4424 = vmax.f32 %v3496, 0.0
  %v4425 = vmax.f32 %v3834, 0.0
  %v4426 = vmax.f32 %v4172, 0.0
  %v4427 = vmax.f32 %v3161, 0.0
  %v4428 = vmax.f32 %v3499, 0.0
  %v4429 = vmax.f32 %v3837, 0.0
  %v4430 = vmax.f32 %v4175, 0.0
  %v4431 = vmax.f32 %v3163, 0.0
  %v4432 = vmax.f32 %v3501, 0.0
  %v4433 = vmax.f32 %v3839, 0.0
  %v4434 = vmax.f32 %v4177, 0.0
  %v4435 = vpack.c.bf16 %v4183, %v4179
  %v4436 = vpack.c.bf16 %v4184, %v4180
  %v4437 = vpack.c.bf16 %v4185, %v4181
  %v4438 = vpack.c.bf16 %v4186, %v4182
  %v4439 = vpack.c.bf16 %v4191, %v4187
  %v4440 = vpack.c.bf16 %v4192, %v4188
  %v4441 = vpack.c.bf16 %v4193, %v4189
  %v4442 = vpack.c.bf16 %v4194, %v4190
  %v4443 = vpack.c.bf16 %v4199, %v4195
  %v4444 = vpack.c.bf16 %v4200, %v4196
  %v4445 = vpack.c.bf16 %v4201, %v4197
  %v4446 = vpack.c.bf16 %v4202, %v4198
  %v4447 = vpack.c.bf16 %v4207, %v4203
  %v4448 = vpack.c.bf16 %v4208, %v4204
  %v4449 = vpack.c.bf16 %v4209, %v4205
  %v4450 = vpack.c.bf16 %v4210, %v4206
  %v4451 = vpack.c.bf16 %v4215, %v4211
  %v4452 = vpack.c.bf16 %v4216, %v4212
  %v4453 = vpack.c.bf16 %v4217, %v4213
  %v4454 = vpack.c.bf16 %v4218, %v4214
  %v4455 = vpack.c.bf16 %v4223, %v4219
  %v4456 = vpack.c.bf16 %v4224, %v4220
  %v4457 = vpack.c.bf16 %v4225, %v4221
  %v4458 = vpack.c.bf16 %v4226, %v4222
  %v4459 = vpack.c.bf16 %v4231, %v4227
  %v4460 = vpack.c.bf16 %v4232, %v4228
  %v4461 = vpack.c.bf16 %v4233, %v4229
  %v4462 = vpack.c.bf16 %v4234, %v4230
  %v4463 = vpack.c.bf16 %v4239, %v4235
  %v4464 = vpack.c.bf16 %v4240, %v4236
  %v4465 = vpack.c.bf16 %v4241, %v4237
  %v4466 = vpack.c.bf16 %v4242, %v4238
  %v4467 = vpack.c.bf16 %v4247, %v4243
  %v4468 = vpack.c.bf16 %v4248, %v4244
  %v4469 = vpack.c.bf16 %v4249, %v4245
  %v4470 = vpack.c.bf16 %v4250, %v4246
  %v4471 = vpack.c.bf16 %v4255, %v4251
  %v4472 = vpack.c.bf16 %v4256, %v4252
  %v4473 = vpack.c.bf16 %v4257, %v4253
  %v4474 = vpack.c.bf16 %v4258, %v4254
  %v4475 = vpack.c.bf16 %v4263, %v4259
  %v4476 = vpack.c.bf16 %v4264, %v4260
  %v4477 = vpack.c.bf16 %v4265, %v4261
  %v4478 = vpack.c.bf16 %v4266, %v4262
  %v4479 = vpack.c.bf16 %v4271, %v4267
  %v4480 = vpack.c.bf16 %v4272, %v4268
  %v4481 = vpack.c.bf16 %v4273, %v4269
  %v4482 = vpack.c.bf16 %v4274, %v4270
  %v4483 = vpack.c.bf16 %v4279, %v4275
  %v4484 = vpack.c.bf16 %v4280, %v4276
  %v4485 = vpack.c.bf16 %v4281, %v4277
  %v4486 = vpack.c.bf16 %v4282, %v4278
  %v4487 = vpack.c.bf16 %v4287, %v4283
  %v4488 = vpack.c.bf16 %v4288, %v4284
  %v4489 = vpack.c.bf16 %v4289, %v4285
  %v4490 = vpack.c.bf16 %v4290, %v4286
  %v4491 = vpack.c.bf16 %v4295, %v4291
  %v4492 = vpack.c.bf16 %v4296, %v4292
  %v4493 = vpack.c.bf16 %v4297, %v4293
  %v4494 = vpack.c.bf16 %v4298, %v4294
  %v4495 = vpack.c.bf16 %v4303, %v4299
  %v4496 = vpack.c.bf16 %v4304, %v4300
  %v4497 = vpack.c.bf16 %v4305, %v4301
  %v4498 = vpack.c.bf16 %v4306, %v4302
  %v4499 = vpack.c.bf16 %v4311, %v4307
  %v4500 = vpack.c.bf16 %v4312, %v4308
  %v4501 = vpack.c.bf16 %v4313, %v4309
  %v4502 = vpack.c.bf16 %v4314, %v4310
  %v4503 = vpack.c.bf16 %v4319, %v4315
  %v4504 = vpack.c.bf16 %v4320, %v4316
  %v4505 = vpack.c.bf16 %v4321, %v4317
  %v4506 = vpack.c.bf16 %v4322, %v4318
  %v4507 = vpack.c.bf16 %v4327, %v4323
  %v4508 = vpack.c.bf16 %v4328, %v4324
  %v4509 = vpack.c.bf16 %v4329, %v4325
  %v4510 = vpack.c.bf16 %v4330, %v4326
  %v4511 = vpack.c.bf16 %v4335, %v4331
  %v4512 = vpack.c.bf16 %v4336, %v4332
  %v4513 = vpack.c.bf16 %v4337, %v4333
  %v4514 = vpack.c.bf16 %v4338, %v4334
  %v4515 = vpack.c.bf16 %v4343, %v4339
  %v4516 = vpack.c.bf16 %v4344, %v4340
  %v4517 = vpack.c.bf16 %v4345, %v4341
  %v4518 = vpack.c.bf16 %v4346, %v4342
  %v4519 = vpack.c.bf16 %v4351, %v4347
  %v4520 = vpack.c.bf16 %v4352, %v4348
  %v4521 = vpack.c.bf16 %v4353, %v4349
  %v4522 = vpack.c.bf16 %v4354, %v4350
  %v4523 = vpack.c.bf16 %v4359, %v4355
  %v4524 = vpack.c.bf16 %v4360, %v4356
  %v4525 = vpack.c.bf16 %v4361, %v4357
  %v4526 = vpack.c.bf16 %v4362, %v4358
  %v4527 = vpack.c.bf16 %v4367, %v4363
  %v4528 = vpack.c.bf16 %v4368, %v4364
  %v4529 = vpack.c.bf16 %v4369, %v4365
  %v4530 = vpack.c.bf16 %v4370, %v4366
  %v4531 = vpack.c.bf16 %v4375, %v4371
  %v4532 = vpack.c.bf16 %v4376, %v4372
  %v4533 = vpack.c.bf16 %v4377, %v4373
  %v4534 = vpack.c.bf16 %v4378, %v4374
  %v4535 = vpack.c.bf16 %v4383, %v4379
  %v4536 = vpack.c.bf16 %v4384, %v4380
  %v4537 = vpack.c.bf16 %v4385, %v4381
  %v4538 = vpack.c.bf16 %v4386, %v4382
  %v4539 = vpack.c.bf16 %v4391, %v4387
  %v4540 = vpack.c.bf16 %v4392, %v4388
  %v4541 = vpack.c.bf16 %v4393, %v4389
  %v4542 = vpack.c.bf16 %v4394, %v4390
  %v4543 = vpack.c.bf16 %v4399, %v4395
  %v4544 = vpack.c.bf16 %v4400, %v4396
  %v4545 = vpack.c.bf16 %v4401, %v4397
  %v4546 = vpack.c.bf16 %v4402, %v4398
  %v4547 = vpack.c.bf16 %v4407, %v4403
  %v4548 = vpack.c.bf16 %v4408, %v4404
  %v4549 = vpack.c.bf16 %v4409, %v4405
  %v4550 = vpack.c.bf16 %v4410, %v4406
  %v4551 = vpack.c.bf16 %v4415, %v4411
  %v4552 = vpack.c.bf16 %v4416, %v4412
  %v4553 = vpack.c.bf16 %v4417, %v4413
  %v4554 = vpack.c.bf16 %v4418, %v4414
  %v4555 = vpack.c.bf16 %v4423, %v4419
  %v4556 = vpack.c.bf16 %v4424, %v4420
  %v4557 = vpack.c.bf16 %v4425, %v4421
  %v4558 = vpack.c.bf16 %v4426, %v4422
  %v4559 = vpack.c.bf16 %v4431, %v4427
  %v4560 = vpack.c.bf16 %v4432, %v4428
  %v4561 = vpack.c.bf16 %v4433, %v4429
  %v4562 = vpack.c.bf16 %v4434, %v4430
  %v4563 = vld [vmem:[%s5] sm:$0xff]
  %v4564 = vld [vmem:[%s5 + $0x8] sm:$0xff]
  %v4565 = vld [vmem:[%s5 + $0x10] sm:$0xff]
  %v4566 = vld [vmem:[%s5 + $0x18] sm:$0xff]
  %v4567 = vld [vmem:[%s5 + $0x20] sm:$0xff]
  %v4568 = vld [vmem:[%s5 + $0x28] sm:$0xff]
  %v4569 = vld [vmem:[%s5 + $0x30] sm:$0xff]
  %v4570 = vld [vmem:[%s5 + $0x38] sm:$0xff]
  %v4571 = vld [vmem:[%s5 + $0x40] sm:$0xff]
  %v4572 = vld [vmem:[%s5 + $0x48] sm:$0xff]
  %v4573 = vld [vmem:[%s5 + $0x50] sm:$0xff]
  %v4574 = vld [vmem:[%s5 + $0x58] sm:$0xff]
  %v4575 = vld [vmem:[%s5 + $0x60] sm:$0xff]
  %v4576 = vld [vmem:[%s5 + $0x68] sm:$0xff]
  %v4577 = vld [vmem:[%s5 + $0x70] sm:$0xff]
  %v4578 = vld [vmem:[%s5 + $0x78] sm:$0xff]
  %v4579 = vld [vmem:[%s5 + $0x80] sm:$0xff]
  %v4580 = vld [vmem:[%s5 + $0x88] sm:$0xff]
  %v4581 = vld [vmem:[%s5 + $0x90] sm:$0xff]
  %v4582 = vld [vmem:[%s5 + $0x98] sm:$0xff]
  %v4583 = vld [vmem:[%s5 + $0xa0] sm:$0xff]
  %v4584 = vld [vmem:[%s5 + $0xa8] sm:$0xff]
  %v4585 = vld [vmem:[%s5 + $0xb0] sm:$0xff]
  %v4586 = vld [vmem:[%s5 + $0xb8] sm:$0xff]
  %v4587 = vld [vmem:[%s5 + $0xc0] sm:$0xff]
  %v4588 = vld [vmem:[%s5 + $0xc8] sm:$0xff]
  %v4589 = vld [vmem:[%s5 + $0xd0] sm:$0xff]
  %v4590 = vld [vmem:[%s5 + $0xd8] sm:$0xff]
  %v4591 = vld [vmem:[%s5 + $0xe0] sm:$0xff]
  %v4592 = vld [vmem:[%s5 + $0xe8] sm:$0xff]
  %v4593 = vld [vmem:[%s5 + $0xf0] sm:$0xff]
  %v4594 = vld [vmem:[%s5 + $0xf8] sm:$0xff]
  %v4595 = vld [vmem:[%s5 + $0x100] sm:$0xff]
  %v4596 = vld [vmem:[%s5 + $0x108] sm:$0xff]
  %v4597 = vld [vmem:[%s5 + $0x110] sm:$0xff]
  %v4598 = vld [vmem:[%s5 + $0x118] sm:$0xff]
  %v4599 = vld [vmem:[%s5 + $0x120] sm:$0xff]
  %v4600 = vld [vmem:[%s5 + $0x128] sm:$0xff]
  %v4601 = vld [vmem:[%s5 + $0x130] sm:$0xff]
  %v4602 = vld [vmem:[%s5 + $0x138] sm:$0xff]
  %v4603 = vld [vmem:[%s5 + $0x140] sm:$0xff]
  %v4604 = vld [vmem:[%s5 + $0x148] sm:$0xff]
  %v4605 = vld [vmem:[%s5 + $0x150] sm:$0xff]
  %v4606 = vld [vmem:[%s5 + $0x158] sm:$0xff]
  %v4607 = vld [vmem:[%s5 + $0x160] sm:$0xff]
  %v4608 = vld [vmem:[%s5 + $0x168] sm:$0xff]
  %v4609 = vld [vmem:[%s5 + $0x170] sm:$0xff]
  %v4610 = vld [vmem:[%s5 + $0x178] sm:$0xff]
  %v4611 = vld [vmem:[%s5 + $0x180] sm:$0xff]
  %v4612 = vld [vmem:[%s5 + $0x188] sm:$0xff]
  %v4613 = vld [vmem:[%s5 + $0x190] sm:$0xff]
  %v4614 = vld [vmem:[%s5 + $0x198] sm:$0xff]
  %v4615 = vld [vmem:[%s5 + $0x1a0] sm:$0xff]
  %v4616 = vld [vmem:[%s5 + $0x1a8] sm:$0xff]
  %v4617 = vld [vmem:[%s5 + $0x1b0] sm:$0xff]
  %v4618 = vld [vmem:[%s5 + $0x1b8] sm:$0xff]
  %v4619 = vld [vmem:[%s5 + $0x1c0] sm:$0xff]
  %v4620 = vld [vmem:[%s5 + $0x1c8] sm:$0xff]
  %v4621 = vld [vmem:[%s5 + $0x1d0] sm:$0xff]
  %v4622 = vld [vmem:[%s5 + $0x1d8] sm:$0xff]
  %v4623 = vld [vmem:[%s5 + $0x1e0] sm:$0xff]
  %v4624 = vld [vmem:[%s5 + $0x1e8] sm:$0xff]
  %v4625 = vld [vmem:[%s5 + $0x1f0] sm:$0xff]
  %v4626 = vld [vmem:[%s5 + $0x1f8] sm:$0xff]
  %v4627 = vld [vmem:[%s5 + $0x200] sm:$0xff]
  %v4628 = vld [vmem:[%s5 + $0x208] sm:$0xff]
  %v4629 = vld [vmem:[%s5 + $0x210] sm:$0xff]
  %v4630 = vld [vmem:[%s5 + $0x218] sm:$0xff]
  %v4631 = vld [vmem:[%s5 + $0x220] sm:$0xff]
  %v4632 = vld [vmem:[%s5 + $0x228] sm:$0xff]
  %v4633 = vld [vmem:[%s5 + $0x230] sm:$0xff]
  %v4634 = vld [vmem:[%s5 + $0x238] sm:$0xff]
  %v4635 = vld [vmem:[%s5 + $0x240] sm:$0xff]
  %v4636 = vld [vmem:[%s5 + $0x248] sm:$0xff]
  %v4637 = vld [vmem:[%s5 + $0x250] sm:$0xff]
  %v4638 = vld [vmem:[%s5 + $0x258] sm:$0xff]
  %v4639 = vld [vmem:[%s5 + $0x260] sm:$0xff]
  %v4640 = vld [vmem:[%s5 + $0x268] sm:$0xff]
  %v4641 = vld [vmem:[%s5 + $0x270] sm:$0xff]
  %v4642 = vld [vmem:[%s5 + $0x278] sm:$0xff]
  %v4643 = vld [vmem:[%s5 + $0x280] sm:$0xff]
  %v4644 = vld [vmem:[%s5 + $0x288] sm:$0xff]
  %v4645 = vld [vmem:[%s5 + $0x290] sm:$0xff]
  %v4646 = vld [vmem:[%s5 + $0x298] sm:$0xff]
  %v4647 = vld [vmem:[%s5 + $0x2a0] sm:$0xff]
  %v4648 = vld [vmem:[%s5 + $0x2a8] sm:$0xff]
  %v4649 = vld [vmem:[%s5 + $0x2b0] sm:$0xff]
  %v4650 = vld [vmem:[%s5 + $0x2b8] sm:$0xff]
  %v4651 = vld [vmem:[%s5 + $0x2c0] sm:$0xff]
  %v4652 = vld [vmem:[%s5 + $0x2c8] sm:$0xff]
  %v4653 = vld [vmem:[%s5 + $0x2d0] sm:$0xff]
  %v4654 = vld [vmem:[%s5 + $0x2d8] sm:$0xff]
  %v4655 = vld [vmem:[%s5 + $0x2e0] sm:$0xff]
  %v4656 = vld [vmem:[%s5 + $0x2e8] sm:$0xff]
  %v4657 = vld [vmem:[%s5 + $0x2f0] sm:$0xff]
  %v4658 = vld [vmem:[%s5 + $0x2f8] sm:$0xff]
  %v4659 = vld [vmem:[%s5 + $0x300] sm:$0xff]
  %v4660 = vld [vmem:[%s5 + $0x308] sm:$0xff]
  %v4661 = vld [vmem:[%s5 + $0x310] sm:$0xff]
  %v4662 = vld [vmem:[%s5 + $0x318] sm:$0xff]
  %v4663 = vld [vmem:[%s5 + $0x320] sm:$0xff]
  %v4664 = vld [vmem:[%s5 + $0x328] sm:$0xff]
  %v4665 = vld [vmem:[%s5 + $0x330] sm:$0xff]
  %v4666 = vld [vmem:[%s5 + $0x338] sm:$0xff]
  %v4667 = vld [vmem:[%s5 + $0x340] sm:$0xff]
  %v4668 = vld [vmem:[%s5 + $0x348] sm:$0xff]
  %v4669 = vld [vmem:[%s5 + $0x350] sm:$0xff]
  %v4670 = vld [vmem:[%s5 + $0x358] sm:$0xff]
  %v4671 = vld [vmem:[%s5 + $0x360] sm:$0xff]
  %v4672 = vld [vmem:[%s5 + $0x368] sm:$0xff]
  %v4673 = vld [vmem:[%s5 + $0x370] sm:$0xff]
  %v4674 = vld [vmem:[%s5 + $0x378] sm:$0xff]
  %v4675 = vld [vmem:[%s5 + $0x380] sm:$0xff]
  %v4676 = vld [vmem:[%s5 + $0x388] sm:$0xff]
  %v4677 = vld [vmem:[%s5 + $0x390] sm:$0xff]
  %v4678 = vld [vmem:[%s5 + $0x398] sm:$0xff]
  %v4679 = vld [vmem:[%s5 + $0x3a0] sm:$0xff]
  %v4680 = vld [vmem:[%s5 + $0x3a8] sm:$0xff]
  %v4681 = vld [vmem:[%s5 + $0x3b0] sm:$0xff]
  %v4682 = vld [vmem:[%s5 + $0x3b8] sm:$0xff]
  %v4683 = vld [vmem:[%s5 + $0x3c0] sm:$0xff]
  %v4684 = vld [vmem:[%s5 + $0x3c8] sm:$0xff]
  %v4685 = vld [vmem:[%s5 + $0x3d0] sm:$0xff]
  %v4686 = vld [vmem:[%s5 + $0x3d8] sm:$0xff]
  %v4687 = vld [vmem:[%s5 + $0x3e0] sm:$0xff]
  %v4688 = vld [vmem:[%s5 + $0x3e8] sm:$0xff]
  %v4689 = vld [vmem:[%s5 + $0x3f0] sm:$0xff]
  %v4690 = vld [vmem:[%s5 + $0x3f8] sm:$0xff]
  %v4691 = vld [vmem:[%s6] sm:$0xf]
  %v4693 = vperm.slane %v4691, 0
  %v4694 = vperm.slane %v4691, 1
  %v4695 = vperm.slane %v4691, 2
  %v4696 = vperm.slane %v4691, 3
  %v4829 = vunpack.c.l.b16 %v4563
  %v4830 = vunpack.c.h.b16 %v4563
  %v4831 = vunpack.c.l.b16 %v4564
  %v4832 = vunpack.c.h.b16 %v4564
  %v4833 = vunpack.c.l.b16 %v4565
  %v4834 = vunpack.c.h.b16 %v4565
  %v4835 = vunpack.c.l.b16 %v4566
  %v4836 = vunpack.c.h.b16 %v4566
  %v4837 = vunpack.c.l.b16 %v4567
  %v4838 = vunpack.c.h.b16 %v4567
  %v4839 = vunpack.c.l.b16 %v4568
  %v4840 = vunpack.c.h.b16 %v4568
  %v4841 = vunpack.c.l.b16 %v4569
  %v4842 = vunpack.c.h.b16 %v4569
  %v4843 = vunpack.c.l.b16 %v4570
  %v4844 = vunpack.c.h.b16 %v4570
  %v4845 = vunpack.c.l.b16 %v4571
  %v4846 = vunpack.c.h.b16 %v4571
  %v4847 = vunpack.c.l.b16 %v4572
  %v4848 = vunpack.c.h.b16 %v4572
  %v4849 = vunpack.c.l.b16 %v4573
  %v4850 = vunpack.c.h.b16 %v4573
  %v4851 = vunpack.c.l.b16 %v4574
  %v4852 = vunpack.c.h.b16 %v4574
  %v4853 = vunpack.c.l.b16 %v4575
  %v4854 = vunpack.c.h.b16 %v4575
  %v4855 = vunpack.c.l.b16 %v4576
  %v4856 = vunpack.c.h.b16 %v4576
  %v4857 = vunpack.c.l.b16 %v4577
  %v4858 = vunpack.c.h.b16 %v4577
  %v4859 = vunpack.c.l.b16 %v4578
  %v4860 = vunpack.c.h.b16 %v4578
  %v4861 = vunpack.c.l.b16 %v4579
  %v4862 = vunpack.c.h.b16 %v4579
  %v4863 = vunpack.c.l.b16 %v4580
  %v4864 = vunpack.c.h.b16 %v4580
  %v4865 = vunpack.c.l.b16 %v4581
  %v4866 = vunpack.c.h.b16 %v4581
  %v4867 = vunpack.c.l.b16 %v4582
  %v4868 = vunpack.c.h.b16 %v4582
  %v4869 = vunpack.c.l.b16 %v4583
  %v4870 = vunpack.c.h.b16 %v4583
  %v4871 = vunpack.c.l.b16 %v4584
  %v4872 = vunpack.c.h.b16 %v4584
  %v4873 = vunpack.c.l.b16 %v4585
  %v4874 = vunpack.c.h.b16 %v4585
  %v4875 = vunpack.c.l.b16 %v4586
  %v4876 = vunpack.c.h.b16 %v4586
  %v4877 = vunpack.c.l.b16 %v4587
  %v4878 = vunpack.c.h.b16 %v4587
  %v4879 = vunpack.c.l.b16 %v4588
  %v4880 = vunpack.c.h.b16 %v4588
  %v4881 = vunpack.c.l.b16 %v4589
  %v4882 = vunpack.c.h.b16 %v4589
  %v4883 = vunpack.c.l.b16 %v4590
  %v4884 = vunpack.c.h.b16 %v4590
  %v4885 = vunpack.c.l.b16 %v4591
  %v4886 = vunpack.c.h.b16 %v4591
  %v4887 = vunpack.c.l.b16 %v4592
  %v4888 = vunpack.c.h.b16 %v4592
  %v4889 = vunpack.c.l.b16 %v4593
  %v4890 = vunpack.c.h.b16 %v4593
  %v4891 = vunpack.c.l.b16 %v4594
  %v4892 = vunpack.c.h.b16 %v4594
  %v4893 = vunpack.c.l.b16 %v4595
  %v4894 = vunpack.c.h.b16 %v4595
  %v4895 = vunpack.c.l.b16 %v4596
  %v4896 = vunpack.c.h.b16 %v4596
  %v4897 = vunpack.c.l.b16 %v4597
  %v4898 = vunpack.c.h.b16 %v4597
  %v4899 = vunpack.c.l.b16 %v4598
  %v4900 = vunpack.c.h.b16 %v4598
  %v4901 = vunpack.c.l.b16 %v4599
  %v4902 = vunpack.c.h.b16 %v4599
  %v4903 = vunpack.c.l.b16 %v4600
  %v4904 = vunpack.c.h.b16 %v4600
  %v4905 = vunpack.c.l.b16 %v4601
  %v4906 = vunpack.c.h.b16 %v4601
  %v4907 = vunpack.c.l.b16 %v4602
  %v4908 = vunpack.c.h.b16 %v4602
  %v4909 = vunpack.c.l.b16 %v4603
  %v4910 = vunpack.c.h.b16 %v4603
  %v4911 = vunpack.c.l.b16 %v4604
  %v4912 = vunpack.c.h.b16 %v4604
  %v4913 = vunpack.c.l.b16 %v4605
  %v4914 = vunpack.c.h.b16 %v4605
  %v4915 = vunpack.c.l.b16 %v4606
  %v4916 = vunpack.c.h.b16 %v4606
  %v4917 = vunpack.c.l.b16 %v4607
  %v4918 = vunpack.c.h.b16 %v4607
  %v4919 = vunpack.c.l.b16 %v4608
  %v4920 = vunpack.c.h.b16 %v4608
  %v4921 = vunpack.c.l.b16 %v4609
  %v4922 = vunpack.c.h.b16 %v4609
  %v4923 = vunpack.c.l.b16 %v4610
  %v4924 = vunpack.c.h.b16 %v4610
  %v4925 = vunpack.c.l.b16 %v4611
  %v4926 = vunpack.c.h.b16 %v4611
  %v4927 = vunpack.c.l.b16 %v4612
  %v4928 = vunpack.c.h.b16 %v4612
  %v4929 = vunpack.c.l.b16 %v4613
  %v4930 = vunpack.c.h.b16 %v4613
  %v4931 = vunpack.c.l.b16 %v4614
  %v4932 = vunpack.c.h.b16 %v4614
  %v4933 = vunpack.c.l.b16 %v4615
  %v4934 = vunpack.c.h.b16 %v4615
  %v4935 = vunpack.c.l.b16 %v4616
  %v4936 = vunpack.c.h.b16 %v4616
  %v4937 = vunpack.c.l.b16 %v4617
  %v4938 = vunpack.c.h.b16 %v4617
  %v4939 = vunpack.c.l.b16 %v4618
  %v4940 = vunpack.c.h.b16 %v4618
  %v4941 = vunpack.c.l.b16 %v4619
  %v4942 = vunpack.c.h.b16 %v4619
  %v4943 = vunpack.c.l.b16 %v4620
  %v4944 = vunpack.c.h.b16 %v4620
  %v4945 = vunpack.c.l.b16 %v4621
  %v4946 = vunpack.c.h.b16 %v4621
  %v4947 = vunpack.c.l.b16 %v4622
  %v4948 = vunpack.c.h.b16 %v4622
  %v4949 = vunpack.c.l.b16 %v4623
  %v4950 = vunpack.c.h.b16 %v4623
  %v4951 = vunpack.c.l.b16 %v4624
  %v4952 = vunpack.c.h.b16 %v4624
  %v4953 = vunpack.c.l.b16 %v4625
  %v4954 = vunpack.c.h.b16 %v4625
  %v4955 = vunpack.c.l.b16 %v4626
  %v4956 = vunpack.c.h.b16 %v4626
  %v4957 = vunpack.c.l.b16 %v4627
  %v4958 = vunpack.c.h.b16 %v4627
  %v4959 = vunpack.c.l.b16 %v4628
  %v4960 = vunpack.c.h.b16 %v4628
  %v4961 = vunpack.c.l.b16 %v4629
  %v4962 = vunpack.c.h.b16 %v4629
  %v4963 = vunpack.c.l.b16 %v4630
  %v4964 = vunpack.c.h.b16 %v4630
  %v4965 = vunpack.c.l.b16 %v4631
  %v4966 = vunpack.c.h.b16 %v4631
  %v4967 = vunpack.c.l.b16 %v4632
  %v4968 = vunpack.c.h.b16 %v4632
  %v4969 = vunpack.c.l.b16 %v4633
  %v4970 = vunpack.c.h.b16 %v4633
  %v4971 = vunpack.c.l.b16 %v4634
  %v4972 = vunpack.c.h.b16 %v4634
  %v4973 = vunpack.c.l.b16 %v4635
  %v4974 = vunpack.c.h.b16 %v4635
  %v4975 = vunpack.c.l.b16 %v4636
  %v4976 = vunpack.c.h.b16 %v4636
  %v4977 = vunpack.c.l.b16 %v4637
  %v4978 = vunpack.c.h.b16 %v4637
  %v4979 = vunpack.c.l.b16 %v4638
  %v4980 = vunpack.c.h.b16 %v4638
  %v4981 = vunpack.c.l.b16 %v4639
  %v4982 = vunpack.c.h.b16 %v4639
  %v4983 = vunpack.c.l.b16 %v4640
  %v4984 = vunpack.c.h.b16 %v4640
  %v4985 = vunpack.c.l.b16 %v4641
  %v4986 = vunpack.c.h.b16 %v4641
  %v4987 = vunpack.c.l.b16 %v4642
  %v4988 = vunpack.c.h.b16 %v4642
  %v4989 = vunpack.c.l.b16 %v4643
  %v4990 = vunpack.c.h.b16 %v4643
  %v4991 = vunpack.c.l.b16 %v4644
  %v4992 = vunpack.c.h.b16 %v4644
  %v4993 = vunpack.c.l.b16 %v4645
  %v4994 = vunpack.c.h.b16 %v4645
  %v4995 = vunpack.c.l.b16 %v4646
  %v4996 = vunpack.c.h.b16 %v4646
  %v4997 = vunpack.c.l.b16 %v4647
  %v4998 = vunpack.c.h.b16 %v4647
  %v4999 = vunpack.c.l.b16 %v4648
  %v5000 = vunpack.c.h.b16 %v4648
  %v5001 = vunpack.c.l.b16 %v4649
  %v5002 = vunpack.c.h.b16 %v4649
  %v5003 = vunpack.c.l.b16 %v4650
  %v5004 = vunpack.c.h.b16 %v4650
  %v5005 = vunpack.c.l.b16 %v4651
  %v5006 = vunpack.c.h.b16 %v4651
  %v5007 = vunpack.c.l.b16 %v4652
  %v5008 = vunpack.c.h.b16 %v4652
  %v5009 = vunpack.c.l.b16 %v4653
  %v5010 = vunpack.c.h.b16 %v4653
  %v5011 = vunpack.c.l.b16 %v4654
  %v5012 = vunpack.c.h.b16 %v4654
  %v5013 = vunpack.c.l.b16 %v4655
  %v5014 = vunpack.c.h.b16 %v4655
  %v5015 = vunpack.c.l.b16 %v4656
  %v5016 = vunpack.c.h.b16 %v4656
  %v5017 = vunpack.c.l.b16 %v4657
  %v5018 = vunpack.c.h.b16 %v4657
  %v5019 = vunpack.c.l.b16 %v4658
  %v5020 = vunpack.c.h.b16 %v4658
  %v5021 = vunpack.c.l.b16 %v4659
  %v5022 = vunpack.c.h.b16 %v4659
  %v5023 = vunpack.c.l.b16 %v4660
  %v5024 = vunpack.c.h.b16 %v4660
  %v5025 = vunpack.c.l.b16 %v4661
  %v5026 = vunpack.c.h.b16 %v4661
  %v5027 = vunpack.c.l.b16 %v4662
  %v5028 = vunpack.c.h.b16 %v4662
  %v5029 = vunpack.c.l.b16 %v4663
  %v5030 = vunpack.c.h.b16 %v4663
  %v5031 = vunpack.c.l.b16 %v4664
  %v5032 = vunpack.c.h.b16 %v4664
  %v5033 = vunpack.c.l.b16 %v4665
  %v5034 = vunpack.c.h.b16 %v4665
  %v5035 = vunpack.c.l.b16 %v4666
  %v5036 = vunpack.c.h.b16 %v4666
  %v5037 = vunpack.c.l.b16 %v4667
  %v5038 = vunpack.c.h.b16 %v4667
  %v5039 = vunpack.c.l.b16 %v4668
  %v5040 = vunpack.c.h.b16 %v4668
  %v5041 = vunpack.c.l.b16 %v4669
  %v5042 = vunpack.c.h.b16 %v4669
  %v5043 = vunpack.c.l.b16 %v4670
  %v5044 = vunpack.c.h.b16 %v4670
  %v5045 = vunpack.c.l.b16 %v4671
  %v5046 = vunpack.c.h.b16 %v4671
  %v5047 = vunpack.c.l.b16 %v4672
  %v5048 = vunpack.c.h.b16 %v4672
  %v5049 = vunpack.c.l.b16 %v4673
  %v5050 = vunpack.c.h.b16 %v4673
  %v5051 = vunpack.c.l.b16 %v4674
  %v5052 = vunpack.c.h.b16 %v4674
  %v5053 = vunpack.c.l.b16 %v4675
  %v5054 = vunpack.c.h.b16 %v4675
  %v5055 = vunpack.c.l.b16 %v4676
  %v5056 = vunpack.c.h.b16 %v4676
  %v5057 = vunpack.c.l.b16 %v4677
  %v5058 = vunpack.c.h.b16 %v4677
  %v5059 = vunpack.c.l.b16 %v4678
  %v5060 = vunpack.c.h.b16 %v4678
  %v5061 = vunpack.c.l.b16 %v4679
  %v5062 = vunpack.c.h.b16 %v4679
  %v5063 = vunpack.c.l.b16 %v4680
  %v5064 = vunpack.c.h.b16 %v4680
  %v5065 = vunpack.c.l.b16 %v4681
  %v5066 = vunpack.c.h.b16 %v4681
  %v5067 = vunpack.c.l.b16 %v4682
  %v5068 = vunpack.c.h.b16 %v4682
  %v5069 = vunpack.c.l.b16 %v4683
  %v5070 = vunpack.c.h.b16 %v4683
  %v5071 = vunpack.c.l.b16 %v4684
  %v5072 = vunpack.c.h.b16 %v4684
  %v5073 = vunpack.c.l.b16 %v4685
  %v5074 = vunpack.c.h.b16 %v4685
  %v5075 = vunpack.c.l.b16 %v4686
  %v5076 = vunpack.c.h.b16 %v4686
  %v5077 = vunpack.c.l.b16 %v4687
  %v5078 = vunpack.c.h.b16 %v4687
  %v5079 = vunpack.c.l.b16 %v4688
  %v5080 = vunpack.c.h.b16 %v4688
  %v5081 = vunpack.c.l.b16 %v4689
  %v5082 = vunpack.c.h.b16 %v4689
  %v5083 = vunpack.c.l.b16 %v4690
  %v5084 = vunpack.c.h.b16 %v4690
  %v5085 = vpack.c.b16 %v4833, %v4829
  %v5086 = vpack.c.b16 %v4834, %v4830
  %v5087 = vpack.c.b16 %v4835, %v4831
  %v5088 = vpack.c.b16 %v4836, %v4832
  %v5089 = vpack.c.b16 %v4841, %v4837
  %v5090 = vpack.c.b16 %v4842, %v4838
  %v5091 = vpack.c.b16 %v4843, %v4839
  %v5092 = vpack.c.b16 %v4844, %v4840
  %v5093 = vpack.c.b16 %v4849, %v4845
  %v5094 = vpack.c.b16 %v4850, %v4846
  %v5095 = vpack.c.b16 %v4851, %v4847
  %v5096 = vpack.c.b16 %v4852, %v4848
  %v5097 = vpack.c.b16 %v4857, %v4853
  %v5098 = vpack.c.b16 %v4858, %v4854
  %v5099 = vpack.c.b16 %v4859, %v4855
  %v5100 = vpack.c.b16 %v4860, %v4856
  %v5101 = vpack.c.b16 %v4865, %v4861
  %v5102 = vpack.c.b16 %v4866, %v4862
  %v5103 = vpack.c.b16 %v4867, %v4863
  %v5104 = vpack.c.b16 %v4868, %v4864
  %v5105 = vpack.c.b16 %v4873, %v4869
  %v5106 = vpack.c.b16 %v4874, %v4870
  %v5107 = vpack.c.b16 %v4875, %v4871
  %v5108 = vpack.c.b16 %v4876, %v4872
  %v5109 = vpack.c.b16 %v4881, %v4877
  %v5110 = vpack.c.b16 %v4882, %v4878
  %v5111 = vpack.c.b16 %v4883, %v4879
  %v5112 = vpack.c.b16 %v4884, %v4880
  %v5113 = vpack.c.b16 %v4889, %v4885
  %v5114 = vpack.c.b16 %v4890, %v4886
  %v5115 = vpack.c.b16 %v4891, %v4887
  %v5116 = vpack.c.b16 %v4892, %v4888
  %v5117 = vpack.c.b16 %v4897, %v4893
  %v5118 = vpack.c.b16 %v4898, %v4894
  %v5119 = vpack.c.b16 %v4899, %v4895
  %v5120 = vpack.c.b16 %v4900, %v4896
  %v5121 = vpack.c.b16 %v4905, %v4901
  %v5122 = vpack.c.b16 %v4906, %v4902
  %v5123 = vpack.c.b16 %v4907, %v4903
  %v5124 = vpack.c.b16 %v4908, %v4904
  %v5125 = vpack.c.b16 %v4913, %v4909
  %v5126 = vpack.c.b16 %v4914, %v4910
  %v5127 = vpack.c.b16 %v4915, %v4911
  %v5128 = vpack.c.b16 %v4916, %v4912
  %v5129 = vpack.c.b16 %v4921, %v4917
  %v5130 = vpack.c.b16 %v4922, %v4918
  %v5131 = vpack.c.b16 %v4923, %v4919
  %v5132 = vpack.c.b16 %v4924, %v4920
  %v5133 = vpack.c.b16 %v4929, %v4925
  %v5134 = vpack.c.b16 %v4930, %v4926
  %v5135 = vpack.c.b16 %v4931, %v4927
  %v5136 = vpack.c.b16 %v4932, %v4928
  %v5137 = vpack.c.b16 %v4937, %v4933
  %v5138 = vpack.c.b16 %v4938, %v4934
  %v5139 = vpack.c.b16 %v4939, %v4935
  %v5140 = vpack.c.b16 %v4940, %v4936
  %v5141 = vpack.c.b16 %v4945, %v4941
  %v5142 = vpack.c.b16 %v4946, %v4942
  %v5143 = vpack.c.b16 %v4947, %v4943
  %v5144 = vpack.c.b16 %v4948, %v4944
  %v5145 = vpack.c.b16 %v4953, %v4949
  %v5146 = vpack.c.b16 %v4954, %v4950
  %v5147 = vpack.c.b16 %v4955, %v4951
  %v5148 = vpack.c.b16 %v4956, %v4952
  %v5149 = vpack.c.b16 %v4961, %v4957
  %v5150 = vpack.c.b16 %v4962, %v4958
  %v5151 = vpack.c.b16 %v4963, %v4959
  %v5152 = vpack.c.b16 %v4964, %v4960
  %v5153 = vpack.c.b16 %v4969, %v4965
  %v5154 = vpack.c.b16 %v4970, %v4966
  %v5155 = vpack.c.b16 %v4971, %v4967
  %v5156 = vpack.c.b16 %v4972, %v4968
  %v5157 = vpack.c.b16 %v4977, %v4973
  %v5158 = vpack.c.b16 %v4978, %v4974
  %v5159 = vpack.c.b16 %v4979, %v4975
  %v5160 = vpack.c.b16 %v4980, %v4976
  %v5161 = vpack.c.b16 %v4985, %v4981
  %v5162 = vpack.c.b16 %v4986, %v4982
  %v5163 = vpack.c.b16 %v4987, %v4983
  %v5164 = vpack.c.b16 %v4988, %v4984
  %v5165 = vpack.c.b16 %v4993, %v4989
  %v5166 = vpack.c.b16 %v4994, %v4990
  %v5167 = vpack.c.b16 %v4995, %v4991
  %v5168 = vpack.c.b16 %v4996, %v4992
  %v5169 = vpack.c.b16 %v5001, %v4997
  %v5170 = vpack.c.b16 %v5002, %v4998
  %v5171 = vpack.c.b16 %v5003, %v4999
  %v5172 = vpack.c.b16 %v5004, %v5000
  %v5173 = vpack.c.b16 %v5009, %v5005
  %v5174 = vpack.c.b16 %v5010, %v5006
  %v5175 = vpack.c.b16 %v5011, %v5007
  %v5176 = vpack.c.b16 %v5012, %v5008
  %v5177 = vpack.c.b16 %v5017, %v5013
  %v5178 = vpack.c.b16 %v5018, %v5014
  %v5179 = vpack.c.b16 %v5019, %v5015
  %v5180 = vpack.c.b16 %v5020, %v5016
  %v5181 = vpack.c.b16 %v5025, %v5021
  %v5182 = vpack.c.b16 %v5026, %v5022
  %v5183 = vpack.c.b16 %v5027, %v5023
  %v5184 = vpack.c.b16 %v5028, %v5024
  %v5185 = vpack.c.b16 %v5033, %v5029
  %v5186 = vpack.c.b16 %v5034, %v5030
  %v5187 = vpack.c.b16 %v5035, %v5031
  %v5188 = vpack.c.b16 %v5036, %v5032
  %v5189 = vpack.c.b16 %v5041, %v5037
  %v5190 = vpack.c.b16 %v5042, %v5038
  %v5191 = vpack.c.b16 %v5043, %v5039
  %v5192 = vpack.c.b16 %v5044, %v5040
  %v5193 = vpack.c.b16 %v5049, %v5045
  %v5194 = vpack.c.b16 %v5050, %v5046
  %v5195 = vpack.c.b16 %v5051, %v5047
  %v5196 = vpack.c.b16 %v5052, %v5048
  %v5197 = vpack.c.b16 %v5057, %v5053
  %v5198 = vpack.c.b16 %v5058, %v5054
  %v5199 = vpack.c.b16 %v5059, %v5055
  %v5200 = vpack.c.b16 %v5060, %v5056
  %v5201 = vpack.c.b16 %v5065, %v5061
  %v5202 = vpack.c.b16 %v5066, %v5062
  %v5203 = vpack.c.b16 %v5067, %v5063
  %v5204 = vpack.c.b16 %v5068, %v5064
  %v5205 = vpack.c.b16 %v5073, %v5069
  %v5206 = vpack.c.b16 %v5074, %v5070
  %v5207 = vpack.c.b16 %v5075, %v5071
  %v5208 = vpack.c.b16 %v5076, %v5072
  %v5209 = vpack.c.b16 %v5081, %v5077
  %v5210 = vpack.c.b16 %v5082, %v5078
  %v5211 = vpack.c.b16 %v5083, %v5079
  %v5212 = vpack.c.b16 %v5084, %v5080
  %5341 = vmatpush.bf16.msra.mxu0 %v5113
  %5342 = vmatpush.bf16.msra.mxu0 %v5109
  %5343 = vmatpush.bf16.msra.mxu0 %v5105
  %5344 = vmatpush.bf16.msra.mxu0 %v5101
  %5345 = vmatpush.bf16.msra.mxu0 %v5097
  %5346 = vmatpush.bf16.msra.mxu0 %v5093
  %5347 = vmatpush.bf16.msra.mxu0 %v5089
  %5348 = vmatpush.bf16.msra.mxu0 %v5085
  %5349 = vmatmul.bf16.gmra.mxu0 %v4435
  %v5350 = vpop.f32.mrf.mxu0
  %v5351 = vadd.f32 %v4693, %v5350
  %v5352 = vpop.f32.mrf.mxu0
  %v5353 = vadd.f32 %v4693, %v5352
  %5354 = vmatmul.bf16.gmra.mxu0 %v4439
  %v5355 = vpop.f32.mrf.mxu0
  %v5356 = vadd.f32 %v4693, %v5355
  %v5357 = vpop.f32.mrf.mxu0
  %v5358 = vadd.f32 %v4693, %v5357
  %5359 = vmatmul.bf16.gmra.mxu0 %v4443
  %v5360 = vpop.f32.mrf.mxu0
  %v5361 = vadd.f32 %v4693, %v5360
  %v5362 = vpop.f32.mrf.mxu0
  %v5363 = vadd.f32 %v4693, %v5362
  %5364 = vmatmul.bf16.gmra.mxu0 %v4447
  %v5365 = vpop.f32.mrf.mxu0
  %v5366 = vadd.f32 %v4693, %v5365
  %v5367 = vpop.f32.mrf.mxu0
  %v5368 = vadd.f32 %v4693, %v5367
  %5369 = vmatmul.bf16.gmra.mxu0 %v4451
  %v5370 = vpop.f32.mrf.mxu0
  %v5371 = vadd.f32 %v4693, %v5370
  %v5372 = vpop.f32.mrf.mxu0
  %v5373 = vadd.f32 %v4693, %v5372
  %5374 = vmatmul.bf16.gmra.mxu0 %v4455
  %v5375 = vpop.f32.mrf.mxu0
  %v5376 = vadd.f32 %v4693, %v5375
  %v5377 = vpop.f32.mrf.mxu0
  %v5378 = vadd.f32 %v4693, %v5377
  %5379 = vmatmul.bf16.gmra.mxu0 %v4459
  %v5380 = vpop.f32.mrf.mxu0
  %v5381 = vadd.f32 %v4693, %v5380
  %v5382 = vpop.f32.mrf.mxu0
  %v5383 = vadd.f32 %v4693, %v5382
  %5384 = vmatmul.bf16.gmra.mxu0 %v4463
  %v5385 = vpop.f32.mrf.mxu0
  %v5386 = vadd.f32 %v4693, %v5385
  %v5387 = vpop.f32.mrf.mxu0
  %v5388 = vadd.f32 %v4693, %v5387
  %5389 = vmatmul.bf16.gmra.mxu0 %v4467
  %v5390 = vpop.f32.mrf.mxu0
  %v5391 = vadd.f32 %v4693, %v5390
  %v5392 = vpop.f32.mrf.mxu0
  %v5393 = vadd.f32 %v4693, %v5392
  %5394 = vmatmul.bf16.gmra.mxu0 %v4471
  %v5395 = vpop.f32.mrf.mxu0
  %v5396 = vadd.f32 %v4693, %v5395
  %v5397 = vpop.f32.mrf.mxu0
  %v5398 = vadd.f32 %v4693, %v5397
  %5399 = vmatmul.bf16.gmra.mxu0 %v4475
  %v5400 = vpop.f32.mrf.mxu0
  %v5401 = vadd.f32 %v4693, %v5400
  %v5402 = vpop.f32.mrf.mxu0
  %v5403 = vadd.f32 %v4693, %v5402
  %5404 = vmatmul.bf16.gmra.mxu0 %v4479
  %v5405 = vpop.f32.mrf.mxu0
  %v5406 = vadd.f32 %v4693, %v5405
  %v5407 = vpop.f32.mrf.mxu0
  %v5408 = vadd.f32 %v4693, %v5407
  %5409 = vmatmul.bf16.gmra.mxu0 %v4483
  %v5410 = vpop.f32.mrf.mxu0
  %v5411 = vadd.f32 %v4693, %v5410
  %v5412 = vpop.f32.mrf.mxu0
  %v5413 = vadd.f32 %v4693, %v5412
  %5414 = vmatmul.bf16.gmra.mxu0 %v4487
  %v5415 = vpop.f32.mrf.mxu0
  %v5416 = vadd.f32 %v4693, %v5415
  %v5417 = vpop.f32.mrf.mxu0
  %v5418 = vadd.f32 %v4693, %v5417
  %5419 = vmatmul.bf16.gmra.mxu0 %v4491
  %v5420 = vpop.f32.mrf.mxu0
  %v5421 = vadd.f32 %v4693, %v5420
  %v5422 = vpop.f32.mrf.mxu0
  %v5423 = vadd.f32 %v4693, %v5422
  %5424 = vmatmul.bf16.gmra.mxu0 %v4495
  %v5425 = vpop.f32.mrf.mxu0
  %v5426 = vadd.f32 %v4693, %v5425
  %v5427 = vpop.f32.mrf.mxu0
  %v5428 = vadd.f32 %v4693, %v5427
  %5429 = vmatmul.bf16.gmra.mxu0 %v4499
  %v5430 = vpop.f32.mrf.mxu0
  %v5431 = vadd.f32 %v4693, %v5430
  %v5432 = vpop.f32.mrf.mxu0
  %v5433 = vadd.f32 %v4693, %v5432
  %5434 = vmatmul.bf16.gmra.mxu0 %v4503
  %v5435 = vpop.f32.mrf.mxu0
  %v5436 = vadd.f32 %v4693, %v5435
  %v5437 = vpop.f32.mrf.mxu0
  %v5438 = vadd.f32 %v4693, %v5437
  %5439 = vmatmul.bf16.gmra.mxu0 %v4507
  %v5440 = vpop.f32.mrf.mxu0
  %v5441 = vadd.f32 %v4693, %v5440
  %v5442 = vpop.f32.mrf.mxu0
  %v5443 = vadd.f32 %v4693, %v5442
  %5444 = vmatmul.bf16.gmra.mxu0 %v4511
  %v5445 = vpop.f32.mrf.mxu0
  %v5446 = vadd.f32 %v4693, %v5445
  %v5447 = vpop.f32.mrf.mxu0
  %v5448 = vadd.f32 %v4693, %v5447
  %5449 = vmatmul.bf16.gmra.mxu0 %v4515
  %v5450 = vpop.f32.mrf.mxu0
  %v5451 = vadd.f32 %v4693, %v5450
  %v5452 = vpop.f32.mrf.mxu0
  %v5453 = vadd.f32 %v4693, %v5452
  %5454 = vmatmul.bf16.gmra.mxu0 %v4519
  %v5455 = vpop.f32.mrf.mxu0
  %v5456 = vadd.f32 %v4693, %v5455
  %v5457 = vpop.f32.mrf.mxu0
  %v5458 = vadd.f32 %v4693, %v5457
  %5459 = vmatmul.bf16.gmra.mxu0 %v4523
  %v5460 = vpop.f32.mrf.mxu0
  %v5461 = vadd.f32 %v4693, %v5460
  %v5462 = vpop.f32.mrf.mxu0
  %v5463 = vadd.f32 %v4693, %v5462
  %5464 = vmatmul.bf16.gmra.mxu0 %v4527
  %v5465 = vpop.f32.mrf.mxu0
  %v5466 = vadd.f32 %v4693, %v5465
  %v5467 = vpop.f32.mrf.mxu0
  %v5468 = vadd.f32 %v4693, %v5467
  %5469 = vmatmul.bf16.gmra.mxu0 %v4531
  %v5470 = vpop.f32.mrf.mxu0
  %v5471 = vadd.f32 %v4693, %v5470
  %v5472 = vpop.f32.mrf.mxu0
  %v5473 = vadd.f32 %v4693, %v5472
  %5474 = vmatmul.bf16.gmra.mxu0 %v4535
  %v5475 = vpop.f32.mrf.mxu0
  %v5476 = vadd.f32 %v4693, %v5475
  %v5477 = vpop.f32.mrf.mxu0
  %v5478 = vadd.f32 %v4693, %v5477
  %5479 = vmatmul.bf16.gmra.mxu0 %v4539
  %v5480 = vpop.f32.mrf.mxu0
  %v5481 = vadd.f32 %v4693, %v5480
  %v5482 = vpop.f32.mrf.mxu0
  %v5483 = vadd.f32 %v4693, %v5482
  %5484 = vmatmul.bf16.gmra.mxu0 %v4543
  %v5485 = vpop.f32.mrf.mxu0
  %v5486 = vadd.f32 %v4693, %v5485
  %v5487 = vpop.f32.mrf.mxu0
  %v5488 = vadd.f32 %v4693, %v5487
  %5489 = vmatmul.bf16.gmra.mxu0 %v4547
  %v5490 = vpop.f32.mrf.mxu0
  %v5491 = vadd.f32 %v4693, %v5490
  %v5492 = vpop.f32.mrf.mxu0
  %v5493 = vadd.f32 %v4693, %v5492
  %5494 = vmatmul.bf16.gmra.mxu0 %v4551
  %v5495 = vpop.f32.mrf.mxu0
  %v5496 = vadd.f32 %v4693, %v5495
  %v5497 = vpop.f32.mrf.mxu0
  %v5498 = vadd.f32 %v4693, %v5497
  %5499 = vmatmul.bf16.gmra.mxu0 %v4555
  %v5500 = vpop.f32.mrf.mxu0
  %v5501 = vadd.f32 %v4693, %v5500
  %v5502 = vpop.f32.mrf.mxu0
  %v5503 = vadd.f32 %v4693, %v5502
  %5504 = vmatmul.bf16.gmra.mxu0 %v4559
  %v5505 = vpop.f32.mrf.mxu0
  %v5506 = vadd.f32 %v4693, %v5505
  %v5507 = vpop.f32.mrf.mxu0
  %v5508 = vadd.f32 %v4693, %v5507
  %5509 = vdwg.mxu0
  %5510 = vmatpush.bf16.msra.mxu0 %v5145
  %5511 = vmatpush.bf16.msra.mxu0 %v5141
  %5512 = vmatpush.bf16.msra.mxu0 %v5137
  %5513 = vmatpush.bf16.msra.mxu0 %v5133
  %5514 = vmatpush.bf16.msra.mxu0 %v5129
  %5515 = vmatpush.bf16.msra.mxu0 %v5125
  %5516 = vmatpush.bf16.msra.mxu0 %v5121
  %5517 = vmatpush.bf16.msra.mxu0 %v5117
  %5518 = vmatmul.bf16.gmra.mxu0 %v4436
  %v5519 = vpop.f32.mrf.mxu0
  %v5520 = vadd.f32 %v5351, %v5519
  %v5521 = vpop.f32.mrf.mxu0
  %v5522 = vadd.f32 %v5353, %v5521
  %5523 = vmatmul.bf16.gmra.mxu0 %v4440
  %v5524 = vpop.f32.mrf.mxu0
  %v5525 = vadd.f32 %v5356, %v5524
  %v5526 = vpop.f32.mrf.mxu0
  %v5527 = vadd.f32 %v5358, %v5526
  %5528 = vmatmul.bf16.gmra.mxu0 %v4444
  %v5529 = vpop.f32.mrf.mxu0
  %v5530 = vadd.f32 %v5361, %v5529
  %v5531 = vpop.f32.mrf.mxu0
  %v5532 = vadd.f32 %v5363, %v5531
  %5533 = vmatmul.bf16.gmra.mxu0 %v4448
  %v5534 = vpop.f32.mrf.mxu0
  %v5535 = vadd.f32 %v5366, %v5534
  %v5536 = vpop.f32.mrf.mxu0
  %v5537 = vadd.f32 %v5368, %v5536
  %5538 = vmatmul.bf16.gmra.mxu0 %v4452
  %v5539 = vpop.f32.mrf.mxu0
  %v5540 = vadd.f32 %v5371, %v5539
  %v5541 = vpop.f32.mrf.mxu0
  %v5542 = vadd.f32 %v5373, %v5541
  %5543 = vmatmul.bf16.gmra.mxu0 %v4456
  %v5544 = vpop.f32.mrf.mxu0
  %v5545 = vadd.f32 %v5376, %v5544
  %v5546 = vpop.f32.mrf.mxu0
  %v5547 = vadd.f32 %v5378, %v5546
  %5548 = vmatmul.bf16.gmra.mxu0 %v4460
  %v5549 = vpop.f32.mrf.mxu0
  %v5550 = vadd.f32 %v5381, %v5549
  %v5551 = vpop.f32.mrf.mxu0
  %v5552 = vadd.f32 %v5383, %v5551
  %5553 = vmatmul.bf16.gmra.mxu0 %v4464
  %v5554 = vpop.f32.mrf.mxu0
  %v5555 = vadd.f32 %v5386, %v5554
  %v5556 = vpop.f32.mrf.mxu0
  %v5557 = vadd.f32 %v5388, %v5556
  %5558 = vmatmul.bf16.gmra.mxu0 %v4468
  %v5559 = vpop.f32.mrf.mxu0
  %v5560 = vadd.f32 %v5391, %v5559
  %v5561 = vpop.f32.mrf.mxu0
  %v5562 = vadd.f32 %v5393, %v5561
  %5563 = vmatmul.bf16.gmra.mxu0 %v4472
  %v5564 = vpop.f32.mrf.mxu0
  %v5565 = vadd.f32 %v5396, %v5564
  %v5566 = vpop.f32.mrf.mxu0
  %v5567 = vadd.f32 %v5398, %v5566
  %5568 = vmatmul.bf16.gmra.mxu0 %v4476
  %v5569 = vpop.f32.mrf.mxu0
  %v5570 = vadd.f32 %v5401, %v5569
  %v5571 = vpop.f32.mrf.mxu0
  %v5572 = vadd.f32 %v5403, %v5571
  %5573 = vmatmul.bf16.gmra.mxu0 %v4480
  %v5574 = vpop.f32.mrf.mxu0
  %v5575 = vadd.f32 %v5406, %v5574
  %v5576 = vpop.f32.mrf.mxu0
  %v5577 = vadd.f32 %v5408, %v5576
  %5578 = vmatmul.bf16.gmra.mxu0 %v4484
  %v5579 = vpop.f32.mrf.mxu0
  %v5580 = vadd.f32 %v5411, %v5579
  %v5581 = vpop.f32.mrf.mxu0
  %v5582 = vadd.f32 %v5413, %v5581
  %5583 = vmatmul.bf16.gmra.mxu0 %v4488
  %v5584 = vpop.f32.mrf.mxu0
  %v5585 = vadd.f32 %v5416, %v5584
  %v5586 = vpop.f32.mrf.mxu0
  %v5587 = vadd.f32 %v5418, %v5586
  %5588 = vmatmul.bf16.gmra.mxu0 %v4492
  %v5589 = vpop.f32.mrf.mxu0
  %v5590 = vadd.f32 %v5421, %v5589
  %v5591 = vpop.f32.mrf.mxu0
  %v5592 = vadd.f32 %v5423, %v5591
  %5593 = vmatmul.bf16.gmra.mxu0 %v4496
  %v5594 = vpop.f32.mrf.mxu0
  %v5595 = vadd.f32 %v5426, %v5594
  %v5596 = vpop.f32.mrf.mxu0
  %v5597 = vadd.f32 %v5428, %v5596
  %5598 = vmatmul.bf16.gmra.mxu0 %v4500
  %v5599 = vpop.f32.mrf.mxu0
  %v5600 = vadd.f32 %v5431, %v5599
  %v5601 = vpop.f32.mrf.mxu0
  %v5602 = vadd.f32 %v5433, %v5601
  %5603 = vmatmul.bf16.gmra.mxu0 %v4504
  %v5604 = vpop.f32.mrf.mxu0
  %v5605 = vadd.f32 %v5436, %v5604
  %v5606 = vpop.f32.mrf.mxu0
  %v5607 = vadd.f32 %v5438, %v5606
  %5608 = vmatmul.bf16.gmra.mxu0 %v4508
  %v5609 = vpop.f32.mrf.mxu0
  %v5610 = vadd.f32 %v5441, %v5609
  %v5611 = vpop.f32.mrf.mxu0
  %v5612 = vadd.f32 %v5443, %v5611
  %5613 = vmatmul.bf16.gmra.mxu0 %v4512
  %v5614 = vpop.f32.mrf.mxu0
  %v5615 = vadd.f32 %v5446, %v5614
  %v5616 = vpop.f32.mrf.mxu0
  %v5617 = vadd.f32 %v5448, %v5616
  %5618 = vmatmul.bf16.gmra.mxu0 %v4516
  %v5619 = vpop.f32.mrf.mxu0
  %v5620 = vadd.f32 %v5451, %v5619
  %v5621 = vpop.f32.mrf.mxu0
  %v5622 = vadd.f32 %v5453, %v5621
  %5623 = vmatmul.bf16.gmra.mxu0 %v4520
  %v5624 = vpop.f32.mrf.mxu0
  %v5625 = vadd.f32 %v5456, %v5624
  %v5626 = vpop.f32.mrf.mxu0
  %v5627 = vadd.f32 %v5458, %v5626
  %5628 = vmatmul.bf16.gmra.mxu0 %v4524
  %v5629 = vpop.f32.mrf.mxu0
  %v5630 = vadd.f32 %v5461, %v5629
  %v5631 = vpop.f32.mrf.mxu0
  %v5632 = vadd.f32 %v5463, %v5631
  %5633 = vmatmul.bf16.gmra.mxu0 %v4528
  %v5634 = vpop.f32.mrf.mxu0
  %v5635 = vadd.f32 %v5466, %v5634
  %v5636 = vpop.f32.mrf.mxu0
  %v5637 = vadd.f32 %v5468, %v5636
  %5638 = vmatmul.bf16.gmra.mxu0 %v4532
  %v5639 = vpop.f32.mrf.mxu0
  %v5640 = vadd.f32 %v5471, %v5639
  %v5641 = vpop.f32.mrf.mxu0
  %v5642 = vadd.f32 %v5473, %v5641
  %5643 = vmatmul.bf16.gmra.mxu0 %v4536
  %v5644 = vpop.f32.mrf.mxu0
  %v5645 = vadd.f32 %v5476, %v5644
  %v5646 = vpop.f32.mrf.mxu0
  %v5647 = vadd.f32 %v5478, %v5646
  %5648 = vmatmul.bf16.gmra.mxu0 %v4540
  %v5649 = vpop.f32.mrf.mxu0
  %v5650 = vadd.f32 %v5481, %v5649
  %v5651 = vpop.f32.mrf.mxu0
  %v5652 = vadd.f32 %v5483, %v5651
  %5653 = vmatmul.bf16.gmra.mxu0 %v4544
  %v5654 = vpop.f32.mrf.mxu0
  %v5655 = vadd.f32 %v5486, %v5654
  %v5656 = vpop.f32.mrf.mxu0
  %v5657 = vadd.f32 %v5488, %v5656
  %5658 = vmatmul.bf16.gmra.mxu0 %v4548
  %v5659 = vpop.f32.mrf.mxu0
  %v5660 = vadd.f32 %v5491, %v5659
  %v5661 = vpop.f32.mrf.mxu0
  %v5662 = vadd.f32 %v5493, %v5661
  %5663 = vmatmul.bf16.gmra.mxu0 %v4552
  %v5664 = vpop.f32.mrf.mxu0
  %v5665 = vadd.f32 %v5496, %v5664
  %v5666 = vpop.f32.mrf.mxu0
  %v5667 = vadd.f32 %v5498, %v5666
  %5668 = vmatmul.bf16.gmra.mxu0 %v4556
  %v5669 = vpop.f32.mrf.mxu0
  %v5670 = vadd.f32 %v5501, %v5669
  %v5671 = vpop.f32.mrf.mxu0
  %v5672 = vadd.f32 %v5503, %v5671
  %5673 = vmatmul.bf16.gmra.mxu0 %v4560
  %v5674 = vpop.f32.mrf.mxu0
  %v5675 = vadd.f32 %v5506, %v5674
  %v5676 = vpop.f32.mrf.mxu0
  %v5677 = vadd.f32 %v5508, %v5676
  %5678 = vdwg.mxu0
  %5679 = vmatpush.bf16.msra.mxu0 %v5177
  %5680 = vmatpush.bf16.msra.mxu0 %v5173
  %5681 = vmatpush.bf16.msra.mxu0 %v5169
  %5682 = vmatpush.bf16.msra.mxu0 %v5165
  %5683 = vmatpush.bf16.msra.mxu0 %v5161
  %5684 = vmatpush.bf16.msra.mxu0 %v5157
  %5685 = vmatpush.bf16.msra.mxu0 %v5153
  %5686 = vmatpush.bf16.msra.mxu0 %v5149
  %5687 = vmatmul.bf16.gmra.mxu0 %v4437
  %v5688 = vpop.f32.mrf.mxu0
  %v5689 = vadd.f32 %v5520, %v5688
  %v5690 = vpop.f32.mrf.mxu0
  %v5691 = vadd.f32 %v5522, %v5690
  %5692 = vmatmul.bf16.gmra.mxu0 %v4441
  %v5693 = vpop.f32.mrf.mxu0
  %v5694 = vadd.f32 %v5525, %v5693
  %v5695 = vpop.f32.mrf.mxu0
  %v5696 = vadd.f32 %v5527, %v5695
  %5697 = vmatmul.bf16.gmra.mxu0 %v4445
  %v5698 = vpop.f32.mrf.mxu0
  %v5699 = vadd.f32 %v5530, %v5698
  %v5700 = vpop.f32.mrf.mxu0
  %v5701 = vadd.f32 %v5532, %v5700
  %5702 = vmatmul.bf16.gmra.mxu0 %v4449
  %v5703 = vpop.f32.mrf.mxu0
  %v5704 = vadd.f32 %v5535, %v5703
  %v5705 = vpop.f32.mrf.mxu0
  %v5706 = vadd.f32 %v5537, %v5705
  %5707 = vmatmul.bf16.gmra.mxu0 %v4453
  %v5708 = vpop.f32.mrf.mxu0
  %v5709 = vadd.f32 %v5540, %v5708
  %v5710 = vpop.f32.mrf.mxu0
  %v5711 = vadd.f32 %v5542, %v5710
  %5712 = vmatmul.bf16.gmra.mxu0 %v4457
  %v5713 = vpop.f32.mrf.mxu0
  %v5714 = vadd.f32 %v5545, %v5713
  %v5715 = vpop.f32.mrf.mxu0
  %v5716 = vadd.f32 %v5547, %v5715
  %5717 = vmatmul.bf16.gmra.mxu0 %v4461
  %v5718 = vpop.f32.mrf.mxu0
  %v5719 = vadd.f32 %v5550, %v5718
  %v5720 = vpop.f32.mrf.mxu0
  %v5721 = vadd.f32 %v5552, %v5720
  %5722 = vmatmul.bf16.gmra.mxu0 %v4465
  %v5723 = vpop.f32.mrf.mxu0
  %v5724 = vadd.f32 %v5555, %v5723
  %v5725 = vpop.f32.mrf.mxu0
  %v5726 = vadd.f32 %v5557, %v5725
  %5727 = vmatmul.bf16.gmra.mxu0 %v4469
  %v5728 = vpop.f32.mrf.mxu0
  %v5729 = vadd.f32 %v5560, %v5728
  %v5730 = vpop.f32.mrf.mxu0
  %v5731 = vadd.f32 %v5562, %v5730
  %5732 = vmatmul.bf16.gmra.mxu0 %v4473
  %v5733 = vpop.f32.mrf.mxu0
  %v5734 = vadd.f32 %v5565, %v5733
  %v5735 = vpop.f32.mrf.mxu0
  %v5736 = vadd.f32 %v5567, %v5735
  %5737 = vmatmul.bf16.gmra.mxu0 %v4477
  %v5738 = vpop.f32.mrf.mxu0
  %v5739 = vadd.f32 %v5570, %v5738
  %v5740 = vpop.f32.mrf.mxu0
  %v5741 = vadd.f32 %v5572, %v5740
  %5742 = vmatmul.bf16.gmra.mxu0 %v4481
  %v5743 = vpop.f32.mrf.mxu0
  %v5744 = vadd.f32 %v5575, %v5743
  %v5745 = vpop.f32.mrf.mxu0
  %v5746 = vadd.f32 %v5577, %v5745
  %5747 = vmatmul.bf16.gmra.mxu0 %v4485
  %v5748 = vpop.f32.mrf.mxu0
  %v5749 = vadd.f32 %v5580, %v5748
  %v5750 = vpop.f32.mrf.mxu0
  %v5751 = vadd.f32 %v5582, %v5750
  %5752 = vmatmul.bf16.gmra.mxu0 %v4489
  %v5753 = vpop.f32.mrf.mxu0
  %v5754 = vadd.f32 %v5585, %v5753
  %v5755 = vpop.f32.mrf.mxu0
  %v5756 = vadd.f32 %v5587, %v5755
  %5757 = vmatmul.bf16.gmra.mxu0 %v4493
  %v5758 = vpop.f32.mrf.mxu0
  %v5759 = vadd.f32 %v5590, %v5758
  %v5760 = vpop.f32.mrf.mxu0
  %v5761 = vadd.f32 %v5592, %v5760
  %5762 = vmatmul.bf16.gmra.mxu0 %v4497
  %v5763 = vpop.f32.mrf.mxu0
  %v5764 = vadd.f32 %v5595, %v5763
  %v5765 = vpop.f32.mrf.mxu0
  %v5766 = vadd.f32 %v5597, %v5765
  %5767 = vmatmul.bf16.gmra.mxu0 %v4501
  %v5768 = vpop.f32.mrf.mxu0
  %v5769 = vadd.f32 %v5600, %v5768
  %v5770 = vpop.f32.mrf.mxu0
  %v5771 = vadd.f32 %v5602, %v5770
  %5772 = vmatmul.bf16.gmra.mxu0 %v4505
  %v5773 = vpop.f32.mrf.mxu0
  %v5774 = vadd.f32 %v5605, %v5773
  %v5775 = vpop.f32.mrf.mxu0
  %v5776 = vadd.f32 %v5607, %v5775
  %5777 = vmatmul.bf16.gmra.mxu0 %v4509
  %v5778 = vpop.f32.mrf.mxu0
  %v5779 = vadd.f32 %v5610, %v5778
  %v5780 = vpop.f32.mrf.mxu0
  %v5781 = vadd.f32 %v5612, %v5780
  %5782 = vmatmul.bf16.gmra.mxu0 %v4513
  %v5783 = vpop.f32.mrf.mxu0
  %v5784 = vadd.f32 %v5615, %v5783
  %v5785 = vpop.f32.mrf.mxu0
  %v5786 = vadd.f32 %v5617, %v5785
  %5787 = vmatmul.bf16.gmra.mxu0 %v4517
  %v5788 = vpop.f32.mrf.mxu0
  %v5789 = vadd.f32 %v5620, %v5788
  %v5790 = vpop.f32.mrf.mxu0
  %v5791 = vadd.f32 %v5622, %v5790
  %5792 = vmatmul.bf16.gmra.mxu0 %v4521
  %v5793 = vpop.f32.mrf.mxu0
  %v5794 = vadd.f32 %v5625, %v5793
  %v5795 = vpop.f32.mrf.mxu0
  %v5796 = vadd.f32 %v5627, %v5795
  %5797 = vmatmul.bf16.gmra.mxu0 %v4525
  %v5798 = vpop.f32.mrf.mxu0
  %v5799 = vadd.f32 %v5630, %v5798
  %v5800 = vpop.f32.mrf.mxu0
  %v5801 = vadd.f32 %v5632, %v5800
  %5802 = vmatmul.bf16.gmra.mxu0 %v4529
  %v5803 = vpop.f32.mrf.mxu0
  %v5804 = vadd.f32 %v5635, %v5803
  %v5805 = vpop.f32.mrf.mxu0
  %v5806 = vadd.f32 %v5637, %v5805
  %5807 = vmatmul.bf16.gmra.mxu0 %v4533
  %v5808 = vpop.f32.mrf.mxu0
  %v5809 = vadd.f32 %v5640, %v5808
  %v5810 = vpop.f32.mrf.mxu0
  %v5811 = vadd.f32 %v5642, %v5810
  %5812 = vmatmul.bf16.gmra.mxu0 %v4537
  %v5813 = vpop.f32.mrf.mxu0
  %v5814 = vadd.f32 %v5645, %v5813
  %v5815 = vpop.f32.mrf.mxu0
  %v5816 = vadd.f32 %v5647, %v5815
  %5817 = vmatmul.bf16.gmra.mxu0 %v4541
  %v5818 = vpop.f32.mrf.mxu0
  %v5819 = vadd.f32 %v5650, %v5818
  %v5820 = vpop.f32.mrf.mxu0
  %v5821 = vadd.f32 %v5652, %v5820
  %5822 = vmatmul.bf16.gmra.mxu0 %v4545
  %v5823 = vpop.f32.mrf.mxu0
  %v5824 = vadd.f32 %v5655, %v5823
  %v5825 = vpop.f32.mrf.mxu0
  %v5826 = vadd.f32 %v5657, %v5825
  %5827 = vmatmul.bf16.gmra.mxu0 %v4549
  %v5828 = vpop.f32.mrf.mxu0
  %v5829 = vadd.f32 %v5660, %v5828
  %v5830 = vpop.f32.mrf.mxu0
  %v5831 = vadd.f32 %v5662, %v5830
  %5832 = vmatmul.bf16.gmra.mxu0 %v4553
  %v5833 = vpop.f32.mrf.mxu0
  %v5834 = vadd.f32 %v5665, %v5833
  %v5835 = vpop.f32.mrf.mxu0
  %v5836 = vadd.f32 %v5667, %v5835
  %5837 = vmatmul.bf16.gmra.mxu0 %v4557
  %v5838 = vpop.f32.mrf.mxu0
  %v5839 = vadd.f32 %v5670, %v5838
  %v5840 = vpop.f32.mrf.mxu0
  %v5841 = vadd.f32 %v5672, %v5840
  %5842 = vmatmul.bf16.gmra.mxu0 %v4561
  %v5843 = vpop.f32.mrf.mxu0
  %v5844 = vadd.f32 %v5675, %v5843
  %v5845 = vpop.f32.mrf.mxu0
  %v5846 = vadd.f32 %v5677, %v5845
  %5847 = vdwg.mxu0
  %5848 = vmatpush.bf16.msra.mxu0 %v5209
  %5849 = vmatpush.bf16.msra.mxu0 %v5205
  %5850 = vmatpush.bf16.msra.mxu0 %v5201
  %5851 = vmatpush.bf16.msra.mxu0 %v5197
  %5852 = vmatpush.bf16.msra.mxu0 %v5193
  %5853 = vmatpush.bf16.msra.mxu0 %v5189
  %5854 = vmatpush.bf16.msra.mxu0 %v5185
  %5855 = vmatpush.bf16.msra.mxu0 %v5181
  %5856 = vmatmul.bf16.gmra.mxu0 %v4438
  %v5857 = vpop.f32.mrf.mxu0
  %v5858 = vadd.f32 %v5689, %v5857
  %v5859 = vpop.f32.mrf.mxu0
  %v5860 = vadd.f32 %v5691, %v5859
  %5861 = vmatmul.bf16.gmra.mxu0 %v4442
  %v5862 = vpop.f32.mrf.mxu0
  %v5863 = vadd.f32 %v5694, %v5862
  %v5864 = vpop.f32.mrf.mxu0
  %v5865 = vadd.f32 %v5696, %v5864
  %5866 = vmatmul.bf16.gmra.mxu0 %v4446
  %v5867 = vpop.f32.mrf.mxu0
  %v5868 = vadd.f32 %v5699, %v5867
  %v5869 = vpop.f32.mrf.mxu0
  %v5870 = vadd.f32 %v5701, %v5869
  %5871 = vmatmul.bf16.gmra.mxu0 %v4450
  %v5872 = vpop.f32.mrf.mxu0
  %v5873 = vadd.f32 %v5704, %v5872
  %v5874 = vpop.f32.mrf.mxu0
  %v5875 = vadd.f32 %v5706, %v5874
  %5876 = vmatmul.bf16.gmra.mxu0 %v4454
  %v5877 = vpop.f32.mrf.mxu0
  %v5878 = vadd.f32 %v5709, %v5877
  %v5879 = vpop.f32.mrf.mxu0
  %v5880 = vadd.f32 %v5711, %v5879
  %5881 = vmatmul.bf16.gmra.mxu0 %v4458
  %v5882 = vpop.f32.mrf.mxu0
  %v5883 = vadd.f32 %v5714, %v5882
  %v5884 = vpop.f32.mrf.mxu0
  %v5885 = vadd.f32 %v5716, %v5884
  %5886 = vmatmul.bf16.gmra.mxu0 %v4462
  %v5887 = vpop.f32.mrf.mxu0
  %v5888 = vadd.f32 %v5719, %v5887
  %v5889 = vpop.f32.mrf.mxu0
  %v5890 = vadd.f32 %v5721, %v5889
  %5891 = vmatmul.bf16.gmra.mxu0 %v4466
  %v5892 = vpop.f32.mrf.mxu0
  %v5893 = vadd.f32 %v5724, %v5892
  %v5894 = vpop.f32.mrf.mxu0
  %v5895 = vadd.f32 %v5726, %v5894
  %5896 = vmatmul.bf16.gmra.mxu0 %v4470
  %v5897 = vpop.f32.mrf.mxu0
  %v5898 = vadd.f32 %v5729, %v5897
  %v5899 = vpop.f32.mrf.mxu0
  %v5900 = vadd.f32 %v5731, %v5899
  %5901 = vmatmul.bf16.gmra.mxu0 %v4474
  %v5902 = vpop.f32.mrf.mxu0
  %v5903 = vadd.f32 %v5734, %v5902
  %v5904 = vpop.f32.mrf.mxu0
  %v5905 = vadd.f32 %v5736, %v5904
  %5906 = vmatmul.bf16.gmra.mxu0 %v4478
  %v5907 = vpop.f32.mrf.mxu0
  %v5908 = vadd.f32 %v5739, %v5907
  %v5909 = vpop.f32.mrf.mxu0
  %v5910 = vadd.f32 %v5741, %v5909
  %5911 = vmatmul.bf16.gmra.mxu0 %v4482
  %v5912 = vpop.f32.mrf.mxu0
  %v5913 = vadd.f32 %v5744, %v5912
  %v5914 = vpop.f32.mrf.mxu0
  %v5915 = vadd.f32 %v5746, %v5914
  %5916 = vmatmul.bf16.gmra.mxu0 %v4486
  %v5917 = vpop.f32.mrf.mxu0
  %v5918 = vadd.f32 %v5749, %v5917
  %v5919 = vpop.f32.mrf.mxu0
  %v5920 = vadd.f32 %v5751, %v5919
  %5921 = vmatmul.bf16.gmra.mxu0 %v4490
  %v5922 = vpop.f32.mrf.mxu0
  %v5923 = vadd.f32 %v5754, %v5922
  %v5924 = vpop.f32.mrf.mxu0
  %v5925 = vadd.f32 %v5756, %v5924
  %5926 = vmatmul.bf16.gmra.mxu0 %v4494
  %v5927 = vpop.f32.mrf.mxu0
  %v5928 = vadd.f32 %v5759, %v5927
  %v5929 = vpop.f32.mrf.mxu0
  %v5930 = vadd.f32 %v5761, %v5929
  %5931 = vmatmul.bf16.gmra.mxu0 %v4498
  %v5932 = vpop.f32.mrf.mxu0
  %v5933 = vadd.f32 %v5764, %v5932
  %v5934 = vpop.f32.mrf.mxu0
  %v5935 = vadd.f32 %v5766, %v5934
  %5936 = vmatmul.bf16.gmra.mxu0 %v4502
  %v5937 = vpop.f32.mrf.mxu0
  %v5938 = vadd.f32 %v5769, %v5937
  %v5939 = vpop.f32.mrf.mxu0
  %v5940 = vadd.f32 %v5771, %v5939
  %5941 = vmatmul.bf16.gmra.mxu0 %v4506
  %v5942 = vpop.f32.mrf.mxu0
  %v5943 = vadd.f32 %v5774, %v5942
  %v5944 = vpop.f32.mrf.mxu0
  %v5945 = vadd.f32 %v5776, %v5944
  %5946 = vmatmul.bf16.gmra.mxu0 %v4510
  %v5947 = vpop.f32.mrf.mxu0
  %v5948 = vadd.f32 %v5779, %v5947
  %v5949 = vpop.f32.mrf.mxu0
  %v5950 = vadd.f32 %v5781, %v5949
  %5951 = vmatmul.bf16.gmra.mxu0 %v4514
  %v5952 = vpop.f32.mrf.mxu0
  %v5953 = vadd.f32 %v5784, %v5952
  %v5954 = vpop.f32.mrf.mxu0
  %v5955 = vadd.f32 %v5786, %v5954
  %5956 = vmatmul.bf16.gmra.mxu0 %v4518
  %v5957 = vpop.f32.mrf.mxu0
  %v5958 = vadd.f32 %v5789, %v5957
  %v5959 = vpop.f32.mrf.mxu0
  %v5960 = vadd.f32 %v5791, %v5959
  %5961 = vmatmul.bf16.gmra.mxu0 %v4522
  %v5962 = vpop.f32.mrf.mxu0
  %v5963 = vadd.f32 %v5794, %v5962
  %v5964 = vpop.f32.mrf.mxu0
  %v5965 = vadd.f32 %v5796, %v5964
  %5966 = vmatmul.bf16.gmra.mxu0 %v4526
  %v5967 = vpop.f32.mrf.mxu0
  %v5968 = vadd.f32 %v5799, %v5967
  %v5969 = vpop.f32.mrf.mxu0
  %v5970 = vadd.f32 %v5801, %v5969
  %5971 = vmatmul.bf16.gmra.mxu0 %v4530
  %v5972 = vpop.f32.mrf.mxu0
  %v5973 = vadd.f32 %v5804, %v5972
  %v5974 = vpop.f32.mrf.mxu0
  %v5975 = vadd.f32 %v5806, %v5974
  %5976 = vmatmul.bf16.gmra.mxu0 %v4534
  %v5977 = vpop.f32.mrf.mxu0
  %v5978 = vadd.f32 %v5809, %v5977
  %v5979 = vpop.f32.mrf.mxu0
  %v5980 = vadd.f32 %v5811, %v5979
  %5981 = vmatmul.bf16.gmra.mxu0 %v4538
  %v5982 = vpop.f32.mrf.mxu0
  %v5983 = vadd.f32 %v5814, %v5982
  %v5984 = vpop.f32.mrf.mxu0
  %v5985 = vadd.f32 %v5816, %v5984
  %5986 = vmatmul.bf16.gmra.mxu0 %v4542
  %v5987 = vpop.f32.mrf.mxu0
  %v5988 = vadd.f32 %v5819, %v5987
  %v5989 = vpop.f32.mrf.mxu0
  %v5990 = vadd.f32 %v5821, %v5989
  %5991 = vmatmul.bf16.gmra.mxu0 %v4546
  %v5992 = vpop.f32.mrf.mxu0
  %v5993 = vadd.f32 %v5824, %v5992
  %v5994 = vpop.f32.mrf.mxu0
  %v5995 = vadd.f32 %v5826, %v5994
  %5996 = vmatmul.bf16.gmra.mxu0 %v4550
  %v5997 = vpop.f32.mrf.mxu0
  %v5998 = vadd.f32 %v5829, %v5997
  %v5999 = vpop.f32.mrf.mxu0
  %v6000 = vadd.f32 %v5831, %v5999
  %6001 = vmatmul.bf16.gmra.mxu0 %v4554
  %v6002 = vpop.f32.mrf.mxu0
  %v6003 = vadd.f32 %v5834, %v6002
  %v6004 = vpop.f32.mrf.mxu0
  %v6005 = vadd.f32 %v5836, %v6004
  %6006 = vmatmul.bf16.gmra.mxu0 %v4558
  %v6007 = vpop.f32.mrf.mxu0
  %v6008 = vadd.f32 %v5839, %v6007
  %v6009 = vpop.f32.mrf.mxu0
  %v6010 = vadd.f32 %v5841, %v6009
  %6011 = vmatmul.bf16.gmra.mxu0 %v4562
  %v6012 = vpop.f32.mrf.mxu0
  %v6013 = vadd.f32 %v5844, %v6012
  %v6014 = vpop.f32.mrf.mxu0
  %v6015 = vadd.f32 %v5846, %v6014
  %6016 = vdwg.mxu0
  %6017 = vmatpush.bf16.msra.mxu0 %v5114
  %6018 = vmatpush.bf16.msra.mxu0 %v5110
  %6019 = vmatpush.bf16.msra.mxu0 %v5106
  %6020 = vmatpush.bf16.msra.mxu0 %v5102
  %6021 = vmatpush.bf16.msra.mxu0 %v5098
  %6022 = vmatpush.bf16.msra.mxu0 %v5094
  %6023 = vmatpush.bf16.msra.mxu0 %v5090
  %6024 = vmatpush.bf16.msra.mxu0 %v5086
  %6025 = vmatmul.bf16.gmra.mxu0 %v4435
  %v6026 = vpop.f32.mrf.mxu0
  %v6027 = vadd.f32 %v4694, %v6026
  %v6028 = vpop.f32.mrf.mxu0
  %v6029 = vadd.f32 %v4694, %v6028
  %6030 = vmatmul.bf16.gmra.mxu0 %v4439
  %v6031 = vpop.f32.mrf.mxu0
  %v6032 = vadd.f32 %v4694, %v6031
  %v6033 = vpop.f32.mrf.mxu0
  %v6034 = vadd.f32 %v4694, %v6033
  %6035 = vmatmul.bf16.gmra.mxu0 %v4443
  %v6036 = vpop.f32.mrf.mxu0
  %v6037 = vadd.f32 %v4694, %v6036
  %v6038 = vpop.f32.mrf.mxu0
  %v6039 = vadd.f32 %v4694, %v6038
  %6040 = vmatmul.bf16.gmra.mxu0 %v4447
  %v6041 = vpop.f32.mrf.mxu0
  %v6042 = vadd.f32 %v4694, %v6041
  %v6043 = vpop.f32.mrf.mxu0
  %v6044 = vadd.f32 %v4694, %v6043
  %6045 = vmatmul.bf16.gmra.mxu0 %v4451
  %v6046 = vpop.f32.mrf.mxu0
  %v6047 = vadd.f32 %v4694, %v6046
  %v6048 = vpop.f32.mrf.mxu0
  %v6049 = vadd.f32 %v4694, %v6048
  %6050 = vmatmul.bf16.gmra.mxu0 %v4455
  %v6051 = vpop.f32.mrf.mxu0
  %v6052 = vadd.f32 %v4694, %v6051
  %v6053 = vpop.f32.mrf.mxu0
  %v6054 = vadd.f32 %v4694, %v6053
  %6055 = vmatmul.bf16.gmra.mxu0 %v4459
  %v6056 = vpop.f32.mrf.mxu0
  %v6057 = vadd.f32 %v4694, %v6056
  %v6058 = vpop.f32.mrf.mxu0
  %v6059 = vadd.f32 %v4694, %v6058
  %6060 = vmatmul.bf16.gmra.mxu0 %v4463
  %v6061 = vpop.f32.mrf.mxu0
  %v6062 = vadd.f32 %v4694, %v6061
  %v6063 = vpop.f32.mrf.mxu0
  %v6064 = vadd.f32 %v4694, %v6063
  %6065 = vmatmul.bf16.gmra.mxu0 %v4467
  %v6066 = vpop.f32.mrf.mxu0
  %v6067 = vadd.f32 %v4694, %v6066
  %v6068 = vpop.f32.mrf.mxu0
  %v6069 = vadd.f32 %v4694, %v6068
  %6070 = vmatmul.bf16.gmra.mxu0 %v4471
  %v6071 = vpop.f32.mrf.mxu0
  %v6072 = vadd.f32 %v4694, %v6071
  %v6073 = vpop.f32.mrf.mxu0
  %v6074 = vadd.f32 %v4694, %v6073
  %6075 = vmatmul.bf16.gmra.mxu0 %v4475
  %v6076 = vpop.f32.mrf.mxu0
  %v6077 = vadd.f32 %v4694, %v6076
  %v6078 = vpop.f32.mrf.mxu0
  %v6079 = vadd.f32 %v4694, %v6078
  %6080 = vmatmul.bf16.gmra.mxu0 %v4479
  %v6081 = vpop.f32.mrf.mxu0
  %v6082 = vadd.f32 %v4694, %v6081
  %v6083 = vpop.f32.mrf.mxu0
  %v6084 = vadd.f32 %v4694, %v6083
  %6085 = vmatmul.bf16.gmra.mxu0 %v4483
  %v6086 = vpop.f32.mrf.mxu0
  %v6087 = vadd.f32 %v4694, %v6086
  %v6088 = vpop.f32.mrf.mxu0
  %v6089 = vadd.f32 %v4694, %v6088
  %6090 = vmatmul.bf16.gmra.mxu0 %v4487
  %v6091 = vpop.f32.mrf.mxu0
  %v6092 = vadd.f32 %v4694, %v6091
  %v6093 = vpop.f32.mrf.mxu0
  %v6094 = vadd.f32 %v4694, %v6093
  %6095 = vmatmul.bf16.gmra.mxu0 %v4491
  %v6096 = vpop.f32.mrf.mxu0
  %v6097 = vadd.f32 %v4694, %v6096
  %v6098 = vpop.f32.mrf.mxu0
  %v6099 = vadd.f32 %v4694, %v6098
  %6100 = vmatmul.bf16.gmra.mxu0 %v4495
  %v6101 = vpop.f32.mrf.mxu0
  %v6102 = vadd.f32 %v4694, %v6101
  %v6103 = vpop.f32.mrf.mxu0
  %v6104 = vadd.f32 %v4694, %v6103
  %6105 = vmatmul.bf16.gmra.mxu0 %v4499
  %v6106 = vpop.f32.mrf.mxu0
  %v6107 = vadd.f32 %v4694, %v6106
  %v6108 = vpop.f32.mrf.mxu0
  %v6109 = vadd.f32 %v4694, %v6108
  %6110 = vmatmul.bf16.gmra.mxu0 %v4503
  %v6111 = vpop.f32.mrf.mxu0
  %v6112 = vadd.f32 %v4694, %v6111
  %v6113 = vpop.f32.mrf.mxu0
  %v6114 = vadd.f32 %v4694, %v6113
  %6115 = vmatmul.bf16.gmra.mxu0 %v4507
  %v6116 = vpop.f32.mrf.mxu0
  %v6117 = vadd.f32 %v4694, %v6116
  %v6118 = vpop.f32.mrf.mxu0
  %v6119 = vadd.f32 %v4694, %v6118
  %6120 = vmatmul.bf16.gmra.mxu0 %v4511
  %v6121 = vpop.f32.mrf.mxu0
  %v6122 = vadd.f32 %v4694, %v6121
  %v6123 = vpop.f32.mrf.mxu0
  %v6124 = vadd.f32 %v4694, %v6123
  %6125 = vmatmul.bf16.gmra.mxu0 %v4515
  %v6126 = vpop.f32.mrf.mxu0
  %v6127 = vadd.f32 %v4694, %v6126
  %v6128 = vpop.f32.mrf.mxu0
  %v6129 = vadd.f32 %v4694, %v6128
  %6130 = vmatmul.bf16.gmra.mxu0 %v4519
  %v6131 = vpop.f32.mrf.mxu0
  %v6132 = vadd.f32 %v4694, %v6131
  %v6133 = vpop.f32.mrf.mxu0
  %v6134 = vadd.f32 %v4694, %v6133
  %6135 = vmatmul.bf16.gmra.mxu0 %v4523
  %v6136 = vpop.f32.mrf.mxu0
  %v6137 = vadd.f32 %v4694, %v6136
  %v6138 = vpop.f32.mrf.mxu0
  %v6139 = vadd.f32 %v4694, %v6138
  %6140 = vmatmul.bf16.gmra.mxu0 %v4527
  %v6141 = vpop.f32.mrf.mxu0
  %v6142 = vadd.f32 %v4694, %v6141
  %v6143 = vpop.f32.mrf.mxu0
  %v6144 = vadd.f32 %v4694, %v6143
  %6145 = vmatmul.bf16.gmra.mxu0 %v4531
  %v6146 = vpop.f32.mrf.mxu0
  %v6147 = vadd.f32 %v4694, %v6146
  %v6148 = vpop.f32.mrf.mxu0
  %v6149 = vadd.f32 %v4694, %v6148
  %6150 = vmatmul.bf16.gmra.mxu0 %v4535
  %v6151 = vpop.f32.mrf.mxu0
  %v6152 = vadd.f32 %v4694, %v6151
  %v6153 = vpop.f32.mrf.mxu0
  %v6154 = vadd.f32 %v4694, %v6153
  %6155 = vmatmul.bf16.gmra.mxu0 %v4539
  %v6156 = vpop.f32.mrf.mxu0
  %v6157 = vadd.f32 %v4694, %v6156
  %v6158 = vpop.f32.mrf.mxu0
  %v6159 = vadd.f32 %v4694, %v6158
  %6160 = vmatmul.bf16.gmra.mxu0 %v4543
  %v6161 = vpop.f32.mrf.mxu0
  %v6162 = vadd.f32 %v4694, %v6161
  %v6163 = vpop.f32.mrf.mxu0
  %v6164 = vadd.f32 %v4694, %v6163
  %6165 = vmatmul.bf16.gmra.mxu0 %v4547
  %v6166 = vpop.f32.mrf.mxu0
  %v6167 = vadd.f32 %v4694, %v6166
  %v6168 = vpop.f32.mrf.mxu0
  %v6169 = vadd.f32 %v4694, %v6168
  %6170 = vmatmul.bf16.gmra.mxu0 %v4551
  %v6171 = vpop.f32.mrf.mxu0
  %v6172 = vadd.f32 %v4694, %v6171
  %v6173 = vpop.f32.mrf.mxu0
  %v6174 = vadd.f32 %v4694, %v6173
  %6175 = vmatmul.bf16.gmra.mxu0 %v4555
  %v6176 = vpop.f32.mrf.mxu0
  %v6177 = vadd.f32 %v4694, %v6176
  %v6178 = vpop.f32.mrf.mxu0
  %v6179 = vadd.f32 %v4694, %v6178
  %6180 = vmatmul.bf16.gmra.mxu0 %v4559
  %v6181 = vpop.f32.mrf.mxu0
  %v6182 = vadd.f32 %v4694, %v6181
  %v6183 = vpop.f32.mrf.mxu0
  %v6184 = vadd.f32 %v4694, %v6183
  %6185 = vdwg.mxu0
  %6186 = vmatpush.bf16.msra.mxu0 %v5146
  %6187 = vmatpush.bf16.msra.mxu0 %v5142
  %6188 = vmatpush.bf16.msra.mxu0 %v5138
  %6189 = vmatpush.bf16.msra.mxu0 %v5134
  %6190 = vmatpush.bf16.msra.mxu0 %v5130
  %6191 = vmatpush.bf16.msra.mxu0 %v5126
  %6192 = vmatpush.bf16.msra.mxu0 %v5122
  %6193 = vmatpush.bf16.msra.mxu0 %v5118
  %6194 = vmatmul.bf16.gmra.mxu0 %v4436
  %v6195 = vpop.f32.mrf.mxu0
  %v6196 = vadd.f32 %v6027, %v6195
  %v6197 = vpop.f32.mrf.mxu0
  %v6198 = vadd.f32 %v6029, %v6197
  %6199 = vmatmul.bf16.gmra.mxu0 %v4440
  %v6200 = vpop.f32.mrf.mxu0
  %v6201 = vadd.f32 %v6032, %v6200
  %v6202 = vpop.f32.mrf.mxu0
  %v6203 = vadd.f32 %v6034, %v6202
  %6204 = vmatmul.bf16.gmra.mxu0 %v4444
  %v6205 = vpop.f32.mrf.mxu0
  %v6206 = vadd.f32 %v6037, %v6205
  %v6207 = vpop.f32.mrf.mxu0
  %v6208 = vadd.f32 %v6039, %v6207
  %6209 = vmatmul.bf16.gmra.mxu0 %v4448
  %v6210 = vpop.f32.mrf.mxu0
  %v6211 = vadd.f32 %v6042, %v6210
  %v6212 = vpop.f32.mrf.mxu0
  %v6213 = vadd.f32 %v6044, %v6212
  %6214 = vmatmul.bf16.gmra.mxu0 %v4452
  %v6215 = vpop.f32.mrf.mxu0
  %v6216 = vadd.f32 %v6047, %v6215
  %v6217 = vpop.f32.mrf.mxu0
  %v6218 = vadd.f32 %v6049, %v6217
  %6219 = vmatmul.bf16.gmra.mxu0 %v4456
  %v6220 = vpop.f32.mrf.mxu0
  %v6221 = vadd.f32 %v6052, %v6220
  %v6222 = vpop.f32.mrf.mxu0
  %v6223 = vadd.f32 %v6054, %v6222
  %6224 = vmatmul.bf16.gmra.mxu0 %v4460
  %v6225 = vpop.f32.mrf.mxu0
  %v6226 = vadd.f32 %v6057, %v6225
  %v6227 = vpop.f32.mrf.mxu0
  %v6228 = vadd.f32 %v6059, %v6227
  %6229 = vmatmul.bf16.gmra.mxu0 %v4464
  %v6230 = vpop.f32.mrf.mxu0
  %v6231 = vadd.f32 %v6062, %v6230
  %v6232 = vpop.f32.mrf.mxu0
  %v6233 = vadd.f32 %v6064, %v6232
  %6234 = vmatmul.bf16.gmra.mxu0 %v4468
  %v6235 = vpop.f32.mrf.mxu0
  %v6236 = vadd.f32 %v6067, %v6235
  %v6237 = vpop.f32.mrf.mxu0
  %v6238 = vadd.f32 %v6069, %v6237
  %6239 = vmatmul.bf16.gmra.mxu0 %v4472
  %v6240 = vpop.f32.mrf.mxu0
  %v6241 = vadd.f32 %v6072, %v6240
  %v6242 = vpop.f32.mrf.mxu0
  %v6243 = vadd.f32 %v6074, %v6242
  %6244 = vmatmul.bf16.gmra.mxu0 %v4476
  %v6245 = vpop.f32.mrf.mxu0
  %v6246 = vadd.f32 %v6077, %v6245
  %v6247 = vpop.f32.mrf.mxu0
  %v6248 = vadd.f32 %v6079, %v6247
  %6249 = vmatmul.bf16.gmra.mxu0 %v4480
  %v6250 = vpop.f32.mrf.mxu0
  %v6251 = vadd.f32 %v6082, %v6250
  %v6252 = vpop.f32.mrf.mxu0
  %v6253 = vadd.f32 %v6084, %v6252
  %6254 = vmatmul.bf16.gmra.mxu0 %v4484
  %v6255 = vpop.f32.mrf.mxu0
  %v6256 = vadd.f32 %v6087, %v6255
  %v6257 = vpop.f32.mrf.mxu0
  %v6258 = vadd.f32 %v6089, %v6257
  %6259 = vmatmul.bf16.gmra.mxu0 %v4488
  %v6260 = vpop.f32.mrf.mxu0
  %v6261 = vadd.f32 %v6092, %v6260
  %v6262 = vpop.f32.mrf.mxu0
  %v6263 = vadd.f32 %v6094, %v6262
  %6264 = vmatmul.bf16.gmra.mxu0 %v4492
  %v6265 = vpop.f32.mrf.mxu0
  %v6266 = vadd.f32 %v6097, %v6265
  %v6267 = vpop.f32.mrf.mxu0
  %v6268 = vadd.f32 %v6099, %v6267
  %6269 = vmatmul.bf16.gmra.mxu0 %v4496
  %v6270 = vpop.f32.mrf.mxu0
  %v6271 = vadd.f32 %v6102, %v6270
  %v6272 = vpop.f32.mrf.mxu0
  %v6273 = vadd.f32 %v6104, %v6272
  %6274 = vmatmul.bf16.gmra.mxu0 %v4500
  %v6275 = vpop.f32.mrf.mxu0
  %v6276 = vadd.f32 %v6107, %v6275
  %v6277 = vpop.f32.mrf.mxu0
  %v6278 = vadd.f32 %v6109, %v6277
  %6279 = vmatmul.bf16.gmra.mxu0 %v4504
  %v6280 = vpop.f32.mrf.mxu0
  %v6281 = vadd.f32 %v6112, %v6280
  %v6282 = vpop.f32.mrf.mxu0
  %v6283 = vadd.f32 %v6114, %v6282
  %6284 = vmatmul.bf16.gmra.mxu0 %v4508
  %v6285 = vpop.f32.mrf.mxu0
  %v6286 = vadd.f32 %v6117, %v6285
  %v6287 = vpop.f32.mrf.mxu0
  %v6288 = vadd.f32 %v6119, %v6287
  %6289 = vmatmul.bf16.gmra.mxu0 %v4512
  %v6290 = vpop.f32.mrf.mxu0
  %v6291 = vadd.f32 %v6122, %v6290
  %v6292 = vpop.f32.mrf.mxu0
  %v6293 = vadd.f32 %v6124, %v6292
  %6294 = vmatmul.bf16.gmra.mxu0 %v4516
  %v6295 = vpop.f32.mrf.mxu0
  %v6296 = vadd.f32 %v6127, %v6295
  %v6297 = vpop.f32.mrf.mxu0
  %v6298 = vadd.f32 %v6129, %v6297
  %6299 = vmatmul.bf16.gmra.mxu0 %v4520
  %v6300 = vpop.f32.mrf.mxu0
  %v6301 = vadd.f32 %v6132, %v6300
  %v6302 = vpop.f32.mrf.mxu0
  %v6303 = vadd.f32 %v6134, %v6302
  %6304 = vmatmul.bf16.gmra.mxu0 %v4524
  %v6305 = vpop.f32.mrf.mxu0
  %v6306 = vadd.f32 %v6137, %v6305
  %v6307 = vpop.f32.mrf.mxu0
  %v6308 = vadd.f32 %v6139, %v6307
  %6309 = vmatmul.bf16.gmra.mxu0 %v4528
  %v6310 = vpop.f32.mrf.mxu0
  %v6311 = vadd.f32 %v6142, %v6310
  %v6312 = vpop.f32.mrf.mxu0
  %v6313 = vadd.f32 %v6144, %v6312
  %6314 = vmatmul.bf16.gmra.mxu0 %v4532
  %v6315 = vpop.f32.mrf.mxu0
  %v6316 = vadd.f32 %v6147, %v6315
  %v6317 = vpop.f32.mrf.mxu0
  %v6318 = vadd.f32 %v6149, %v6317
  %6319 = vmatmul.bf16.gmra.mxu0 %v4536
  %v6320 = vpop.f32.mrf.mxu0
  %v6321 = vadd.f32 %v6152, %v6320
  %v6322 = vpop.f32.mrf.mxu0
  %v6323 = vadd.f32 %v6154, %v6322
  %6324 = vmatmul.bf16.gmra.mxu0 %v4540
  %v6325 = vpop.f32.mrf.mxu0
  %v6326 = vadd.f32 %v6157, %v6325
  %v6327 = vpop.f32.mrf.mxu0
  %v6328 = vadd.f32 %v6159, %v6327
  %6329 = vmatmul.bf16.gmra.mxu0 %v4544
  %v6330 = vpop.f32.mrf.mxu0
  %v6331 = vadd.f32 %v6162, %v6330
  %v6332 = vpop.f32.mrf.mxu0
  %v6333 = vadd.f32 %v6164, %v6332
  %6334 = vmatmul.bf16.gmra.mxu0 %v4548
  %v6335 = vpop.f32.mrf.mxu0
  %v6336 = vadd.f32 %v6167, %v6335
  %v6337 = vpop.f32.mrf.mxu0
  %v6338 = vadd.f32 %v6169, %v6337
  %6339 = vmatmul.bf16.gmra.mxu0 %v4552
  %v6340 = vpop.f32.mrf.mxu0
  %v6341 = vadd.f32 %v6172, %v6340
  %v6342 = vpop.f32.mrf.mxu0
  %v6343 = vadd.f32 %v6174, %v6342
  %6344 = vmatmul.bf16.gmra.mxu0 %v4556
  %v6345 = vpop.f32.mrf.mxu0
  %v6346 = vadd.f32 %v6177, %v6345
  %v6347 = vpop.f32.mrf.mxu0
  %v6348 = vadd.f32 %v6179, %v6347
  %6349 = vmatmul.bf16.gmra.mxu0 %v4560
  %v6350 = vpop.f32.mrf.mxu0
  %v6351 = vadd.f32 %v6182, %v6350
  %v6352 = vpop.f32.mrf.mxu0
  %v6353 = vadd.f32 %v6184, %v6352
  %6354 = vdwg.mxu0
  %6355 = vmatpush.bf16.msra.mxu0 %v5178
  %6356 = vmatpush.bf16.msra.mxu0 %v5174
  %6357 = vmatpush.bf16.msra.mxu0 %v5170
  %6358 = vmatpush.bf16.msra.mxu0 %v5166
  %6359 = vmatpush.bf16.msra.mxu0 %v5162
  %6360 = vmatpush.bf16.msra.mxu0 %v5158
  %6361 = vmatpush.bf16.msra.mxu0 %v5154
  %6362 = vmatpush.bf16.msra.mxu0 %v5150
  %6363 = vmatmul.bf16.gmra.mxu0 %v4437
  %v6364 = vpop.f32.mrf.mxu0
  %v6365 = vadd.f32 %v6196, %v6364
  %v6366 = vpop.f32.mrf.mxu0
  %v6367 = vadd.f32 %v6198, %v6366
  %6368 = vmatmul.bf16.gmra.mxu0 %v4441
  %v6369 = vpop.f32.mrf.mxu0
  %v6370 = vadd.f32 %v6201, %v6369
  %v6371 = vpop.f32.mrf.mxu0
  %v6372 = vadd.f32 %v6203, %v6371
  %6373 = vmatmul.bf16.gmra.mxu0 %v4445
  %v6374 = vpop.f32.mrf.mxu0
  %v6375 = vadd.f32 %v6206, %v6374
  %v6376 = vpop.f32.mrf.mxu0
  %v6377 = vadd.f32 %v6208, %v6376
  %6378 = vmatmul.bf16.gmra.mxu0 %v4449
  %v6379 = vpop.f32.mrf.mxu0
  %v6380 = vadd.f32 %v6211, %v6379
  %v6381 = vpop.f32.mrf.mxu0
  %v6382 = vadd.f32 %v6213, %v6381
  %6383 = vmatmul.bf16.gmra.mxu0 %v4453
  %v6384 = vpop.f32.mrf.mxu0
  %v6385 = vadd.f32 %v6216, %v6384
  %v6386 = vpop.f32.mrf.mxu0
  %v6387 = vadd.f32 %v6218, %v6386
  %6388 = vmatmul.bf16.gmra.mxu0 %v4457
  %v6389 = vpop.f32.mrf.mxu0
  %v6390 = vadd.f32 %v6221, %v6389
  %v6391 = vpop.f32.mrf.mxu0
  %v6392 = vadd.f32 %v6223, %v6391
  %6393 = vmatmul.bf16.gmra.mxu0 %v4461
  %v6394 = vpop.f32.mrf.mxu0
  %v6395 = vadd.f32 %v6226, %v6394
  %v6396 = vpop.f32.mrf.mxu0
  %v6397 = vadd.f32 %v6228, %v6396
  %6398 = vmatmul.bf16.gmra.mxu0 %v4465
  %v6399 = vpop.f32.mrf.mxu0
  %v6400 = vadd.f32 %v6231, %v6399
  %v6401 = vpop.f32.mrf.mxu0
  %v6402 = vadd.f32 %v6233, %v6401
  %6403 = vmatmul.bf16.gmra.mxu0 %v4469
  %v6404 = vpop.f32.mrf.mxu0
  %v6405 = vadd.f32 %v6236, %v6404
  %v6406 = vpop.f32.mrf.mxu0
  %v6407 = vadd.f32 %v6238, %v6406
  %6408 = vmatmul.bf16.gmra.mxu0 %v4473
  %v6409 = vpop.f32.mrf.mxu0
  %v6410 = vadd.f32 %v6241, %v6409
  %v6411 = vpop.f32.mrf.mxu0
  %v6412 = vadd.f32 %v6243, %v6411
  %6413 = vmatmul.bf16.gmra.mxu0 %v4477
  %v6414 = vpop.f32.mrf.mxu0
  %v6415 = vadd.f32 %v6246, %v6414
  %v6416 = vpop.f32.mrf.mxu0
  %v6417 = vadd.f32 %v6248, %v6416
  %6418 = vmatmul.bf16.gmra.mxu0 %v4481
  %v6419 = vpop.f32.mrf.mxu0
  %v6420 = vadd.f32 %v6251, %v6419
  %v6421 = vpop.f32.mrf.mxu0
  %v6422 = vadd.f32 %v6253, %v6421
  %6423 = vmatmul.bf16.gmra.mxu0 %v4485
  %v6424 = vpop.f32.mrf.mxu0
  %v6425 = vadd.f32 %v6256, %v6424
  %v6426 = vpop.f32.mrf.mxu0
  %v6427 = vadd.f32 %v6258, %v6426
  %6428 = vmatmul.bf16.gmra.mxu0 %v4489
  %v6429 = vpop.f32.mrf.mxu0
  %v6430 = vadd.f32 %v6261, %v6429
  %v6431 = vpop.f32.mrf.mxu0
  %v6432 = vadd.f32 %v6263, %v6431
  %6433 = vmatmul.bf16.gmra.mxu0 %v4493
  %v6434 = vpop.f32.mrf.mxu0
  %v6435 = vadd.f32 %v6266, %v6434
  %v6436 = vpop.f32.mrf.mxu0
  %v6437 = vadd.f32 %v6268, %v6436
  %6438 = vmatmul.bf16.gmra.mxu0 %v4497
  %v6439 = vpop.f32.mrf.mxu0
  %v6440 = vadd.f32 %v6271, %v6439
  %v6441 = vpop.f32.mrf.mxu0
  %v6442 = vadd.f32 %v6273, %v6441
  %6443 = vmatmul.bf16.gmra.mxu0 %v4501
  %v6444 = vpop.f32.mrf.mxu0
  %v6445 = vadd.f32 %v6276, %v6444
  %v6446 = vpop.f32.mrf.mxu0
  %v6447 = vadd.f32 %v6278, %v6446
  %6448 = vmatmul.bf16.gmra.mxu0 %v4505
  %v6449 = vpop.f32.mrf.mxu0
  %v6450 = vadd.f32 %v6281, %v6449
  %v6451 = vpop.f32.mrf.mxu0
  %v6452 = vadd.f32 %v6283, %v6451
  %6453 = vmatmul.bf16.gmra.mxu0 %v4509
  %v6454 = vpop.f32.mrf.mxu0
  %v6455 = vadd.f32 %v6286, %v6454
  %v6456 = vpop.f32.mrf.mxu0
  %v6457 = vadd.f32 %v6288, %v6456
  %6458 = vmatmul.bf16.gmra.mxu0 %v4513
  %v6459 = vpop.f32.mrf.mxu0
  %v6460 = vadd.f32 %v6291, %v6459
  %v6461 = vpop.f32.mrf.mxu0
  %v6462 = vadd.f32 %v6293, %v6461
  %6463 = vmatmul.bf16.gmra.mxu0 %v4517
  %v6464 = vpop.f32.mrf.mxu0
  %v6465 = vadd.f32 %v6296, %v6464
  %v6466 = vpop.f32.mrf.mxu0
  %v6467 = vadd.f32 %v6298, %v6466
  %6468 = vmatmul.bf16.gmra.mxu0 %v4521
  %v6469 = vpop.f32.mrf.mxu0
  %v6470 = vadd.f32 %v6301, %v6469
  %v6471 = vpop.f32.mrf.mxu0
  %v6472 = vadd.f32 %v6303, %v6471
  %6473 = vmatmul.bf16.gmra.mxu0 %v4525
  %v6474 = vpop.f32.mrf.mxu0
  %v6475 = vadd.f32 %v6306, %v6474
  %v6476 = vpop.f32.mrf.mxu0
  %v6477 = vadd.f32 %v6308, %v6476
  %6478 = vmatmul.bf16.gmra.mxu0 %v4529
  %v6479 = vpop.f32.mrf.mxu0
  %v6480 = vadd.f32 %v6311, %v6479
  %v6481 = vpop.f32.mrf.mxu0
  %v6482 = vadd.f32 %v6313, %v6481
  %6483 = vmatmul.bf16.gmra.mxu0 %v4533
  %v6484 = vpop.f32.mrf.mxu0
  %v6485 = vadd.f32 %v6316, %v6484
  %v6486 = vpop.f32.mrf.mxu0
  %v6487 = vadd.f32 %v6318, %v6486
  %6488 = vmatmul.bf16.gmra.mxu0 %v4537
  %v6489 = vpop.f32.mrf.mxu0
  %v6490 = vadd.f32 %v6321, %v6489
  %v6491 = vpop.f32.mrf.mxu0
  %v6492 = vadd.f32 %v6323, %v6491
  %6493 = vmatmul.bf16.gmra.mxu0 %v4541
  %v6494 = vpop.f32.mrf.mxu0
  %v6495 = vadd.f32 %v6326, %v6494
  %v6496 = vpop.f32.mrf.mxu0
  %v6497 = vadd.f32 %v6328, %v6496
  %6498 = vmatmul.bf16.gmra.mxu0 %v4545
  %v6499 = vpop.f32.mrf.mxu0
  %v6500 = vadd.f32 %v6331, %v6499
  %v6501 = vpop.f32.mrf.mxu0
  %v6502 = vadd.f32 %v6333, %v6501
  %6503 = vmatmul.bf16.gmra.mxu0 %v4549
  %v6504 = vpop.f32.mrf.mxu0
  %v6505 = vadd.f32 %v6336, %v6504
  %v6506 = vpop.f32.mrf.mxu0
  %v6507 = vadd.f32 %v6338, %v6506
  %6508 = vmatmul.bf16.gmra.mxu0 %v4553
  %v6509 = vpop.f32.mrf.mxu0
  %v6510 = vadd.f32 %v6341, %v6509
  %v6511 = vpop.f32.mrf.mxu0
  %v6512 = vadd.f32 %v6343, %v6511
  %6513 = vmatmul.bf16.gmra.mxu0 %v4557
  %v6514 = vpop.f32.mrf.mxu0
  %v6515 = vadd.f32 %v6346, %v6514
  %v6516 = vpop.f32.mrf.mxu0
  %v6517 = vadd.f32 %v6348, %v6516
  %6518 = vmatmul.bf16.gmra.mxu0 %v4561
  %v6519 = vpop.f32.mrf.mxu0
  %v6520 = vadd.f32 %v6351, %v6519
  %v6521 = vpop.f32.mrf.mxu0
  %v6522 = vadd.f32 %v6353, %v6521
  %6523 = vdwg.mxu0
  %6524 = vmatpush.bf16.msra.mxu0 %v5210
  %6525 = vmatpush.bf16.msra.mxu0 %v5206
  %6526 = vmatpush.bf16.msra.mxu0 %v5202
  %6527 = vmatpush.bf16.msra.mxu0 %v5198
  %6528 = vmatpush.bf16.msra.mxu0 %v5194
  %6529 = vmatpush.bf16.msra.mxu0 %v5190
  %6530 = vmatpush.bf16.msra.mxu0 %v5186
  %6531 = vmatpush.bf16.msra.mxu0 %v5182
  %6532 = vmatmul.bf16.gmra.mxu0 %v4438
  %v6533 = vpop.f32.mrf.mxu0
  %v6534 = vadd.f32 %v6365, %v6533
  %v6535 = vpop.f32.mrf.mxu0
  %v6536 = vadd.f32 %v6367, %v6535
  %6537 = vmatmul.bf16.gmra.mxu0 %v4442
  %v6538 = vpop.f32.mrf.mxu0
  %v6539 = vadd.f32 %v6370, %v6538
  %v6540 = vpop.f32.mrf.mxu0
  %v6541 = vadd.f32 %v6372, %v6540
  %6542 = vmatmul.bf16.gmra.mxu0 %v4446
  %v6543 = vpop.f32.mrf.mxu0
  %v6544 = vadd.f32 %v6375, %v6543
  %v6545 = vpop.f32.mrf.mxu0
  %v6546 = vadd.f32 %v6377, %v6545
  %6547 = vmatmul.bf16.gmra.mxu0 %v4450
  %v6548 = vpop.f32.mrf.mxu0
  %v6549 = vadd.f32 %v6380, %v6548
  %v6550 = vpop.f32.mrf.mxu0
  %v6551 = vadd.f32 %v6382, %v6550
  %6552 = vmatmul.bf16.gmra.mxu0 %v4454
  %v6553 = vpop.f32.mrf.mxu0
  %v6554 = vadd.f32 %v6385, %v6553
  %v6555 = vpop.f32.mrf.mxu0
  %v6556 = vadd.f32 %v6387, %v6555
  %6557 = vmatmul.bf16.gmra.mxu0 %v4458
  %v6558 = vpop.f32.mrf.mxu0
  %v6559 = vadd.f32 %v6390, %v6558
  %v6560 = vpop.f32.mrf.mxu0
  %v6561 = vadd.f32 %v6392, %v6560
  %6562 = vmatmul.bf16.gmra.mxu0 %v4462
  %v6563 = vpop.f32.mrf.mxu0
  %v6564 = vadd.f32 %v6395, %v6563
  %v6565 = vpop.f32.mrf.mxu0
  %v6566 = vadd.f32 %v6397, %v6565
  %6567 = vmatmul.bf16.gmra.mxu0 %v4466
  %v6568 = vpop.f32.mrf.mxu0
  %v6569 = vadd.f32 %v6400, %v6568
  %v6570 = vpop.f32.mrf.mxu0
  %v6571 = vadd.f32 %v6402, %v6570
  %6572 = vmatmul.bf16.gmra.mxu0 %v4470
  %v6573 = vpop.f32.mrf.mxu0
  %v6574 = vadd.f32 %v6405, %v6573
  %v6575 = vpop.f32.mrf.mxu0
  %v6576 = vadd.f32 %v6407, %v6575
  %6577 = vmatmul.bf16.gmra.mxu0 %v4474
  %v6578 = vpop.f32.mrf.mxu0
  %v6579 = vadd.f32 %v6410, %v6578
  %v6580 = vpop.f32.mrf.mxu0
  %v6581 = vadd.f32 %v6412, %v6580
  %6582 = vmatmul.bf16.gmra.mxu0 %v4478
  %v6583 = vpop.f32.mrf.mxu0
  %v6584 = vadd.f32 %v6415, %v6583
  %v6585 = vpop.f32.mrf.mxu0
  %v6586 = vadd.f32 %v6417, %v6585
  %6587 = vmatmul.bf16.gmra.mxu0 %v4482
  %v6588 = vpop.f32.mrf.mxu0
  %v6589 = vadd.f32 %v6420, %v6588
  %v6590 = vpop.f32.mrf.mxu0
  %v6591 = vadd.f32 %v6422, %v6590
  %6592 = vmatmul.bf16.gmra.mxu0 %v4486
  %v6593 = vpop.f32.mrf.mxu0
  %v6594 = vadd.f32 %v6425, %v6593
  %v6595 = vpop.f32.mrf.mxu0
  %v6596 = vadd.f32 %v6427, %v6595
  %6597 = vmatmul.bf16.gmra.mxu0 %v4490
  %v6598 = vpop.f32.mrf.mxu0
  %v6599 = vadd.f32 %v6430, %v6598
  %v6600 = vpop.f32.mrf.mxu0
  %v6601 = vadd.f32 %v6432, %v6600
  %6602 = vmatmul.bf16.gmra.mxu0 %v4494
  %v6603 = vpop.f32.mrf.mxu0
  %v6604 = vadd.f32 %v6435, %v6603
  %v6605 = vpop.f32.mrf.mxu0
  %v6606 = vadd.f32 %v6437, %v6605
  %6607 = vmatmul.bf16.gmra.mxu0 %v4498
  %v6608 = vpop.f32.mrf.mxu0
  %v6609 = vadd.f32 %v6440, %v6608
  %v6610 = vpop.f32.mrf.mxu0
  %v6611 = vadd.f32 %v6442, %v6610
  %6612 = vmatmul.bf16.gmra.mxu0 %v4502
  %v6613 = vpop.f32.mrf.mxu0
  %v6614 = vadd.f32 %v6445, %v6613
  %v6615 = vpop.f32.mrf.mxu0
  %v6616 = vadd.f32 %v6447, %v6615
  %6617 = vmatmul.bf16.gmra.mxu0 %v4506
  %v6618 = vpop.f32.mrf.mxu0
  %v6619 = vadd.f32 %v6450, %v6618
  %v6620 = vpop.f32.mrf.mxu0
  %v6621 = vadd.f32 %v6452, %v6620
  %6622 = vmatmul.bf16.gmra.mxu0 %v4510
  %v6623 = vpop.f32.mrf.mxu0
  %v6624 = vadd.f32 %v6455, %v6623
  %v6625 = vpop.f32.mrf.mxu0
  %v6626 = vadd.f32 %v6457, %v6625
  %6627 = vmatmul.bf16.gmra.mxu0 %v4514
  %v6628 = vpop.f32.mrf.mxu0
  %v6629 = vadd.f32 %v6460, %v6628
  %v6630 = vpop.f32.mrf.mxu0
  %v6631 = vadd.f32 %v6462, %v6630
  %6632 = vmatmul.bf16.gmra.mxu0 %v4518
  %v6633 = vpop.f32.mrf.mxu0
  %v6634 = vadd.f32 %v6465, %v6633
  %v6635 = vpop.f32.mrf.mxu0
  %v6636 = vadd.f32 %v6467, %v6635
  %6637 = vmatmul.bf16.gmra.mxu0 %v4522
  %v6638 = vpop.f32.mrf.mxu0
  %v6639 = vadd.f32 %v6470, %v6638
  %v6640 = vpop.f32.mrf.mxu0
  %v6641 = vadd.f32 %v6472, %v6640
  %6642 = vmatmul.bf16.gmra.mxu0 %v4526
  %v6643 = vpop.f32.mrf.mxu0
  %v6644 = vadd.f32 %v6475, %v6643
  %v6645 = vpop.f32.mrf.mxu0
  %v6646 = vadd.f32 %v6477, %v6645
  %6647 = vmatmul.bf16.gmra.mxu0 %v4530
  %v6648 = vpop.f32.mrf.mxu0
  %v6649 = vadd.f32 %v6480, %v6648
  %v6650 = vpop.f32.mrf.mxu0
  %v6651 = vadd.f32 %v6482, %v6650
  %6652 = vmatmul.bf16.gmra.mxu0 %v4534
  %v6653 = vpop.f32.mrf.mxu0
  %v6654 = vadd.f32 %v6485, %v6653
  %v6655 = vpop.f32.mrf.mxu0
  %v6656 = vadd.f32 %v6487, %v6655
  %6657 = vmatmul.bf16.gmra.mxu0 %v4538
  %v6658 = vpop.f32.mrf.mxu0
  %v6659 = vadd.f32 %v6490, %v6658
  %v6660 = vpop.f32.mrf.mxu0
  %v6661 = vadd.f32 %v6492, %v6660
  %6662 = vmatmul.bf16.gmra.mxu0 %v4542
  %v6663 = vpop.f32.mrf.mxu0
  %v6664 = vadd.f32 %v6495, %v6663
  %v6665 = vpop.f32.mrf.mxu0
  %v6666 = vadd.f32 %v6497, %v6665
  %6667 = vmatmul.bf16.gmra.mxu0 %v4546
  %v6668 = vpop.f32.mrf.mxu0
  %v6669 = vadd.f32 %v6500, %v6668
  %v6670 = vpop.f32.mrf.mxu0
  %v6671 = vadd.f32 %v6502, %v6670
  %6672 = vmatmul.bf16.gmra.mxu0 %v4550
  %v6673 = vpop.f32.mrf.mxu0
  %v6674 = vadd.f32 %v6505, %v6673
  %v6675 = vpop.f32.mrf.mxu0
  %v6676 = vadd.f32 %v6507, %v6675
  %6677 = vmatmul.bf16.gmra.mxu0 %v4554
  %v6678 = vpop.f32.mrf.mxu0
  %v6679 = vadd.f32 %v6510, %v6678
  %v6680 = vpop.f32.mrf.mxu0
  %v6681 = vadd.f32 %v6512, %v6680
  %6682 = vmatmul.bf16.gmra.mxu0 %v4558
  %v6683 = vpop.f32.mrf.mxu0
  %v6684 = vadd.f32 %v6515, %v6683
  %v6685 = vpop.f32.mrf.mxu0
  %v6686 = vadd.f32 %v6517, %v6685
  %6687 = vmatmul.bf16.gmra.mxu0 %v4562
  %v6688 = vpop.f32.mrf.mxu0
  %v6689 = vadd.f32 %v6520, %v6688
  %v6690 = vpop.f32.mrf.mxu0
  %v6691 = vadd.f32 %v6522, %v6690
  %6692 = vdwg.mxu0
  %6693 = vmatpush.bf16.msra.mxu0 %v5115
  %6694 = vmatpush.bf16.msra.mxu0 %v5111
  %6695 = vmatpush.bf16.msra.mxu0 %v5107
  %6696 = vmatpush.bf16.msra.mxu0 %v5103
  %6697 = vmatpush.bf16.msra.mxu0 %v5099
  %6698 = vmatpush.bf16.msra.mxu0 %v5095
  %6699 = vmatpush.bf16.msra.mxu0 %v5091
  %6700 = vmatpush.bf16.msra.mxu0 %v5087
  %6701 = vmatmul.bf16.gmra.mxu0 %v4435
  %v6702 = vpop.f32.mrf.mxu0
  %v6703 = vadd.f32 %v4695, %v6702
  %v6704 = vpop.f32.mrf.mxu0
  %v6705 = vadd.f32 %v4695, %v6704
  %6706 = vmatmul.bf16.gmra.mxu0 %v4439
  %v6707 = vpop.f32.mrf.mxu0
  %v6708 = vadd.f32 %v4695, %v6707
  %v6709 = vpop.f32.mrf.mxu0
  %v6710 = vadd.f32 %v4695, %v6709
  %6711 = vmatmul.bf16.gmra.mxu0 %v4443
  %v6712 = vpop.f32.mrf.mxu0
  %v6713 = vadd.f32 %v4695, %v6712
  %v6714 = vpop.f32.mrf.mxu0
  %v6715 = vadd.f32 %v4695, %v6714
  %6716 = vmatmul.bf16.gmra.mxu0 %v4447
  %v6717 = vpop.f32.mrf.mxu0
  %v6718 = vadd.f32 %v4695, %v6717
  %v6719 = vpop.f32.mrf.mxu0
  %v6720 = vadd.f32 %v4695, %v6719
  %6721 = vmatmul.bf16.gmra.mxu0 %v4451
  %v6722 = vpop.f32.mrf.mxu0
  %v6723 = vadd.f32 %v4695, %v6722
  %v6724 = vpop.f32.mrf.mxu0
  %v6725 = vadd.f32 %v4695, %v6724
  %6726 = vmatmul.bf16.gmra.mxu0 %v4455
  %v6727 = vpop.f32.mrf.mxu0
  %v6728 = vadd.f32 %v4695, %v6727
  %v6729 = vpop.f32.mrf.mxu0
  %v6730 = vadd.f32 %v4695, %v6729
  %6731 = vmatmul.bf16.gmra.mxu0 %v4459
  %v6732 = vpop.f32.mrf.mxu0
  %v6733 = vadd.f32 %v4695, %v6732
  %v6734 = vpop.f32.mrf.mxu0
  %v6735 = vadd.f32 %v4695, %v6734
  %6736 = vmatmul.bf16.gmra.mxu0 %v4463
  %v6737 = vpop.f32.mrf.mxu0
  %v6738 = vadd.f32 %v4695, %v6737
  %v6739 = vpop.f32.mrf.mxu0
  %v6740 = vadd.f32 %v4695, %v6739
  %6741 = vmatmul.bf16.gmra.mxu0 %v4467
  %v6742 = vpop.f32.mrf.mxu0
  %v6743 = vadd.f32 %v4695, %v6742
  %v6744 = vpop.f32.mrf.mxu0
  %v6745 = vadd.f32 %v4695, %v6744
  %6746 = vmatmul.bf16.gmra.mxu0 %v4471
  %v6747 = vpop.f32.mrf.mxu0
  %v6748 = vadd.f32 %v4695, %v6747
  %v6749 = vpop.f32.mrf.mxu0
  %v6750 = vadd.f32 %v4695, %v6749
  %6751 = vmatmul.bf16.gmra.mxu0 %v4475
  %v6752 = vpop.f32.mrf.mxu0
  %v6753 = vadd.f32 %v4695, %v6752
  %v6754 = vpop.f32.mrf.mxu0
  %v6755 = vadd.f32 %v4695, %v6754
  %6756 = vmatmul.bf16.gmra.mxu0 %v4479
  %v6757 = vpop.f32.mrf.mxu0
  %v6758 = vadd.f32 %v4695, %v6757
  %v6759 = vpop.f32.mrf.mxu0
  %v6760 = vadd.f32 %v4695, %v6759
  %6761 = vmatmul.bf16.gmra.mxu0 %v4483
  %v6762 = vpop.f32.mrf.mxu0
  %v6763 = vadd.f32 %v4695, %v6762
  %v6764 = vpop.f32.mrf.mxu0
  %v6765 = vadd.f32 %v4695, %v6764
  %6766 = vmatmul.bf16.gmra.mxu0 %v4487
  %v6767 = vpop.f32.mrf.mxu0
  %v6768 = vadd.f32 %v4695, %v6767
  %v6769 = vpop.f32.mrf.mxu0
  %v6770 = vadd.f32 %v4695, %v6769
  %6771 = vmatmul.bf16.gmra.mxu0 %v4491
  %v6772 = vpop.f32.mrf.mxu0
  %v6773 = vadd.f32 %v4695, %v6772
  %v6774 = vpop.f32.mrf.mxu0
  %v6775 = vadd.f32 %v4695, %v6774
  %6776 = vmatmul.bf16.gmra.mxu0 %v4495
  %v6777 = vpop.f32.mrf.mxu0
  %v6778 = vadd.f32 %v4695, %v6777
  %v6779 = vpop.f32.mrf.mxu0
  %v6780 = vadd.f32 %v4695, %v6779
  %6781 = vmatmul.bf16.gmra.mxu0 %v4499
  %v6782 = vpop.f32.mrf.mxu0
  %v6783 = vadd.f32 %v4695, %v6782
  %v6784 = vpop.f32.mrf.mxu0
  %v6785 = vadd.f32 %v4695, %v6784
  %6786 = vmatmul.bf16.gmra.mxu0 %v4503
  %v6787 = vpop.f32.mrf.mxu0
  %v6788 = vadd.f32 %v4695, %v6787
  %v6789 = vpop.f32.mrf.mxu0
  %v6790 = vadd.f32 %v4695, %v6789
  %6791 = vmatmul.bf16.gmra.mxu0 %v4507
  %v6792 = vpop.f32.mrf.mxu0
  %v6793 = vadd.f32 %v4695, %v6792
  %v6794 = vpop.f32.mrf.mxu0
  %v6795 = vadd.f32 %v4695, %v6794
  %6796 = vmatmul.bf16.gmra.mxu0 %v4511
  %v6797 = vpop.f32.mrf.mxu0
  %v6798 = vadd.f32 %v4695, %v6797
  %v6799 = vpop.f32.mrf.mxu0
  %v6800 = vadd.f32 %v4695, %v6799
  %6801 = vmatmul.bf16.gmra.mxu0 %v4515
  %v6802 = vpop.f32.mrf.mxu0
  %v6803 = vadd.f32 %v4695, %v6802
  %v6804 = vpop.f32.mrf.mxu0
  %v6805 = vadd.f32 %v4695, %v6804
  %6806 = vmatmul.bf16.gmra.mxu0 %v4519
  %v6807 = vpop.f32.mrf.mxu0
  %v6808 = vadd.f32 %v4695, %v6807
  %v6809 = vpop.f32.mrf.mxu0
  %v6810 = vadd.f32 %v4695, %v6809
  %6811 = vmatmul.bf16.gmra.mxu0 %v4523
  %v6812 = vpop.f32.mrf.mxu0
  %v6813 = vadd.f32 %v4695, %v6812
  %v6814 = vpop.f32.mrf.mxu0
  %v6815 = vadd.f32 %v4695, %v6814
  %6816 = vmatmul.bf16.gmra.mxu0 %v4527
  %v6817 = vpop.f32.mrf.mxu0
  %v6818 = vadd.f32 %v4695, %v6817
  %v6819 = vpop.f32.mrf.mxu0
  %v6820 = vadd.f32 %v4695, %v6819
  %6821 = vmatmul.bf16.gmra.mxu0 %v4531
  %v6822 = vpop.f32.mrf.mxu0
  %v6823 = vadd.f32 %v4695, %v6822
  %v6824 = vpop.f32.mrf.mxu0
  %v6825 = vadd.f32 %v4695, %v6824
  %6826 = vmatmul.bf16.gmra.mxu0 %v4535
  %v6827 = vpop.f32.mrf.mxu0
  %v6828 = vadd.f32 %v4695, %v6827
  %v6829 = vpop.f32.mrf.mxu0
  %v6830 = vadd.f32 %v4695, %v6829
  %6831 = vmatmul.bf16.gmra.mxu0 %v4539
  %v6832 = vpop.f32.mrf.mxu0
  %v6833 = vadd.f32 %v4695, %v6832
  %v6834 = vpop.f32.mrf.mxu0
  %v6835 = vadd.f32 %v4695, %v6834
  %6836 = vmatmul.bf16.gmra.mxu0 %v4543
  %v6837 = vpop.f32.mrf.mxu0
  %v6838 = vadd.f32 %v4695, %v6837
  %v6839 = vpop.f32.mrf.mxu0
  %v6840 = vadd.f32 %v4695, %v6839
  %6841 = vmatmul.bf16.gmra.mxu0 %v4547
  %v6842 = vpop.f32.mrf.mxu0
  %v6843 = vadd.f32 %v4695, %v6842
  %v6844 = vpop.f32.mrf.mxu0
  %v6845 = vadd.f32 %v4695, %v6844
  %6846 = vmatmul.bf16.gmra.mxu0 %v4551
  %v6847 = vpop.f32.mrf.mxu0
  %v6848 = vadd.f32 %v4695, %v6847
  %v6849 = vpop.f32.mrf.mxu0
  %v6850 = vadd.f32 %v4695, %v6849
  %6851 = vmatmul.bf16.gmra.mxu0 %v4555
  %v6852 = vpop.f32.mrf.mxu0
  %v6853 = vadd.f32 %v4695, %v6852
  %v6854 = vpop.f32.mrf.mxu0
  %v6855 = vadd.f32 %v4695, %v6854
  %6856 = vmatmul.bf16.gmra.mxu0 %v4559
  %v6857 = vpop.f32.mrf.mxu0
  %v6858 = vadd.f32 %v4695, %v6857
  %v6859 = vpop.f32.mrf.mxu0
  %v6860 = vadd.f32 %v4695, %v6859
  %6861 = vdwg.mxu0
  %6862 = vmatpush.bf16.msra.mxu0 %v5147
  %6863 = vmatpush.bf16.msra.mxu0 %v5143
  %6864 = vmatpush.bf16.msra.mxu0 %v5139
  %6865 = vmatpush.bf16.msra.mxu0 %v5135
  %6866 = vmatpush.bf16.msra.mxu0 %v5131
  %6867 = vmatpush.bf16.msra.mxu0 %v5127
  %6868 = vmatpush.bf16.msra.mxu0 %v5123
  %6869 = vmatpush.bf16.msra.mxu0 %v5119
  %6870 = vmatmul.bf16.gmra.mxu0 %v4436
  %v6871 = vpop.f32.mrf.mxu0
  %v6872 = vadd.f32 %v6703, %v6871
  %v6873 = vpop.f32.mrf.mxu0
  %v6874 = vadd.f32 %v6705, %v6873
  %6875 = vmatmul.bf16.gmra.mxu0 %v4440
  %v6876 = vpop.f32.mrf.mxu0
  %v6877 = vadd.f32 %v6708, %v6876
  %v6878 = vpop.f32.mrf.mxu0
  %v6879 = vadd.f32 %v6710, %v6878
  %6880 = vmatmul.bf16.gmra.mxu0 %v4444
  %v6881 = vpop.f32.mrf.mxu0
  %v6882 = vadd.f32 %v6713, %v6881
  %v6883 = vpop.f32.mrf.mxu0
  %v6884 = vadd.f32 %v6715, %v6883
  %6885 = vmatmul.bf16.gmra.mxu0 %v4448
  %v6886 = vpop.f32.mrf.mxu0
  %v6887 = vadd.f32 %v6718, %v6886
  %v6888 = vpop.f32.mrf.mxu0
  %v6889 = vadd.f32 %v6720, %v6888
  %6890 = vmatmul.bf16.gmra.mxu0 %v4452
  %v6891 = vpop.f32.mrf.mxu0
  %v6892 = vadd.f32 %v6723, %v6891
  %v6893 = vpop.f32.mrf.mxu0
  %v6894 = vadd.f32 %v6725, %v6893
  %6895 = vmatmul.bf16.gmra.mxu0 %v4456
  %v6896 = vpop.f32.mrf.mxu0
  %v6897 = vadd.f32 %v6728, %v6896
  %v6898 = vpop.f32.mrf.mxu0
  %v6899 = vadd.f32 %v6730, %v6898
  %6900 = vmatmul.bf16.gmra.mxu0 %v4460
  %v6901 = vpop.f32.mrf.mxu0
  %v6902 = vadd.f32 %v6733, %v6901
  %v6903 = vpop.f32.mrf.mxu0
  %v6904 = vadd.f32 %v6735, %v6903
  %6905 = vmatmul.bf16.gmra.mxu0 %v4464
  %v6906 = vpop.f32.mrf.mxu0
  %v6907 = vadd.f32 %v6738, %v6906
  %v6908 = vpop.f32.mrf.mxu0
  %v6909 = vadd.f32 %v6740, %v6908
  %6910 = vmatmul.bf16.gmra.mxu0 %v4468
  %v6911 = vpop.f32.mrf.mxu0
  %v6912 = vadd.f32 %v6743, %v6911
  %v6913 = vpop.f32.mrf.mxu0
  %v6914 = vadd.f32 %v6745, %v6913
  %6915 = vmatmul.bf16.gmra.mxu0 %v4472
  %v6916 = vpop.f32.mrf.mxu0
  %v6917 = vadd.f32 %v6748, %v6916
  %v6918 = vpop.f32.mrf.mxu0
  %v6919 = vadd.f32 %v6750, %v6918
  %6920 = vmatmul.bf16.gmra.mxu0 %v4476
  %v6921 = vpop.f32.mrf.mxu0
  %v6922 = vadd.f32 %v6753, %v6921
  %v6923 = vpop.f32.mrf.mxu0
  %v6924 = vadd.f32 %v6755, %v6923
  %6925 = vmatmul.bf16.gmra.mxu0 %v4480
  %v6926 = vpop.f32.mrf.mxu0
  %v6927 = vadd.f32 %v6758, %v6926
  %v6928 = vpop.f32.mrf.mxu0
  %v6929 = vadd.f32 %v6760, %v6928
  %6930 = vmatmul.bf16.gmra.mxu0 %v4484
  %v6931 = vpop.f32.mrf.mxu0
  %v6932 = vadd.f32 %v6763, %v6931
  %v6933 = vpop.f32.mrf.mxu0
  %v6934 = vadd.f32 %v6765, %v6933
  %6935 = vmatmul.bf16.gmra.mxu0 %v4488
  %v6936 = vpop.f32.mrf.mxu0
  %v6937 = vadd.f32 %v6768, %v6936
  %v6938 = vpop.f32.mrf.mxu0
  %v6939 = vadd.f32 %v6770, %v6938
  %6940 = vmatmul.bf16.gmra.mxu0 %v4492
  %v6941 = vpop.f32.mrf.mxu0
  %v6942 = vadd.f32 %v6773, %v6941
  %v6943 = vpop.f32.mrf.mxu0
  %v6944 = vadd.f32 %v6775, %v6943
  %6945 = vmatmul.bf16.gmra.mxu0 %v4496
  %v6946 = vpop.f32.mrf.mxu0
  %v6947 = vadd.f32 %v6778, %v6946
  %v6948 = vpop.f32.mrf.mxu0
  %v6949 = vadd.f32 %v6780, %v6948
  %6950 = vmatmul.bf16.gmra.mxu0 %v4500
  %v6951 = vpop.f32.mrf.mxu0
  %v6952 = vadd.f32 %v6783, %v6951
  %v6953 = vpop.f32.mrf.mxu0
  %v6954 = vadd.f32 %v6785, %v6953
  %6955 = vmatmul.bf16.gmra.mxu0 %v4504
  %v6956 = vpop.f32.mrf.mxu0
  %v6957 = vadd.f32 %v6788, %v6956
  %v6958 = vpop.f32.mrf.mxu0
  %v6959 = vadd.f32 %v6790, %v6958
  %6960 = vmatmul.bf16.gmra.mxu0 %v4508
  %v6961 = vpop.f32.mrf.mxu0
  %v6962 = vadd.f32 %v6793, %v6961
  %v6963 = vpop.f32.mrf.mxu0
  %v6964 = vadd.f32 %v6795, %v6963
  %6965 = vmatmul.bf16.gmra.mxu0 %v4512
  %v6966 = vpop.f32.mrf.mxu0
  %v6967 = vadd.f32 %v6798, %v6966
  %v6968 = vpop.f32.mrf.mxu0
  %v6969 = vadd.f32 %v6800, %v6968
  %6970 = vmatmul.bf16.gmra.mxu0 %v4516
  %v6971 = vpop.f32.mrf.mxu0
  %v6972 = vadd.f32 %v6803, %v6971
  %v6973 = vpop.f32.mrf.mxu0
  %v6974 = vadd.f32 %v6805, %v6973
  %6975 = vmatmul.bf16.gmra.mxu0 %v4520
  %v6976 = vpop.f32.mrf.mxu0
  %v6977 = vadd.f32 %v6808, %v6976
  %v6978 = vpop.f32.mrf.mxu0
  %v6979 = vadd.f32 %v6810, %v6978
  %6980 = vmatmul.bf16.gmra.mxu0 %v4524
  %v6981 = vpop.f32.mrf.mxu0
  %v6982 = vadd.f32 %v6813, %v6981
  %v6983 = vpop.f32.mrf.mxu0
  %v6984 = vadd.f32 %v6815, %v6983
  %6985 = vmatmul.bf16.gmra.mxu0 %v4528
  %v6986 = vpop.f32.mrf.mxu0
  %v6987 = vadd.f32 %v6818, %v6986
  %v6988 = vpop.f32.mrf.mxu0
  %v6989 = vadd.f32 %v6820, %v6988
  %6990 = vmatmul.bf16.gmra.mxu0 %v4532
  %v6991 = vpop.f32.mrf.mxu0
  %v6992 = vadd.f32 %v6823, %v6991
  %v6993 = vpop.f32.mrf.mxu0
  %v6994 = vadd.f32 %v6825, %v6993
  %6995 = vmatmul.bf16.gmra.mxu0 %v4536
  %v6996 = vpop.f32.mrf.mxu0
  %v6997 = vadd.f32 %v6828, %v6996
  %v6998 = vpop.f32.mrf.mxu0
  %v6999 = vadd.f32 %v6830, %v6998
  %7000 = vmatmul.bf16.gmra.mxu0 %v4540
  %v7001 = vpop.f32.mrf.mxu0
  %v7002 = vadd.f32 %v6833, %v7001
  %v7003 = vpop.f32.mrf.mxu0
  %v7004 = vadd.f32 %v6835, %v7003
  %7005 = vmatmul.bf16.gmra.mxu0 %v4544
  %v7006 = vpop.f32.mrf.mxu0
  %v7007 = vadd.f32 %v6838, %v7006
  %v7008 = vpop.f32.mrf.mxu0
  %v7009 = vadd.f32 %v6840, %v7008
  %7010 = vmatmul.bf16.gmra.mxu0 %v4548
  %v7011 = vpop.f32.mrf.mxu0
  %v7012 = vadd.f32 %v6843, %v7011
  %v7013 = vpop.f32.mrf.mxu0
  %v7014 = vadd.f32 %v6845, %v7013
  %7015 = vmatmul.bf16.gmra.mxu0 %v4552
  %v7016 = vpop.f32.mrf.mxu0
  %v7017 = vadd.f32 %v6848, %v7016
  %v7018 = vpop.f32.mrf.mxu0
  %v7019 = vadd.f32 %v6850, %v7018
  %7020 = vmatmul.bf16.gmra.mxu0 %v4556
  %v7021 = vpop.f32.mrf.mxu0
  %v7022 = vadd.f32 %v6853, %v7021
  %v7023 = vpop.f32.mrf.mxu0
  %v7024 = vadd.f32 %v6855, %v7023
  %7025 = vmatmul.bf16.gmra.mxu0 %v4560
  %v7026 = vpop.f32.mrf.mxu0
  %v7027 = vadd.f32 %v6858, %v7026
  %v7028 = vpop.f32.mrf.mxu0
  %v7029 = vadd.f32 %v6860, %v7028
  %7030 = vdwg.mxu0
  %7031 = vmatpush.bf16.msra.mxu0 %v5179
  %7032 = vmatpush.bf16.msra.mxu0 %v5175
  %7033 = vmatpush.bf16.msra.mxu0 %v5171
  %7034 = vmatpush.bf16.msra.mxu0 %v5167
  %7035 = vmatpush.bf16.msra.mxu0 %v5163
  %7036 = vmatpush.bf16.msra.mxu0 %v5159
  %7037 = vmatpush.bf16.msra.mxu0 %v5155
  %7038 = vmatpush.bf16.msra.mxu0 %v5151
  %7039 = vmatmul.bf16.gmra.mxu0 %v4437
  %v7040 = vpop.f32.mrf.mxu0
  %v7041 = vadd.f32 %v6872, %v7040
  %v7042 = vpop.f32.mrf.mxu0
  %v7043 = vadd.f32 %v6874, %v7042
  %7044 = vmatmul.bf16.gmra.mxu0 %v4441
  %v7045 = vpop.f32.mrf.mxu0
  %v7046 = vadd.f32 %v6877, %v7045
  %v7047 = vpop.f32.mrf.mxu0
  %v7048 = vadd.f32 %v6879, %v7047
  %7049 = vmatmul.bf16.gmra.mxu0 %v4445
  %v7050 = vpop.f32.mrf.mxu0
  %v7051 = vadd.f32 %v6882, %v7050
  %v7052 = vpop.f32.mrf.mxu0
  %v7053 = vadd.f32 %v6884, %v7052
  %7054 = vmatmul.bf16.gmra.mxu0 %v4449
  %v7055 = vpop.f32.mrf.mxu0
  %v7056 = vadd.f32 %v6887, %v7055
  %v7057 = vpop.f32.mrf.mxu0
  %v7058 = vadd.f32 %v6889, %v7057
  %7059 = vmatmul.bf16.gmra.mxu0 %v4453
  %v7060 = vpop.f32.mrf.mxu0
  %v7061 = vadd.f32 %v6892, %v7060
  %v7062 = vpop.f32.mrf.mxu0
  %v7063 = vadd.f32 %v6894, %v7062
  %7064 = vmatmul.bf16.gmra.mxu0 %v4457
  %v7065 = vpop.f32.mrf.mxu0
  %v7066 = vadd.f32 %v6897, %v7065
  %v7067 = vpop.f32.mrf.mxu0
  %v7068 = vadd.f32 %v6899, %v7067
  %7069 = vmatmul.bf16.gmra.mxu0 %v4461
  %v7070 = vpop.f32.mrf.mxu0
  %v7071 = vadd.f32 %v6902, %v7070
  %v7072 = vpop.f32.mrf.mxu0
  %v7073 = vadd.f32 %v6904, %v7072
  %7074 = vmatmul.bf16.gmra.mxu0 %v4465
  %v7075 = vpop.f32.mrf.mxu0
  %v7076 = vadd.f32 %v6907, %v7075
  %v7077 = vpop.f32.mrf.mxu0
  %v7078 = vadd.f32 %v6909, %v7077
  %7079 = vmatmul.bf16.gmra.mxu0 %v4469
  %v7080 = vpop.f32.mrf.mxu0
  %v7081 = vadd.f32 %v6912, %v7080
  %v7082 = vpop.f32.mrf.mxu0
  %v7083 = vadd.f32 %v6914, %v7082
  %7084 = vmatmul.bf16.gmra.mxu0 %v4473
  %v7085 = vpop.f32.mrf.mxu0
  %v7086 = vadd.f32 %v6917, %v7085
  %v7087 = vpop.f32.mrf.mxu0
  %v7088 = vadd.f32 %v6919, %v7087
  %7089 = vmatmul.bf16.gmra.mxu0 %v4477
  %v7090 = vpop.f32.mrf.mxu0
  %v7091 = vadd.f32 %v6922, %v7090
  %v7092 = vpop.f32.mrf.mxu0
  %v7093 = vadd.f32 %v6924, %v7092
  %7094 = vmatmul.bf16.gmra.mxu0 %v4481
  %v7095 = vpop.f32.mrf.mxu0
  %v7096 = vadd.f32 %v6927, %v7095
  %v7097 = vpop.f32.mrf.mxu0
  %v7098 = vadd.f32 %v6929, %v7097
  %7099 = vmatmul.bf16.gmra.mxu0 %v4485
  %v7100 = vpop.f32.mrf.mxu0
  %v7101 = vadd.f32 %v6932, %v7100
  %v7102 = vpop.f32.mrf.mxu0
  %v7103 = vadd.f32 %v6934, %v7102
  %7104 = vmatmul.bf16.gmra.mxu0 %v4489
  %v7105 = vpop.f32.mrf.mxu0
  %v7106 = vadd.f32 %v6937, %v7105
  %v7107 = vpop.f32.mrf.mxu0
  %v7108 = vadd.f32 %v6939, %v7107
  %7109 = vmatmul.bf16.gmra.mxu0 %v4493
  %v7110 = vpop.f32.mrf.mxu0
  %v7111 = vadd.f32 %v6942, %v7110
  %v7112 = vpop.f32.mrf.mxu0
  %v7113 = vadd.f32 %v6944, %v7112
  %7114 = vmatmul.bf16.gmra.mxu0 %v4497
  %v7115 = vpop.f32.mrf.mxu0
  %v7116 = vadd.f32 %v6947, %v7115
  %v7117 = vpop.f32.mrf.mxu0
  %v7118 = vadd.f32 %v6949, %v7117
  %7119 = vmatmul.bf16.gmra.mxu0 %v4501
  %v7120 = vpop.f32.mrf.mxu0
  %v7121 = vadd.f32 %v6952, %v7120
  %v7122 = vpop.f32.mrf.mxu0
  %v7123 = vadd.f32 %v6954, %v7122
  %7124 = vmatmul.bf16.gmra.mxu0 %v4505
  %v7125 = vpop.f32.mrf.mxu0
  %v7126 = vadd.f32 %v6957, %v7125
  %v7127 = vpop.f32.mrf.mxu0
  %v7128 = vadd.f32 %v6959, %v7127
  %7129 = vmatmul.bf16.gmra.mxu0 %v4509
  %v7130 = vpop.f32.mrf.mxu0
  %v7131 = vadd.f32 %v6962, %v7130
  %v7132 = vpop.f32.mrf.mxu0
  %v7133 = vadd.f32 %v6964, %v7132
  %7134 = vmatmul.bf16.gmra.mxu0 %v4513
  %v7135 = vpop.f32.mrf.mxu0
  %v7136 = vadd.f32 %v6967, %v7135
  %v7137 = vpop.f32.mrf.mxu0
  %v7138 = vadd.f32 %v6969, %v7137
  %7139 = vmatmul.bf16.gmra.mxu0 %v4517
  %v7140 = vpop.f32.mrf.mxu0
  %v7141 = vadd.f32 %v6972, %v7140
  %v7142 = vpop.f32.mrf.mxu0
  %v7143 = vadd.f32 %v6974, %v7142
  %7144 = vmatmul.bf16.gmra.mxu0 %v4521
  %v7145 = vpop.f32.mrf.mxu0
  %v7146 = vadd.f32 %v6977, %v7145
  %v7147 = vpop.f32.mrf.mxu0
  %v7148 = vadd.f32 %v6979, %v7147
  %7149 = vmatmul.bf16.gmra.mxu0 %v4525
  %v7150 = vpop.f32.mrf.mxu0
  %v7151 = vadd.f32 %v6982, %v7150
  %v7152 = vpop.f32.mrf.mxu0
  %v7153 = vadd.f32 %v6984, %v7152
  %7154 = vmatmul.bf16.gmra.mxu0 %v4529
  %v7155 = vpop.f32.mrf.mxu0
  %v7156 = vadd.f32 %v6987, %v7155
  %v7157 = vpop.f32.mrf.mxu0
  %v7158 = vadd.f32 %v6989, %v7157
  %7159 = vmatmul.bf16.gmra.mxu0 %v4533
  %v7160 = vpop.f32.mrf.mxu0
  %v7161 = vadd.f32 %v6992, %v7160
  %v7162 = vpop.f32.mrf.mxu0
  %v7163 = vadd.f32 %v6994, %v7162
  %7164 = vmatmul.bf16.gmra.mxu0 %v4537
  %v7165 = vpop.f32.mrf.mxu0
  %v7166 = vadd.f32 %v6997, %v7165
  %v7167 = vpop.f32.mrf.mxu0
  %v7168 = vadd.f32 %v6999, %v7167
  %7169 = vmatmul.bf16.gmra.mxu0 %v4541
  %v7170 = vpop.f32.mrf.mxu0
  %v7171 = vadd.f32 %v7002, %v7170
  %v7172 = vpop.f32.mrf.mxu0
  %v7173 = vadd.f32 %v7004, %v7172
  %7174 = vmatmul.bf16.gmra.mxu0 %v4545
  %v7175 = vpop.f32.mrf.mxu0
  %v7176 = vadd.f32 %v7007, %v7175
  %v7177 = vpop.f32.mrf.mxu0
  %v7178 = vadd.f32 %v7009, %v7177
  %7179 = vmatmul.bf16.gmra.mxu0 %v4549
  %v7180 = vpop.f32.mrf.mxu0
  %v7181 = vadd.f32 %v7012, %v7180
  %v7182 = vpop.f32.mrf.mxu0
  %v7183 = vadd.f32 %v7014, %v7182
  %7184 = vmatmul.bf16.gmra.mxu0 %v4553
  %v7185 = vpop.f32.mrf.mxu0
  %v7186 = vadd.f32 %v7017, %v7185
  %v7187 = vpop.f32.mrf.mxu0
  %v7188 = vadd.f32 %v7019, %v7187
  %7189 = vmatmul.bf16.gmra.mxu0 %v4557
  %v7190 = vpop.f32.mrf.mxu0
  %v7191 = vadd.f32 %v7022, %v7190
  %v7192 = vpop.f32.mrf.mxu0
  %v7193 = vadd.f32 %v7024, %v7192
  %7194 = vmatmul.bf16.gmra.mxu0 %v4561
  %v7195 = vpop.f32.mrf.mxu0
  %v7196 = vadd.f32 %v7027, %v7195
  %v7197 = vpop.f32.mrf.mxu0
  %v7198 = vadd.f32 %v7029, %v7197
  %7199 = vdwg.mxu0
  %7200 = vmatpush.bf16.msra.mxu0 %v5211
  %7201 = vmatpush.bf16.msra.mxu0 %v5207
  %7202 = vmatpush.bf16.msra.mxu0 %v5203
  %7203 = vmatpush.bf16.msra.mxu0 %v5199
  %7204 = vmatpush.bf16.msra.mxu0 %v5195
  %7205 = vmatpush.bf16.msra.mxu0 %v5191
  %7206 = vmatpush.bf16.msra.mxu0 %v5187
  %7207 = vmatpush.bf16.msra.mxu0 %v5183
  %7208 = vmatmul.bf16.gmra.mxu0 %v4438
  %v7209 = vpop.f32.mrf.mxu0
  %v7210 = vadd.f32 %v7041, %v7209
  %v7211 = vpop.f32.mrf.mxu0
  %v7212 = vadd.f32 %v7043, %v7211
  %7213 = vmatmul.bf16.gmra.mxu0 %v4442
  %v7214 = vpop.f32.mrf.mxu0
  %v7215 = vadd.f32 %v7046, %v7214
  %v7216 = vpop.f32.mrf.mxu0
  %v7217 = vadd.f32 %v7048, %v7216
  %7218 = vmatmul.bf16.gmra.mxu0 %v4446
  %v7219 = vpop.f32.mrf.mxu0
  %v7220 = vadd.f32 %v7051, %v7219
  %v7221 = vpop.f32.mrf.mxu0
  %v7222 = vadd.f32 %v7053, %v7221
  %7223 = vmatmul.bf16.gmra.mxu0 %v4450
  %v7224 = vpop.f32.mrf.mxu0
  %v7225 = vadd.f32 %v7056, %v7224
  %v7226 = vpop.f32.mrf.mxu0
  %v7227 = vadd.f32 %v7058, %v7226
  %7228 = vmatmul.bf16.gmra.mxu0 %v4454
  %v7229 = vpop.f32.mrf.mxu0
  %v7230 = vadd.f32 %v7061, %v7229
  %v7231 = vpop.f32.mrf.mxu0
  %v7232 = vadd.f32 %v7063, %v7231
  %7233 = vmatmul.bf16.gmra.mxu0 %v4458
  %v7234 = vpop.f32.mrf.mxu0
  %v7235 = vadd.f32 %v7066, %v7234
  %v7236 = vpop.f32.mrf.mxu0
  %v7237 = vadd.f32 %v7068, %v7236
  %7238 = vmatmul.bf16.gmra.mxu0 %v4462
  %v7239 = vpop.f32.mrf.mxu0
  %v7240 = vadd.f32 %v7071, %v7239
  %v7241 = vpop.f32.mrf.mxu0
  %v7242 = vadd.f32 %v7073, %v7241
  %7243 = vmatmul.bf16.gmra.mxu0 %v4466
  %v7244 = vpop.f32.mrf.mxu0
  %v7245 = vadd.f32 %v7076, %v7244
  %v7246 = vpop.f32.mrf.mxu0
  %v7247 = vadd.f32 %v7078, %v7246
  %7248 = vmatmul.bf16.gmra.mxu0 %v4470
  %v7249 = vpop.f32.mrf.mxu0
  %v7250 = vadd.f32 %v7081, %v7249
  %v7251 = vpop.f32.mrf.mxu0
  %v7252 = vadd.f32 %v7083, %v7251
  %7253 = vmatmul.bf16.gmra.mxu0 %v4474
  %v7254 = vpop.f32.mrf.mxu0
  %v7255 = vadd.f32 %v7086, %v7254
  %v7256 = vpop.f32.mrf.mxu0
  %v7257 = vadd.f32 %v7088, %v7256
  %7258 = vmatmul.bf16.gmra.mxu0 %v4478
  %v7259 = vpop.f32.mrf.mxu0
  %v7260 = vadd.f32 %v7091, %v7259
  %v7261 = vpop.f32.mrf.mxu0
  %v7262 = vadd.f32 %v7093, %v7261
  %7263 = vmatmul.bf16.gmra.mxu0 %v4482
  %v7264 = vpop.f32.mrf.mxu0
  %v7265 = vadd.f32 %v7096, %v7264
  %v7266 = vpop.f32.mrf.mxu0
  %v7267 = vadd.f32 %v7098, %v7266
  %7268 = vmatmul.bf16.gmra.mxu0 %v4486
  %v7269 = vpop.f32.mrf.mxu0
  %v7270 = vadd.f32 %v7101, %v7269
  %v7271 = vpop.f32.mrf.mxu0
  %v7272 = vadd.f32 %v7103, %v7271
  %7273 = vmatmul.bf16.gmra.mxu0 %v4490
  %v7274 = vpop.f32.mrf.mxu0
  %v7275 = vadd.f32 %v7106, %v7274
  %v7276 = vpop.f32.mrf.mxu0
  %v7277 = vadd.f32 %v7108, %v7276
  %7278 = vmatmul.bf16.gmra.mxu0 %v4494
  %v7279 = vpop.f32.mrf.mxu0
  %v7280 = vadd.f32 %v7111, %v7279
  %v7281 = vpop.f32.mrf.mxu0
  %v7282 = vadd.f32 %v7113, %v7281
  %7283 = vmatmul.bf16.gmra.mxu0 %v4498
  %v7284 = vpop.f32.mrf.mxu0
  %v7285 = vadd.f32 %v7116, %v7284
  %v7286 = vpop.f32.mrf.mxu0
  %v7287 = vadd.f32 %v7118, %v7286
  %7288 = vmatmul.bf16.gmra.mxu0 %v4502
  %v7289 = vpop.f32.mrf.mxu0
  %v7290 = vadd.f32 %v7121, %v7289
  %v7291 = vpop.f32.mrf.mxu0
  %v7292 = vadd.f32 %v7123, %v7291
  %7293 = vmatmul.bf16.gmra.mxu0 %v4506
  %v7294 = vpop.f32.mrf.mxu0
  %v7295 = vadd.f32 %v7126, %v7294
  %v7296 = vpop.f32.mrf.mxu0
  %v7297 = vadd.f32 %v7128, %v7296
  %7298 = vmatmul.bf16.gmra.mxu0 %v4510
  %v7299 = vpop.f32.mrf.mxu0
  %v7300 = vadd.f32 %v7131, %v7299
  %v7301 = vpop.f32.mrf.mxu0
  %v7302 = vadd.f32 %v7133, %v7301
  %7303 = vmatmul.bf16.gmra.mxu0 %v4514
  %v7304 = vpop.f32.mrf.mxu0
  %v7305 = vadd.f32 %v7136, %v7304
  %v7306 = vpop.f32.mrf.mxu0
  %v7307 = vadd.f32 %v7138, %v7306
  %7308 = vmatmul.bf16.gmra.mxu0 %v4518
  %v7309 = vpop.f32.mrf.mxu0
  %v7310 = vadd.f32 %v7141, %v7309
  %v7311 = vpop.f32.mrf.mxu0
  %v7312 = vadd.f32 %v7143, %v7311
  %7313 = vmatmul.bf16.gmra.mxu0 %v4522
  %v7314 = vpop.f32.mrf.mxu0
  %v7315 = vadd.f32 %v7146, %v7314
  %v7316 = vpop.f32.mrf.mxu0
  %v7317 = vadd.f32 %v7148, %v7316
  %7318 = vmatmul.bf16.gmra.mxu0 %v4526
  %v7319 = vpop.f32.mrf.mxu0
  %v7320 = vadd.f32 %v7151, %v7319
  %v7321 = vpop.f32.mrf.mxu0
  %v7322 = vadd.f32 %v7153, %v7321
  %7323 = vmatmul.bf16.gmra.mxu0 %v4530
  %v7324 = vpop.f32.mrf.mxu0
  %v7325 = vadd.f32 %v7156, %v7324
  %v7326 = vpop.f32.mrf.mxu0
  %v7327 = vadd.f32 %v7158, %v7326
  %7328 = vmatmul.bf16.gmra.mxu0 %v4534
  %v7329 = vpop.f32.mrf.mxu0
  %v7330 = vadd.f32 %v7161, %v7329
  %v7331 = vpop.f32.mrf.mxu0
  %v7332 = vadd.f32 %v7163, %v7331
  %7333 = vmatmul.bf16.gmra.mxu0 %v4538
  %v7334 = vpop.f32.mrf.mxu0
  %v7335 = vadd.f32 %v7166, %v7334
  %v7336 = vpop.f32.mrf.mxu0
  %v7337 = vadd.f32 %v7168, %v7336
  %7338 = vmatmul.bf16.gmra.mxu0 %v4542
  %v7339 = vpop.f32.mrf.mxu0
  %v7340 = vadd.f32 %v7171, %v7339
  %v7341 = vpop.f32.mrf.mxu0
  %v7342 = vadd.f32 %v7173, %v7341
  %7343 = vmatmul.bf16.gmra.mxu0 %v4546
  %v7344 = vpop.f32.mrf.mxu0
  %v7345 = vadd.f32 %v7176, %v7344
  %v7346 = vpop.f32.mrf.mxu0
  %v7347 = vadd.f32 %v7178, %v7346
  %7348 = vmatmul.bf16.gmra.mxu0 %v4550
  %v7349 = vpop.f32.mrf.mxu0
  %v7350 = vadd.f32 %v7181, %v7349
  %v7351 = vpop.f32.mrf.mxu0
  %v7352 = vadd.f32 %v7183, %v7351
  %7353 = vmatmul.bf16.gmra.mxu0 %v4554
  %v7354 = vpop.f32.mrf.mxu0
  %v7355 = vadd.f32 %v7186, %v7354
  %v7356 = vpop.f32.mrf.mxu0
  %v7357 = vadd.f32 %v7188, %v7356
  %7358 = vmatmul.bf16.gmra.mxu0 %v4558
  %v7359 = vpop.f32.mrf.mxu0
  %v7360 = vadd.f32 %v7191, %v7359
  %v7361 = vpop.f32.mrf.mxu0
  %v7362 = vadd.f32 %v7193, %v7361
  %7363 = vmatmul.bf16.gmra.mxu0 %v4562
  %v7364 = vpop.f32.mrf.mxu0
  %v7365 = vadd.f32 %v7196, %v7364
  %v7366 = vpop.f32.mrf.mxu0
  %v7367 = vadd.f32 %v7198, %v7366
  %7368 = vdwg.mxu0
  %7369 = vmatpush.bf16.msra.mxu0 %v5116
  %7370 = vmatpush.bf16.msra.mxu0 %v5112
  %7371 = vmatpush.bf16.msra.mxu0 %v5108
  %7372 = vmatpush.bf16.msra.mxu0 %v5104
  %7373 = vmatpush.bf16.msra.mxu0 %v5100
  %7374 = vmatpush.bf16.msra.mxu0 %v5096
  %7375 = vmatpush.bf16.msra.mxu0 %v5092
  %7376 = vmatpush.bf16.msra.mxu0 %v5088
  %7377 = vmatmul.bf16.gmra.mxu0 %v4435
  %v7378 = vpop.f32.mrf.mxu0
  %v7379 = vadd.f32 %v4696, %v7378
  %v7380 = vpop.f32.mrf.mxu0
  %v7381 = vadd.f32 %v4696, %v7380
  %7382 = vmatmul.bf16.gmra.mxu0 %v4439
  %v7383 = vpop.f32.mrf.mxu0
  %v7384 = vadd.f32 %v4696, %v7383
  %v7385 = vpop.f32.mrf.mxu0
  %v7386 = vadd.f32 %v4696, %v7385
  %7387 = vmatmul.bf16.gmra.mxu0 %v4443
  %v7388 = vpop.f32.mrf.mxu0
  %v7389 = vadd.f32 %v4696, %v7388
  %v7390 = vpop.f32.mrf.mxu0
  %v7391 = vadd.f32 %v4696, %v7390
  %7392 = vmatmul.bf16.gmra.mxu0 %v4447
  %v7393 = vpop.f32.mrf.mxu0
  %v7394 = vadd.f32 %v4696, %v7393
  %v7395 = vpop.f32.mrf.mxu0
  %v7396 = vadd.f32 %v4696, %v7395
  %7397 = vmatmul.bf16.gmra.mxu0 %v4451
  %v7398 = vpop.f32.mrf.mxu0
  %v7399 = vadd.f32 %v4696, %v7398
  %v7400 = vpop.f32.mrf.mxu0
  %v7401 = vadd.f32 %v4696, %v7400
  %7402 = vmatmul.bf16.gmra.mxu0 %v4455
  %v7403 = vpop.f32.mrf.mxu0
  %v7404 = vadd.f32 %v4696, %v7403
  %v7405 = vpop.f32.mrf.mxu0
  %v7406 = vadd.f32 %v4696, %v7405
  %7407 = vmatmul.bf16.gmra.mxu0 %v4459
  %v7408 = vpop.f32.mrf.mxu0
  %v7409 = vadd.f32 %v4696, %v7408
  %v7410 = vpop.f32.mrf.mxu0
  %v7411 = vadd.f32 %v4696, %v7410
  %7412 = vmatmul.bf16.gmra.mxu0 %v4463
  %v7413 = vpop.f32.mrf.mxu0
  %v7414 = vadd.f32 %v4696, %v7413
  %v7415 = vpop.f32.mrf.mxu0
  %v7416 = vadd.f32 %v4696, %v7415
  %7417 = vmatmul.bf16.gmra.mxu0 %v4467
  %v7418 = vpop.f32.mrf.mxu0
  %v7419 = vadd.f32 %v4696, %v7418
  %v7420 = vpop.f32.mrf.mxu0
  %v7421 = vadd.f32 %v4696, %v7420
  %7422 = vmatmul.bf16.gmra.mxu0 %v4471
  %v7423 = vpop.f32.mrf.mxu0
  %v7424 = vadd.f32 %v4696, %v7423
  %v7425 = vpop.f32.mrf.mxu0
  %v7426 = vadd.f32 %v4696, %v7425
  %7427 = vmatmul.bf16.gmra.mxu0 %v4475
  %v7428 = vpop.f32.mrf.mxu0
  %v7429 = vadd.f32 %v4696, %v7428
  %v7430 = vpop.f32.mrf.mxu0
  %v7431 = vadd.f32 %v4696, %v7430
  %7432 = vmatmul.bf16.gmra.mxu0 %v4479
  %v7433 = vpop.f32.mrf.mxu0
  %v7434 = vadd.f32 %v4696, %v7433
  %v7435 = vpop.f32.mrf.mxu0
  %v7436 = vadd.f32 %v4696, %v7435
  %7437 = vmatmul.bf16.gmra.mxu0 %v4483
  %v7438 = vpop.f32.mrf.mxu0
  %v7439 = vadd.f32 %v4696, %v7438
  %v7440 = vpop.f32.mrf.mxu0
  %v7441 = vadd.f32 %v4696, %v7440
  %7442 = vmatmul.bf16.gmra.mxu0 %v4487
  %v7443 = vpop.f32.mrf.mxu0
  %v7444 = vadd.f32 %v4696, %v7443
  %v7445 = vpop.f32.mrf.mxu0
  %v7446 = vadd.f32 %v4696, %v7445
  %7447 = vmatmul.bf16.gmra.mxu0 %v4491
  %v7448 = vpop.f32.mrf.mxu0
  %v7449 = vadd.f32 %v4696, %v7448
  %v7450 = vpop.f32.mrf.mxu0
  %v7451 = vadd.f32 %v4696, %v7450
  %7452 = vmatmul.bf16.gmra.mxu0 %v4495
  %v7453 = vpop.f32.mrf.mxu0
  %v7454 = vadd.f32 %v4696, %v7453
  %v7455 = vpop.f32.mrf.mxu0
  %v7456 = vadd.f32 %v4696, %v7455
  %7457 = vmatmul.bf16.gmra.mxu0 %v4499
  %v7458 = vpop.f32.mrf.mxu0
  %v7459 = vadd.f32 %v4696, %v7458
  %v7460 = vpop.f32.mrf.mxu0
  %v7461 = vadd.f32 %v4696, %v7460
  %7462 = vmatmul.bf16.gmra.mxu0 %v4503
  %v7463 = vpop.f32.mrf.mxu0
  %v7464 = vadd.f32 %v4696, %v7463
  %v7465 = vpop.f32.mrf.mxu0
  %v7466 = vadd.f32 %v4696, %v7465
  %7467 = vmatmul.bf16.gmra.mxu0 %v4507
  %v7468 = vpop.f32.mrf.mxu0
  %v7469 = vadd.f32 %v4696, %v7468
  %v7470 = vpop.f32.mrf.mxu0
  %v7471 = vadd.f32 %v4696, %v7470
  %7472 = vmatmul.bf16.gmra.mxu0 %v4511
  %v7473 = vpop.f32.mrf.mxu0
  %v7474 = vadd.f32 %v4696, %v7473
  %v7475 = vpop.f32.mrf.mxu0
  %v7476 = vadd.f32 %v4696, %v7475
  %7477 = vmatmul.bf16.gmra.mxu0 %v4515
  %v7478 = vpop.f32.mrf.mxu0
  %v7479 = vadd.f32 %v4696, %v7478
  %v7480 = vpop.f32.mrf.mxu0
  %v7481 = vadd.f32 %v4696, %v7480
  %7482 = vmatmul.bf16.gmra.mxu0 %v4519
  %v7483 = vpop.f32.mrf.mxu0
  %v7484 = vadd.f32 %v4696, %v7483
  %v7485 = vpop.f32.mrf.mxu0
  %v7486 = vadd.f32 %v4696, %v7485
  %7487 = vmatmul.bf16.gmra.mxu0 %v4523
  %v7488 = vpop.f32.mrf.mxu0
  %v7489 = vadd.f32 %v4696, %v7488
  %v7490 = vpop.f32.mrf.mxu0
  %v7491 = vadd.f32 %v4696, %v7490
  %7492 = vmatmul.bf16.gmra.mxu0 %v4527
  %v7493 = vpop.f32.mrf.mxu0
  %v7494 = vadd.f32 %v4696, %v7493
  %v7495 = vpop.f32.mrf.mxu0
  %v7496 = vadd.f32 %v4696, %v7495
  %7497 = vmatmul.bf16.gmra.mxu0 %v4531
  %v7498 = vpop.f32.mrf.mxu0
  %v7499 = vadd.f32 %v4696, %v7498
  %v7500 = vpop.f32.mrf.mxu0
  %v7501 = vadd.f32 %v4696, %v7500
  %7502 = vmatmul.bf16.gmra.mxu0 %v4535
  %v7503 = vpop.f32.mrf.mxu0
  %v7504 = vadd.f32 %v4696, %v7503
  %v7505 = vpop.f32.mrf.mxu0
  %v7506 = vadd.f32 %v4696, %v7505
  %7507 = vmatmul.bf16.gmra.mxu0 %v4539
  %v7508 = vpop.f32.mrf.mxu0
  %v7509 = vadd.f32 %v4696, %v7508
  %v7510 = vpop.f32.mrf.mxu0
  %v7511 = vadd.f32 %v4696, %v7510
  %7512 = vmatmul.bf16.gmra.mxu0 %v4543
  %v7513 = vpop.f32.mrf.mxu0
  %v7514 = vadd.f32 %v4696, %v7513
  %v7515 = vpop.f32.mrf.mxu0
  %v7516 = vadd.f32 %v4696, %v7515
  %7517 = vmatmul.bf16.gmra.mxu0 %v4547
  %v7518 = vpop.f32.mrf.mxu0
  %v7519 = vadd.f32 %v4696, %v7518
  %v7520 = vpop.f32.mrf.mxu0
  %v7521 = vadd.f32 %v4696, %v7520
  %7522 = vmatmul.bf16.gmra.mxu0 %v4551
  %v7523 = vpop.f32.mrf.mxu0
  %v7524 = vadd.f32 %v4696, %v7523
  %v7525 = vpop.f32.mrf.mxu0
  %v7526 = vadd.f32 %v4696, %v7525
  %7527 = vmatmul.bf16.gmra.mxu0 %v4555
  %v7528 = vpop.f32.mrf.mxu0
  %v7529 = vadd.f32 %v4696, %v7528
  %v7530 = vpop.f32.mrf.mxu0
  %v7531 = vadd.f32 %v4696, %v7530
  %7532 = vmatmul.bf16.gmra.mxu0 %v4559
  %v7533 = vpop.f32.mrf.mxu0
  %v7534 = vadd.f32 %v4696, %v7533
  %v7535 = vpop.f32.mrf.mxu0
  %v7536 = vadd.f32 %v4696, %v7535
  %7537 = vdwg.mxu0
  %7538 = vmatpush.bf16.msra.mxu0 %v5148
  %7539 = vmatpush.bf16.msra.mxu0 %v5144
  %7540 = vmatpush.bf16.msra.mxu0 %v5140
  %7541 = vmatpush.bf16.msra.mxu0 %v5136
  %7542 = vmatpush.bf16.msra.mxu0 %v5132
  %7543 = vmatpush.bf16.msra.mxu0 %v5128
  %7544 = vmatpush.bf16.msra.mxu0 %v5124
  %7545 = vmatpush.bf16.msra.mxu0 %v5120
  %7546 = vmatmul.bf16.gmra.mxu0 %v4436
  %v7547 = vpop.f32.mrf.mxu0
  %v7548 = vadd.f32 %v7379, %v7547
  %v7549 = vpop.f32.mrf.mxu0
  %v7550 = vadd.f32 %v7381, %v7549
  %7551 = vmatmul.bf16.gmra.mxu0 %v4440
  %v7552 = vpop.f32.mrf.mxu0
  %v7553 = vadd.f32 %v7384, %v7552
  %v7554 = vpop.f32.mrf.mxu0
  %v7555 = vadd.f32 %v7386, %v7554
  %7556 = vmatmul.bf16.gmra.mxu0 %v4444
  %v7557 = vpop.f32.mrf.mxu0
  %v7558 = vadd.f32 %v7389, %v7557
  %v7559 = vpop.f32.mrf.mxu0
  %v7560 = vadd.f32 %v7391, %v7559
  %7561 = vmatmul.bf16.gmra.mxu0 %v4448
  %v7562 = vpop.f32.mrf.mxu0
  %v7563 = vadd.f32 %v7394, %v7562
  %v7564 = vpop.f32.mrf.mxu0
  %v7565 = vadd.f32 %v7396, %v7564
  %7566 = vmatmul.bf16.gmra.mxu0 %v4452
  %v7567 = vpop.f32.mrf.mxu0
  %v7568 = vadd.f32 %v7399, %v7567
  %v7569 = vpop.f32.mrf.mxu0
  %v7570 = vadd.f32 %v7401, %v7569
  %7571 = vmatmul.bf16.gmra.mxu0 %v4456
  %v7572 = vpop.f32.mrf.mxu0
  %v7573 = vadd.f32 %v7404, %v7572
  %v7574 = vpop.f32.mrf.mxu0
  %v7575 = vadd.f32 %v7406, %v7574
  %7576 = vmatmul.bf16.gmra.mxu0 %v4460
  %v7577 = vpop.f32.mrf.mxu0
  %v7578 = vadd.f32 %v7409, %v7577
  %v7579 = vpop.f32.mrf.mxu0
  %v7580 = vadd.f32 %v7411, %v7579
  %7581 = vmatmul.bf16.gmra.mxu0 %v4464
  %v7582 = vpop.f32.mrf.mxu0
  %v7583 = vadd.f32 %v7414, %v7582
  %v7584 = vpop.f32.mrf.mxu0
  %v7585 = vadd.f32 %v7416, %v7584
  %7586 = vmatmul.bf16.gmra.mxu0 %v4468
  %v7587 = vpop.f32.mrf.mxu0
  %v7588 = vadd.f32 %v7419, %v7587
  %v7589 = vpop.f32.mrf.mxu0
  %v7590 = vadd.f32 %v7421, %v7589
  %7591 = vmatmul.bf16.gmra.mxu0 %v4472
  %v7592 = vpop.f32.mrf.mxu0
  %v7593 = vadd.f32 %v7424, %v7592
  %v7594 = vpop.f32.mrf.mxu0
  %v7595 = vadd.f32 %v7426, %v7594
  %7596 = vmatmul.bf16.gmra.mxu0 %v4476
  %v7597 = vpop.f32.mrf.mxu0
  %v7598 = vadd.f32 %v7429, %v7597
  %v7599 = vpop.f32.mrf.mxu0
  %v7600 = vadd.f32 %v7431, %v7599
  %7601 = vmatmul.bf16.gmra.mxu0 %v4480
  %v7602 = vpop.f32.mrf.mxu0
  %v7603 = vadd.f32 %v7434, %v7602
  %v7604 = vpop.f32.mrf.mxu0
  %v7605 = vadd.f32 %v7436, %v7604
  %7606 = vmatmul.bf16.gmra.mxu0 %v4484
  %v7607 = vpop.f32.mrf.mxu0
  %v7608 = vadd.f32 %v7439, %v7607
  %v7609 = vpop.f32.mrf.mxu0
  %v7610 = vadd.f32 %v7441, %v7609
  %7611 = vmatmul.bf16.gmra.mxu0 %v4488
  %v7612 = vpop.f32.mrf.mxu0
  %v7613 = vadd.f32 %v7444, %v7612
  %v7614 = vpop.f32.mrf.mxu0
  %v7615 = vadd.f32 %v7446, %v7614
  %7616 = vmatmul.bf16.gmra.mxu0 %v4492
  %v7617 = vpop.f32.mrf.mxu0
  %v7618 = vadd.f32 %v7449, %v7617
  %v7619 = vpop.f32.mrf.mxu0
  %v7620 = vadd.f32 %v7451, %v7619
  %7621 = vmatmul.bf16.gmra.mxu0 %v4496
  %v7622 = vpop.f32.mrf.mxu0
  %v7623 = vadd.f32 %v7454, %v7622
  %v7624 = vpop.f32.mrf.mxu0
  %v7625 = vadd.f32 %v7456, %v7624
  %7626 = vmatmul.bf16.gmra.mxu0 %v4500
  %v7627 = vpop.f32.mrf.mxu0
  %v7628 = vadd.f32 %v7459, %v7627
  %v7629 = vpop.f32.mrf.mxu0
  %v7630 = vadd.f32 %v7461, %v7629
  %7631 = vmatmul.bf16.gmra.mxu0 %v4504
  %v7632 = vpop.f32.mrf.mxu0
  %v7633 = vadd.f32 %v7464, %v7632
  %v7634 = vpop.f32.mrf.mxu0
  %v7635 = vadd.f32 %v7466, %v7634
  %7636 = vmatmul.bf16.gmra.mxu0 %v4508
  %v7637 = vpop.f32.mrf.mxu0
  %v7638 = vadd.f32 %v7469, %v7637
  %v7639 = vpop.f32.mrf.mxu0
  %v7640 = vadd.f32 %v7471, %v7639
  %7641 = vmatmul.bf16.gmra.mxu0 %v4512
  %v7642 = vpop.f32.mrf.mxu0
  %v7643 = vadd.f32 %v7474, %v7642
  %v7644 = vpop.f32.mrf.mxu0
  %v7645 = vadd.f32 %v7476, %v7644
  %7646 = vmatmul.bf16.gmra.mxu0 %v4516
  %v7647 = vpop.f32.mrf.mxu0
  %v7648 = vadd.f32 %v7479, %v7647
  %v7649 = vpop.f32.mrf.mxu0
  %v7650 = vadd.f32 %v7481, %v7649
  %7651 = vmatmul.bf16.gmra.mxu0 %v4520
  %v7652 = vpop.f32.mrf.mxu0
  %v7653 = vadd.f32 %v7484, %v7652
  %v7654 = vpop.f32.mrf.mxu0
  %v7655 = vadd.f32 %v7486, %v7654
  %7656 = vmatmul.bf16.gmra.mxu0 %v4524
  %v7657 = vpop.f32.mrf.mxu0
  %v7658 = vadd.f32 %v7489, %v7657
  %v7659 = vpop.f32.mrf.mxu0
  %v7660 = vadd.f32 %v7491, %v7659
  %7661 = vmatmul.bf16.gmra.mxu0 %v4528
  %v7662 = vpop.f32.mrf.mxu0
  %v7663 = vadd.f32 %v7494, %v7662
  %v7664 = vpop.f32.mrf.mxu0
  %v7665 = vadd.f32 %v7496, %v7664
  %7666 = vmatmul.bf16.gmra.mxu0 %v4532
  %v7667 = vpop.f32.mrf.mxu0
  %v7668 = vadd.f32 %v7499, %v7667
  %v7669 = vpop.f32.mrf.mxu0
  %v7670 = vadd.f32 %v7501, %v7669
  %7671 = vmatmul.bf16.gmra.mxu0 %v4536
  %v7672 = vpop.f32.mrf.mxu0
  %v7673 = vadd.f32 %v7504, %v7672
  %v7674 = vpop.f32.mrf.mxu0
  %v7675 = vadd.f32 %v7506, %v7674
  %7676 = vmatmul.bf16.gmra.mxu0 %v4540
  %v7677 = vpop.f32.mrf.mxu0
  %v7678 = vadd.f32 %v7509, %v7677
  %v7679 = vpop.f32.mrf.mxu0
  %v7680 = vadd.f32 %v7511, %v7679
  %7681 = vmatmul.bf16.gmra.mxu0 %v4544
  %v7682 = vpop.f32.mrf.mxu0
  %v7683 = vadd.f32 %v7514, %v7682
  %v7684 = vpop.f32.mrf.mxu0
  %v7685 = vadd.f32 %v7516, %v7684
  %7686 = vmatmul.bf16.gmra.mxu0 %v4548
  %v7687 = vpop.f32.mrf.mxu0
  %v7688 = vadd.f32 %v7519, %v7687
  %v7689 = vpop.f32.mrf.mxu0
  %v7690 = vadd.f32 %v7521, %v7689
  %7691 = vmatmul.bf16.gmra.mxu0 %v4552
  %v7692 = vpop.f32.mrf.mxu0
  %v7693 = vadd.f32 %v7524, %v7692
  %v7694 = vpop.f32.mrf.mxu0
  %v7695 = vadd.f32 %v7526, %v7694
  %7696 = vmatmul.bf16.gmra.mxu0 %v4556
  %v7697 = vpop.f32.mrf.mxu0
  %v7698 = vadd.f32 %v7529, %v7697
  %v7699 = vpop.f32.mrf.mxu0
  %v7700 = vadd.f32 %v7531, %v7699
  %7701 = vmatmul.bf16.gmra.mxu0 %v4560
  %v7702 = vpop.f32.mrf.mxu0
  %v7703 = vadd.f32 %v7534, %v7702
  %v7704 = vpop.f32.mrf.mxu0
  %v7705 = vadd.f32 %v7536, %v7704
  %7706 = vdwg.mxu0
  %7707 = vmatpush.bf16.msra.mxu0 %v5180
  %7708 = vmatpush.bf16.msra.mxu0 %v5176
  %7709 = vmatpush.bf16.msra.mxu0 %v5172
  %7710 = vmatpush.bf16.msra.mxu0 %v5168
  %7711 = vmatpush.bf16.msra.mxu0 %v5164
  %7712 = vmatpush.bf16.msra.mxu0 %v5160
  %7713 = vmatpush.bf16.msra.mxu0 %v5156
  %7714 = vmatpush.bf16.msra.mxu0 %v5152
  %7715 = vmatmul.bf16.gmra.mxu0 %v4437
  %v7716 = vpop.f32.mrf.mxu0
  %v7717 = vadd.f32 %v7548, %v7716
  %v7718 = vpop.f32.mrf.mxu0
  %v7719 = vadd.f32 %v7550, %v7718
  %7720 = vmatmul.bf16.gmra.mxu0 %v4441
  %v7721 = vpop.f32.mrf.mxu0
  %v7722 = vadd.f32 %v7553, %v7721
  %v7723 = vpop.f32.mrf.mxu0
  %v7724 = vadd.f32 %v7555, %v7723
  %7725 = vmatmul.bf16.gmra.mxu0 %v4445
  %v7726 = vpop.f32.mrf.mxu0
  %v7727 = vadd.f32 %v7558, %v7726
  %v7728 = vpop.f32.mrf.mxu0
  %v7729 = vadd.f32 %v7560, %v7728
  %7730 = vmatmul.bf16.gmra.mxu0 %v4449
  %v7731 = vpop.f32.mrf.mxu0
  %v7732 = vadd.f32 %v7563, %v7731
  %v7733 = vpop.f32.mrf.mxu0
  %v7734 = vadd.f32 %v7565, %v7733
  %7735 = vmatmul.bf16.gmra.mxu0 %v4453
  %v7736 = vpop.f32.mrf.mxu0
  %v7737 = vadd.f32 %v7568, %v7736
  %v7738 = vpop.f32.mrf.mxu0
  %v7739 = vadd.f32 %v7570, %v7738
  %7740 = vmatmul.bf16.gmra.mxu0 %v4457
  %v7741 = vpop.f32.mrf.mxu0
  %v7742 = vadd.f32 %v7573, %v7741
  %v7743 = vpop.f32.mrf.mxu0
  %v7744 = vadd.f32 %v7575, %v7743
  %7745 = vmatmul.bf16.gmra.mxu0 %v4461
  %v7746 = vpop.f32.mrf.mxu0
  %v7747 = vadd.f32 %v7578, %v7746
  %v7748 = vpop.f32.mrf.mxu0
  %v7749 = vadd.f32 %v7580, %v7748
  %7750 = vmatmul.bf16.gmra.mxu0 %v4465
  %v7751 = vpop.f32.mrf.mxu0
  %v7752 = vadd.f32 %v7583, %v7751
  %v7753 = vpop.f32.mrf.mxu0
  %v7754 = vadd.f32 %v7585, %v7753
  %7755 = vmatmul.bf16.gmra.mxu0 %v4469
  %v7756 = vpop.f32.mrf.mxu0
  %v7757 = vadd.f32 %v7588, %v7756
  %v7758 = vpop.f32.mrf.mxu0
  %v7759 = vadd.f32 %v7590, %v7758
  %7760 = vmatmul.bf16.gmra.mxu0 %v4473
  %v7761 = vpop.f32.mrf.mxu0
  %v7762 = vadd.f32 %v7593, %v7761
  %v7763 = vpop.f32.mrf.mxu0
  %v7764 = vadd.f32 %v7595, %v7763
  %7765 = vmatmul.bf16.gmra.mxu0 %v4477
  %v7766 = vpop.f32.mrf.mxu0
  %v7767 = vadd.f32 %v7598, %v7766
  %v7768 = vpop.f32.mrf.mxu0
  %v7769 = vadd.f32 %v7600, %v7768
  %7770 = vmatmul.bf16.gmra.mxu0 %v4481
  %v7771 = vpop.f32.mrf.mxu0
  %v7772 = vadd.f32 %v7603, %v7771
  %v7773 = vpop.f32.mrf.mxu0
  %v7774 = vadd.f32 %v7605, %v7773
  %7775 = vmatmul.bf16.gmra.mxu0 %v4485
  %v7776 = vpop.f32.mrf.mxu0
  %v7777 = vadd.f32 %v7608, %v7776
  %v7778 = vpop.f32.mrf.mxu0
  %v7779 = vadd.f32 %v7610, %v7778
  %7780 = vmatmul.bf16.gmra.mxu0 %v4489
  %v7781 = vpop.f32.mrf.mxu0
  %v7782 = vadd.f32 %v7613, %v7781
  %v7783 = vpop.f32.mrf.mxu0
  %v7784 = vadd.f32 %v7615, %v7783
  %7785 = vmatmul.bf16.gmra.mxu0 %v4493
  %v7786 = vpop.f32.mrf.mxu0
  %v7787 = vadd.f32 %v7618, %v7786
  %v7788 = vpop.f32.mrf.mxu0
  %v7789 = vadd.f32 %v7620, %v7788
  %7790 = vmatmul.bf16.gmra.mxu0 %v4497
  %v7791 = vpop.f32.mrf.mxu0
  %v7792 = vadd.f32 %v7623, %v7791
  %v7793 = vpop.f32.mrf.mxu0
  %v7794 = vadd.f32 %v7625, %v7793
  %7795 = vmatmul.bf16.gmra.mxu0 %v4501
  %v7796 = vpop.f32.mrf.mxu0
  %v7797 = vadd.f32 %v7628, %v7796
  %v7798 = vpop.f32.mrf.mxu0
  %v7799 = vadd.f32 %v7630, %v7798
  %7800 = vmatmul.bf16.gmra.mxu0 %v4505
  %v7801 = vpop.f32.mrf.mxu0
  %v7802 = vadd.f32 %v7633, %v7801
  %v7803 = vpop.f32.mrf.mxu0
  %v7804 = vadd.f32 %v7635, %v7803
  %7805 = vmatmul.bf16.gmra.mxu0 %v4509
  %v7806 = vpop.f32.mrf.mxu0
  %v7807 = vadd.f32 %v7638, %v7806
  %v7808 = vpop.f32.mrf.mxu0
  %v7809 = vadd.f32 %v7640, %v7808
  %7810 = vmatmul.bf16.gmra.mxu0 %v4513
  %v7811 = vpop.f32.mrf.mxu0
  %v7812 = vadd.f32 %v7643, %v7811
  %v7813 = vpop.f32.mrf.mxu0
  %v7814 = vadd.f32 %v7645, %v7813
  %7815 = vmatmul.bf16.gmra.mxu0 %v4517
  %v7816 = vpop.f32.mrf.mxu0
  %v7817 = vadd.f32 %v7648, %v7816
  %v7818 = vpop.f32.mrf.mxu0
  %v7819 = vadd.f32 %v7650, %v7818
  %7820 = vmatmul.bf16.gmra.mxu0 %v4521
  %v7821 = vpop.f32.mrf.mxu0
  %v7822 = vadd.f32 %v7653, %v7821
  %v7823 = vpop.f32.mrf.mxu0
  %v7824 = vadd.f32 %v7655, %v7823
  %7825 = vmatmul.bf16.gmra.mxu0 %v4525
  %v7826 = vpop.f32.mrf.mxu0
  %v7827 = vadd.f32 %v7658, %v7826
  %v7828 = vpop.f32.mrf.mxu0
  %v7829 = vadd.f32 %v7660, %v7828
  %7830 = vmatmul.bf16.gmra.mxu0 %v4529
  %v7831 = vpop.f32.mrf.mxu0
  %v7832 = vadd.f32 %v7663, %v7831
  %v7833 = vpop.f32.mrf.mxu0
  %v7834 = vadd.f32 %v7665, %v7833
  %7835 = vmatmul.bf16.gmra.mxu0 %v4533
  %v7836 = vpop.f32.mrf.mxu0
  %v7837 = vadd.f32 %v7668, %v7836
  %v7838 = vpop.f32.mrf.mxu0
  %v7839 = vadd.f32 %v7670, %v7838
  %7840 = vmatmul.bf16.gmra.mxu0 %v4537
  %v7841 = vpop.f32.mrf.mxu0
  %v7842 = vadd.f32 %v7673, %v7841
  %v7843 = vpop.f32.mrf.mxu0
  %v7844 = vadd.f32 %v7675, %v7843
  %7845 = vmatmul.bf16.gmra.mxu0 %v4541
  %v7846 = vpop.f32.mrf.mxu0
  %v7847 = vadd.f32 %v7678, %v7846
  %v7848 = vpop.f32.mrf.mxu0
  %v7849 = vadd.f32 %v7680, %v7848
  %7850 = vmatmul.bf16.gmra.mxu0 %v4545
  %v7851 = vpop.f32.mrf.mxu0
  %v7852 = vadd.f32 %v7683, %v7851
  %v7853 = vpop.f32.mrf.mxu0
  %v7854 = vadd.f32 %v7685, %v7853
  %7855 = vmatmul.bf16.gmra.mxu0 %v4549
  %v7856 = vpop.f32.mrf.mxu0
  %v7857 = vadd.f32 %v7688, %v7856
  %v7858 = vpop.f32.mrf.mxu0
  %v7859 = vadd.f32 %v7690, %v7858
  %7860 = vmatmul.bf16.gmra.mxu0 %v4553
  %v7861 = vpop.f32.mrf.mxu0
  %v7862 = vadd.f32 %v7693, %v7861
  %v7863 = vpop.f32.mrf.mxu0
  %v7864 = vadd.f32 %v7695, %v7863
  %7865 = vmatmul.bf16.gmra.mxu0 %v4557
  %v7866 = vpop.f32.mrf.mxu0
  %v7867 = vadd.f32 %v7698, %v7866
  %v7868 = vpop.f32.mrf.mxu0
  %v7869 = vadd.f32 %v7700, %v7868
  %7870 = vmatmul.bf16.gmra.mxu0 %v4561
  %v7871 = vpop.f32.mrf.mxu0
  %v7872 = vadd.f32 %v7703, %v7871
  %v7873 = vpop.f32.mrf.mxu0
  %v7874 = vadd.f32 %v7705, %v7873
  %7875 = vdwg.mxu0
  %7876 = vmatpush.bf16.msra.mxu0 %v5212
  %7877 = vmatpush.bf16.msra.mxu0 %v5208
  %7878 = vmatpush.bf16.msra.mxu0 %v5204
  %7879 = vmatpush.bf16.msra.mxu0 %v5200
  %7880 = vmatpush.bf16.msra.mxu0 %v5196
  %7881 = vmatpush.bf16.msra.mxu0 %v5192
  %7882 = vmatpush.bf16.msra.mxu0 %v5188
  %7883 = vmatpush.bf16.msra.mxu0 %v5184
  %7884 = vmatmul.bf16.gmra.mxu0 %v4438
  %v7885 = vpop.f32.mrf.mxu0
  %v7886 = vadd.f32 %v7717, %v7885
  %v7887 = vpop.f32.mrf.mxu0
  %v7888 = vadd.f32 %v7719, %v7887
  %7889 = vmatmul.bf16.gmra.mxu0 %v4442
  %v7890 = vpop.f32.mrf.mxu0
  %v7891 = vadd.f32 %v7722, %v7890
  %v7892 = vpop.f32.mrf.mxu0
  %v7893 = vadd.f32 %v7724, %v7892
  %7894 = vmatmul.bf16.gmra.mxu0 %v4446
  %v7895 = vpop.f32.mrf.mxu0
  %v7896 = vadd.f32 %v7727, %v7895
  %v7897 = vpop.f32.mrf.mxu0
  %v7898 = vadd.f32 %v7729, %v7897
  %7899 = vmatmul.bf16.gmra.mxu0 %v4450
  %v7900 = vpop.f32.mrf.mxu0
  %v7901 = vadd.f32 %v7732, %v7900
  %v7902 = vpop.f32.mrf.mxu0
  %v7903 = vadd.f32 %v7734, %v7902
  %7904 = vmatmul.bf16.gmra.mxu0 %v4454
  %v7905 = vpop.f32.mrf.mxu0
  %v7906 = vadd.f32 %v7737, %v7905
  %v7907 = vpop.f32.mrf.mxu0
  %v7908 = vadd.f32 %v7739, %v7907
  %7909 = vmatmul.bf16.gmra.mxu0 %v4458
  %v7910 = vpop.f32.mrf.mxu0
  %v7911 = vadd.f32 %v7742, %v7910
  %v7912 = vpop.f32.mrf.mxu0
  %v7913 = vadd.f32 %v7744, %v7912
  %7914 = vmatmul.bf16.gmra.mxu0 %v4462
  %v7915 = vpop.f32.mrf.mxu0
  %v7916 = vadd.f32 %v7747, %v7915
  %v7917 = vpop.f32.mrf.mxu0
  %v7918 = vadd.f32 %v7749, %v7917
  %7919 = vmatmul.bf16.gmra.mxu0 %v4466
  %v7920 = vpop.f32.mrf.mxu0
  %v7921 = vadd.f32 %v7752, %v7920
  %v7922 = vpop.f32.mrf.mxu0
  %v7923 = vadd.f32 %v7754, %v7922
  %7924 = vmatmul.bf16.gmra.mxu0 %v4470
  %v7925 = vpop.f32.mrf.mxu0
  %v7926 = vadd.f32 %v7757, %v7925
  %v7927 = vpop.f32.mrf.mxu0
  %v7928 = vadd.f32 %v7759, %v7927
  %7929 = vmatmul.bf16.gmra.mxu0 %v4474
  %v7930 = vpop.f32.mrf.mxu0
  %v7931 = vadd.f32 %v7762, %v7930
  %v7932 = vpop.f32.mrf.mxu0
  %v7933 = vadd.f32 %v7764, %v7932
  %7934 = vmatmul.bf16.gmra.mxu0 %v4478
  %v7935 = vpop.f32.mrf.mxu0
  %v7936 = vadd.f32 %v7767, %v7935
  %v7937 = vpop.f32.mrf.mxu0
  %v7938 = vadd.f32 %v7769, %v7937
  %7939 = vmatmul.bf16.gmra.mxu0 %v4482
  %v7940 = vpop.f32.mrf.mxu0
  %v7941 = vadd.f32 %v7772, %v7940
  %v7942 = vpop.f32.mrf.mxu0
  %v7943 = vadd.f32 %v7774, %v7942
  %7944 = vmatmul.bf16.gmra.mxu0 %v4486
  %v7945 = vpop.f32.mrf.mxu0
  %v7946 = vadd.f32 %v7777, %v7945
  %v7947 = vpop.f32.mrf.mxu0
  %v7948 = vadd.f32 %v7779, %v7947
  %7949 = vmatmul.bf16.gmra.mxu0 %v4490
  %v7950 = vpop.f32.mrf.mxu0
  %v7951 = vadd.f32 %v7782, %v7950
  %v7952 = vpop.f32.mrf.mxu0
  %v7953 = vadd.f32 %v7784, %v7952
  %7954 = vmatmul.bf16.gmra.mxu0 %v4494
  %v7955 = vpop.f32.mrf.mxu0
  %v7956 = vadd.f32 %v7787, %v7955
  %v7957 = vpop.f32.mrf.mxu0
  %v7958 = vadd.f32 %v7789, %v7957
  %7959 = vmatmul.bf16.gmra.mxu0 %v4498
  %v7960 = vpop.f32.mrf.mxu0
  %v7961 = vadd.f32 %v7792, %v7960
  %v7962 = vpop.f32.mrf.mxu0
  %v7963 = vadd.f32 %v7794, %v7962
  %7964 = vmatmul.bf16.gmra.mxu0 %v4502
  %v7965 = vpop.f32.mrf.mxu0
  %v7966 = vadd.f32 %v7797, %v7965
  %v7967 = vpop.f32.mrf.mxu0
  %v7968 = vadd.f32 %v7799, %v7967
  %7969 = vmatmul.bf16.gmra.mxu0 %v4506
  %v7970 = vpop.f32.mrf.mxu0
  %v7971 = vadd.f32 %v7802, %v7970
  %v7972 = vpop.f32.mrf.mxu0
  %v7973 = vadd.f32 %v7804, %v7972
  %7974 = vmatmul.bf16.gmra.mxu0 %v4510
  %v7975 = vpop.f32.mrf.mxu0
  %v7976 = vadd.f32 %v7807, %v7975
  %v7977 = vpop.f32.mrf.mxu0
  %v7978 = vadd.f32 %v7809, %v7977
  %7979 = vmatmul.bf16.gmra.mxu0 %v4514
  %v7980 = vpop.f32.mrf.mxu0
  %v7981 = vadd.f32 %v7812, %v7980
  %v7982 = vpop.f32.mrf.mxu0
  %v7983 = vadd.f32 %v7814, %v7982
  %7984 = vmatmul.bf16.gmra.mxu0 %v4518
  %v7985 = vpop.f32.mrf.mxu0
  %v7986 = vadd.f32 %v7817, %v7985
  %v7987 = vpop.f32.mrf.mxu0
  %v7988 = vadd.f32 %v7819, %v7987
  %7989 = vmatmul.bf16.gmra.mxu0 %v4522
  %v7990 = vpop.f32.mrf.mxu0
  %v7991 = vadd.f32 %v7822, %v7990
  %v7992 = vpop.f32.mrf.mxu0
  %v7993 = vadd.f32 %v7824, %v7992
  %7994 = vmatmul.bf16.gmra.mxu0 %v4526
  %v7995 = vpop.f32.mrf.mxu0
  %v7996 = vadd.f32 %v7827, %v7995
  %v7997 = vpop.f32.mrf.mxu0
  %v7998 = vadd.f32 %v7829, %v7997
  %7999 = vmatmul.bf16.gmra.mxu0 %v4530
  %v8000 = vpop.f32.mrf.mxu0
  %v8001 = vadd.f32 %v7832, %v8000
  %v8002 = vpop.f32.mrf.mxu0
  %v8003 = vadd.f32 %v7834, %v8002
  %8004 = vmatmul.bf16.gmra.mxu0 %v4534
  %v8005 = vpop.f32.mrf.mxu0
  %v8006 = vadd.f32 %v7837, %v8005
  %v8007 = vpop.f32.mrf.mxu0
  %v8008 = vadd.f32 %v7839, %v8007
  %8009 = vmatmul.bf16.gmra.mxu0 %v4538
  %v8010 = vpop.f32.mrf.mxu0
  %v8011 = vadd.f32 %v7842, %v8010
  %v8012 = vpop.f32.mrf.mxu0
  %v8013 = vadd.f32 %v7844, %v8012
  %8014 = vmatmul.bf16.gmra.mxu0 %v4542
  %v8015 = vpop.f32.mrf.mxu0
  %v8016 = vadd.f32 %v7847, %v8015
  %v8017 = vpop.f32.mrf.mxu0
  %v8018 = vadd.f32 %v7849, %v8017
  %8019 = vmatmul.bf16.gmra.mxu0 %v4546
  %v8020 = vpop.f32.mrf.mxu0
  %v8021 = vadd.f32 %v7852, %v8020
  %v8022 = vpop.f32.mrf.mxu0
  %v8023 = vadd.f32 %v7854, %v8022
  %8024 = vmatmul.bf16.gmra.mxu0 %v4550
  %v8025 = vpop.f32.mrf.mxu0
  %v8026 = vadd.f32 %v7857, %v8025
  %v8027 = vpop.f32.mrf.mxu0
  %v8028 = vadd.f32 %v7859, %v8027
  %8029 = vmatmul.bf16.gmra.mxu0 %v4554
  %v8030 = vpop.f32.mrf.mxu0
  %v8031 = vadd.f32 %v7862, %v8030
  %v8032 = vpop.f32.mrf.mxu0
  %v8033 = vadd.f32 %v7864, %v8032
  %8034 = vmatmul.bf16.gmra.mxu0 %v4558
  %v8035 = vpop.f32.mrf.mxu0
  %v8036 = vadd.f32 %v7867, %v8035
  %v8037 = vpop.f32.mrf.mxu0
  %v8038 = vadd.f32 %v7869, %v8037
  %8039 = vmatmul.bf16.gmra.mxu0 %v4562
  %v8040 = vpop.f32.mrf.mxu0
  %v8041 = vadd.f32 %v7872, %v8040
  %v8042 = vpop.f32.mrf.mxu0
  %v8043 = vadd.f32 %v7874, %v8042
  %8044 = vdwg.mxu0
  %v8045 = vmax.f32 %v5858, 0.0
  %v8046 = vmax.f32 %v6534, 0.0
  %v8047 = vmax.f32 %v7210, 0.0
  %v8048 = vmax.f32 %v7886, 0.0
  %v8049 = vmax.f32 %v5860, 0.0
  %v8050 = vmax.f32 %v6536, 0.0
  %v8051 = vmax.f32 %v7212, 0.0
  %v8052 = vmax.f32 %v7888, 0.0
  %v8053 = vmax.f32 %v5863, 0.0
  %v8054 = vmax.f32 %v6539, 0.0
  %v8055 = vmax.f32 %v7215, 0.0
  %v8056 = vmax.f32 %v7891, 0.0
  %v8057 = vmax.f32 %v5865, 0.0
  %v8058 = vmax.f32 %v6541, 0.0
  %v8059 = vmax.f32 %v7217, 0.0
  %v8060 = vmax.f32 %v7893, 0.0
  %v8061 = vmax.f32 %v5868, 0.0
  %v8062 = vmax.f32 %v6544, 0.0
  %v8063 = vmax.f32 %v7220, 0.0
  %v8064 = vmax.f32 %v7896, 0.0
  %v8065 = vmax.f32 %v5870, 0.0
  %v8066 = vmax.f32 %v6546, 0.0
  %v8067 = vmax.f32 %v7222, 0.0
  %v8068 = vmax.f32 %v7898, 0.0
  %v8069 = vmax.f32 %v5873, 0.0
  %v8070 = vmax.f32 %v6549, 0.0
  %v8071 = vmax.f32 %v7225, 0.0
  %v8072 = vmax.f32 %v7901, 0.0
  %v8073 = vmax.f32 %v5875, 0.0
  %v8074 = vmax.f32 %v6551, 0.0
  %v8075 = vmax.f32 %v7227, 0.0
  %v8076 = vmax.f32 %v7903, 0.0
  %v8077 = vmax.f32 %v5878, 0.0
  %v8078 = vmax.f32 %v6554, 0.0
  %v8079 = vmax.f32 %v7230, 0.0
  %v8080 = vmax.f32 %v7906, 0.0
  %v8081 = vmax.f32 %v5880, 0.0
  %v8082 = vmax.f32 %v6556, 0.0
  %v8083 = vmax.f32 %v7232, 0.0
  %v8084 = vmax.f32 %v7908, 0.0
  %v8085 = vmax.f32 %v5883, 0.0
  %v8086 = vmax.f32 %v6559, 0.0
  %v8087 = vmax.f32 %v7235, 0.0
  %v8088 = vmax.f32 %v7911, 0.0
  %v8089 = vmax.f32 %v5885, 0.0
  %v8090 = vmax.f32 %v6561, 0.0
  %v8091 = vmax.f32 %v7237, 0.0
  %v8092 = vmax.f32 %v7913, 0.0
  %v8093 = vmax.f32 %v5888, 0.0
  %v8094 = vmax.f32 %v6564, 0.0
  %v8095 = vmax.f32 %v7240, 0.0
  %v8096 = vmax.f32 %v7916, 0.0
  %v8097 = vmax.f32 %v5890, 0.0
  %v8098 = vmax.f32 %v6566, 0.0
  %v8099 = vmax.f32 %v7242, 0.0
  %v8100 = vmax.f32 %v7918, 0.0
  %v8101 = vmax.f32 %v5893, 0.0
  %v8102 = vmax.f32 %v6569, 0.0
  %v8103 = vmax.f32 %v7245, 0.0
  %v8104 = vmax.f32 %v7921, 0.0
  %v8105 = vmax.f32 %v5895, 0.0
  %v8106 = vmax.f32 %v6571, 0.0
  %v8107 = vmax.f32 %v7247, 0.0
  %v8108 = vmax.f32 %v7923, 0.0
  %v8109 = vmax.f32 %v5898, 0.0
  %v8110 = vmax.f32 %v6574, 0.0
  %v8111 = vmax.f32 %v7250, 0.0
  %v8112 = vmax.f32 %v7926, 0.0
  %v8113 = vmax.f32 %v5900, 0.0
  %v8114 = vmax.f32 %v6576, 0.0
  %v8115 = vmax.f32 %v7252, 0.0
  %v8116 = vmax.f32 %v7928, 0.0
  %v8117 = vmax.f32 %v5903, 0.0
  %v8118 = vmax.f32 %v6579, 0.0
  %v8119 = vmax.f32 %v7255, 0.0
  %v8120 = vmax.f32 %v7931, 0.0
  %v8121 = vmax.f32 %v5905, 0.0
  %v8122 = vmax.f32 %v6581, 0.0
  %v8123 = vmax.f32 %v7257, 0.0
  %v8124 = vmax.f32 %v7933, 0.0
  %v8125 = vmax.f32 %v5908, 0.0
  %v8126 = vmax.f32 %v6584, 0.0
  %v8127 = vmax.f32 %v7260, 0.0
  %v8128 = vmax.f32 %v7936, 0.0
  %v8129 = vmax.f32 %v5910, 0.0
  %v8130 = vmax.f32 %v6586, 0.0
  %v8131 = vmax.f32 %v7262, 0.0
  %v8132 = vmax.f32 %v7938, 0.0
  %v8133 = vmax.f32 %v5913, 0.0
  %v8134 = vmax.f32 %v6589, 0.0
  %v8135 = vmax.f32 %v7265, 0.0
  %v8136 = vmax.f32 %v7941, 0.0
  %v8137 = vmax.f32 %v5915, 0.0
  %v8138 = vmax.f32 %v6591, 0.0
  %v8139 = vmax.f32 %v7267, 0.0
  %v8140 = vmax.f32 %v7943, 0.0
  %v8141 = vmax.f32 %v5918, 0.0
  %v8142 = vmax.f32 %v6594, 0.0
  %v8143 = vmax.f32 %v7270, 0.0
  %v8144 = vmax.f32 %v7946, 0.0
  %v8145 = vmax.f32 %v5920, 0.0
  %v8146 = vmax.f32 %v6596, 0.0
  %v8147 = vmax.f32 %v7272, 0.0
  %v8148 = vmax.f32 %v7948, 0.0
  %v8149 = vmax.f32 %v5923, 0.0
  %v8150 = vmax.f32 %v6599, 0.0
  %v8151 = vmax.f32 %v7275, 0.0
  %v8152 = vmax.f32 %v7951, 0.0
  %v8153 = vmax.f32 %v5925, 0.0
  %v8154 = vmax.f32 %v6601, 0.0
  %v8155 = vmax.f32 %v7277, 0.0
  %v8156 = vmax.f32 %v7953, 0.0
  %v8157 = vmax.f32 %v5928, 0.0
  %v8158 = vmax.f32 %v6604, 0.0
  %v8159 = vmax.f32 %v7280, 0.0
  %v8160 = vmax.f32 %v7956, 0.0
  %v8161 = vmax.f32 %v5930, 0.0
  %v8162 = vmax.f32 %v6606, 0.0
  %v8163 = vmax.f32 %v7282, 0.0
  %v8164 = vmax.f32 %v7958, 0.0
  %v8165 = vmax.f32 %v5933, 0.0
  %v8166 = vmax.f32 %v6609, 0.0
  %v8167 = vmax.f32 %v7285, 0.0
  %v8168 = vmax.f32 %v7961, 0.0
  %v8169 = vmax.f32 %v5935, 0.0
  %v8170 = vmax.f32 %v6611, 0.0
  %v8171 = vmax.f32 %v7287, 0.0
  %v8172 = vmax.f32 %v7963, 0.0
  %v8173 = vmax.f32 %v5938, 0.0
  %v8174 = vmax.f32 %v6614, 0.0
  %v8175 = vmax.f32 %v7290, 0.0
  %v8176 = vmax.f32 %v7966, 0.0
  %v8177 = vmax.f32 %v5940, 0.0
  %v8178 = vmax.f32 %v6616, 0.0
  %v8179 = vmax.f32 %v7292, 0.0
  %v8180 = vmax.f32 %v7968, 0.0
  %v8181 = vmax.f32 %v5943, 0.0
  %v8182 = vmax.f32 %v6619, 0.0
  %v8183 = vmax.f32 %v7295, 0.0
  %v8184 = vmax.f32 %v7971, 0.0
  %v8185 = vmax.f32 %v5945, 0.0
  %v8186 = vmax.f32 %v6621, 0.0
  %v8187 = vmax.f32 %v7297, 0.0
  %v8188 = vmax.f32 %v7973, 0.0
  %v8189 = vmax.f32 %v5948, 0.0
  %v8190 = vmax.f32 %v6624, 0.0
  %v8191 = vmax.f32 %v7300, 0.0
  %v8192 = vmax.f32 %v7976, 0.0
  %v8193 = vmax.f32 %v5950, 0.0
  %v8194 = vmax.f32 %v6626, 0.0
  %v8195 = vmax.f32 %v7302, 0.0
  %v8196 = vmax.f32 %v7978, 0.0
  %v8197 = vmax.f32 %v5953, 0.0
  %v8198 = vmax.f32 %v6629, 0.0
  %v8199 = vmax.f32 %v7305, 0.0
  %v8200 = vmax.f32 %v7981, 0.0
  %v8201 = vmax.f32 %v5955, 0.0
  %v8202 = vmax.f32 %v6631, 0.0
  %v8203 = vmax.f32 %v7307, 0.0
  %v8204 = vmax.f32 %v7983, 0.0
  %v8205 = vmax.f32 %v5958, 0.0
  %v8206 = vmax.f32 %v6634, 0.0
  %v8207 = vmax.f32 %v7310, 0.0
  %v8208 = vmax.f32 %v7986, 0.0
  %v8209 = vmax.f32 %v5960, 0.0
  %v8210 = vmax.f32 %v6636, 0.0
  %v8211 = vmax.f32 %v7312, 0.0
  %v8212 = vmax.f32 %v7988, 0.0
  %v8213 = vmax.f32 %v5963, 0.0
  %v8214 = vmax.f32 %v6639, 0.0
  %v8215 = vmax.f32 %v7315, 0.0
  %v8216 = vmax.f32 %v7991, 0.0
  %v8217 = vmax.f32 %v5965, 0.0
  %v8218 = vmax.f32 %v6641, 0.0
  %v8219 = vmax.f32 %v7317, 0.0
  %v8220 = vmax.f32 %v7993, 0.0
  %v8221 = vmax.f32 %v5968, 0.0
  %v8222 = vmax.f32 %v6644, 0.0
  %v8223 = vmax.f32 %v7320, 0.0
  %v8224 = vmax.f32 %v7996, 0.0
  %v8225 = vmax.f32 %v5970, 0.0
  %v8226 = vmax.f32 %v6646, 0.0
  %v8227 = vmax.f32 %v7322, 0.0
  %v8228 = vmax.f32 %v7998, 0.0
  %v8229 = vmax.f32 %v5973, 0.0
  %v8230 = vmax.f32 %v6649, 0.0
  %v8231 = vmax.f32 %v7325, 0.0
  %v8232 = vmax.f32 %v8001, 0.0
  %v8233 = vmax.f32 %v5975, 0.0
  %v8234 = vmax.f32 %v6651, 0.0
  %v8235 = vmax.f32 %v7327, 0.0
  %v8236 = vmax.f32 %v8003, 0.0
  %v8237 = vmax.f32 %v5978, 0.0
  %v8238 = vmax.f32 %v6654, 0.0
  %v8239 = vmax.f32 %v7330, 0.0
  %v8240 = vmax.f32 %v8006, 0.0
  %v8241 = vmax.f32 %v5980, 0.0
  %v8242 = vmax.f32 %v6656, 0.0
  %v8243 = vmax.f32 %v7332, 0.0
  %v8244 = vmax.f32 %v8008, 0.0
  %v8245 = vmax.f32 %v5983, 0.0
  %v8246 = vmax.f32 %v6659, 0.0
  %v8247 = vmax.f32 %v7335, 0.0
  %v8248 = vmax.f32 %v8011, 0.0
  %v8249 = vmax.f32 %v5985, 0.0
  %v8250 = vmax.f32 %v6661, 0.0
  %v8251 = vmax.f32 %v7337, 0.0
  %v8252 = vmax.f32 %v8013, 0.0
  %v8253 = vmax.f32 %v5988, 0.0
  %v8254 = vmax.f32 %v6664, 0.0
  %v8255 = vmax.f32 %v7340, 0.0
  %v8256 = vmax.f32 %v8016, 0.0
  %v8257 = vmax.f32 %v5990, 0.0
  %v8258 = vmax.f32 %v6666, 0.0
  %v8259 = vmax.f32 %v7342, 0.0
  %v8260 = vmax.f32 %v8018, 0.0
  %v8261 = vmax.f32 %v5993, 0.0
  %v8262 = vmax.f32 %v6669, 0.0
  %v8263 = vmax.f32 %v7345, 0.0
  %v8264 = vmax.f32 %v8021, 0.0
  %v8265 = vmax.f32 %v5995, 0.0
  %v8266 = vmax.f32 %v6671, 0.0
  %v8267 = vmax.f32 %v7347, 0.0
  %v8268 = vmax.f32 %v8023, 0.0
  %v8269 = vmax.f32 %v5998, 0.0
  %v8270 = vmax.f32 %v6674, 0.0
  %v8271 = vmax.f32 %v7350, 0.0
  %v8272 = vmax.f32 %v8026, 0.0
  %v8273 = vmax.f32 %v6000, 0.0
  %v8274 = vmax.f32 %v6676, 0.0
  %v8275 = vmax.f32 %v7352, 0.0
  %v8276 = vmax.f32 %v8028, 0.0
  %v8277 = vmax.f32 %v6003, 0.0
  %v8278 = vmax.f32 %v6679, 0.0
  %v8279 = vmax.f32 %v7355, 0.0
  %v8280 = vmax.f32 %v8031, 0.0
  %v8281 = vmax.f32 %v6005, 0.0
  %v8282 = vmax.f32 %v6681, 0.0
  %v8283 = vmax.f32 %v7357, 0.0
  %v8284 = vmax.f32 %v8033, 0.0
  %v8285 = vmax.f32 %v6008, 0.0
  %v8286 = vmax.f32 %v6684, 0.0
  %v8287 = vmax.f32 %v7360, 0.0
  %v8288 = vmax.f32 %v8036, 0.0
  %v8289 = vmax.f32 %v6010, 0.0
  %v8290 = vmax.f32 %v6686, 0.0
  %v8291 = vmax.f32 %v7362, 0.0
  %v8292 = vmax.f32 %v8038, 0.0
  %v8293 = vmax.f32 %v6013, 0.0
  %v8294 = vmax.f32 %v6689, 0.0
  %v8295 = vmax.f32 %v7365, 0.0
  %v8296 = vmax.f32 %v8041, 0.0
  %v8297 = vmax.f32 %v6015, 0.0
  %v8298 = vmax.f32 %v6691, 0.0
  %v8299 = vmax.f32 %v7367, 0.0
  %v8300 = vmax.f32 %v8043, 0.0
  %v8301 = vpack.c.bf16 %v8049, %v8045
  %v8302 = vpack.c.bf16 %v8050, %v8046
  %v8303 = vpack.c.bf16 %v8051, %v8047
  %v8304 = vpack.c.bf16 %v8052, %v8048
  %v8305 = vpack.c.bf16 %v8057, %v8053
  %v8306 = vpack.c.bf16 %v8058, %v8054
  %v8307 = vpack.c.bf16 %v8059, %v8055
  %v8308 = vpack.c.bf16 %v8060, %v8056
  %v8309 = vpack.c.bf16 %v8065, %v8061
  %v8310 = vpack.c.bf16 %v8066, %v8062
  %v8311 = vpack.c.bf16 %v8067, %v8063
  %v8312 = vpack.c.bf16 %v8068, %v8064
  %v8313 = vpack.c.bf16 %v8073, %v8069
  %v8314 = vpack.c.bf16 %v8074, %v8070
  %v8315 = vpack.c.bf16 %v8075, %v8071
  %v8316 = vpack.c.bf16 %v8076, %v8072
  %v8317 = vpack.c.bf16 %v8081, %v8077
  %v8318 = vpack.c.bf16 %v8082, %v8078
  %v8319 = vpack.c.bf16 %v8083, %v8079
  %v8320 = vpack.c.bf16 %v8084, %v8080
  %v8321 = vpack.c.bf16 %v8089, %v8085
  %v8322 = vpack.c.bf16 %v8090, %v8086
  %v8323 = vpack.c.bf16 %v8091, %v8087
  %v8324 = vpack.c.bf16 %v8092, %v8088
  %v8325 = vpack.c.bf16 %v8097, %v8093
  %v8326 = vpack.c.bf16 %v8098, %v8094
  %v8327 = vpack.c.bf16 %v8099, %v8095
  %v8328 = vpack.c.bf16 %v8100, %v8096
  %v8329 = vpack.c.bf16 %v8105, %v8101
  %v8330 = vpack.c.bf16 %v8106, %v8102
  %v8331 = vpack.c.bf16 %v8107, %v8103
  %v8332 = vpack.c.bf16 %v8108, %v8104
  %v8333 = vpack.c.bf16 %v8113, %v8109
  %v8334 = vpack.c.bf16 %v8114, %v8110
  %v8335 = vpack.c.bf16 %v8115, %v8111
  %v8336 = vpack.c.bf16 %v8116, %v8112
  %v8337 = vpack.c.bf16 %v8121, %v8117
  %v8338 = vpack.c.bf16 %v8122, %v8118
  %v8339 = vpack.c.bf16 %v8123, %v8119
  %v8340 = vpack.c.bf16 %v8124, %v8120
  %v8341 = vpack.c.bf16 %v8129, %v8125
  %v8342 = vpack.c.bf16 %v8130, %v8126
  %v8343 = vpack.c.bf16 %v8131, %v8127
  %v8344 = vpack.c.bf16 %v8132, %v8128
  %v8345 = vpack.c.bf16 %v8137, %v8133
  %v8346 = vpack.c.bf16 %v8138, %v8134
  %v8347 = vpack.c.bf16 %v8139, %v8135
  %v8348 = vpack.c.bf16 %v8140, %v8136
  %v8349 = vpack.c.bf16 %v8145, %v8141
  %v8350 = vpack.c.bf16 %v8146, %v8142
  %v8351 = vpack.c.bf16 %v8147, %v8143
  %v8352 = vpack.c.bf16 %v8148, %v8144
  %v8353 = vpack.c.bf16 %v8153, %v8149
  %v8354 = vpack.c.bf16 %v8154, %v8150
  %v8355 = vpack.c.bf16 %v8155, %v8151
  %v8356 = vpack.c.bf16 %v8156, %v8152
  %v8357 = vpack.c.bf16 %v8161, %v8157
  %v8358 = vpack.c.bf16 %v8162, %v8158
  %v8359 = vpack.c.bf16 %v8163, %v8159
  %v8360 = vpack.c.bf16 %v8164, %v8160
  %v8361 = vpack.c.bf16 %v8169, %v8165
  %v8362 = vpack.c.bf16 %v8170, %v8166
  %v8363 = vpack.c.bf16 %v8171, %v8167
  %v8364 = vpack.c.bf16 %v8172, %v8168
  %v8365 = vpack.c.bf16 %v8177, %v8173
  %v8366 = vpack.c.bf16 %v8178, %v8174
  %v8367 = vpack.c.bf16 %v8179, %v8175
  %v8368 = vpack.c.bf16 %v8180, %v8176
  %v8369 = vpack.c.bf16 %v8185, %v8181
  %v8370 = vpack.c.bf16 %v8186, %v8182
  %v8371 = vpack.c.bf16 %v8187, %v8183
  %v8372 = vpack.c.bf16 %v8188, %v8184
  %v8373 = vpack.c.bf16 %v8193, %v8189
  %v8374 = vpack.c.bf16 %v8194, %v8190
  %v8375 = vpack.c.bf16 %v8195, %v8191
  %v8376 = vpack.c.bf16 %v8196, %v8192
  %v8377 = vpack.c.bf16 %v8201, %v8197
  %v8378 = vpack.c.bf16 %v8202, %v8198
  %v8379 = vpack.c.bf16 %v8203, %v8199
  %v8380 = vpack.c.bf16 %v8204, %v8200
  %v8381 = vpack.c.bf16 %v8209, %v8205
  %v8382 = vpack.c.bf16 %v8210, %v8206
  %v8383 = vpack.c.bf16 %v8211, %v8207
  %v8384 = vpack.c.bf16 %v8212, %v8208
  %v8385 = vpack.c.bf16 %v8217, %v8213
  %v8386 = vpack.c.bf16 %v8218, %v8214
  %v8387 = vpack.c.bf16 %v8219, %v8215
  %v8388 = vpack.c.bf16 %v8220, %v8216
  %v8389 = vpack.c.bf16 %v8225, %v8221
  %v8390 = vpack.c.bf16 %v8226, %v8222
  %v8391 = vpack.c.bf16 %v8227, %v8223
  %v8392 = vpack.c.bf16 %v8228, %v8224
  %v8393 = vpack.c.bf16 %v8233, %v8229
  %v8394 = vpack.c.bf16 %v8234, %v8230
  %v8395 = vpack.c.bf16 %v8235, %v8231
  %v8396 = vpack.c.bf16 %v8236, %v8232
  %v8397 = vpack.c.bf16 %v8241, %v8237
  %v8398 = vpack.c.bf16 %v8242, %v8238
  %v8399 = vpack.c.bf16 %v8243, %v8239
  %v8400 = vpack.c.bf16 %v8244, %v8240
  %v8401 = vpack.c.bf16 %v8249, %v8245
  %v8402 = vpack.c.bf16 %v8250, %v8246
  %v8403 = vpack.c.bf16 %v8251, %v8247
  %v8404 = vpack.c.bf16 %v8252, %v8248
  %v8405 = vpack.c.bf16 %v8257, %v8253
  %v8406 = vpack.c.bf16 %v8258, %v8254
  %v8407 = vpack.c.bf16 %v8259, %v8255
  %v8408 = vpack.c.bf16 %v8260, %v8256
  %v8409 = vpack.c.bf16 %v8265, %v8261
  %v8410 = vpack.c.bf16 %v8266, %v8262
  %v8411 = vpack.c.bf16 %v8267, %v8263
  %v8412 = vpack.c.bf16 %v8268, %v8264
  %v8413 = vpack.c.bf16 %v8273, %v8269
  %v8414 = vpack.c.bf16 %v8274, %v8270
  %v8415 = vpack.c.bf16 %v8275, %v8271
  %v8416 = vpack.c.bf16 %v8276, %v8272
  %v8417 = vpack.c.bf16 %v8281, %v8277
  %v8418 = vpack.c.bf16 %v8282, %v8278
  %v8419 = vpack.c.bf16 %v8283, %v8279
  %v8420 = vpack.c.bf16 %v8284, %v8280
  %v8421 = vpack.c.bf16 %v8289, %v8285
  %v8422 = vpack.c.bf16 %v8290, %v8286
  %v8423 = vpack.c.bf16 %v8291, %v8287
  %v8424 = vpack.c.bf16 %v8292, %v8288
  %v8425 = vpack.c.bf16 %v8297, %v8293
  %v8426 = vpack.c.bf16 %v8298, %v8294
  %v8427 = vpack.c.bf16 %v8299, %v8295
  %v8428 = vpack.c.bf16 %v8300, %v8296
  %v8429 = vld [vmem:[%s7] sm:$0xff]
  %v8430 = vld [vmem:[%s7 + $0x8] sm:$0xff]
  %v8431 = vld [vmem:[%s7 + $0x10] sm:$0xff]
  %v8432 = vld [vmem:[%s7 + $0x18] sm:$0xff]
  %v8433 = vld [vmem:[%s7 + $0x20] sm:$0xff]
  %v8434 = vld [vmem:[%s7 + $0x28] sm:$0xff]
  %v8435 = vld [vmem:[%s7 + $0x30] sm:$0xff]
  %v8436 = vld [vmem:[%s7 + $0x38] sm:$0xff]
  %v8437 = vld [vmem:[%s7 + $0x40] sm:$0xff]
  %v8438 = vld [vmem:[%s7 + $0x48] sm:$0xff]
  %v8439 = vld [vmem:[%s7 + $0x50] sm:$0xff]
  %v8440 = vld [vmem:[%s7 + $0x58] sm:$0xff]
  %v8441 = vld [vmem:[%s7 + $0x60] sm:$0xff]
  %v8442 = vld [vmem:[%s7 + $0x68] sm:$0xff]
  %v8443 = vld [vmem:[%s7 + $0x70] sm:$0xff]
  %v8444 = vld [vmem:[%s7 + $0x78] sm:$0xff]
  %v8445 = vld [vmem:[%s7 + $0x80] sm:$0xff]
  %v8446 = vld [vmem:[%s7 + $0x88] sm:$0xff]
  %v8447 = vld [vmem:[%s7 + $0x90] sm:$0xff]
  %v8448 = vld [vmem:[%s7 + $0x98] sm:$0xff]
  %v8449 = vld [vmem:[%s7 + $0xa0] sm:$0xff]
  %v8450 = vld [vmem:[%s7 + $0xa8] sm:$0xff]
  %v8451 = vld [vmem:[%s7 + $0xb0] sm:$0xff]
  %v8452 = vld [vmem:[%s7 + $0xb8] sm:$0xff]
  %v8453 = vld [vmem:[%s7 + $0xc0] sm:$0xff]
  %v8454 = vld [vmem:[%s7 + $0xc8] sm:$0xff]
  %v8455 = vld [vmem:[%s7 + $0xd0] sm:$0xff]
  %v8456 = vld [vmem:[%s7 + $0xd8] sm:$0xff]
  %v8457 = vld [vmem:[%s7 + $0xe0] sm:$0xff]
  %v8458 = vld [vmem:[%s7 + $0xe8] sm:$0xff]
  %v8459 = vld [vmem:[%s7 + $0xf0] sm:$0xff]
  %v8460 = vld [vmem:[%s7 + $0xf8] sm:$0xff]
  %v8461 = vld [vmem:[%s7 + $0x100] sm:$0xff]
  %v8462 = vld [vmem:[%s7 + $0x108] sm:$0xff]
  %v8463 = vld [vmem:[%s7 + $0x110] sm:$0xff]
  %v8464 = vld [vmem:[%s7 + $0x118] sm:$0xff]
  %v8465 = vld [vmem:[%s7 + $0x120] sm:$0xff]
  %v8466 = vld [vmem:[%s7 + $0x128] sm:$0xff]
  %v8467 = vld [vmem:[%s7 + $0x130] sm:$0xff]
  %v8468 = vld [vmem:[%s7 + $0x138] sm:$0xff]
  %v8469 = vld [vmem:[%s7 + $0x140] sm:$0xff]
  %v8470 = vld [vmem:[%s7 + $0x148] sm:$0xff]
  %v8471 = vld [vmem:[%s7 + $0x150] sm:$0xff]
  %v8472 = vld [vmem:[%s7 + $0x158] sm:$0xff]
  %v8473 = vld [vmem:[%s7 + $0x160] sm:$0xff]
  %v8474 = vld [vmem:[%s7 + $0x168] sm:$0xff]
  %v8475 = vld [vmem:[%s7 + $0x170] sm:$0xff]
  %v8476 = vld [vmem:[%s7 + $0x178] sm:$0xff]
  %v8477 = vld [vmem:[%s7 + $0x180] sm:$0xff]
  %v8478 = vld [vmem:[%s7 + $0x188] sm:$0xff]
  %v8479 = vld [vmem:[%s7 + $0x190] sm:$0xff]
  %v8480 = vld [vmem:[%s7 + $0x198] sm:$0xff]
  %v8481 = vld [vmem:[%s7 + $0x1a0] sm:$0xff]
  %v8482 = vld [vmem:[%s7 + $0x1a8] sm:$0xff]
  %v8483 = vld [vmem:[%s7 + $0x1b0] sm:$0xff]
  %v8484 = vld [vmem:[%s7 + $0x1b8] sm:$0xff]
  %v8485 = vld [vmem:[%s7 + $0x1c0] sm:$0xff]
  %v8486 = vld [vmem:[%s7 + $0x1c8] sm:$0xff]
  %v8487 = vld [vmem:[%s7 + $0x1d0] sm:$0xff]
  %v8488 = vld [vmem:[%s7 + $0x1d8] sm:$0xff]
  %v8489 = vld [vmem:[%s7 + $0x1e0] sm:$0xff]
  %v8490 = vld [vmem:[%s7 + $0x1e8] sm:$0xff]
  %v8491 = vld [vmem:[%s7 + $0x1f0] sm:$0xff]
  %v8492 = vld [vmem:[%s7 + $0x1f8] sm:$0xff]
  %v8493 = vld [vmem:[%s7 + $0x200] sm:$0xff]
  %v8494 = vld [vmem:[%s7 + $0x208] sm:$0xff]
  %v8495 = vld [vmem:[%s7 + $0x210] sm:$0xff]
  %v8496 = vld [vmem:[%s7 + $0x218] sm:$0xff]
  %v8497 = vld [vmem:[%s7 + $0x220] sm:$0xff]
  %v8498 = vld [vmem:[%s7 + $0x228] sm:$0xff]
  %v8499 = vld [vmem:[%s7 + $0x230] sm:$0xff]
  %v8500 = vld [vmem:[%s7 + $0x238] sm:$0xff]
  %v8501 = vld [vmem:[%s7 + $0x240] sm:$0xff]
  %v8502 = vld [vmem:[%s7 + $0x248] sm:$0xff]
  %v8503 = vld [vmem:[%s7 + $0x250] sm:$0xff]
  %v8504 = vld [vmem:[%s7 + $0x258] sm:$0xff]
  %v8505 = vld [vmem:[%s7 + $0x260] sm:$0xff]
  %v8506 = vld [vmem:[%s7 + $0x268] sm:$0xff]
  %v8507 = vld [vmem:[%s7 + $0x270] sm:$0xff]
  %v8508 = vld [vmem:[%s7 + $0x278] sm:$0xff]
  %v8509 = vld [vmem:[%s7 + $0x280] sm:$0xff]
  %v8510 = vld [vmem:[%s7 + $0x288] sm:$0xff]
  %v8511 = vld [vmem:[%s7 + $0x290] sm:$0xff]
  %v8512 = vld [vmem:[%s7 + $0x298] sm:$0xff]
  %v8513 = vld [vmem:[%s7 + $0x2a0] sm:$0xff]
  %v8514 = vld [vmem:[%s7 + $0x2a8] sm:$0xff]
  %v8515 = vld [vmem:[%s7 + $0x2b0] sm:$0xff]
  %v8516 = vld [vmem:[%s7 + $0x2b8] sm:$0xff]
  %v8517 = vld [vmem:[%s7 + $0x2c0] sm:$0xff]
  %v8518 = vld [vmem:[%s7 + $0x2c8] sm:$0xff]
  %v8519 = vld [vmem:[%s7 + $0x2d0] sm:$0xff]
  %v8520 = vld [vmem:[%s7 + $0x2d8] sm:$0xff]
  %v8521 = vld [vmem:[%s7 + $0x2e0] sm:$0xff]
  %v8522 = vld [vmem:[%s7 + $0x2e8] sm:$0xff]
  %v8523 = vld [vmem:[%s7 + $0x2f0] sm:$0xff]
  %v8524 = vld [vmem:[%s7 + $0x2f8] sm:$0xff]
  %v8525 = vld [vmem:[%s7 + $0x300] sm:$0xff]
  %v8526 = vld [vmem:[%s7 + $0x308] sm:$0xff]
  %v8527 = vld [vmem:[%s7 + $0x310] sm:$0xff]
  %v8528 = vld [vmem:[%s7 + $0x318] sm:$0xff]
  %v8529 = vld [vmem:[%s7 + $0x320] sm:$0xff]
  %v8530 = vld [vmem:[%s7 + $0x328] sm:$0xff]
  %v8531 = vld [vmem:[%s7 + $0x330] sm:$0xff]
  %v8532 = vld [vmem:[%s7 + $0x338] sm:$0xff]
  %v8533 = vld [vmem:[%s7 + $0x340] sm:$0xff]
  %v8534 = vld [vmem:[%s7 + $0x348] sm:$0xff]
  %v8535 = vld [vmem:[%s7 + $0x350] sm:$0xff]
  %v8536 = vld [vmem:[%s7 + $0x358] sm:$0xff]
  %v8537 = vld [vmem:[%s7 + $0x360] sm:$0xff]
  %v8538 = vld [vmem:[%s7 + $0x368] sm:$0xff]
  %v8539 = vld [vmem:[%s7 + $0x370] sm:$0xff]
  %v8540 = vld [vmem:[%s7 + $0x378] sm:$0xff]
  %v8541 = vld [vmem:[%s7 + $0x380] sm:$0xff]
  %v8542 = vld [vmem:[%s7 + $0x388] sm:$0xff]
  %v8543 = vld [vmem:[%s7 + $0x390] sm:$0xff]
  %v8544 = vld [vmem:[%s7 + $0x398] sm:$0xff]
  %v8545 = vld [vmem:[%s7 + $0x3a0] sm:$0xff]
  %v8546 = vld [vmem:[%s7 + $0x3a8] sm:$0xff]
  %v8547 = vld [vmem:[%s7 + $0x3b0] sm:$0xff]
  %v8548 = vld [vmem:[%s7 + $0x3b8] sm:$0xff]
  %v8549 = vld [vmem:[%s7 + $0x3c0] sm:$0xff]
  %v8550 = vld [vmem:[%s7 + $0x3c8] sm:$0xff]
  %v8551 = vld [vmem:[%s7 + $0x3d0] sm:$0xff]
  %v8552 = vld [vmem:[%s7 + $0x3d8] sm:$0xff]
  %v8553 = vld [vmem:[%s7 + $0x3e0] sm:$0xff]
  %v8554 = vld [vmem:[%s7 + $0x3e8] sm:$0xff]
  %v8555 = vld [vmem:[%s7 + $0x3f0] sm:$0xff]
  %v8556 = vld [vmem:[%s7 + $0x3f8] sm:$0xff]
  %v8557 = vld [vmem:[%s8] sm:$0xf]
  %v8559 = vperm.slane %v8557, 0
  %v8560 = vperm.slane %v8557, 1
  %v8561 = vperm.slane %v8557, 2
  %v8562 = vperm.slane %v8557, 3
  %v8695 = vunpack.c.l.b16 %v8429
  %v8696 = vunpack.c.h.b16 %v8429
  %v8697 = vunpack.c.l.b16 %v8430
  %v8698 = vunpack.c.h.b16 %v8430
  %v8699 = vunpack.c.l.b16 %v8431
  %v8700 = vunpack.c.h.b16 %v8431
  %v8701 = vunpack.c.l.b16 %v8432
  %v8702 = vunpack.c.h.b16 %v8432
  %v8703 = vunpack.c.l.b16 %v8433
  %v8704 = vunpack.c.h.b16 %v8433
  %v8705 = vunpack.c.l.b16 %v8434
  %v8706 = vunpack.c.h.b16 %v8434
  %v8707 = vunpack.c.l.b16 %v8435
  %v8708 = vunpack.c.h.b16 %v8435
  %v8709 = vunpack.c.l.b16 %v8436
  %v8710 = vunpack.c.h.b16 %v8436
  %v8711 = vunpack.c.l.b16 %v8437
  %v8712 = vunpack.c.h.b16 %v8437
  %v8713 = vunpack.c.l.b16 %v8438
  %v8714 = vunpack.c.h.b16 %v8438
  %v8715 = vunpack.c.l.b16 %v8439
  %v8716 = vunpack.c.h.b16 %v8439
  %v8717 = vunpack.c.l.b16 %v8440
  %v8718 = vunpack.c.h.b16 %v8440
  %v8719 = vunpack.c.l.b16 %v8441
  %v8720 = vunpack.c.h.b16 %v8441
  %v8721 = vunpack.c.l.b16 %v8442
  %v8722 = vunpack.c.h.b16 %v8442
  %v8723 = vunpack.c.l.b16 %v8443
  %v8724 = vunpack.c.h.b16 %v8443
  %v8725 = vunpack.c.l.b16 %v8444
  %v8726 = vunpack.c.h.b16 %v8444
  %v8727 = vunpack.c.l.b16 %v8445
  %v8728 = vunpack.c.h.b16 %v8445
  %v8729 = vunpack.c.l.b16 %v8446
  %v8730 = vunpack.c.h.b16 %v8446
  %v8731 = vunpack.c.l.b16 %v8447
  %v8732 = vunpack.c.h.b16 %v8447
  %v8733 = vunpack.c.l.b16 %v8448
  %v8734 = vunpack.c.h.b16 %v8448
  %v8735 = vunpack.c.l.b16 %v8449
  %v8736 = vunpack.c.h.b16 %v8449
  %v8737 = vunpack.c.l.b16 %v8450
  %v8738 = vunpack.c.h.b16 %v8450
  %v8739 = vunpack.c.l.b16 %v8451
  %v8740 = vunpack.c.h.b16 %v8451
  %v8741 = vunpack.c.l.b16 %v8452
  %v8742 = vunpack.c.h.b16 %v8452
  %v8743 = vunpack.c.l.b16 %v8453
  %v8744 = vunpack.c.h.b16 %v8453
  %v8745 = vunpack.c.l.b16 %v8454
  %v8746 = vunpack.c.h.b16 %v8454
  %v8747 = vunpack.c.l.b16 %v8455
  %v8748 = vunpack.c.h.b16 %v8455
  %v8749 = vunpack.c.l.b16 %v8456
  %v8750 = vunpack.c.h.b16 %v8456
  %v8751 = vunpack.c.l.b16 %v8457
  %v8752 = vunpack.c.h.b16 %v8457
  %v8753 = vunpack.c.l.b16 %v8458
  %v8754 = vunpack.c.h.b16 %v8458
  %v8755 = vunpack.c.l.b16 %v8459
  %v8756 = vunpack.c.h.b16 %v8459
  %v8757 = vunpack.c.l.b16 %v8460
  %v8758 = vunpack.c.h.b16 %v8460
  %v8759 = vunpack.c.l.b16 %v8461
  %v8760 = vunpack.c.h.b16 %v8461
  %v8761 = vunpack.c.l.b16 %v8462
  %v8762 = vunpack.c.h.b16 %v8462
  %v8763 = vunpack.c.l.b16 %v8463
  %v8764 = vunpack.c.h.b16 %v8463
  %v8765 = vunpack.c.l.b16 %v8464
  %v8766 = vunpack.c.h.b16 %v8464
  %v8767 = vunpack.c.l.b16 %v8465
  %v8768 = vunpack.c.h.b16 %v8465
  %v8769 = vunpack.c.l.b16 %v8466
  %v8770 = vunpack.c.h.b16 %v8466
  %v8771 = vunpack.c.l.b16 %v8467
  %v8772 = vunpack.c.h.b16 %v8467
  %v8773 = vunpack.c.l.b16 %v8468
  %v8774 = vunpack.c.h.b16 %v8468
  %v8775 = vunpack.c.l.b16 %v8469
  %v8776 = vunpack.c.h.b16 %v8469
  %v8777 = vunpack.c.l.b16 %v8470
  %v8778 = vunpack.c.h.b16 %v8470
  %v8779 = vunpack.c.l.b16 %v8471
  %v8780 = vunpack.c.h.b16 %v8471
  %v8781 = vunpack.c.l.b16 %v8472
  %v8782 = vunpack.c.h.b16 %v8472
  %v8783 = vunpack.c.l.b16 %v8473
  %v8784 = vunpack.c.h.b16 %v8473
  %v8785 = vunpack.c.l.b16 %v8474
  %v8786 = vunpack.c.h.b16 %v8474
  %v8787 = vunpack.c.l.b16 %v8475
  %v8788 = vunpack.c.h.b16 %v8475
  %v8789 = vunpack.c.l.b16 %v8476
  %v8790 = vunpack.c.h.b16 %v8476
  %v8791 = vunpack.c.l.b16 %v8477
  %v8792 = vunpack.c.h.b16 %v8477
  %v8793 = vunpack.c.l.b16 %v8478
  %v8794 = vunpack.c.h.b16 %v8478
  %v8795 = vunpack.c.l.b16 %v8479
  %v8796 = vunpack.c.h.b16 %v8479
  %v8797 = vunpack.c.l.b16 %v8480
  %v8798 = vunpack.c.h.b16 %v8480
  %v8799 = vunpack.c.l.b16 %v8481
  %v8800 = vunpack.c.h.b16 %v8481
  %v8801 = vunpack.c.l.b16 %v8482
  %v8802 = vunpack.c.h.b16 %v8482
  %v8803 = vunpack.c.l.b16 %v8483
  %v8804 = vunpack.c.h.b16 %v8483
  %v8805 = vunpack.c.l.b16 %v8484
  %v8806 = vunpack.c.h.b16 %v8484
  %v8807 = vunpack.c.l.b16 %v8485
  %v8808 = vunpack.c.h.b16 %v8485
  %v8809 = vunpack.c.l.b16 %v8486
  %v8810 = vunpack.c.h.b16 %v8486
  %v8811 = vunpack.c.l.b16 %v8487
  %v8812 = vunpack.c.h.b16 %v8487
  %v8813 = vunpack.c.l.b16 %v8488
  %v8814 = vunpack.c.h.b16 %v8488
  %v8815 = vunpack.c.l.b16 %v8489
  %v8816 = vunpack.c.h.b16 %v8489
  %v8817 = vunpack.c.l.b16 %v8490
  %v8818 = vunpack.c.h.b16 %v8490
  %v8819 = vunpack.c.l.b16 %v8491
  %v8820 = vunpack.c.h.b16 %v8491
  %v8821 = vunpack.c.l.b16 %v8492
  %v8822 = vunpack.c.h.b16 %v8492
  %v8823 = vunpack.c.l.b16 %v8493
  %v8824 = vunpack.c.h.b16 %v8493
  %v8825 = vunpack.c.l.b16 %v8494
  %v8826 = vunpack.c.h.b16 %v8494
  %v8827 = vunpack.c.l.b16 %v8495
  %v8828 = vunpack.c.h.b16 %v8495
  %v8829 = vunpack.c.l.b16 %v8496
  %v8830 = vunpack.c.h.b16 %v8496
  %v8831 = vunpack.c.l.b16 %v8497
  %v8832 = vunpack.c.h.b16 %v8497
  %v8833 = vunpack.c.l.b16 %v8498
  %v8834 = vunpack.c.h.b16 %v8498
  %v8835 = vunpack.c.l.b16 %v8499
  %v8836 = vunpack.c.h.b16 %v8499
  %v8837 = vunpack.c.l.b16 %v8500
  %v8838 = vunpack.c.h.b16 %v8500
  %v8839 = vunpack.c.l.b16 %v8501
  %v8840 = vunpack.c.h.b16 %v8501
  %v8841 = vunpack.c.l.b16 %v8502
  %v8842 = vunpack.c.h.b16 %v8502
  %v8843 = vunpack.c.l.b16 %v8503
  %v8844 = vunpack.c.h.b16 %v8503
  %v8845 = vunpack.c.l.b16 %v8504
  %v8846 = vunpack.c.h.b16 %v8504
  %v8847 = vunpack.c.l.b16 %v8505
  %v8848 = vunpack.c.h.b16 %v8505
  %v8849 = vunpack.c.l.b16 %v8506
  %v8850 = vunpack.c.h.b16 %v8506
  %v8851 = vunpack.c.l.b16 %v8507
  %v8852 = vunpack.c.h.b16 %v8507
  %v8853 = vunpack.c.l.b16 %v8508
  %v8854 = vunpack.c.h.b16 %v8508
  %v8855 = vunpack.c.l.b16 %v8509
  %v8856 = vunpack.c.h.b16 %v8509
  %v8857 = vunpack.c.l.b16 %v8510
  %v8858 = vunpack.c.h.b16 %v8510
  %v8859 = vunpack.c.l.b16 %v8511
  %v8860 = vunpack.c.h.b16 %v8511
  %v8861 = vunpack.c.l.b16 %v8512
  %v8862 = vunpack.c.h.b16 %v8512
  %v8863 = vunpack.c.l.b16 %v8513
  %v8864 = vunpack.c.h.b16 %v8513
  %v8865 = vunpack.c.l.b16 %v8514
  %v8866 = vunpack.c.h.b16 %v8514
  %v8867 = vunpack.c.l.b16 %v8515
  %v8868 = vunpack.c.h.b16 %v8515
  %v8869 = vunpack.c.l.b16 %v8516
  %v8870 = vunpack.c.h.b16 %v8516
  %v8871 = vunpack.c.l.b16 %v8517
  %v8872 = vunpack.c.h.b16 %v8517
  %v8873 = vunpack.c.l.b16 %v8518
  %v8874 = vunpack.c.h.b16 %v8518
  %v8875 = vunpack.c.l.b16 %v8519
  %v8876 = vunpack.c.h.b16 %v8519
  %v8877 = vunpack.c.l.b16 %v8520
  %v8878 = vunpack.c.h.b16 %v8520
  %v8879 = vunpack.c.l.b16 %v8521
  %v8880 = vunpack.c.h.b16 %v8521
  %v8881 = vunpack.c.l.b16 %v8522
  %v8882 = vunpack.c.h.b16 %v8522
  %v8883 = vunpack.c.l.b16 %v8523
  %v8884 = vunpack.c.h.b16 %v8523
  %v8885 = vunpack.c.l.b16 %v8524
  %v8886 = vunpack.c.h.b16 %v8524
  %v8887 = vunpack.c.l.b16 %v8525
  %v8888 = vunpack.c.h.b16 %v8525
  %v8889 = vunpack.c.l.b16 %v8526
  %v8890 = vunpack.c.h.b16 %v8526
  %v8891 = vunpack.c.l.b16 %v8527
  %v8892 = vunpack.c.h.b16 %v8527
  %v8893 = vunpack.c.l.b16 %v8528
  %v8894 = vunpack.c.h.b16 %v8528
  %v8895 = vunpack.c.l.b16 %v8529
  %v8896 = vunpack.c.h.b16 %v8529
  %v8897 = vunpack.c.l.b16 %v8530
  %v8898 = vunpack.c.h.b16 %v8530
  %v8899 = vunpack.c.l.b16 %v8531
  %v8900 = vunpack.c.h.b16 %v8531
  %v8901 = vunpack.c.l.b16 %v8532
  %v8902 = vunpack.c.h.b16 %v8532
  %v8903 = vunpack.c.l.b16 %v8533
  %v8904 = vunpack.c.h.b16 %v8533
  %v8905 = vunpack.c.l.b16 %v8534
  %v8906 = vunpack.c.h.b16 %v8534
  %v8907 = vunpack.c.l.b16 %v8535
  %v8908 = vunpack.c.h.b16 %v8535
  %v8909 = vunpack.c.l.b16 %v8536
  %v8910 = vunpack.c.h.b16 %v8536
  %v8911 = vunpack.c.l.b16 %v8537
  %v8912 = vunpack.c.h.b16 %v8537
  %v8913 = vunpack.c.l.b16 %v8538
  %v8914 = vunpack.c.h.b16 %v8538
  %v8915 = vunpack.c.l.b16 %v8539
  %v8916 = vunpack.c.h.b16 %v8539
  %v8917 = vunpack.c.l.b16 %v8540
  %v8918 = vunpack.c.h.b16 %v8540
  %v8919 = vunpack.c.l.b16 %v8541
  %v8920 = vunpack.c.h.b16 %v8541
  %v8921 = vunpack.c.l.b16 %v8542
  %v8922 = vunpack.c.h.b16 %v8542
  %v8923 = vunpack.c.l.b16 %v8543
  %v8924 = vunpack.c.h.b16 %v8543
  %v8925 = vunpack.c.l.b16 %v8544
  %v8926 = vunpack.c.h.b16 %v8544
  %v8927 = vunpack.c.l.b16 %v8545
  %v8928 = vunpack.c.h.b16 %v8545
  %v8929 = vunpack.c.l.b16 %v8546
  %v8930 = vunpack.c.h.b16 %v8546
  %v8931 = vunpack.c.l.b16 %v8547
  %v8932 = vunpack.c.h.b16 %v8547
  %v8933 = vunpack.c.l.b16 %v8548
  %v8934 = vunpack.c.h.b16 %v8548
  %v8935 = vunpack.c.l.b16 %v8549
  %v8936 = vunpack.c.h.b16 %v8549
  %v8937 = vunpack.c.l.b16 %v8550
  %v8938 = vunpack.c.h.b16 %v8550
  %v8939 = vunpack.c.l.b16 %v8551
  %v8940 = vunpack.c.h.b16 %v8551
  %v8941 = vunpack.c.l.b16 %v8552
  %v8942 = vunpack.c.h.b16 %v8552
  %v8943 = vunpack.c.l.b16 %v8553
  %v8944 = vunpack.c.h.b16 %v8553
  %v8945 = vunpack.c.l.b16 %v8554
  %v8946 = vunpack.c.h.b16 %v8554
  %v8947 = vunpack.c.l.b16 %v8555
  %v8948 = vunpack.c.h.b16 %v8555
  %v8949 = vunpack.c.l.b16 %v8556
  %v8950 = vunpack.c.h.b16 %v8556
  %v8951 = vpack.c.b16 %v8699, %v8695
  %v8952 = vpack.c.b16 %v8700, %v8696
  %v8953 = vpack.c.b16 %v8701, %v8697
  %v8954 = vpack.c.b16 %v8702, %v8698
  %v8955 = vpack.c.b16 %v8707, %v8703
  %v8956 = vpack.c.b16 %v8708, %v8704
  %v8957 = vpack.c.b16 %v8709, %v8705
  %v8958 = vpack.c.b16 %v8710, %v8706
  %v8959 = vpack.c.b16 %v8715, %v8711
  %v8960 = vpack.c.b16 %v8716, %v8712
  %v8961 = vpack.c.b16 %v8717, %v8713
  %v8962 = vpack.c.b16 %v8718, %v8714
  %v8963 = vpack.c.b16 %v8723, %v8719
  %v8964 = vpack.c.b16 %v8724, %v8720
  %v8965 = vpack.c.b16 %v8725, %v8721
  %v8966 = vpack.c.b16 %v8726, %v8722
  %v8967 = vpack.c.b16 %v8731, %v8727
  %v8968 = vpack.c.b16 %v8732, %v8728
  %v8969 = vpack.c.b16 %v8733, %v8729
  %v8970 = vpack.c.b16 %v8734, %v8730
  %v8971 = vpack.c.b16 %v8739, %v8735
  %v8972 = vpack.c.b16 %v8740, %v8736
  %v8973 = vpack.c.b16 %v8741, %v8737
  %v8974 = vpack.c.b16 %v8742, %v8738
  %v8975 = vpack.c.b16 %v8747, %v8743
  %v8976 = vpack.c.b16 %v8748, %v8744
  %v8977 = vpack.c.b16 %v8749, %v8745
  %v8978 = vpack.c.b16 %v8750, %v8746
  %v8979 = vpack.c.b16 %v8755, %v8751
  %v8980 = vpack.c.b16 %v8756, %v8752
  %v8981 = vpack.c.b16 %v8757, %v8753
  %v8982 = vpack.c.b16 %v8758, %v8754
  %v8983 = vpack.c.b16 %v8763, %v8759
  %v8984 = vpack.c.b16 %v8764, %v8760
  %v8985 = vpack.c.b16 %v8765, %v8761
  %v8986 = vpack.c.b16 %v8766, %v8762
  %v8987 = vpack.c.b16 %v8771, %v8767
  %v8988 = vpack.c.b16 %v8772, %v8768
  %v8989 = vpack.c.b16 %v8773, %v8769
  %v8990 = vpack.c.b16 %v8774, %v8770
  %v8991 = vpack.c.b16 %v8779, %v8775
  %v8992 = vpack.c.b16 %v8780, %v8776
  %v8993 = vpack.c.b16 %v8781, %v8777
  %v8994 = vpack.c.b16 %v8782, %v8778
  %v8995 = vpack.c.b16 %v8787, %v8783
  %v8996 = vpack.c.b16 %v8788, %v8784
  %v8997 = vpack.c.b16 %v8789, %v8785
  %v8998 = vpack.c.b16 %v8790, %v8786
  %v8999 = vpack.c.b16 %v8795, %v8791
  %v9000 = vpack.c.b16 %v8796, %v8792
  %v9001 = vpack.c.b16 %v8797, %v8793
  %v9002 = vpack.c.b16 %v8798, %v8794
  %v9003 = vpack.c.b16 %v8803, %v8799
  %v9004 = vpack.c.b16 %v8804, %v8800
  %v9005 = vpack.c.b16 %v8805, %v8801
  %v9006 = vpack.c.b16 %v8806, %v8802
  %v9007 = vpack.c.b16 %v8811, %v8807
  %v9008 = vpack.c.b16 %v8812, %v8808
  %v9009 = vpack.c.b16 %v8813, %v8809
  %v9010 = vpack.c.b16 %v8814, %v8810
  %v9011 = vpack.c.b16 %v8819, %v8815
  %v9012 = vpack.c.b16 %v8820, %v8816
  %v9013 = vpack.c.b16 %v8821, %v8817
  %v9014 = vpack.c.b16 %v8822, %v8818
  %v9015 = vpack.c.b16 %v8827, %v8823
  %v9016 = vpack.c.b16 %v8828, %v8824
  %v9017 = vpack.c.b16 %v8829, %v8825
  %v9018 = vpack.c.b16 %v8830, %v8826
  %v9019 = vpack.c.b16 %v8835, %v8831
  %v9020 = vpack.c.b16 %v8836, %v8832
  %v9021 = vpack.c.b16 %v8837, %v8833
  %v9022 = vpack.c.b16 %v8838, %v8834
  %v9023 = vpack.c.b16 %v8843, %v8839
  %v9024 = vpack.c.b16 %v8844, %v8840
  %v9025 = vpack.c.b16 %v8845, %v8841
  %v9026 = vpack.c.b16 %v8846, %v8842
  %v9027 = vpack.c.b16 %v8851, %v8847
  %v9028 = vpack.c.b16 %v8852, %v8848
  %v9029 = vpack.c.b16 %v8853, %v8849
  %v9030 = vpack.c.b16 %v8854, %v8850
  %v9031 = vpack.c.b16 %v8859, %v8855
  %v9032 = vpack.c.b16 %v8860, %v8856
  %v9033 = vpack.c.b16 %v8861, %v8857
  %v9034 = vpack.c.b16 %v8862, %v8858
  %v9035 = vpack.c.b16 %v8867, %v8863
  %v9036 = vpack.c.b16 %v8868, %v8864
  %v9037 = vpack.c.b16 %v8869, %v8865
  %v9038 = vpack.c.b16 %v8870, %v8866
  %v9039 = vpack.c.b16 %v8875, %v8871
  %v9040 = vpack.c.b16 %v8876, %v8872
  %v9041 = vpack.c.b16 %v8877, %v8873
  %v9042 = vpack.c.b16 %v8878, %v8874
  %v9043 = vpack.c.b16 %v8883, %v8879
  %v9044 = vpack.c.b16 %v8884, %v8880
  %v9045 = vpack.c.b16 %v8885, %v8881
  %v9046 = vpack.c.b16 %v8886, %v8882
  %v9047 = vpack.c.b16 %v8891, %v8887
  %v9048 = vpack.c.b16 %v8892, %v8888
  %v9049 = vpack.c.b16 %v8893, %v8889
  %v9050 = vpack.c.b16 %v8894, %v8890
  %v9051 = vpack.c.b16 %v8899, %v8895
  %v9052 = vpack.c.b16 %v8900, %v8896
  %v9053 = vpack.c.b16 %v8901, %v8897
  %v9054 = vpack.c.b16 %v8902, %v8898
  %v9055 = vpack.c.b16 %v8907, %v8903
  %v9056 = vpack.c.b16 %v8908, %v8904
  %v9057 = vpack.c.b16 %v8909, %v8905
  %v9058 = vpack.c.b16 %v8910, %v8906
  %v9059 = vpack.c.b16 %v8915, %v8911
  %v9060 = vpack.c.b16 %v8916, %v8912
  %v9061 = vpack.c.b16 %v8917, %v8913
  %v9062 = vpack.c.b16 %v8918, %v8914
  %v9063 = vpack.c.b16 %v8923, %v8919
  %v9064 = vpack.c.b16 %v8924, %v8920
  %v9065 = vpack.c.b16 %v8925, %v8921
  %v9066 = vpack.c.b16 %v8926, %v8922
  %v9067 = vpack.c.b16 %v8931, %v8927
  %v9068 = vpack.c.b16 %v8932, %v8928
  %v9069 = vpack.c.b16 %v8933, %v8929
  %v9070 = vpack.c.b16 %v8934, %v8930
  %v9071 = vpack.c.b16 %v8939, %v8935
  %v9072 = vpack.c.b16 %v8940, %v8936
  %v9073 = vpack.c.b16 %v8941, %v8937
  %v9074 = vpack.c.b16 %v8942, %v8938
  %v9075 = vpack.c.b16 %v8947, %v8943
  %v9076 = vpack.c.b16 %v8948, %v8944
  %v9077 = vpack.c.b16 %v8949, %v8945
  %v9078 = vpack.c.b16 %v8950, %v8946
  %9207 = vmatpush.bf16.msra.mxu0 %v8979
  %9208 = vmatpush.bf16.msra.mxu0 %v8975
  %9209 = vmatpush.bf16.msra.mxu0 %v8971
  %9210 = vmatpush.bf16.msra.mxu0 %v8967
  %9211 = vmatpush.bf16.msra.mxu0 %v8963
  %9212 = vmatpush.bf16.msra.mxu0 %v8959
  %9213 = vmatpush.bf16.msra.mxu0 %v8955
  %9214 = vmatpush.bf16.msra.mxu0 %v8951
  %9215 = vmatmul.bf16.gmra.mxu0 %v8301
  %v9216 = vpop.f32.mrf.mxu0
  %v9217 = vadd.f32 %v8559, %v9216
  %v9218 = vpop.f32.mrf.mxu0
  %v9219 = vadd.f32 %v8559, %v9218
  %9220 = vmatmul.bf16.gmra.mxu0 %v8305
  %v9221 = vpop.f32.mrf.mxu0
  %v9222 = vadd.f32 %v8559, %v9221
  %v9223 = vpop.f32.mrf.mxu0
  %v9224 = vadd.f32 %v8559, %v9223
  %9225 = vmatmul.bf16.gmra.mxu0 %v8309
  %v9226 = vpop.f32.mrf.mxu0
  %v9227 = vadd.f32 %v8559, %v9226
  %v9228 = vpop.f32.mrf.mxu0
  %v9229 = vadd.f32 %v8559, %v9228
  %9230 = vmatmul.bf16.gmra.mxu0 %v8313
  %v9231 = vpop.f32.mrf.mxu0
  %v9232 = vadd.f32 %v8559, %v9231
  %v9233 = vpop.f32.mrf.mxu0
  %v9234 = vadd.f32 %v8559, %v9233
  %9235 = vmatmul.bf16.gmra.mxu0 %v8317
  %v9236 = vpop.f32.mrf.mxu0
  %v9237 = vadd.f32 %v8559, %v9236
  %v9238 = vpop.f32.mrf.mxu0
  %v9239 = vadd.f32 %v8559, %v9238
  %9240 = vmatmul.bf16.gmra.mxu0 %v8321
  %v9241 = vpop.f32.mrf.mxu0
  %v9242 = vadd.f32 %v8559, %v9241
  %v9243 = vpop.f32.mrf.mxu0
  %v9244 = vadd.f32 %v8559, %v9243
  %9245 = vmatmul.bf16.gmra.mxu0 %v8325
  %v9246 = vpop.f32.mrf.mxu0
  %v9247 = vadd.f32 %v8559, %v9246
  %v9248 = vpop.f32.mrf.mxu0
  %v9249 = vadd.f32 %v8559, %v9248
  %9250 = vmatmul.bf16.gmra.mxu0 %v8329
  %v9251 = vpop.f32.mrf.mxu0
  %v9252 = vadd.f32 %v8559, %v9251
  %v9253 = vpop.f32.mrf.mxu0
  %v9254 = vadd.f32 %v8559, %v9253
  %9255 = vmatmul.bf16.gmra.mxu0 %v8333
  %v9256 = vpop.f32.mrf.mxu0
  %v9257 = vadd.f32 %v8559, %v9256
  %v9258 = vpop.f32.mrf.mxu0
  %v9259 = vadd.f32 %v8559, %v9258
  %9260 = vmatmul.bf16.gmra.mxu0 %v8337
  %v9261 = vpop.f32.mrf.mxu0
  %v9262 = vadd.f32 %v8559, %v9261
  %v9263 = vpop.f32.mrf.mxu0
  %v9264 = vadd.f32 %v8559, %v9263
  %9265 = vmatmul.bf16.gmra.mxu0 %v8341
  %v9266 = vpop.f32.mrf.mxu0
  %v9267 = vadd.f32 %v8559, %v9266
  %v9268 = vpop.f32.mrf.mxu0
  %v9269 = vadd.f32 %v8559, %v9268
  %9270 = vmatmul.bf16.gmra.mxu0 %v8345
  %v9271 = vpop.f32.mrf.mxu0
  %v9272 = vadd.f32 %v8559, %v9271
  %v9273 = vpop.f32.mrf.mxu0
  %v9274 = vadd.f32 %v8559, %v9273
  %9275 = vmatmul.bf16.gmra.mxu0 %v8349
  %v9276 = vpop.f32.mrf.mxu0
  %v9277 = vadd.f32 %v8559, %v9276
  %v9278 = vpop.f32.mrf.mxu0
  %v9279 = vadd.f32 %v8559, %v9278
  %9280 = vmatmul.bf16.gmra.mxu0 %v8353
  %v9281 = vpop.f32.mrf.mxu0
  %v9282 = vadd.f32 %v8559, %v9281
  %v9283 = vpop.f32.mrf.mxu0
  %v9284 = vadd.f32 %v8559, %v9283
  %9285 = vmatmul.bf16.gmra.mxu0 %v8357
  %v9286 = vpop.f32.mrf.mxu0
  %v9287 = vadd.f32 %v8559, %v9286
  %v9288 = vpop.f32.mrf.mxu0
  %v9289 = vadd.f32 %v8559, %v9288
  %9290 = vmatmul.bf16.gmra.mxu0 %v8361
  %v9291 = vpop.f32.mrf.mxu0
  %v9292 = vadd.f32 %v8559, %v9291
  %v9293 = vpop.f32.mrf.mxu0
  %v9294 = vadd.f32 %v8559, %v9293
  %9295 = vmatmul.bf16.gmra.mxu0 %v8365
  %v9296 = vpop.f32.mrf.mxu0
  %v9297 = vadd.f32 %v8559, %v9296
  %v9298 = vpop.f32.mrf.mxu0
  %v9299 = vadd.f32 %v8559, %v9298
  %9300 = vmatmul.bf16.gmra.mxu0 %v8369
  %v9301 = vpop.f32.mrf.mxu0
  %v9302 = vadd.f32 %v8559, %v9301
  %v9303 = vpop.f32.mrf.mxu0
  %v9304 = vadd.f32 %v8559, %v9303
  %9305 = vmatmul.bf16.gmra.mxu0 %v8373
  %v9306 = vpop.f32.mrf.mxu0
  %v9307 = vadd.f32 %v8559, %v9306
  %v9308 = vpop.f32.mrf.mxu0
  %v9309 = vadd.f32 %v8559, %v9308
  %9310 = vmatmul.bf16.gmra.mxu0 %v8377
  %v9311 = vpop.f32.mrf.mxu0
  %v9312 = vadd.f32 %v8559, %v9311
  %v9313 = vpop.f32.mrf.mxu0
  %v9314 = vadd.f32 %v8559, %v9313
  %9315 = vmatmul.bf16.gmra.mxu0 %v8381
  %v9316 = vpop.f32.mrf.mxu0
  %v9317 = vadd.f32 %v8559, %v9316
  %v9318 = vpop.f32.mrf.mxu0
  %v9319 = vadd.f32 %v8559, %v9318
  %9320 = vmatmul.bf16.gmra.mxu0 %v8385
  %v9321 = vpop.f32.mrf.mxu0
  %v9322 = vadd.f32 %v8559, %v9321
  %v9323 = vpop.f32.mrf.mxu0
  %v9324 = vadd.f32 %v8559, %v9323
  %9325 = vmatmul.bf16.gmra.mxu0 %v8389
  %v9326 = vpop.f32.mrf.mxu0
  %v9327 = vadd.f32 %v8559, %v9326
  %v9328 = vpop.f32.mrf.mxu0
  %v9329 = vadd.f32 %v8559, %v9328
  %9330 = vmatmul.bf16.gmra.mxu0 %v8393
  %v9331 = vpop.f32.mrf.mxu0
  %v9332 = vadd.f32 %v8559, %v9331
  %v9333 = vpop.f32.mrf.mxu0
  %v9334 = vadd.f32 %v8559, %v9333
  %9335 = vmatmul.bf16.gmra.mxu0 %v8397
  %v9336 = vpop.f32.mrf.mxu0
  %v9337 = vadd.f32 %v8559, %v9336
  %v9338 = vpop.f32.mrf.mxu0
  %v9339 = vadd.f32 %v8559, %v9338
  %9340 = vmatmul.bf16.gmra.mxu0 %v8401
  %v9341 = vpop.f32.mrf.mxu0
  %v9342 = vadd.f32 %v8559, %v9341
  %v9343 = vpop.f32.mrf.mxu0
  %v9344 = vadd.f32 %v8559, %v9343
  %9345 = vmatmul.bf16.gmra.mxu0 %v8405
  %v9346 = vpop.f32.mrf.mxu0
  %v9347 = vadd.f32 %v8559, %v9346
  %v9348 = vpop.f32.mrf.mxu0
  %v9349 = vadd.f32 %v8559, %v9348
  %9350 = vmatmul.bf16.gmra.mxu0 %v8409
  %v9351 = vpop.f32.mrf.mxu0
  %v9352 = vadd.f32 %v8559, %v9351
  %v9353 = vpop.f32.mrf.mxu0
  %v9354 = vadd.f32 %v8559, %v9353
  %9355 = vmatmul.bf16.gmra.mxu0 %v8413
  %v9356 = vpop.f32.mrf.mxu0
  %v9357 = vadd.f32 %v8559, %v9356
  %v9358 = vpop.f32.mrf.mxu0
  %v9359 = vadd.f32 %v8559, %v9358
  %9360 = vmatmul.bf16.gmra.mxu0 %v8417
  %v9361 = vpop.f32.mrf.mxu0
  %v9362 = vadd.f32 %v8559, %v9361
  %v9363 = vpop.f32.mrf.mxu0
  %v9364 = vadd.f32 %v8559, %v9363
  %9365 = vmatmul.bf16.gmra.mxu0 %v8421
  %v9366 = vpop.f32.mrf.mxu0
  %v9367 = vadd.f32 %v8559, %v9366
  %v9368 = vpop.f32.mrf.mxu0
  %v9369 = vadd.f32 %v8559, %v9368
  %9370 = vmatmul.bf16.gmra.mxu0 %v8425
  %v9371 = vpop.f32.mrf.mxu0
  %v9372 = vadd.f32 %v8559, %v9371
  %v9373 = vpop.f32.mrf.mxu0
  %v9374 = vadd.f32 %v8559, %v9373
  %9375 = vdwg.mxu0
  %9376 = vmatpush.bf16.msra.mxu0 %v9011
  %9377 = vmatpush.bf16.msra.mxu0 %v9007
  %9378 = vmatpush.bf16.msra.mxu0 %v9003
  %9379 = vmatpush.bf16.msra.mxu0 %v8999
  %9380 = vmatpush.bf16.msra.mxu0 %v8995
  %9381 = vmatpush.bf16.msra.mxu0 %v8991
  %9382 = vmatpush.bf16.msra.mxu0 %v8987
  %9383 = vmatpush.bf16.msra.mxu0 %v8983
  %9384 = vmatmul.bf16.gmra.mxu0 %v8302
  %v9385 = vpop.f32.mrf.mxu0
  %v9386 = vadd.f32 %v9217, %v9385
  %v9387 = vpop.f32.mrf.mxu0
  %v9388 = vadd.f32 %v9219, %v9387
  %9389 = vmatmul.bf16.gmra.mxu0 %v8306
  %v9390 = vpop.f32.mrf.mxu0
  %v9391 = vadd.f32 %v9222, %v9390
  %v9392 = vpop.f32.mrf.mxu0
  %v9393 = vadd.f32 %v9224, %v9392
  %9394 = vmatmul.bf16.gmra.mxu0 %v8310
  %v9395 = vpop.f32.mrf.mxu0
  %v9396 = vadd.f32 %v9227, %v9395
  %v9397 = vpop.f32.mrf.mxu0
  %v9398 = vadd.f32 %v9229, %v9397
  %9399 = vmatmul.bf16.gmra.mxu0 %v8314
  %v9400 = vpop.f32.mrf.mxu0
  %v9401 = vadd.f32 %v9232, %v9400
  %v9402 = vpop.f32.mrf.mxu0
  %v9403 = vadd.f32 %v9234, %v9402
  %9404 = vmatmul.bf16.gmra.mxu0 %v8318
  %v9405 = vpop.f32.mrf.mxu0
  %v9406 = vadd.f32 %v9237, %v9405
  %v9407 = vpop.f32.mrf.mxu0
  %v9408 = vadd.f32 %v9239, %v9407
  %9409 = vmatmul.bf16.gmra.mxu0 %v8322
  %v9410 = vpop.f32.mrf.mxu0
  %v9411 = vadd.f32 %v9242, %v9410
  %v9412 = vpop.f32.mrf.mxu0
  %v9413 = vadd.f32 %v9244, %v9412
  %9414 = vmatmul.bf16.gmra.mxu0 %v8326
  %v9415 = vpop.f32.mrf.mxu0
  %v9416 = vadd.f32 %v9247, %v9415
  %v9417 = vpop.f32.mrf.mxu0
  %v9418 = vadd.f32 %v9249, %v9417
  %9419 = vmatmul.bf16.gmra.mxu0 %v8330
  %v9420 = vpop.f32.mrf.mxu0
  %v9421 = vadd.f32 %v9252, %v9420
  %v9422 = vpop.f32.mrf.mxu0
  %v9423 = vadd.f32 %v9254, %v9422
  %9424 = vmatmul.bf16.gmra.mxu0 %v8334
  %v9425 = vpop.f32.mrf.mxu0
  %v9426 = vadd.f32 %v9257, %v9425
  %v9427 = vpop.f32.mrf.mxu0
  %v9428 = vadd.f32 %v9259, %v9427
  %9429 = vmatmul.bf16.gmra.mxu0 %v8338
  %v9430 = vpop.f32.mrf.mxu0
  %v9431 = vadd.f32 %v9262, %v9430
  %v9432 = vpop.f32.mrf.mxu0
  %v9433 = vadd.f32 %v9264, %v9432
  %9434 = vmatmul.bf16.gmra.mxu0 %v8342
  %v9435 = vpop.f32.mrf.mxu0
  %v9436 = vadd.f32 %v9267, %v9435
  %v9437 = vpop.f32.mrf.mxu0
  %v9438 = vadd.f32 %v9269, %v9437
  %9439 = vmatmul.bf16.gmra.mxu0 %v8346
  %v9440 = vpop.f32.mrf.mxu0
  %v9441 = vadd.f32 %v9272, %v9440
  %v9442 = vpop.f32.mrf.mxu0
  %v9443 = vadd.f32 %v9274, %v9442
  %9444 = vmatmul.bf16.gmra.mxu0 %v8350
  %v9445 = vpop.f32.mrf.mxu0
  %v9446 = vadd.f32 %v9277, %v9445
  %v9447 = vpop.f32.mrf.mxu0
  %v9448 = vadd.f32 %v9279, %v9447
  %9449 = vmatmul.bf16.gmra.mxu0 %v8354
  %v9450 = vpop.f32.mrf.mxu0
  %v9451 = vadd.f32 %v9282, %v9450
  %v9452 = vpop.f32.mrf.mxu0
  %v9453 = vadd.f32 %v9284, %v9452
  %9454 = vmatmul.bf16.gmra.mxu0 %v8358
  %v9455 = vpop.f32.mrf.mxu0
  %v9456 = vadd.f32 %v9287, %v9455
  %v9457 = vpop.f32.mrf.mxu0
  %v9458 = vadd.f32 %v9289, %v9457
  %9459 = vmatmul.bf16.gmra.mxu0 %v8362
  %v9460 = vpop.f32.mrf.mxu0
  %v9461 = vadd.f32 %v9292, %v9460
  %v9462 = vpop.f32.mrf.mxu0
  %v9463 = vadd.f32 %v9294, %v9462
  %9464 = vmatmul.bf16.gmra.mxu0 %v8366
  %v9465 = vpop.f32.mrf.mxu0
  %v9466 = vadd.f32 %v9297, %v9465
  %v9467 = vpop.f32.mrf.mxu0
  %v9468 = vadd.f32 %v9299, %v9467
  %9469 = vmatmul.bf16.gmra.mxu0 %v8370
  %v9470 = vpop.f32.mrf.mxu0
  %v9471 = vadd.f32 %v9302, %v9470
  %v9472 = vpop.f32.mrf.mxu0
  %v9473 = vadd.f32 %v9304, %v9472
  %9474 = vmatmul.bf16.gmra.mxu0 %v8374
  %v9475 = vpop.f32.mrf.mxu0
  %v9476 = vadd.f32 %v9307, %v9475
  %v9477 = vpop.f32.mrf.mxu0
  %v9478 = vadd.f32 %v9309, %v9477
  %9479 = vmatmul.bf16.gmra.mxu0 %v8378
  %v9480 = vpop.f32.mrf.mxu0
  %v9481 = vadd.f32 %v9312, %v9480
  %v9482 = vpop.f32.mrf.mxu0
  %v9483 = vadd.f32 %v9314, %v9482
  %9484 = vmatmul.bf16.gmra.mxu0 %v8382
  %v9485 = vpop.f32.mrf.mxu0
  %v9486 = vadd.f32 %v9317, %v9485
  %v9487 = vpop.f32.mrf.mxu0
  %v9488 = vadd.f32 %v9319, %v9487
  %9489 = vmatmul.bf16.gmra.mxu0 %v8386
  %v9490 = vpop.f32.mrf.mxu0
  %v9491 = vadd.f32 %v9322, %v9490
  %v9492 = vpop.f32.mrf.mxu0
  %v9493 = vadd.f32 %v9324, %v9492
  %9494 = vmatmul.bf16.gmra.mxu0 %v8390
  %v9495 = vpop.f32.mrf.mxu0
  %v9496 = vadd.f32 %v9327, %v9495
  %v9497 = vpop.f32.mrf.mxu0
  %v9498 = vadd.f32 %v9329, %v9497
  %9499 = vmatmul.bf16.gmra.mxu0 %v8394
  %v9500 = vpop.f32.mrf.mxu0
  %v9501 = vadd.f32 %v9332, %v9500
  %v9502 = vpop.f32.mrf.mxu0
  %v9503 = vadd.f32 %v9334, %v9502
  %9504 = vmatmul.bf16.gmra.mxu0 %v8398
  %v9505 = vpop.f32.mrf.mxu0
  %v9506 = vadd.f32 %v9337, %v9505
  %v9507 = vpop.f32.mrf.mxu0
  %v9508 = vadd.f32 %v9339, %v9507
  %9509 = vmatmul.bf16.gmra.mxu0 %v8402
  %v9510 = vpop.f32.mrf.mxu0
  %v9511 = vadd.f32 %v9342, %v9510
  %v9512 = vpop.f32.mrf.mxu0
  %v9513 = vadd.f32 %v9344, %v9512
  %9514 = vmatmul.bf16.gmra.mxu0 %v8406
  %v9515 = vpop.f32.mrf.mxu0
  %v9516 = vadd.f32 %v9347, %v9515
  %v9517 = vpop.f32.mrf.mxu0
  %v9518 = vadd.f32 %v9349, %v9517
  %9519 = vmatmul.bf16.gmra.mxu0 %v8410
  %v9520 = vpop.f32.mrf.mxu0
  %v9521 = vadd.f32 %v9352, %v9520
  %v9522 = vpop.f32.mrf.mxu0
  %v9523 = vadd.f32 %v9354, %v9522
  %9524 = vmatmul.bf16.gmra.mxu0 %v8414
  %v9525 = vpop.f32.mrf.mxu0
  %v9526 = vadd.f32 %v9357, %v9525
  %v9527 = vpop.f32.mrf.mxu0
  %v9528 = vadd.f32 %v9359, %v9527
  %9529 = vmatmul.bf16.gmra.mxu0 %v8418
  %v9530 = vpop.f32.mrf.mxu0
  %v9531 = vadd.f32 %v9362, %v9530
  %v9532 = vpop.f32.mrf.mxu0
  %v9533 = vadd.f32 %v9364, %v9532
  %9534 = vmatmul.bf16.gmra.mxu0 %v8422
  %v9535 = vpop.f32.mrf.mxu0
  %v9536 = vadd.f32 %v9367, %v9535
  %v9537 = vpop.f32.mrf.mxu0
  %v9538 = vadd.f32 %v9369, %v9537
  %9539 = vmatmul.bf16.gmra.mxu0 %v8426
  %v9540 = vpop.f32.mrf.mxu0
  %v9541 = vadd.f32 %v9372, %v9540
  %v9542 = vpop.f32.mrf.mxu0
  %v9543 = vadd.f32 %v9374, %v9542
  %9544 = vdwg.mxu0
  %9545 = vmatpush.bf16.msra.mxu0 %v9043
  %9546 = vmatpush.bf16.msra.mxu0 %v9039
  %9547 = vmatpush.bf16.msra.mxu0 %v9035
  %9548 = vmatpush.bf16.msra.mxu0 %v9031
  %9549 = vmatpush.bf16.msra.mxu0 %v9027
  %9550 = vmatpush.bf16.msra.mxu0 %v9023
  %9551 = vmatpush.bf16.msra.mxu0 %v9019
  %9552 = vmatpush.bf16.msra.mxu0 %v9015
  %9553 = vmatmul.bf16.gmra.mxu0 %v8303
  %v9554 = vpop.f32.mrf.mxu0
  %v9555 = vadd.f32 %v9386, %v9554
  %v9556 = vpop.f32.mrf.mxu0
  %v9557 = vadd.f32 %v9388, %v9556
  %9558 = vmatmul.bf16.gmra.mxu0 %v8307
  %v9559 = vpop.f32.mrf.mxu0
  %v9560 = vadd.f32 %v9391, %v9559
  %v9561 = vpop.f32.mrf.mxu0
  %v9562 = vadd.f32 %v9393, %v9561
  %9563 = vmatmul.bf16.gmra.mxu0 %v8311
  %v9564 = vpop.f32.mrf.mxu0
  %v9565 = vadd.f32 %v9396, %v9564
  %v9566 = vpop.f32.mrf.mxu0
  %v9567 = vadd.f32 %v9398, %v9566
  %9568 = vmatmul.bf16.gmra.mxu0 %v8315
  %v9569 = vpop.f32.mrf.mxu0
  %v9570 = vadd.f32 %v9401, %v9569
  %v9571 = vpop.f32.mrf.mxu0
  %v9572 = vadd.f32 %v9403, %v9571
  %9573 = vmatmul.bf16.gmra.mxu0 %v8319
  %v9574 = vpop.f32.mrf.mxu0
  %v9575 = vadd.f32 %v9406, %v9574
  %v9576 = vpop.f32.mrf.mxu0
  %v9577 = vadd.f32 %v9408, %v9576
  %9578 = vmatmul.bf16.gmra.mxu0 %v8323
  %v9579 = vpop.f32.mrf.mxu0
  %v9580 = vadd.f32 %v9411, %v9579
  %v9581 = vpop.f32.mrf.mxu0
  %v9582 = vadd.f32 %v9413, %v9581
  %9583 = vmatmul.bf16.gmra.mxu0 %v8327
  %v9584 = vpop.f32.mrf.mxu0
  %v9585 = vadd.f32 %v9416, %v9584
  %v9586 = vpop.f32.mrf.mxu0
  %v9587 = vadd.f32 %v9418, %v9586
  %9588 = vmatmul.bf16.gmra.mxu0 %v8331
  %v9589 = vpop.f32.mrf.mxu0
  %v9590 = vadd.f32 %v9421, %v9589
  %v9591 = vpop.f32.mrf.mxu0
  %v9592 = vadd.f32 %v9423, %v9591
  %9593 = vmatmul.bf16.gmra.mxu0 %v8335
  %v9594 = vpop.f32.mrf.mxu0
  %v9595 = vadd.f32 %v9426, %v9594
  %v9596 = vpop.f32.mrf.mxu0
  %v9597 = vadd.f32 %v9428, %v9596
  %9598 = vmatmul.bf16.gmra.mxu0 %v8339
  %v9599 = vpop.f32.mrf.mxu0
  %v9600 = vadd.f32 %v9431, %v9599
  %v9601 = vpop.f32.mrf.mxu0
  %v9602 = vadd.f32 %v9433, %v9601
  %9603 = vmatmul.bf16.gmra.mxu0 %v8343
  %v9604 = vpop.f32.mrf.mxu0
  %v9605 = vadd.f32 %v9436, %v9604
  %v9606 = vpop.f32.mrf.mxu0
  %v9607 = vadd.f32 %v9438, %v9606
  %9608 = vmatmul.bf16.gmra.mxu0 %v8347
  %v9609 = vpop.f32.mrf.mxu0
  %v9610 = vadd.f32 %v9441, %v9609
  %v9611 = vpop.f32.mrf.mxu0
  %v9612 = vadd.f32 %v9443, %v9611
  %9613 = vmatmul.bf16.gmra.mxu0 %v8351
  %v9614 = vpop.f32.mrf.mxu0
  %v9615 = vadd.f32 %v9446, %v9614
  %v9616 = vpop.f32.mrf.mxu0
  %v9617 = vadd.f32 %v9448, %v9616
  %9618 = vmatmul.bf16.gmra.mxu0 %v8355
  %v9619 = vpop.f32.mrf.mxu0
  %v9620 = vadd.f32 %v9451, %v9619
  %v9621 = vpop.f32.mrf.mxu0
  %v9622 = vadd.f32 %v9453, %v9621
  %9623 = vmatmul.bf16.gmra.mxu0 %v8359
  %v9624 = vpop.f32.mrf.mxu0
  %v9625 = vadd.f32 %v9456, %v9624
  %v9626 = vpop.f32.mrf.mxu0
  %v9627 = vadd.f32 %v9458, %v9626
  %9628 = vmatmul.bf16.gmra.mxu0 %v8363
  %v9629 = vpop.f32.mrf.mxu0
  %v9630 = vadd.f32 %v9461, %v9629
  %v9631 = vpop.f32.mrf.mxu0
  %v9632 = vadd.f32 %v9463, %v9631
  %9633 = vmatmul.bf16.gmra.mxu0 %v8367
  %v9634 = vpop.f32.mrf.mxu0
  %v9635 = vadd.f32 %v9466, %v9634
  %v9636 = vpop.f32.mrf.mxu0
  %v9637 = vadd.f32 %v9468, %v9636
  %9638 = vmatmul.bf16.gmra.mxu0 %v8371
  %v9639 = vpop.f32.mrf.mxu0
  %v9640 = vadd.f32 %v9471, %v9639
  %v9641 = vpop.f32.mrf.mxu0
  %v9642 = vadd.f32 %v9473, %v9641
  %9643 = vmatmul.bf16.gmra.mxu0 %v8375
  %v9644 = vpop.f32.mrf.mxu0
  %v9645 = vadd.f32 %v9476, %v9644
  %v9646 = vpop.f32.mrf.mxu0
  %v9647 = vadd.f32 %v9478, %v9646
  %9648 = vmatmul.bf16.gmra.mxu0 %v8379
  %v9649 = vpop.f32.mrf.mxu0
  %v9650 = vadd.f32 %v9481, %v9649
  %v9651 = vpop.f32.mrf.mxu0
  %v9652 = vadd.f32 %v9483, %v9651
  %9653 = vmatmul.bf16.gmra.mxu0 %v8383
  %v9654 = vpop.f32.mrf.mxu0
  %v9655 = vadd.f32 %v9486, %v9654
  %v9656 = vpop.f32.mrf.mxu0
  %v9657 = vadd.f32 %v9488, %v9656
  %9658 = vmatmul.bf16.gmra.mxu0 %v8387
  %v9659 = vpop.f32.mrf.mxu0
  %v9660 = vadd.f32 %v9491, %v9659
  %v9661 = vpop.f32.mrf.mxu0
  %v9662 = vadd.f32 %v9493, %v9661
  %9663 = vmatmul.bf16.gmra.mxu0 %v8391
  %v9664 = vpop.f32.mrf.mxu0
  %v9665 = vadd.f32 %v9496, %v9664
  %v9666 = vpop.f32.mrf.mxu0
  %v9667 = vadd.f32 %v9498, %v9666
  %9668 = vmatmul.bf16.gmra.mxu0 %v8395
  %v9669 = vpop.f32.mrf.mxu0
  %v9670 = vadd.f32 %v9501, %v9669
  %v9671 = vpop.f32.mrf.mxu0
  %v9672 = vadd.f32 %v9503, %v9671
  %9673 = vmatmul.bf16.gmra.mxu0 %v8399
  %v9674 = vpop.f32.mrf.mxu0
  %v9675 = vadd.f32 %v9506, %v9674
  %v9676 = vpop.f32.mrf.mxu0
  %v9677 = vadd.f32 %v9508, %v9676
  %9678 = vmatmul.bf16.gmra.mxu0 %v8403
  %v9679 = vpop.f32.mrf.mxu0
  %v9680 = vadd.f32 %v9511, %v9679
  %v9681 = vpop.f32.mrf.mxu0
  %v9682 = vadd.f32 %v9513, %v9681
  %9683 = vmatmul.bf16.gmra.mxu0 %v8407
  %v9684 = vpop.f32.mrf.mxu0
  %v9685 = vadd.f32 %v9516, %v9684
  %v9686 = vpop.f32.mrf.mxu0
  %v9687 = vadd.f32 %v9518, %v9686
  %9688 = vmatmul.bf16.gmra.mxu0 %v8411
  %v9689 = vpop.f32.mrf.mxu0
  %v9690 = vadd.f32 %v9521, %v9689
  %v9691 = vpop.f32.mrf.mxu0
  %v9692 = vadd.f32 %v9523, %v9691
  %9693 = vmatmul.bf16.gmra.mxu0 %v8415
  %v9694 = vpop.f32.mrf.mxu0
  %v9695 = vadd.f32 %v9526, %v9694
  %v9696 = vpop.f32.mrf.mxu0
  %v9697 = vadd.f32 %v9528, %v9696
  %9698 = vmatmul.bf16.gmra.mxu0 %v8419
  %v9699 = vpop.f32.mrf.mxu0
  %v9700 = vadd.f32 %v9531, %v9699
  %v9701 = vpop.f32.mrf.mxu0
  %v9702 = vadd.f32 %v9533, %v9701
  %9703 = vmatmul.bf16.gmra.mxu0 %v8423
  %v9704 = vpop.f32.mrf.mxu0
  %v9705 = vadd.f32 %v9536, %v9704
  %v9706 = vpop.f32.mrf.mxu0
  %v9707 = vadd.f32 %v9538, %v9706
  %9708 = vmatmul.bf16.gmra.mxu0 %v8427
  %v9709 = vpop.f32.mrf.mxu0
  %v9710 = vadd.f32 %v9541, %v9709
  %v9711 = vpop.f32.mrf.mxu0
  %v9712 = vadd.f32 %v9543, %v9711
  %9713 = vdwg.mxu0
  %9714 = vmatpush.bf16.msra.mxu0 %v9075
  %9715 = vmatpush.bf16.msra.mxu0 %v9071
  %9716 = vmatpush.bf16.msra.mxu0 %v9067
  %9717 = vmatpush.bf16.msra.mxu0 %v9063
  %9718 = vmatpush.bf16.msra.mxu0 %v9059
  %9719 = vmatpush.bf16.msra.mxu0 %v9055
  %9720 = vmatpush.bf16.msra.mxu0 %v9051
  %9721 = vmatpush.bf16.msra.mxu0 %v9047
  %9722 = vmatmul.bf16.gmra.mxu0 %v8304
  %v9723 = vpop.f32.mrf.mxu0
  %v9724 = vadd.f32 %v9555, %v9723
  %v9725 = vpop.f32.mrf.mxu0
  %v9726 = vadd.f32 %v9557, %v9725
  %9727 = vmatmul.bf16.gmra.mxu0 %v8308
  %v9728 = vpop.f32.mrf.mxu0
  %v9729 = vadd.f32 %v9560, %v9728
  %v9730 = vpop.f32.mrf.mxu0
  %v9731 = vadd.f32 %v9562, %v9730
  %9732 = vmatmul.bf16.gmra.mxu0 %v8312
  %v9733 = vpop.f32.mrf.mxu0
  %v9734 = vadd.f32 %v9565, %v9733
  %v9735 = vpop.f32.mrf.mxu0
  %v9736 = vadd.f32 %v9567, %v9735
  %9737 = vmatmul.bf16.gmra.mxu0 %v8316
  %v9738 = vpop.f32.mrf.mxu0
  %v9739 = vadd.f32 %v9570, %v9738
  %v9740 = vpop.f32.mrf.mxu0
  %v9741 = vadd.f32 %v9572, %v9740
  %9742 = vmatmul.bf16.gmra.mxu0 %v8320
  %v9743 = vpop.f32.mrf.mxu0
  %v9744 = vadd.f32 %v9575, %v9743
  %v9745 = vpop.f32.mrf.mxu0
  %v9746 = vadd.f32 %v9577, %v9745
  %9747 = vmatmul.bf16.gmra.mxu0 %v8324
  %v9748 = vpop.f32.mrf.mxu0
  %v9749 = vadd.f32 %v9580, %v9748
  %v9750 = vpop.f32.mrf.mxu0
  %v9751 = vadd.f32 %v9582, %v9750
  %9752 = vmatmul.bf16.gmra.mxu0 %v8328
  %v9753 = vpop.f32.mrf.mxu0
  %v9754 = vadd.f32 %v9585, %v9753
  %v9755 = vpop.f32.mrf.mxu0
  %v9756 = vadd.f32 %v9587, %v9755
  %9757 = vmatmul.bf16.gmra.mxu0 %v8332
  %v9758 = vpop.f32.mrf.mxu0
  %v9759 = vadd.f32 %v9590, %v9758
  %v9760 = vpop.f32.mrf.mxu0
  %v9761 = vadd.f32 %v9592, %v9760
  %9762 = vmatmul.bf16.gmra.mxu0 %v8336
  %v9763 = vpop.f32.mrf.mxu0
  %v9764 = vadd.f32 %v9595, %v9763
  %v9765 = vpop.f32.mrf.mxu0
  %v9766 = vadd.f32 %v9597, %v9765
  %9767 = vmatmul.bf16.gmra.mxu0 %v8340
  %v9768 = vpop.f32.mrf.mxu0
  %v9769 = vadd.f32 %v9600, %v9768
  %v9770 = vpop.f32.mrf.mxu0
  %v9771 = vadd.f32 %v9602, %v9770
  %9772 = vmatmul.bf16.gmra.mxu0 %v8344
  %v9773 = vpop.f32.mrf.mxu0
  %v9774 = vadd.f32 %v9605, %v9773
  %v9775 = vpop.f32.mrf.mxu0
  %v9776 = vadd.f32 %v9607, %v9775
  %9777 = vmatmul.bf16.gmra.mxu0 %v8348
  %v9778 = vpop.f32.mrf.mxu0
  %v9779 = vadd.f32 %v9610, %v9778
  %v9780 = vpop.f32.mrf.mxu0
  %v9781 = vadd.f32 %v9612, %v9780
  %9782 = vmatmul.bf16.gmra.mxu0 %v8352
  %v9783 = vpop.f32.mrf.mxu0
  %v9784 = vadd.f32 %v9615, %v9783
  %v9785 = vpop.f32.mrf.mxu0
  %v9786 = vadd.f32 %v9617, %v9785
  %9787 = vmatmul.bf16.gmra.mxu0 %v8356
  %v9788 = vpop.f32.mrf.mxu0
  %v9789 = vadd.f32 %v9620, %v9788
  %v9790 = vpop.f32.mrf.mxu0
  %v9791 = vadd.f32 %v9622, %v9790
  %9792 = vmatmul.bf16.gmra.mxu0 %v8360
  %v9793 = vpop.f32.mrf.mxu0
  %v9794 = vadd.f32 %v9625, %v9793
  %v9795 = vpop.f32.mrf.mxu0
  %v9796 = vadd.f32 %v9627, %v9795
  %9797 = vmatmul.bf16.gmra.mxu0 %v8364
  %v9798 = vpop.f32.mrf.mxu0
  %v9799 = vadd.f32 %v9630, %v9798
  %v9800 = vpop.f32.mrf.mxu0
  %v9801 = vadd.f32 %v9632, %v9800
  %9802 = vmatmul.bf16.gmra.mxu0 %v8368
  %v9803 = vpop.f32.mrf.mxu0
  %v9804 = vadd.f32 %v9635, %v9803
  %v9805 = vpop.f32.mrf.mxu0
  %v9806 = vadd.f32 %v9637, %v9805
  %9807 = vmatmul.bf16.gmra.mxu0 %v8372
  %v9808 = vpop.f32.mrf.mxu0
  %v9809 = vadd.f32 %v9640, %v9808
  %v9810 = vpop.f32.mrf.mxu0
  %v9811 = vadd.f32 %v9642, %v9810
  %9812 = vmatmul.bf16.gmra.mxu0 %v8376
  %v9813 = vpop.f32.mrf.mxu0
  %v9814 = vadd.f32 %v9645, %v9813
  %v9815 = vpop.f32.mrf.mxu0
  %v9816 = vadd.f32 %v9647, %v9815
  %9817 = vmatmul.bf16.gmra.mxu0 %v8380
  %v9818 = vpop.f32.mrf.mxu0
  %v9819 = vadd.f32 %v9650, %v9818
  %v9820 = vpop.f32.mrf.mxu0
  %v9821 = vadd.f32 %v9652, %v9820
  %9822 = vmatmul.bf16.gmra.mxu0 %v8384
  %v9823 = vpop.f32.mrf.mxu0
  %v9824 = vadd.f32 %v9655, %v9823
  %v9825 = vpop.f32.mrf.mxu0
  %v9826 = vadd.f32 %v9657, %v9825
  %9827 = vmatmul.bf16.gmra.mxu0 %v8388
  %v9828 = vpop.f32.mrf.mxu0
  %v9829 = vadd.f32 %v9660, %v9828
  %v9830 = vpop.f32.mrf.mxu0
  %v9831 = vadd.f32 %v9662, %v9830
  %9832 = vmatmul.bf16.gmra.mxu0 %v8392
  %v9833 = vpop.f32.mrf.mxu0
  %v9834 = vadd.f32 %v9665, %v9833
  %v9835 = vpop.f32.mrf.mxu0
  %v9836 = vadd.f32 %v9667, %v9835
  %9837 = vmatmul.bf16.gmra.mxu0 %v8396
  %v9838 = vpop.f32.mrf.mxu0
  %v9839 = vadd.f32 %v9670, %v9838
  %v9840 = vpop.f32.mrf.mxu0
  %v9841 = vadd.f32 %v9672, %v9840
  %9842 = vmatmul.bf16.gmra.mxu0 %v8400
  %v9843 = vpop.f32.mrf.mxu0
  %v9844 = vadd.f32 %v9675, %v9843
  %v9845 = vpop.f32.mrf.mxu0
  %v9846 = vadd.f32 %v9677, %v9845
  %9847 = vmatmul.bf16.gmra.mxu0 %v8404
  %v9848 = vpop.f32.mrf.mxu0
  %v9849 = vadd.f32 %v9680, %v9848
  %v9850 = vpop.f32.mrf.mxu0
  %v9851 = vadd.f32 %v9682, %v9850
  %9852 = vmatmul.bf16.gmra.mxu0 %v8408
  %v9853 = vpop.f32.mrf.mxu0
  %v9854 = vadd.f32 %v9685, %v9853
  %v9855 = vpop.f32.mrf.mxu0
  %v9856 = vadd.f32 %v9687, %v9855
  %9857 = vmatmul.bf16.gmra.mxu0 %v8412
  %v9858 = vpop.f32.mrf.mxu0
  %v9859 = vadd.f32 %v9690, %v9858
  %v9860 = vpop.f32.mrf.mxu0
  %v9861 = vadd.f32 %v9692, %v9860
  %9862 = vmatmul.bf16.gmra.mxu0 %v8416
  %v9863 = vpop.f32.mrf.mxu0
  %v9864 = vadd.f32 %v9695, %v9863
  %v9865 = vpop.f32.mrf.mxu0
  %v9866 = vadd.f32 %v9697, %v9865
  %9867 = vmatmul.bf16.gmra.mxu0 %v8420
  %v9868 = vpop.f32.mrf.mxu0
  %v9869 = vadd.f32 %v9700, %v9868
  %v9870 = vpop.f32.mrf.mxu0
  %v9871 = vadd.f32 %v9702, %v9870
  %9872 = vmatmul.bf16.gmra.mxu0 %v8424
  %v9873 = vpop.f32.mrf.mxu0
  %v9874 = vadd.f32 %v9705, %v9873
  %v9875 = vpop.f32.mrf.mxu0
  %v9876 = vadd.f32 %v9707, %v9875
  %9877 = vmatmul.bf16.gmra.mxu0 %v8428
  %v9878 = vpop.f32.mrf.mxu0
  %v9879 = vadd.f32 %v9710, %v9878
  %v9880 = vpop.f32.mrf.mxu0
  %v9881 = vadd.f32 %v9712, %v9880
  %9882 = vdwg.mxu0
  %9883 = vmatpush.bf16.msra.mxu0 %v8980
  %9884 = vmatpush.bf16.msra.mxu0 %v8976
  %9885 = vmatpush.bf16.msra.mxu0 %v8972
  %9886 = vmatpush.bf16.msra.mxu0 %v8968
  %9887 = vmatpush.bf16.msra.mxu0 %v8964
  %9888 = vmatpush.bf16.msra.mxu0 %v8960
  %9889 = vmatpush.bf16.msra.mxu0 %v8956
  %9890 = vmatpush.bf16.msra.mxu0 %v8952
  %9891 = vmatmul.bf16.gmra.mxu0 %v8301
  %v9892 = vpop.f32.mrf.mxu0
  %v9893 = vadd.f32 %v8560, %v9892
  %v9894 = vpop.f32.mrf.mxu0
  %v9895 = vadd.f32 %v8560, %v9894
  %9896 = vmatmul.bf16.gmra.mxu0 %v8305
  %v9897 = vpop.f32.mrf.mxu0
  %v9898 = vadd.f32 %v8560, %v9897
  %v9899 = vpop.f32.mrf.mxu0
  %v9900 = vadd.f32 %v8560, %v9899
  %9901 = vmatmul.bf16.gmra.mxu0 %v8309
  %v9902 = vpop.f32.mrf.mxu0
  %v9903 = vadd.f32 %v8560, %v9902
  %v9904 = vpop.f32.mrf.mxu0
  %v9905 = vadd.f32 %v8560, %v9904
  %9906 = vmatmul.bf16.gmra.mxu0 %v8313
  %v9907 = vpop.f32.mrf.mxu0
  %v9908 = vadd.f32 %v8560, %v9907
  %v9909 = vpop.f32.mrf.mxu0
  %v9910 = vadd.f32 %v8560, %v9909
  %9911 = vmatmul.bf16.gmra.mxu0 %v8317
  %v9912 = vpop.f32.mrf.mxu0
  %v9913 = vadd.f32 %v8560, %v9912
  %v9914 = vpop.f32.mrf.mxu0
  %v9915 = vadd.f32 %v8560, %v9914
  %9916 = vmatmul.bf16.gmra.mxu0 %v8321
  %v9917 = vpop.f32.mrf.mxu0
  %v9918 = vadd.f32 %v8560, %v9917
  %v9919 = vpop.f32.mrf.mxu0
  %v9920 = vadd.f32 %v8560, %v9919
  %9921 = vmatmul.bf16.gmra.mxu0 %v8325
  %v9922 = vpop.f32.mrf.mxu0
  %v9923 = vadd.f32 %v8560, %v9922
  %v9924 = vpop.f32.mrf.mxu0
  %v9925 = vadd.f32 %v8560, %v9924
  %9926 = vmatmul.bf16.gmra.mxu0 %v8329
  %v9927 = vpop.f32.mrf.mxu0
  %v9928 = vadd.f32 %v8560, %v9927
  %v9929 = vpop.f32.mrf.mxu0
  %v9930 = vadd.f32 %v8560, %v9929
  %9931 = vmatmul.bf16.gmra.mxu0 %v8333
  %v9932 = vpop.f32.mrf.mxu0
  %v9933 = vadd.f32 %v8560, %v9932
  %v9934 = vpop.f32.mrf.mxu0
  %v9935 = vadd.f32 %v8560, %v9934
  %9936 = vmatmul.bf16.gmra.mxu0 %v8337
  %v9937 = vpop.f32.mrf.mxu0
  %v9938 = vadd.f32 %v8560, %v9937
  %v9939 = vpop.f32.mrf.mxu0
  %v9940 = vadd.f32 %v8560, %v9939
  %9941 = vmatmul.bf16.gmra.mxu0 %v8341
  %v9942 = vpop.f32.mrf.mxu0
  %v9943 = vadd.f32 %v8560, %v9942
  %v9944 = vpop.f32.mrf.mxu0
  %v9945 = vadd.f32 %v8560, %v9944
  %9946 = vmatmul.bf16.gmra.mxu0 %v8345
  %v9947 = vpop.f32.mrf.mxu0
  %v9948 = vadd.f32 %v8560, %v9947
  %v9949 = vpop.f32.mrf.mxu0
  %v9950 = vadd.f32 %v8560, %v9949
  %9951 = vmatmul.bf16.gmra.mxu0 %v8349
  %v9952 = vpop.f32.mrf.mxu0
  %v9953 = vadd.f32 %v8560, %v9952
  %v9954 = vpop.f32.mrf.mxu0
  %v9955 = vadd.f32 %v8560, %v9954
  %9956 = vmatmul.bf16.gmra.mxu0 %v8353
  %v9957 = vpop.f32.mrf.mxu0
  %v9958 = vadd.f32 %v8560, %v9957
  %v9959 = vpop.f32.mrf.mxu0
  %v9960 = vadd.f32 %v8560, %v9959
  %9961 = vmatmul.bf16.gmra.mxu0 %v8357
  %v9962 = vpop.f32.mrf.mxu0
  %v9963 = vadd.f32 %v8560, %v9962
  %v9964 = vpop.f32.mrf.mxu0
  %v9965 = vadd.f32 %v8560, %v9964
  %9966 = vmatmul.bf16.gmra.mxu0 %v8361
  %v9967 = vpop.f32.mrf.mxu0
  %v9968 = vadd.f32 %v8560, %v9967
  %v9969 = vpop.f32.mrf.mxu0
  %v9970 = vadd.f32 %v8560, %v9969
  %9971 = vmatmul.bf16.gmra.mxu0 %v8365
  %v9972 = vpop.f32.mrf.mxu0
  %v9973 = vadd.f32 %v8560, %v9972
  %v9974 = vpop.f32.mrf.mxu0
  %v9975 = vadd.f32 %v8560, %v9974
  %9976 = vmatmul.bf16.gmra.mxu0 %v8369
  %v9977 = vpop.f32.mrf.mxu0
  %v9978 = vadd.f32 %v8560, %v9977
  %v9979 = vpop.f32.mrf.mxu0
  %v9980 = vadd.f32 %v8560, %v9979
  %9981 = vmatmul.bf16.gmra.mxu0 %v8373
  %v9982 = vpop.f32.mrf.mxu0
  %v9983 = vadd.f32 %v8560, %v9982
  %v9984 = vpop.f32.mrf.mxu0
  %v9985 = vadd.f32 %v8560, %v9984
  %9986 = vmatmul.bf16.gmra.mxu0 %v8377
  %v9987 = vpop.f32.mrf.mxu0
  %v9988 = vadd.f32 %v8560, %v9987
  %v9989 = vpop.f32.mrf.mxu0
  %v9990 = vadd.f32 %v8560, %v9989
  %9991 = vmatmul.bf16.gmra.mxu0 %v8381
  %v9992 = vpop.f32.mrf.mxu0
  %v9993 = vadd.f32 %v8560, %v9992
  %v9994 = vpop.f32.mrf.mxu0
  %v9995 = vadd.f32 %v8560, %v9994
  %9996 = vmatmul.bf16.gmra.mxu0 %v8385
  %v9997 = vpop.f32.mrf.mxu0
  %v9998 = vadd.f32 %v8560, %v9997
  %v9999 = vpop.f32.mrf.mxu0
  %v10000 = vadd.f32 %v8560, %v9999
  %10001 = vmatmul.bf16.gmra.mxu0 %v8389
  %v10002 = vpop.f32.mrf.mxu0
  %v10003 = vadd.f32 %v8560, %v10002
  %v10004 = vpop.f32.mrf.mxu0
  %v10005 = vadd.f32 %v8560, %v10004
  %10006 = vmatmul.bf16.gmra.mxu0 %v8393
  %v10007 = vpop.f32.mrf.mxu0
  %v10008 = vadd.f32 %v8560, %v10007
  %v10009 = vpop.f32.mrf.mxu0
  %v10010 = vadd.f32 %v8560, %v10009
  %10011 = vmatmul.bf16.gmra.mxu0 %v8397
  %v10012 = vpop.f32.mrf.mxu0
  %v10013 = vadd.f32 %v8560, %v10012
  %v10014 = vpop.f32.mrf.mxu0
  %v10015 = vadd.f32 %v8560, %v10014
  %10016 = vmatmul.bf16.gmra.mxu0 %v8401
  %v10017 = vpop.f32.mrf.mxu0
  %v10018 = vadd.f32 %v8560, %v10017
  %v10019 = vpop.f32.mrf.mxu0
  %v10020 = vadd.f32 %v8560, %v10019
  %10021 = vmatmul.bf16.gmra.mxu0 %v8405
  %v10022 = vpop.f32.mrf.mxu0
  %v10023 = vadd.f32 %v8560, %v10022
  %v10024 = vpop.f32.mrf.mxu0
  %v10025 = vadd.f32 %v8560, %v10024
  %10026 = vmatmul.bf16.gmra.mxu0 %v8409
  %v10027 = vpop.f32.mrf.mxu0
  %v10028 = vadd.f32 %v8560, %v10027
  %v10029 = vpop.f32.mrf.mxu0
  %v10030 = vadd.f32 %v8560, %v10029
  %10031 = vmatmul.bf16.gmra.mxu0 %v8413
  %v10032 = vpop.f32.mrf.mxu0
  %v10033 = vadd.f32 %v8560, %v10032
  %v10034 = vpop.f32.mrf.mxu0
  %v10035 = vadd.f32 %v8560, %v10034
  %10036 = vmatmul.bf16.gmra.mxu0 %v8417
  %v10037 = vpop.f32.mrf.mxu0
  %v10038 = vadd.f32 %v8560, %v10037
  %v10039 = vpop.f32.mrf.mxu0
  %v10040 = vadd.f32 %v8560, %v10039
  %10041 = vmatmul.bf16.gmra.mxu0 %v8421
  %v10042 = vpop.f32.mrf.mxu0
  %v10043 = vadd.f32 %v8560, %v10042
  %v10044 = vpop.f32.mrf.mxu0
  %v10045 = vadd.f32 %v8560, %v10044
  %10046 = vmatmul.bf16.gmra.mxu0 %v8425
  %v10047 = vpop.f32.mrf.mxu0
  %v10048 = vadd.f32 %v8560, %v10047
  %v10049 = vpop.f32.mrf.mxu0
  %v10050 = vadd.f32 %v8560, %v10049
  %10051 = vdwg.mxu0
  %10052 = vmatpush.bf16.msra.mxu0 %v9012
  %10053 = vmatpush.bf16.msra.mxu0 %v9008
  %10054 = vmatpush.bf16.msra.mxu0 %v9004
  %10055 = vmatpush.bf16.msra.mxu0 %v9000
  %10056 = vmatpush.bf16.msra.mxu0 %v8996
  %10057 = vmatpush.bf16.msra.mxu0 %v8992
  %10058 = vmatpush.bf16.msra.mxu0 %v8988
  %10059 = vmatpush.bf16.msra.mxu0 %v8984
  %10060 = vmatmul.bf16.gmra.mxu0 %v8302
  %v10061 = vpop.f32.mrf.mxu0
  %v10062 = vadd.f32 %v9893, %v10061
  %v10063 = vpop.f32.mrf.mxu0
  %v10064 = vadd.f32 %v9895, %v10063
  %10065 = vmatmul.bf16.gmra.mxu0 %v8306
  %v10066 = vpop.f32.mrf.mxu0
  %v10067 = vadd.f32 %v9898, %v10066
  %v10068 = vpop.f32.mrf.mxu0
  %v10069 = vadd.f32 %v9900, %v10068
  %10070 = vmatmul.bf16.gmra.mxu0 %v8310
  %v10071 = vpop.f32.mrf.mxu0
  %v10072 = vadd.f32 %v9903, %v10071
  %v10073 = vpop.f32.mrf.mxu0
  %v10074 = vadd.f32 %v9905, %v10073
  %10075 = vmatmul.bf16.gmra.mxu0 %v8314
  %v10076 = vpop.f32.mrf.mxu0
  %v10077 = vadd.f32 %v9908, %v10076
  %v10078 = vpop.f32.mrf.mxu0
  %v10079 = vadd.f32 %v9910, %v10078
  %10080 = vmatmul.bf16.gmra.mxu0 %v8318
  %v10081 = vpop.f32.mrf.mxu0
  %v10082 = vadd.f32 %v9913, %v10081
  %v10083 = vpop.f32.mrf.mxu0
  %v10084 = vadd.f32 %v9915, %v10083
  %10085 = vmatmul.bf16.gmra.mxu0 %v8322
  %v10086 = vpop.f32.mrf.mxu0
  %v10087 = vadd.f32 %v9918, %v10086
  %v10088 = vpop.f32.mrf.mxu0
  %v10089 = vadd.f32 %v9920, %v10088
  %10090 = vmatmul.bf16.gmra.mxu0 %v8326
  %v10091 = vpop.f32.mrf.mxu0
  %v10092 = vadd.f32 %v9923, %v10091
  %v10093 = vpop.f32.mrf.mxu0
  %v10094 = vadd.f32 %v9925, %v10093
  %10095 = vmatmul.bf16.gmra.mxu0 %v8330
  %v10096 = vpop.f32.mrf.mxu0
  %v10097 = vadd.f32 %v9928, %v10096
  %v10098 = vpop.f32.mrf.mxu0
  %v10099 = vadd.f32 %v9930, %v10098
  %10100 = vmatmul.bf16.gmra.mxu0 %v8334
  %v10101 = vpop.f32.mrf.mxu0
  %v10102 = vadd.f32 %v9933, %v10101
  %v10103 = vpop.f32.mrf.mxu0
  %v10104 = vadd.f32 %v9935, %v10103
  %10105 = vmatmul.bf16.gmra.mxu0 %v8338
  %v10106 = vpop.f32.mrf.mxu0
  %v10107 = vadd.f32 %v9938, %v10106
  %v10108 = vpop.f32.mrf.mxu0
  %v10109 = vadd.f32 %v9940, %v10108
  %10110 = vmatmul.bf16.gmra.mxu0 %v8342
  %v10111 = vpop.f32.mrf.mxu0
  %v10112 = vadd.f32 %v9943, %v10111
  %v10113 = vpop.f32.mrf.mxu0
  %v10114 = vadd.f32 %v9945, %v10113
  %10115 = vmatmul.bf16.gmra.mxu0 %v8346
  %v10116 = vpop.f32.mrf.mxu0
  %v10117 = vadd.f32 %v9948, %v10116
  %v10118 = vpop.f32.mrf.mxu0
  %v10119 = vadd.f32 %v9950, %v10118
  %10120 = vmatmul.bf16.gmra.mxu0 %v8350
  %v10121 = vpop.f32.mrf.mxu0
  %v10122 = vadd.f32 %v9953, %v10121
  %v10123 = vpop.f32.mrf.mxu0
  %v10124 = vadd.f32 %v9955, %v10123
  %10125 = vmatmul.bf16.gmra.mxu0 %v8354
  %v10126 = vpop.f32.mrf.mxu0
  %v10127 = vadd.f32 %v9958, %v10126
  %v10128 = vpop.f32.mrf.mxu0
  %v10129 = vadd.f32 %v9960, %v10128
  %10130 = vmatmul.bf16.gmra.mxu0 %v8358
  %v10131 = vpop.f32.mrf.mxu0
  %v10132 = vadd.f32 %v9963, %v10131
  %v10133 = vpop.f32.mrf.mxu0
  %v10134 = vadd.f32 %v9965, %v10133
  %10135 = vmatmul.bf16.gmra.mxu0 %v8362
  %v10136 = vpop.f32.mrf.mxu0
  %v10137 = vadd.f32 %v9968, %v10136
  %v10138 = vpop.f32.mrf.mxu0
  %v10139 = vadd.f32 %v9970, %v10138
  %10140 = vmatmul.bf16.gmra.mxu0 %v8366
  %v10141 = vpop.f32.mrf.mxu0
  %v10142 = vadd.f32 %v9973, %v10141
  %v10143 = vpop.f32.mrf.mxu0
  %v10144 = vadd.f32 %v9975, %v10143
  %10145 = vmatmul.bf16.gmra.mxu0 %v8370
  %v10146 = vpop.f32.mrf.mxu0
  %v10147 = vadd.f32 %v9978, %v10146
  %v10148 = vpop.f32.mrf.mxu0
  %v10149 = vadd.f32 %v9980, %v10148
  %10150 = vmatmul.bf16.gmra.mxu0 %v8374
  %v10151 = vpop.f32.mrf.mxu0
  %v10152 = vadd.f32 %v9983, %v10151
  %v10153 = vpop.f32.mrf.mxu0
  %v10154 = vadd.f32 %v9985, %v10153
  %10155 = vmatmul.bf16.gmra.mxu0 %v8378
  %v10156 = vpop.f32.mrf.mxu0
  %v10157 = vadd.f32 %v9988, %v10156
  %v10158 = vpop.f32.mrf.mxu0
  %v10159 = vadd.f32 %v9990, %v10158
  %10160 = vmatmul.bf16.gmra.mxu0 %v8382
  %v10161 = vpop.f32.mrf.mxu0
  %v10162 = vadd.f32 %v9993, %v10161
  %v10163 = vpop.f32.mrf.mxu0
  %v10164 = vadd.f32 %v9995, %v10163
  %10165 = vmatmul.bf16.gmra.mxu0 %v8386
  %v10166 = vpop.f32.mrf.mxu0
  %v10167 = vadd.f32 %v9998, %v10166
  %v10168 = vpop.f32.mrf.mxu0
  %v10169 = vadd.f32 %v10000, %v10168
  %10170 = vmatmul.bf16.gmra.mxu0 %v8390
  %v10171 = vpop.f32.mrf.mxu0
  %v10172 = vadd.f32 %v10003, %v10171
  %v10173 = vpop.f32.mrf.mxu0
  %v10174 = vadd.f32 %v10005, %v10173
  %10175 = vmatmul.bf16.gmra.mxu0 %v8394
  %v10176 = vpop.f32.mrf.mxu0
  %v10177 = vadd.f32 %v10008, %v10176
  %v10178 = vpop.f32.mrf.mxu0
  %v10179 = vadd.f32 %v10010, %v10178
  %10180 = vmatmul.bf16.gmra.mxu0 %v8398
  %v10181 = vpop.f32.mrf.mxu0
  %v10182 = vadd.f32 %v10013, %v10181
  %v10183 = vpop.f32.mrf.mxu0
  %v10184 = vadd.f32 %v10015, %v10183
  %10185 = vmatmul.bf16.gmra.mxu0 %v8402
  %v10186 = vpop.f32.mrf.mxu0
  %v10187 = vadd.f32 %v10018, %v10186
  %v10188 = vpop.f32.mrf.mxu0
  %v10189 = vadd.f32 %v10020, %v10188
  %10190 = vmatmul.bf16.gmra.mxu0 %v8406
  %v10191 = vpop.f32.mrf.mxu0
  %v10192 = vadd.f32 %v10023, %v10191
  %v10193 = vpop.f32.mrf.mxu0
  %v10194 = vadd.f32 %v10025, %v10193
  %10195 = vmatmul.bf16.gmra.mxu0 %v8410
  %v10196 = vpop.f32.mrf.mxu0
  %v10197 = vadd.f32 %v10028, %v10196
  %v10198 = vpop.f32.mrf.mxu0
  %v10199 = vadd.f32 %v10030, %v10198
  %10200 = vmatmul.bf16.gmra.mxu0 %v8414
  %v10201 = vpop.f32.mrf.mxu0
  %v10202 = vadd.f32 %v10033, %v10201
  %v10203 = vpop.f32.mrf.mxu0
  %v10204 = vadd.f32 %v10035, %v10203
  %10205 = vmatmul.bf16.gmra.mxu0 %v8418
  %v10206 = vpop.f32.mrf.mxu0
  %v10207 = vadd.f32 %v10038, %v10206
  %v10208 = vpop.f32.mrf.mxu0
  %v10209 = vadd.f32 %v10040, %v10208
  %10210 = vmatmul.bf16.gmra.mxu0 %v8422
  %v10211 = vpop.f32.mrf.mxu0
  %v10212 = vadd.f32 %v10043, %v10211
  %v10213 = vpop.f32.mrf.mxu0
  %v10214 = vadd.f32 %v10045, %v10213
  %10215 = vmatmul.bf16.gmra.mxu0 %v8426
  %v10216 = vpop.f32.mrf.mxu0
  %v10217 = vadd.f32 %v10048, %v10216
  %v10218 = vpop.f32.mrf.mxu0
  %v10219 = vadd.f32 %v10050, %v10218
  %10220 = vdwg.mxu0
  %10221 = vmatpush.bf16.msra.mxu0 %v9044
  %10222 = vmatpush.bf16.msra.mxu0 %v9040
  %10223 = vmatpush.bf16.msra.mxu0 %v9036
  %10224 = vmatpush.bf16.msra.mxu0 %v9032
  %10225 = vmatpush.bf16.msra.mxu0 %v9028
  %10226 = vmatpush.bf16.msra.mxu0 %v9024
  %10227 = vmatpush.bf16.msra.mxu0 %v9020
  %10228 = vmatpush.bf16.msra.mxu0 %v9016
  %10229 = vmatmul.bf16.gmra.mxu0 %v8303
  %v10230 = vpop.f32.mrf.mxu0
  %v10231 = vadd.f32 %v10062, %v10230
  %v10232 = vpop.f32.mrf.mxu0
  %v10233 = vadd.f32 %v10064, %v10232
  %10234 = vmatmul.bf16.gmra.mxu0 %v8307
  %v10235 = vpop.f32.mrf.mxu0
  %v10236 = vadd.f32 %v10067, %v10235
  %v10237 = vpop.f32.mrf.mxu0
  %v10238 = vadd.f32 %v10069, %v10237
  %10239 = vmatmul.bf16.gmra.mxu0 %v8311
  %v10240 = vpop.f32.mrf.mxu0
  %v10241 = vadd.f32 %v10072, %v10240
  %v10242 = vpop.f32.mrf.mxu0
  %v10243 = vadd.f32 %v10074, %v10242
  %10244 = vmatmul.bf16.gmra.mxu0 %v8315
  %v10245 = vpop.f32.mrf.mxu0
  %v10246 = vadd.f32 %v10077, %v10245
  %v10247 = vpop.f32.mrf.mxu0
  %v10248 = vadd.f32 %v10079, %v10247
  %10249 = vmatmul.bf16.gmra.mxu0 %v8319
  %v10250 = vpop.f32.mrf.mxu0
  %v10251 = vadd.f32 %v10082, %v10250
  %v10252 = vpop.f32.mrf.mxu0
  %v10253 = vadd.f32 %v10084, %v10252
  %10254 = vmatmul.bf16.gmra.mxu0 %v8323
  %v10255 = vpop.f32.mrf.mxu0
  %v10256 = vadd.f32 %v10087, %v10255
  %v10257 = vpop.f32.mrf.mxu0
  %v10258 = vadd.f32 %v10089, %v10257
  %10259 = vmatmul.bf16.gmra.mxu0 %v8327
  %v10260 = vpop.f32.mrf.mxu0
  %v10261 = vadd.f32 %v10092, %v10260
  %v10262 = vpop.f32.mrf.mxu0
  %v10263 = vadd.f32 %v10094, %v10262
  %10264 = vmatmul.bf16.gmra.mxu0 %v8331
  %v10265 = vpop.f32.mrf.mxu0
  %v10266 = vadd.f32 %v10097, %v10265
  %v10267 = vpop.f32.mrf.mxu0
  %v10268 = vadd.f32 %v10099, %v10267
  %10269 = vmatmul.bf16.gmra.mxu0 %v8335
  %v10270 = vpop.f32.mrf.mxu0
  %v10271 = vadd.f32 %v10102, %v10270
  %v10272 = vpop.f32.mrf.mxu0
  %v10273 = vadd.f32 %v10104, %v10272
  %10274 = vmatmul.bf16.gmra.mxu0 %v8339
  %v10275 = vpop.f32.mrf.mxu0
  %v10276 = vadd.f32 %v10107, %v10275
  %v10277 = vpop.f32.mrf.mxu0
  %v10278 = vadd.f32 %v10109, %v10277
  %10279 = vmatmul.bf16.gmra.mxu0 %v8343
  %v10280 = vpop.f32.mrf.mxu0
  %v10281 = vadd.f32 %v10112, %v10280
  %v10282 = vpop.f32.mrf.mxu0
  %v10283 = vadd.f32 %v10114, %v10282
  %10284 = vmatmul.bf16.gmra.mxu0 %v8347
  %v10285 = vpop.f32.mrf.mxu0
  %v10286 = vadd.f32 %v10117, %v10285
  %v10287 = vpop.f32.mrf.mxu0
  %v10288 = vadd.f32 %v10119, %v10287
  %10289 = vmatmul.bf16.gmra.mxu0 %v8351
  %v10290 = vpop.f32.mrf.mxu0
  %v10291 = vadd.f32 %v10122, %v10290
  %v10292 = vpop.f32.mrf.mxu0
  %v10293 = vadd.f32 %v10124, %v10292
  %10294 = vmatmul.bf16.gmra.mxu0 %v8355
  %v10295 = vpop.f32.mrf.mxu0
  %v10296 = vadd.f32 %v10127, %v10295
  %v10297 = vpop.f32.mrf.mxu0
  %v10298 = vadd.f32 %v10129, %v10297
  %10299 = vmatmul.bf16.gmra.mxu0 %v8359
  %v10300 = vpop.f32.mrf.mxu0
  %v10301 = vadd.f32 %v10132, %v10300
  %v10302 = vpop.f32.mrf.mxu0
  %v10303 = vadd.f32 %v10134, %v10302
  %10304 = vmatmul.bf16.gmra.mxu0 %v8363
  %v10305 = vpop.f32.mrf.mxu0
  %v10306 = vadd.f32 %v10137, %v10305
  %v10307 = vpop.f32.mrf.mxu0
  %v10308 = vadd.f32 %v10139, %v10307
  %10309 = vmatmul.bf16.gmra.mxu0 %v8367
  %v10310 = vpop.f32.mrf.mxu0
  %v10311 = vadd.f32 %v10142, %v10310
  %v10312 = vpop.f32.mrf.mxu0
  %v10313 = vadd.f32 %v10144, %v10312
  %10314 = vmatmul.bf16.gmra.mxu0 %v8371
  %v10315 = vpop.f32.mrf.mxu0
  %v10316 = vadd.f32 %v10147, %v10315
  %v10317 = vpop.f32.mrf.mxu0
  %v10318 = vadd.f32 %v10149, %v10317
  %10319 = vmatmul.bf16.gmra.mxu0 %v8375
  %v10320 = vpop.f32.mrf.mxu0
  %v10321 = vadd.f32 %v10152, %v10320
  %v10322 = vpop.f32.mrf.mxu0
  %v10323 = vadd.f32 %v10154, %v10322
  %10324 = vmatmul.bf16.gmra.mxu0 %v8379
  %v10325 = vpop.f32.mrf.mxu0
  %v10326 = vadd.f32 %v10157, %v10325
  %v10327 = vpop.f32.mrf.mxu0
  %v10328 = vadd.f32 %v10159, %v10327
  %10329 = vmatmul.bf16.gmra.mxu0 %v8383
  %v10330 = vpop.f32.mrf.mxu0
  %v10331 = vadd.f32 %v10162, %v10330
  %v10332 = vpop.f32.mrf.mxu0
  %v10333 = vadd.f32 %v10164, %v10332
  %10334 = vmatmul.bf16.gmra.mxu0 %v8387
  %v10335 = vpop.f32.mrf.mxu0
  %v10336 = vadd.f32 %v10167, %v10335
  %v10337 = vpop.f32.mrf.mxu0
  %v10338 = vadd.f32 %v10169, %v10337
  %10339 = vmatmul.bf16.gmra.mxu0 %v8391
  %v10340 = vpop.f32.mrf.mxu0
  %v10341 = vadd.f32 %v10172, %v10340
  %v10342 = vpop.f32.mrf.mxu0
  %v10343 = vadd.f32 %v10174, %v10342
  %10344 = vmatmul.bf16.gmra.mxu0 %v8395
  %v10345 = vpop.f32.mrf.mxu0
  %v10346 = vadd.f32 %v10177, %v10345
  %v10347 = vpop.f32.mrf.mxu0
  %v10348 = vadd.f32 %v10179, %v10347
  %10349 = vmatmul.bf16.gmra.mxu0 %v8399
  %v10350 = vpop.f32.mrf.mxu0
  %v10351 = vadd.f32 %v10182, %v10350
  %v10352 = vpop.f32.mrf.mxu0
  %v10353 = vadd.f32 %v10184, %v10352
  %10354 = vmatmul.bf16.gmra.mxu0 %v8403
  %v10355 = vpop.f32.mrf.mxu0
  %v10356 = vadd.f32 %v10187, %v10355
  %v10357 = vpop.f32.mrf.mxu0
  %v10358 = vadd.f32 %v10189, %v10357
  %10359 = vmatmul.bf16.gmra.mxu0 %v8407
  %v10360 = vpop.f32.mrf.mxu0
  %v10361 = vadd.f32 %v10192, %v10360
  %v10362 = vpop.f32.mrf.mxu0
  %v10363 = vadd.f32 %v10194, %v10362
  %10364 = vmatmul.bf16.gmra.mxu0 %v8411
  %v10365 = vpop.f32.mrf.mxu0
  %v10366 = vadd.f32 %v10197, %v10365
  %v10367 = vpop.f32.mrf.mxu0
  %v10368 = vadd.f32 %v10199, %v10367
  %10369 = vmatmul.bf16.gmra.mxu0 %v8415
  %v10370 = vpop.f32.mrf.mxu0
  %v10371 = vadd.f32 %v10202, %v10370
  %v10372 = vpop.f32.mrf.mxu0
  %v10373 = vadd.f32 %v10204, %v10372
  %10374 = vmatmul.bf16.gmra.mxu0 %v8419
  %v10375 = vpop.f32.mrf.mxu0
  %v10376 = vadd.f32 %v10207, %v10375
  %v10377 = vpop.f32.mrf.mxu0
  %v10378 = vadd.f32 %v10209, %v10377
  %10379 = vmatmul.bf16.gmra.mxu0 %v8423
  %v10380 = vpop.f32.mrf.mxu0
  %v10381 = vadd.f32 %v10212, %v10380
  %v10382 = vpop.f32.mrf.mxu0
  %v10383 = vadd.f32 %v10214, %v10382
  %10384 = vmatmul.bf16.gmra.mxu0 %v8427
  %v10385 = vpop.f32.mrf.mxu0
  %v10386 = vadd.f32 %v10217, %v10385
  %v10387 = vpop.f32.mrf.mxu0
  %v10388 = vadd.f32 %v10219, %v10387
  %10389 = vdwg.mxu0
  %10390 = vmatpush.bf16.msra.mxu0 %v9076
  %10391 = vmatpush.bf16.msra.mxu0 %v9072
  %10392 = vmatpush.bf16.msra.mxu0 %v9068
  %10393 = vmatpush.bf16.msra.mxu0 %v9064
  %10394 = vmatpush.bf16.msra.mxu0 %v9060
  %10395 = vmatpush.bf16.msra.mxu0 %v9056
  %10396 = vmatpush.bf16.msra.mxu0 %v9052
  %10397 = vmatpush.bf16.msra.mxu0 %v9048
  %10398 = vmatmul.bf16.gmra.mxu0 %v8304
  %v10399 = vpop.f32.mrf.mxu0
  %v10400 = vadd.f32 %v10231, %v10399
  %v10401 = vpop.f32.mrf.mxu0
  %v10402 = vadd.f32 %v10233, %v10401
  %10403 = vmatmul.bf16.gmra.mxu0 %v8308
  %v10404 = vpop.f32.mrf.mxu0
  %v10405 = vadd.f32 %v10236, %v10404
  %v10406 = vpop.f32.mrf.mxu0
  %v10407 = vadd.f32 %v10238, %v10406
  %10408 = vmatmul.bf16.gmra.mxu0 %v8312
  %v10409 = vpop.f32.mrf.mxu0
  %v10410 = vadd.f32 %v10241, %v10409
  %v10411 = vpop.f32.mrf.mxu0
  %v10412 = vadd.f32 %v10243, %v10411
  %10413 = vmatmul.bf16.gmra.mxu0 %v8316
  %v10414 = vpop.f32.mrf.mxu0
  %v10415 = vadd.f32 %v10246, %v10414
  %v10416 = vpop.f32.mrf.mxu0
  %v10417 = vadd.f32 %v10248, %v10416
  %10418 = vmatmul.bf16.gmra.mxu0 %v8320
  %v10419 = vpop.f32.mrf.mxu0
  %v10420 = vadd.f32 %v10251, %v10419
  %v10421 = vpop.f32.mrf.mxu0
  %v10422 = vadd.f32 %v10253, %v10421
  %10423 = vmatmul.bf16.gmra.mxu0 %v8324
  %v10424 = vpop.f32.mrf.mxu0
  %v10425 = vadd.f32 %v10256, %v10424
  %v10426 = vpop.f32.mrf.mxu0
  %v10427 = vadd.f32 %v10258, %v10426
  %10428 = vmatmul.bf16.gmra.mxu0 %v8328
  %v10429 = vpop.f32.mrf.mxu0
  %v10430 = vadd.f32 %v10261, %v10429
  %v10431 = vpop.f32.mrf.mxu0
  %v10432 = vadd.f32 %v10263, %v10431
  %10433 = vmatmul.bf16.gmra.mxu0 %v8332
  %v10434 = vpop.f32.mrf.mxu0
  %v10435 = vadd.f32 %v10266, %v10434
  %v10436 = vpop.f32.mrf.mxu0
  %v10437 = vadd.f32 %v10268, %v10436
  %10438 = vmatmul.bf16.gmra.mxu0 %v8336
  %v10439 = vpop.f32.mrf.mxu0
  %v10440 = vadd.f32 %v10271, %v10439
  %v10441 = vpop.f32.mrf.mxu0
  %v10442 = vadd.f32 %v10273, %v10441
  %10443 = vmatmul.bf16.gmra.mxu0 %v8340
  %v10444 = vpop.f32.mrf.mxu0
  %v10445 = vadd.f32 %v10276, %v10444
  %v10446 = vpop.f32.mrf.mxu0
  %v10447 = vadd.f32 %v10278, %v10446
  %10448 = vmatmul.bf16.gmra.mxu0 %v8344
  %v10449 = vpop.f32.mrf.mxu0
  %v10450 = vadd.f32 %v10281, %v10449
  %v10451 = vpop.f32.mrf.mxu0
  %v10452 = vadd.f32 %v10283, %v10451
  %10453 = vmatmul.bf16.gmra.mxu0 %v8348
  %v10454 = vpop.f32.mrf.mxu0
  %v10455 = vadd.f32 %v10286, %v10454
  %v10456 = vpop.f32.mrf.mxu0
  %v10457 = vadd.f32 %v10288, %v10456
  %10458 = vmatmul.bf16.gmra.mxu0 %v8352
  %v10459 = vpop.f32.mrf.mxu0
  %v10460 = vadd.f32 %v10291, %v10459
  %v10461 = vpop.f32.mrf.mxu0
  %v10462 = vadd.f32 %v10293, %v10461
  %10463 = vmatmul.bf16.gmra.mxu0 %v8356
  %v10464 = vpop.f32.mrf.mxu0
  %v10465 = vadd.f32 %v10296, %v10464
  %v10466 = vpop.f32.mrf.mxu0
  %v10467 = vadd.f32 %v10298, %v10466
  %10468 = vmatmul.bf16.gmra.mxu0 %v8360
  %v10469 = vpop.f32.mrf.mxu0
  %v10470 = vadd.f32 %v10301, %v10469
  %v10471 = vpop.f32.mrf.mxu0
  %v10472 = vadd.f32 %v10303, %v10471
  %10473 = vmatmul.bf16.gmra.mxu0 %v8364
  %v10474 = vpop.f32.mrf.mxu0
  %v10475 = vadd.f32 %v10306, %v10474
  %v10476 = vpop.f32.mrf.mxu0
  %v10477 = vadd.f32 %v10308, %v10476
  %10478 = vmatmul.bf16.gmra.mxu0 %v8368
  %v10479 = vpop.f32.mrf.mxu0
  %v10480 = vadd.f32 %v10311, %v10479
  %v10481 = vpop.f32.mrf.mxu0
  %v10482 = vadd.f32 %v10313, %v10481
  %10483 = vmatmul.bf16.gmra.mxu0 %v8372
  %v10484 = vpop.f32.mrf.mxu0
  %v10485 = vadd.f32 %v10316, %v10484
  %v10486 = vpop.f32.mrf.mxu0
  %v10487 = vadd.f32 %v10318, %v10486
  %10488 = vmatmul.bf16.gmra.mxu0 %v8376
  %v10489 = vpop.f32.mrf.mxu0
  %v10490 = vadd.f32 %v10321, %v10489
  %v10491 = vpop.f32.mrf.mxu0
  %v10492 = vadd.f32 %v10323, %v10491
  %10493 = vmatmul.bf16.gmra.mxu0 %v8380
  %v10494 = vpop.f32.mrf.mxu0
  %v10495 = vadd.f32 %v10326, %v10494
  %v10496 = vpop.f32.mrf.mxu0
  %v10497 = vadd.f32 %v10328, %v10496
  %10498 = vmatmul.bf16.gmra.mxu0 %v8384
  %v10499 = vpop.f32.mrf.mxu0
  %v10500 = vadd.f32 %v10331, %v10499
  %v10501 = vpop.f32.mrf.mxu0
  %v10502 = vadd.f32 %v10333, %v10501
  %10503 = vmatmul.bf16.gmra.mxu0 %v8388
  %v10504 = vpop.f32.mrf.mxu0
  %v10505 = vadd.f32 %v10336, %v10504
  %v10506 = vpop.f32.mrf.mxu0
  %v10507 = vadd.f32 %v10338, %v10506
  %10508 = vmatmul.bf16.gmra.mxu0 %v8392
  %v10509 = vpop.f32.mrf.mxu0
  %v10510 = vadd.f32 %v10341, %v10509
  %v10511 = vpop.f32.mrf.mxu0
  %v10512 = vadd.f32 %v10343, %v10511
  %10513 = vmatmul.bf16.gmra.mxu0 %v8396
  %v10514 = vpop.f32.mrf.mxu0
  %v10515 = vadd.f32 %v10346, %v10514
  %v10516 = vpop.f32.mrf.mxu0
  %v10517 = vadd.f32 %v10348, %v10516
  %10518 = vmatmul.bf16.gmra.mxu0 %v8400
  %v10519 = vpop.f32.mrf.mxu0
  %v10520 = vadd.f32 %v10351, %v10519
  %v10521 = vpop.f32.mrf.mxu0
  %v10522 = vadd.f32 %v10353, %v10521
  %10523 = vmatmul.bf16.gmra.mxu0 %v8404
  %v10524 = vpop.f32.mrf.mxu0
  %v10525 = vadd.f32 %v10356, %v10524
  %v10526 = vpop.f32.mrf.mxu0
  %v10527 = vadd.f32 %v10358, %v10526
  %10528 = vmatmul.bf16.gmra.mxu0 %v8408
  %v10529 = vpop.f32.mrf.mxu0
  %v10530 = vadd.f32 %v10361, %v10529
  %v10531 = vpop.f32.mrf.mxu0
  %v10532 = vadd.f32 %v10363, %v10531
  %10533 = vmatmul.bf16.gmra.mxu0 %v8412
  %v10534 = vpop.f32.mrf.mxu0
  %v10535 = vadd.f32 %v10366, %v10534
  %v10536 = vpop.f32.mrf.mxu0
  %v10537 = vadd.f32 %v10368, %v10536
  %10538 = vmatmul.bf16.gmra.mxu0 %v8416
  %v10539 = vpop.f32.mrf.mxu0
  %v10540 = vadd.f32 %v10371, %v10539
  %v10541 = vpop.f32.mrf.mxu0
  %v10542 = vadd.f32 %v10373, %v10541
  %10543 = vmatmul.bf16.gmra.mxu0 %v8420
  %v10544 = vpop.f32.mrf.mxu0
  %v10545 = vadd.f32 %v10376, %v10544
  %v10546 = vpop.f32.mrf.mxu0
  %v10547 = vadd.f32 %v10378, %v10546
  %10548 = vmatmul.bf16.gmra.mxu0 %v8424
  %v10549 = vpop.f32.mrf.mxu0
  %v10550 = vadd.f32 %v10381, %v10549
  %v10551 = vpop.f32.mrf.mxu0
  %v10552 = vadd.f32 %v10383, %v10551
  %10553 = vmatmul.bf16.gmra.mxu0 %v8428
  %v10554 = vpop.f32.mrf.mxu0
  %v10555 = vadd.f32 %v10386, %v10554
  %v10556 = vpop.f32.mrf.mxu0
  %v10557 = vadd.f32 %v10388, %v10556
  %10558 = vdwg.mxu0
  %10559 = vmatpush.bf16.msra.mxu0 %v8981
  %10560 = vmatpush.bf16.msra.mxu0 %v8977
  %10561 = vmatpush.bf16.msra.mxu0 %v8973
  %10562 = vmatpush.bf16.msra.mxu0 %v8969
  %10563 = vmatpush.bf16.msra.mxu0 %v8965
  %10564 = vmatpush.bf16.msra.mxu0 %v8961
  %10565 = vmatpush.bf16.msra.mxu0 %v8957
  %10566 = vmatpush.bf16.msra.mxu0 %v8953
  %10567 = vmatmul.bf16.gmra.mxu0 %v8301
  %v10568 = vpop.f32.mrf.mxu0
  %v10569 = vadd.f32 %v8561, %v10568
  %v10570 = vpop.f32.mrf.mxu0
  %v10571 = vadd.f32 %v8561, %v10570
  %10572 = vmatmul.bf16.gmra.mxu0 %v8305
  %v10573 = vpop.f32.mrf.mxu0
  %v10574 = vadd.f32 %v8561, %v10573
  %v10575 = vpop.f32.mrf.mxu0
  %v10576 = vadd.f32 %v8561, %v10575
  %10577 = vmatmul.bf16.gmra.mxu0 %v8309
  %v10578 = vpop.f32.mrf.mxu0
  %v10579 = vadd.f32 %v8561, %v10578
  %v10580 = vpop.f32.mrf.mxu0
  %v10581 = vadd.f32 %v8561, %v10580
  %10582 = vmatmul.bf16.gmra.mxu0 %v8313
  %v10583 = vpop.f32.mrf.mxu0
  %v10584 = vadd.f32 %v8561, %v10583
  %v10585 = vpop.f32.mrf.mxu0
  %v10586 = vadd.f32 %v8561, %v10585
  %10587 = vmatmul.bf16.gmra.mxu0 %v8317
  %v10588 = vpop.f32.mrf.mxu0
  %v10589 = vadd.f32 %v8561, %v10588
  %v10590 = vpop.f32.mrf.mxu0
  %v10591 = vadd.f32 %v8561, %v10590
  %10592 = vmatmul.bf16.gmra.mxu0 %v8321
  %v10593 = vpop.f32.mrf.mxu0
  %v10594 = vadd.f32 %v8561, %v10593
  %v10595 = vpop.f32.mrf.mxu0
  %v10596 = vadd.f32 %v8561, %v10595
  %10597 = vmatmul.bf16.gmra.mxu0 %v8325
  %v10598 = vpop.f32.mrf.mxu0
  %v10599 = vadd.f32 %v8561, %v10598
  %v10600 = vpop.f32.mrf.mxu0
  %v10601 = vadd.f32 %v8561, %v10600
  %10602 = vmatmul.bf16.gmra.mxu0 %v8329
  %v10603 = vpop.f32.mrf.mxu0
  %v10604 = vadd.f32 %v8561, %v10603
  %v10605 = vpop.f32.mrf.mxu0
  %v10606 = vadd.f32 %v8561, %v10605
  %10607 = vmatmul.bf16.gmra.mxu0 %v8333
  %v10608 = vpop.f32.mrf.mxu0
  %v10609 = vadd.f32 %v8561, %v10608
  %v10610 = vpop.f32.mrf.mxu0
  %v10611 = vadd.f32 %v8561, %v10610
  %10612 = vmatmul.bf16.gmra.mxu0 %v8337
  %v10613 = vpop.f32.mrf.mxu0
  %v10614 = vadd.f32 %v8561, %v10613
  %v10615 = vpop.f32.mrf.mxu0
  %v10616 = vadd.f32 %v8561, %v10615
  %10617 = vmatmul.bf16.gmra.mxu0 %v8341
  %v10618 = vpop.f32.mrf.mxu0
  %v10619 = vadd.f32 %v8561, %v10618
  %v10620 = vpop.f32.mrf.mxu0
  %v10621 = vadd.f32 %v8561, %v10620
  %10622 = vmatmul.bf16.gmra.mxu0 %v8345
  %v10623 = vpop.f32.mrf.mxu0
  %v10624 = vadd.f32 %v8561, %v10623
  %v10625 = vpop.f32.mrf.mxu0
  %v10626 = vadd.f32 %v8561, %v10625
  %10627 = vmatmul.bf16.gmra.mxu0 %v8349
  %v10628 = vpop.f32.mrf.mxu0
  %v10629 = vadd.f32 %v8561, %v10628
  %v10630 = vpop.f32.mrf.mxu0
  %v10631 = vadd.f32 %v8561, %v10630
  %10632 = vmatmul.bf16.gmra.mxu0 %v8353
  %v10633 = vpop.f32.mrf.mxu0
  %v10634 = vadd.f32 %v8561, %v10633
  %v10635 = vpop.f32.mrf.mxu0
  %v10636 = vadd.f32 %v8561, %v10635
  %10637 = vmatmul.bf16.gmra.mxu0 %v8357
  %v10638 = vpop.f32.mrf.mxu0
  %v10639 = vadd.f32 %v8561, %v10638
  %v10640 = vpop.f32.mrf.mxu0
  %v10641 = vadd.f32 %v8561, %v10640
  %10642 = vmatmul.bf16.gmra.mxu0 %v8361
  %v10643 = vpop.f32.mrf.mxu0
  %v10644 = vadd.f32 %v8561, %v10643
  %v10645 = vpop.f32.mrf.mxu0
  %v10646 = vadd.f32 %v8561, %v10645
  %10647 = vmatmul.bf16.gmra.mxu0 %v8365
  %v10648 = vpop.f32.mrf.mxu0
  %v10649 = vadd.f32 %v8561, %v10648
  %v10650 = vpop.f32.mrf.mxu0
  %v10651 = vadd.f32 %v8561, %v10650
  %10652 = vmatmul.bf16.gmra.mxu0 %v8369
  %v10653 = vpop.f32.mrf.mxu0
  %v10654 = vadd.f32 %v8561, %v10653
  %v10655 = vpop.f32.mrf.mxu0
  %v10656 = vadd.f32 %v8561, %v10655
  %10657 = vmatmul.bf16.gmra.mxu0 %v8373
  %v10658 = vpop.f32.mrf.mxu0
  %v10659 = vadd.f32 %v8561, %v10658
  %v10660 = vpop.f32.mrf.mxu0
  %v10661 = vadd.f32 %v8561, %v10660
  %10662 = vmatmul.bf16.gmra.mxu0 %v8377
  %v10663 = vpop.f32.mrf.mxu0
  %v10664 = vadd.f32 %v8561, %v10663
  %v10665 = vpop.f32.mrf.mxu0
  %v10666 = vadd.f32 %v8561, %v10665
  %10667 = vmatmul.bf16.gmra.mxu0 %v8381
  %v10668 = vpop.f32.mrf.mxu0
  %v10669 = vadd.f32 %v8561, %v10668
  %v10670 = vpop.f32.mrf.mxu0
  %v10671 = vadd.f32 %v8561, %v10670
  %10672 = vmatmul.bf16.gmra.mxu0 %v8385
  %v10673 = vpop.f32.mrf.mxu0
  %v10674 = vadd.f32 %v8561, %v10673
  %v10675 = vpop.f32.mrf.mxu0
  %v10676 = vadd.f32 %v8561, %v10675
  %10677 = vmatmul.bf16.gmra.mxu0 %v8389
  %v10678 = vpop.f32.mrf.mxu0
  %v10679 = vadd.f32 %v8561, %v10678
  %v10680 = vpop.f32.mrf.mxu0
  %v10681 = vadd.f32 %v8561, %v10680
  %10682 = vmatmul.bf16.gmra.mxu0 %v8393
  %v10683 = vpop.f32.mrf.mxu0
  %v10684 = vadd.f32 %v8561, %v10683
  %v10685 = vpop.f32.mrf.mxu0
  %v10686 = vadd.f32 %v8561, %v10685
  %10687 = vmatmul.bf16.gmra.mxu0 %v8397
  %v10688 = vpop.f32.mrf.mxu0
  %v10689 = vadd.f32 %v8561, %v10688
  %v10690 = vpop.f32.mrf.mxu0
  %v10691 = vadd.f32 %v8561, %v10690
  %10692 = vmatmul.bf16.gmra.mxu0 %v8401
  %v10693 = vpop.f32.mrf.mxu0
  %v10694 = vadd.f32 %v8561, %v10693
  %v10695 = vpop.f32.mrf.mxu0
  %v10696 = vadd.f32 %v8561, %v10695
  %10697 = vmatmul.bf16.gmra.mxu0 %v8405
  %v10698 = vpop.f32.mrf.mxu0
  %v10699 = vadd.f32 %v8561, %v10698
  %v10700 = vpop.f32.mrf.mxu0
  %v10701 = vadd.f32 %v8561, %v10700
  %10702 = vmatmul.bf16.gmra.mxu0 %v8409
  %v10703 = vpop.f32.mrf.mxu0
  %v10704 = vadd.f32 %v8561, %v10703
  %v10705 = vpop.f32.mrf.mxu0
  %v10706 = vadd.f32 %v8561, %v10705
  %10707 = vmatmul.bf16.gmra.mxu0 %v8413
  %v10708 = vpop.f32.mrf.mxu0
  %v10709 = vadd.f32 %v8561, %v10708
  %v10710 = vpop.f32.mrf.mxu0
  %v10711 = vadd.f32 %v8561, %v10710
  %10712 = vmatmul.bf16.gmra.mxu0 %v8417
  %v10713 = vpop.f32.mrf.mxu0
  %v10714 = vadd.f32 %v8561, %v10713
  %v10715 = vpop.f32.mrf.mxu0
  %v10716 = vadd.f32 %v8561, %v10715
  %10717 = vmatmul.bf16.gmra.mxu0 %v8421
  %v10718 = vpop.f32.mrf.mxu0
  %v10719 = vadd.f32 %v8561, %v10718
  %v10720 = vpop.f32.mrf.mxu0
  %v10721 = vadd.f32 %v8561, %v10720
  %10722 = vmatmul.bf16.gmra.mxu0 %v8425
  %v10723 = vpop.f32.mrf.mxu0
  %v10724 = vadd.f32 %v8561, %v10723
  %v10725 = vpop.f32.mrf.mxu0
  %v10726 = vadd.f32 %v8561, %v10725
  %10727 = vdwg.mxu0
  %10728 = vmatpush.bf16.msra.mxu0 %v9013
  %10729 = vmatpush.bf16.msra.mxu0 %v9009
  %10730 = vmatpush.bf16.msra.mxu0 %v9005
  %10731 = vmatpush.bf16.msra.mxu0 %v9001
  %10732 = vmatpush.bf16.msra.mxu0 %v8997
  %10733 = vmatpush.bf16.msra.mxu0 %v8993
  %10734 = vmatpush.bf16.msra.mxu0 %v8989
  %10735 = vmatpush.bf16.msra.mxu0 %v8985
  %10736 = vmatmul.bf16.gmra.mxu0 %v8302
  %v10737 = vpop.f32.mrf.mxu0
  %v10738 = vadd.f32 %v10569, %v10737
  %v10739 = vpop.f32.mrf.mxu0
  %v10740 = vadd.f32 %v10571, %v10739
  %10741 = vmatmul.bf16.gmra.mxu0 %v8306
  %v10742 = vpop.f32.mrf.mxu0
  %v10743 = vadd.f32 %v10574, %v10742
  %v10744 = vpop.f32.mrf.mxu0
  %v10745 = vadd.f32 %v10576, %v10744
  %10746 = vmatmul.bf16.gmra.mxu0 %v8310
  %v10747 = vpop.f32.mrf.mxu0
  %v10748 = vadd.f32 %v10579, %v10747
  %v10749 = vpop.f32.mrf.mxu0
  %v10750 = vadd.f32 %v10581, %v10749
  %10751 = vmatmul.bf16.gmra.mxu0 %v8314
  %v10752 = vpop.f32.mrf.mxu0
  %v10753 = vadd.f32 %v10584, %v10752
  %v10754 = vpop.f32.mrf.mxu0
  %v10755 = vadd.f32 %v10586, %v10754
  %10756 = vmatmul.bf16.gmra.mxu0 %v8318
  %v10757 = vpop.f32.mrf.mxu0
  %v10758 = vadd.f32 %v10589, %v10757
  %v10759 = vpop.f32.mrf.mxu0
  %v10760 = vadd.f32 %v10591, %v10759
  %10761 = vmatmul.bf16.gmra.mxu0 %v8322
  %v10762 = vpop.f32.mrf.mxu0
  %v10763 = vadd.f32 %v10594, %v10762
  %v10764 = vpop.f32.mrf.mxu0
  %v10765 = vadd.f32 %v10596, %v10764
  %10766 = vmatmul.bf16.gmra.mxu0 %v8326
  %v10767 = vpop.f32.mrf.mxu0
  %v10768 = vadd.f32 %v10599, %v10767
  %v10769 = vpop.f32.mrf.mxu0
  %v10770 = vadd.f32 %v10601, %v10769
  %10771 = vmatmul.bf16.gmra.mxu0 %v8330
  %v10772 = vpop.f32.mrf.mxu0
  %v10773 = vadd.f32 %v10604, %v10772
  %v10774 = vpop.f32.mrf.mxu0
  %v10775 = vadd.f32 %v10606, %v10774
  %10776 = vmatmul.bf16.gmra.mxu0 %v8334
  %v10777 = vpop.f32.mrf.mxu0
  %v10778 = vadd.f32 %v10609, %v10777
  %v10779 = vpop.f32.mrf.mxu0
  %v10780 = vadd.f32 %v10611, %v10779
  %10781 = vmatmul.bf16.gmra.mxu0 %v8338
  %v10782 = vpop.f32.mrf.mxu0
  %v10783 = vadd.f32 %v10614, %v10782
  %v10784 = vpop.f32.mrf.mxu0
  %v10785 = vadd.f32 %v10616, %v10784
  %10786 = vmatmul.bf16.gmra.mxu0 %v8342
  %v10787 = vpop.f32.mrf.mxu0
  %v10788 = vadd.f32 %v10619, %v10787
  %v10789 = vpop.f32.mrf.mxu0
  %v10790 = vadd.f32 %v10621, %v10789
  %10791 = vmatmul.bf16.gmra.mxu0 %v8346
  %v10792 = vpop.f32.mrf.mxu0
  %v10793 = vadd.f32 %v10624, %v10792
  %v10794 = vpop.f32.mrf.mxu0
  %v10795 = vadd.f32 %v10626, %v10794
  %10796 = vmatmul.bf16.gmra.mxu0 %v8350
  %v10797 = vpop.f32.mrf.mxu0
  %v10798 = vadd.f32 %v10629, %v10797
  %v10799 = vpop.f32.mrf.mxu0
  %v10800 = vadd.f32 %v10631, %v10799
  %10801 = vmatmul.bf16.gmra.mxu0 %v8354
  %v10802 = vpop.f32.mrf.mxu0
  %v10803 = vadd.f32 %v10634, %v10802
  %v10804 = vpop.f32.mrf.mxu0
  %v10805 = vadd.f32 %v10636, %v10804
  %10806 = vmatmul.bf16.gmra.mxu0 %v8358
  %v10807 = vpop.f32.mrf.mxu0
  %v10808 = vadd.f32 %v10639, %v10807
  %v10809 = vpop.f32.mrf.mxu0
  %v10810 = vadd.f32 %v10641, %v10809
  %10811 = vmatmul.bf16.gmra.mxu0 %v8362
  %v10812 = vpop.f32.mrf.mxu0
  %v10813 = vadd.f32 %v10644, %v10812
  %v10814 = vpop.f32.mrf.mxu0
  %v10815 = vadd.f32 %v10646, %v10814
  %10816 = vmatmul.bf16.gmra.mxu0 %v8366
  %v10817 = vpop.f32.mrf.mxu0
  %v10818 = vadd.f32 %v10649, %v10817
  %v10819 = vpop.f32.mrf.mxu0
  %v10820 = vadd.f32 %v10651, %v10819
  %10821 = vmatmul.bf16.gmra.mxu0 %v8370
  %v10822 = vpop.f32.mrf.mxu0
  %v10823 = vadd.f32 %v10654, %v10822
  %v10824 = vpop.f32.mrf.mxu0
  %v10825 = vadd.f32 %v10656, %v10824
  %10826 = vmatmul.bf16.gmra.mxu0 %v8374
  %v10827 = vpop.f32.mrf.mxu0
  %v10828 = vadd.f32 %v10659, %v10827
  %v10829 = vpop.f32.mrf.mxu0
  %v10830 = vadd.f32 %v10661, %v10829
  %10831 = vmatmul.bf16.gmra.mxu0 %v8378
  %v10832 = vpop.f32.mrf.mxu0
  %v10833 = vadd.f32 %v10664, %v10832
  %v10834 = vpop.f32.mrf.mxu0
  %v10835 = vadd.f32 %v10666, %v10834
  %10836 = vmatmul.bf16.gmra.mxu0 %v8382
  %v10837 = vpop.f32.mrf.mxu0
  %v10838 = vadd.f32 %v10669, %v10837
  %v10839 = vpop.f32.mrf.mxu0
  %v10840 = vadd.f32 %v10671, %v10839
  %10841 = vmatmul.bf16.gmra.mxu0 %v8386
  %v10842 = vpop.f32.mrf.mxu0
  %v10843 = vadd.f32 %v10674, %v10842
  %v10844 = vpop.f32.mrf.mxu0
  %v10845 = vadd.f32 %v10676, %v10844
  %10846 = vmatmul.bf16.gmra.mxu0 %v8390
  %v10847 = vpop.f32.mrf.mxu0
  %v10848 = vadd.f32 %v10679, %v10847
  %v10849 = vpop.f32.mrf.mxu0
  %v10850 = vadd.f32 %v10681, %v10849
  %10851 = vmatmul.bf16.gmra.mxu0 %v8394
  %v10852 = vpop.f32.mrf.mxu0
  %v10853 = vadd.f32 %v10684, %v10852
  %v10854 = vpop.f32.mrf.mxu0
  %v10855 = vadd.f32 %v10686, %v10854
  %10856 = vmatmul.bf16.gmra.mxu0 %v8398
  %v10857 = vpop.f32.mrf.mxu0
  %v10858 = vadd.f32 %v10689, %v10857
  %v10859 = vpop.f32.mrf.mxu0
  %v10860 = vadd.f32 %v10691, %v10859
  %10861 = vmatmul.bf16.gmra.mxu0 %v8402
  %v10862 = vpop.f32.mrf.mxu0
  %v10863 = vadd.f32 %v10694, %v10862
  %v10864 = vpop.f32.mrf.mxu0
  %v10865 = vadd.f32 %v10696, %v10864
  %10866 = vmatmul.bf16.gmra.mxu0 %v8406
  %v10867 = vpop.f32.mrf.mxu0
  %v10868 = vadd.f32 %v10699, %v10867
  %v10869 = vpop.f32.mrf.mxu0
  %v10870 = vadd.f32 %v10701, %v10869
  %10871 = vmatmul.bf16.gmra.mxu0 %v8410
  %v10872 = vpop.f32.mrf.mxu0
  %v10873 = vadd.f32 %v10704, %v10872
  %v10874 = vpop.f32.mrf.mxu0
  %v10875 = vadd.f32 %v10706, %v10874
  %10876 = vmatmul.bf16.gmra.mxu0 %v8414
  %v10877 = vpop.f32.mrf.mxu0
  %v10878 = vadd.f32 %v10709, %v10877
  %v10879 = vpop.f32.mrf.mxu0
  %v10880 = vadd.f32 %v10711, %v10879
  %10881 = vmatmul.bf16.gmra.mxu0 %v8418
  %v10882 = vpop.f32.mrf.mxu0
  %v10883 = vadd.f32 %v10714, %v10882
  %v10884 = vpop.f32.mrf.mxu0
  %v10885 = vadd.f32 %v10716, %v10884
  %10886 = vmatmul.bf16.gmra.mxu0 %v8422
  %v10887 = vpop.f32.mrf.mxu0
  %v10888 = vadd.f32 %v10719, %v10887
  %v10889 = vpop.f32.mrf.mxu0
  %v10890 = vadd.f32 %v10721, %v10889
  %10891 = vmatmul.bf16.gmra.mxu0 %v8426
  %v10892 = vpop.f32.mrf.mxu0
  %v10893 = vadd.f32 %v10724, %v10892
  %v10894 = vpop.f32.mrf.mxu0
  %v10895 = vadd.f32 %v10726, %v10894
  %10896 = vdwg.mxu0
  %10897 = vmatpush.bf16.msra.mxu0 %v9045
  %10898 = vmatpush.bf16.msra.mxu0 %v9041
  %10899 = vmatpush.bf16.msra.mxu0 %v9037
  %10900 = vmatpush.bf16.msra.mxu0 %v9033
  %10901 = vmatpush.bf16.msra.mxu0 %v9029
  %10902 = vmatpush.bf16.msra.mxu0 %v9025
  %10903 = vmatpush.bf16.msra.mxu0 %v9021
  %10904 = vmatpush.bf16.msra.mxu0 %v9017
  %10905 = vmatmul.bf16.gmra.mxu0 %v8303
  %v10906 = vpop.f32.mrf.mxu0
  %v10907 = vadd.f32 %v10738, %v10906
  %v10908 = vpop.f32.mrf.mxu0
  %v10909 = vadd.f32 %v10740, %v10908
  %10910 = vmatmul.bf16.gmra.mxu0 %v8307
  %v10911 = vpop.f32.mrf.mxu0
  %v10912 = vadd.f32 %v10743, %v10911
  %v10913 = vpop.f32.mrf.mxu0
  %v10914 = vadd.f32 %v10745, %v10913
  %10915 = vmatmul.bf16.gmra.mxu0 %v8311
  %v10916 = vpop.f32.mrf.mxu0
  %v10917 = vadd.f32 %v10748, %v10916
  %v10918 = vpop.f32.mrf.mxu0
  %v10919 = vadd.f32 %v10750, %v10918
  %10920 = vmatmul.bf16.gmra.mxu0 %v8315
  %v10921 = vpop.f32.mrf.mxu0
  %v10922 = vadd.f32 %v10753, %v10921
  %v10923 = vpop.f32.mrf.mxu0
  %v10924 = vadd.f32 %v10755, %v10923
  %10925 = vmatmul.bf16.gmra.mxu0 %v8319
  %v10926 = vpop.f32.mrf.mxu0
  %v10927 = vadd.f32 %v10758, %v10926
  %v10928 = vpop.f32.mrf.mxu0
  %v10929 = vadd.f32 %v10760, %v10928
  %10930 = vmatmul.bf16.gmra.mxu0 %v8323
  %v10931 = vpop.f32.mrf.mxu0
  %v10932 = vadd.f32 %v10763, %v10931
  %v10933 = vpop.f32.mrf.mxu0
  %v10934 = vadd.f32 %v10765, %v10933
  %10935 = vmatmul.bf16.gmra.mxu0 %v8327
  %v10936 = vpop.f32.mrf.mxu0
  %v10937 = vadd.f32 %v10768, %v10936
  %v10938 = vpop.f32.mrf.mxu0
  %v10939 = vadd.f32 %v10770, %v10938
  %10940 = vmatmul.bf16.gmra.mxu0 %v8331
  %v10941 = vpop.f32.mrf.mxu0
  %v10942 = vadd.f32 %v10773, %v10941
  %v10943 = vpop.f32.mrf.mxu0
  %v10944 = vadd.f32 %v10775, %v10943
  %10945 = vmatmul.bf16.gmra.mxu0 %v8335
  %v10946 = vpop.f32.mrf.mxu0
  %v10947 = vadd.f32 %v10778, %v10946
  %v10948 = vpop.f32.mrf.mxu0
  %v10949 = vadd.f32 %v10780, %v10948
  %10950 = vmatmul.bf16.gmra.mxu0 %v8339
  %v10951 = vpop.f32.mrf.mxu0
  %v10952 = vadd.f32 %v10783, %v10951
  %v10953 = vpop.f32.mrf.mxu0
  %v10954 = vadd.f32 %v10785, %v10953
  %10955 = vmatmul.bf16.gmra.mxu0 %v8343
  %v10956 = vpop.f32.mrf.mxu0
  %v10957 = vadd.f32 %v10788, %v10956
  %v10958 = vpop.f32.mrf.mxu0
  %v10959 = vadd.f32 %v10790, %v10958
  %10960 = vmatmul.bf16.gmra.mxu0 %v8347
  %v10961 = vpop.f32.mrf.mxu0
  %v10962 = vadd.f32 %v10793, %v10961
  %v10963 = vpop.f32.mrf.mxu0
  %v10964 = vadd.f32 %v10795, %v10963
  %10965 = vmatmul.bf16.gmra.mxu0 %v8351
  %v10966 = vpop.f32.mrf.mxu0
  %v10967 = vadd.f32 %v10798, %v10966
  %v10968 = vpop.f32.mrf.mxu0
  %v10969 = vadd.f32 %v10800, %v10968
  %10970 = vmatmul.bf16.gmra.mxu0 %v8355
  %v10971 = vpop.f32.mrf.mxu0
  %v10972 = vadd.f32 %v10803, %v10971
  %v10973 = vpop.f32.mrf.mxu0
  %v10974 = vadd.f32 %v10805, %v10973
  %10975 = vmatmul.bf16.gmra.mxu0 %v8359
  %v10976 = vpop.f32.mrf.mxu0
  %v10977 = vadd.f32 %v10808, %v10976
  %v10978 = vpop.f32.mrf.mxu0
  %v10979 = vadd.f32 %v10810, %v10978
  %10980 = vmatmul.bf16.gmra.mxu0 %v8363
  %v10981 = vpop.f32.mrf.mxu0
  %v10982 = vadd.f32 %v10813, %v10981
  %v10983 = vpop.f32.mrf.mxu0
  %v10984 = vadd.f32 %v10815, %v10983
  %10985 = vmatmul.bf16.gmra.mxu0 %v8367
  %v10986 = vpop.f32.mrf.mxu0
  %v10987 = vadd.f32 %v10818, %v10986
  %v10988 = vpop.f32.mrf.mxu0
  %v10989 = vadd.f32 %v10820, %v10988
  %10990 = vmatmul.bf16.gmra.mxu0 %v8371
  %v10991 = vpop.f32.mrf.mxu0
  %v10992 = vadd.f32 %v10823, %v10991
  %v10993 = vpop.f32.mrf.mxu0
  %v10994 = vadd.f32 %v10825, %v10993
  %10995 = vmatmul.bf16.gmra.mxu0 %v8375
  %v10996 = vpop.f32.mrf.mxu0
  %v10997 = vadd.f32 %v10828, %v10996
  %v10998 = vpop.f32.mrf.mxu0
  %v10999 = vadd.f32 %v10830, %v10998
  %11000 = vmatmul.bf16.gmra.mxu0 %v8379
  %v11001 = vpop.f32.mrf.mxu0
  %v11002 = vadd.f32 %v10833, %v11001
  %v11003 = vpop.f32.mrf.mxu0
  %v11004 = vadd.f32 %v10835, %v11003
  %11005 = vmatmul.bf16.gmra.mxu0 %v8383
  %v11006 = vpop.f32.mrf.mxu0
  %v11007 = vadd.f32 %v10838, %v11006
  %v11008 = vpop.f32.mrf.mxu0
  %v11009 = vadd.f32 %v10840, %v11008
  %11010 = vmatmul.bf16.gmra.mxu0 %v8387
  %v11011 = vpop.f32.mrf.mxu0
  %v11012 = vadd.f32 %v10843, %v11011
  %v11013 = vpop.f32.mrf.mxu0
  %v11014 = vadd.f32 %v10845, %v11013
  %11015 = vmatmul.bf16.gmra.mxu0 %v8391
  %v11016 = vpop.f32.mrf.mxu0
  %v11017 = vadd.f32 %v10848, %v11016
  %v11018 = vpop.f32.mrf.mxu0
  %v11019 = vadd.f32 %v10850, %v11018
  %11020 = vmatmul.bf16.gmra.mxu0 %v8395
  %v11021 = vpop.f32.mrf.mxu0
  %v11022 = vadd.f32 %v10853, %v11021
  %v11023 = vpop.f32.mrf.mxu0
  %v11024 = vadd.f32 %v10855, %v11023
  %11025 = vmatmul.bf16.gmra.mxu0 %v8399
  %v11026 = vpop.f32.mrf.mxu0
  %v11027 = vadd.f32 %v10858, %v11026
  %v11028 = vpop.f32.mrf.mxu0
  %v11029 = vadd.f32 %v10860, %v11028
  %11030 = vmatmul.bf16.gmra.mxu0 %v8403
  %v11031 = vpop.f32.mrf.mxu0
  %v11032 = vadd.f32 %v10863, %v11031
  %v11033 = vpop.f32.mrf.mxu0
  %v11034 = vadd.f32 %v10865, %v11033
  %11035 = vmatmul.bf16.gmra.mxu0 %v8407
  %v11036 = vpop.f32.mrf.mxu0
  %v11037 = vadd.f32 %v10868, %v11036
  %v11038 = vpop.f32.mrf.mxu0
  %v11039 = vadd.f32 %v10870, %v11038
  %11040 = vmatmul.bf16.gmra.mxu0 %v8411
  %v11041 = vpop.f32.mrf.mxu0
  %v11042 = vadd.f32 %v10873, %v11041
  %v11043 = vpop.f32.mrf.mxu0
  %v11044 = vadd.f32 %v10875, %v11043
  %11045 = vmatmul.bf16.gmra.mxu0 %v8415
  %v11046 = vpop.f32.mrf.mxu0
  %v11047 = vadd.f32 %v10878, %v11046
  %v11048 = vpop.f32.mrf.mxu0
  %v11049 = vadd.f32 %v10880, %v11048
  %11050 = vmatmul.bf16.gmra.mxu0 %v8419
  %v11051 = vpop.f32.mrf.mxu0
  %v11052 = vadd.f32 %v10883, %v11051
  %v11053 = vpop.f32.mrf.mxu0
  %v11054 = vadd.f32 %v10885, %v11053
  %11055 = vmatmul.bf16.gmra.mxu0 %v8423
  %v11056 = vpop.f32.mrf.mxu0
  %v11057 = vadd.f32 %v10888, %v11056
  %v11058 = vpop.f32.mrf.mxu0
  %v11059 = vadd.f32 %v10890, %v11058
  %11060 = vmatmul.bf16.gmra.mxu0 %v8427
  %v11061 = vpop.f32.mrf.mxu0
  %v11062 = vadd.f32 %v10893, %v11061
  %v11063 = vpop.f32.mrf.mxu0
  %v11064 = vadd.f32 %v10895, %v11063
  %11065 = vdwg.mxu0
  %11066 = vmatpush.bf16.msra.mxu0 %v9077
  %11067 = vmatpush.bf16.msra.mxu0 %v9073
  %11068 = vmatpush.bf16.msra.mxu0 %v9069
  %11069 = vmatpush.bf16.msra.mxu0 %v9065
  %11070 = vmatpush.bf16.msra.mxu0 %v9061
  %11071 = vmatpush.bf16.msra.mxu0 %v9057
  %11072 = vmatpush.bf16.msra.mxu0 %v9053
  %11073 = vmatpush.bf16.msra.mxu0 %v9049
  %11074 = vmatmul.bf16.gmra.mxu0 %v8304
  %v11075 = vpop.f32.mrf.mxu0
  %v11076 = vadd.f32 %v10907, %v11075
  %v11077 = vpop.f32.mrf.mxu0
  %v11078 = vadd.f32 %v10909, %v11077
  %11079 = vmatmul.bf16.gmra.mxu0 %v8308
  %v11080 = vpop.f32.mrf.mxu0
  %v11081 = vadd.f32 %v10912, %v11080
  %v11082 = vpop.f32.mrf.mxu0
  %v11083 = vadd.f32 %v10914, %v11082
  %11084 = vmatmul.bf16.gmra.mxu0 %v8312
  %v11085 = vpop.f32.mrf.mxu0
  %v11086 = vadd.f32 %v10917, %v11085
  %v11087 = vpop.f32.mrf.mxu0
  %v11088 = vadd.f32 %v10919, %v11087
  %11089 = vmatmul.bf16.gmra.mxu0 %v8316
  %v11090 = vpop.f32.mrf.mxu0
  %v11091 = vadd.f32 %v10922, %v11090
  %v11092 = vpop.f32.mrf.mxu0
  %v11093 = vadd.f32 %v10924, %v11092
  %11094 = vmatmul.bf16.gmra.mxu0 %v8320
  %v11095 = vpop.f32.mrf.mxu0
  %v11096 = vadd.f32 %v10927, %v11095
  %v11097 = vpop.f32.mrf.mxu0
  %v11098 = vadd.f32 %v10929, %v11097
  %11099 = vmatmul.bf16.gmra.mxu0 %v8324
  %v11100 = vpop.f32.mrf.mxu0
  %v11101 = vadd.f32 %v10932, %v11100
  %v11102 = vpop.f32.mrf.mxu0
  %v11103 = vadd.f32 %v10934, %v11102
  %11104 = vmatmul.bf16.gmra.mxu0 %v8328
  %v11105 = vpop.f32.mrf.mxu0
  %v11106 = vadd.f32 %v10937, %v11105
  %v11107 = vpop.f32.mrf.mxu0
  %v11108 = vadd.f32 %v10939, %v11107
  %11109 = vmatmul.bf16.gmra.mxu0 %v8332
  %v11110 = vpop.f32.mrf.mxu0
  %v11111 = vadd.f32 %v10942, %v11110
  %v11112 = vpop.f32.mrf.mxu0
  %v11113 = vadd.f32 %v10944, %v11112
  %11114 = vmatmul.bf16.gmra.mxu0 %v8336
  %v11115 = vpop.f32.mrf.mxu0
  %v11116 = vadd.f32 %v10947, %v11115
  %v11117 = vpop.f32.mrf.mxu0
  %v11118 = vadd.f32 %v10949, %v11117
  %11119 = vmatmul.bf16.gmra.mxu0 %v8340
  %v11120 = vpop.f32.mrf.mxu0
  %v11121 = vadd.f32 %v10952, %v11120
  %v11122 = vpop.f32.mrf.mxu0
  %v11123 = vadd.f32 %v10954, %v11122
  %11124 = vmatmul.bf16.gmra.mxu0 %v8344
  %v11125 = vpop.f32.mrf.mxu0
  %v11126 = vadd.f32 %v10957, %v11125
  %v11127 = vpop.f32.mrf.mxu0
  %v11128 = vadd.f32 %v10959, %v11127
  %11129 = vmatmul.bf16.gmra.mxu0 %v8348
  %v11130 = vpop.f32.mrf.mxu0
  %v11131 = vadd.f32 %v10962, %v11130
  %v11132 = vpop.f32.mrf.mxu0
  %v11133 = vadd.f32 %v10964, %v11132
  %11134 = vmatmul.bf16.gmra.mxu0 %v8352
  %v11135 = vpop.f32.mrf.mxu0
  %v11136 = vadd.f32 %v10967, %v11135
  %v11137 = vpop.f32.mrf.mxu0
  %v11138 = vadd.f32 %v10969, %v11137
  %11139 = vmatmul.bf16.gmra.mxu0 %v8356
  %v11140 = vpop.f32.mrf.mxu0
  %v11141 = vadd.f32 %v10972, %v11140
  %v11142 = vpop.f32.mrf.mxu0
  %v11143 = vadd.f32 %v10974, %v11142
  %11144 = vmatmul.bf16.gmra.mxu0 %v8360
  %v11145 = vpop.f32.mrf.mxu0
  %v11146 = vadd.f32 %v10977, %v11145
  %v11147 = vpop.f32.mrf.mxu0
  %v11148 = vadd.f32 %v10979, %v11147
  %11149 = vmatmul.bf16.gmra.mxu0 %v8364
  %v11150 = vpop.f32.mrf.mxu0
  %v11151 = vadd.f32 %v10982, %v11150
  %v11152 = vpop.f32.mrf.mxu0
  %v11153 = vadd.f32 %v10984, %v11152
  %11154 = vmatmul.bf16.gmra.mxu0 %v8368
  %v11155 = vpop.f32.mrf.mxu0
  %v11156 = vadd.f32 %v10987, %v11155
  %v11157 = vpop.f32.mrf.mxu0
  %v11158 = vadd.f32 %v10989, %v11157
  %11159 = vmatmul.bf16.gmra.mxu0 %v8372
  %v11160 = vpop.f32.mrf.mxu0
  %v11161 = vadd.f32 %v10992, %v11160
  %v11162 = vpop.f32.mrf.mxu0
  %v11163 = vadd.f32 %v10994, %v11162
  %11164 = vmatmul.bf16.gmra.mxu0 %v8376
  %v11165 = vpop.f32.mrf.mxu0
  %v11166 = vadd.f32 %v10997, %v11165
  %v11167 = vpop.f32.mrf.mxu0
  %v11168 = vadd.f32 %v10999, %v11167
  %11169 = vmatmul.bf16.gmra.mxu0 %v8380
  %v11170 = vpop.f32.mrf.mxu0
  %v11171 = vadd.f32 %v11002, %v11170
  %v11172 = vpop.f32.mrf.mxu0
  %v11173 = vadd.f32 %v11004, %v11172
  %11174 = vmatmul.bf16.gmra.mxu0 %v8384
  %v11175 = vpop.f32.mrf.mxu0
  %v11176 = vadd.f32 %v11007, %v11175
  %v11177 = vpop.f32.mrf.mxu0
  %v11178 = vadd.f32 %v11009, %v11177
  %11179 = vmatmul.bf16.gmra.mxu0 %v8388
  %v11180 = vpop.f32.mrf.mxu0
  %v11181 = vadd.f32 %v11012, %v11180
  %v11182 = vpop.f32.mrf.mxu0
  %v11183 = vadd.f32 %v11014, %v11182
  %11184 = vmatmul.bf16.gmra.mxu0 %v8392
  %v11185 = vpop.f32.mrf.mxu0
  %v11186 = vadd.f32 %v11017, %v11185
  %v11187 = vpop.f32.mrf.mxu0
  %v11188 = vadd.f32 %v11019, %v11187
  %11189 = vmatmul.bf16.gmra.mxu0 %v8396
  %v11190 = vpop.f32.mrf.mxu0
  %v11191 = vadd.f32 %v11022, %v11190
  %v11192 = vpop.f32.mrf.mxu0
  %v11193 = vadd.f32 %v11024, %v11192
  %11194 = vmatmul.bf16.gmra.mxu0 %v8400
  %v11195 = vpop.f32.mrf.mxu0
  %v11196 = vadd.f32 %v11027, %v11195
  %v11197 = vpop.f32.mrf.mxu0
  %v11198 = vadd.f32 %v11029, %v11197
  %11199 = vmatmul.bf16.gmra.mxu0 %v8404
  %v11200 = vpop.f32.mrf.mxu0
  %v11201 = vadd.f32 %v11032, %v11200
  %v11202 = vpop.f32.mrf.mxu0
  %v11203 = vadd.f32 %v11034, %v11202
  %11204 = vmatmul.bf16.gmra.mxu0 %v8408
  %v11205 = vpop.f32.mrf.mxu0
  %v11206 = vadd.f32 %v11037, %v11205
  %v11207 = vpop.f32.mrf.mxu0
  %v11208 = vadd.f32 %v11039, %v11207
  %11209 = vmatmul.bf16.gmra.mxu0 %v8412
  %v11210 = vpop.f32.mrf.mxu0
  %v11211 = vadd.f32 %v11042, %v11210
  %v11212 = vpop.f32.mrf.mxu0
  %v11213 = vadd.f32 %v11044, %v11212
  %11214 = vmatmul.bf16.gmra.mxu0 %v8416
  %v11215 = vpop.f32.mrf.mxu0
  %v11216 = vadd.f32 %v11047, %v11215
  %v11217 = vpop.f32.mrf.mxu0
  %v11218 = vadd.f32 %v11049, %v11217
  %11219 = vmatmul.bf16.gmra.mxu0 %v8420
  %v11220 = vpop.f32.mrf.mxu0
  %v11221 = vadd.f32 %v11052, %v11220
  %v11222 = vpop.f32.mrf.mxu0
  %v11223 = vadd.f32 %v11054, %v11222
  %11224 = vmatmul.bf16.gmra.mxu0 %v8424
  %v11225 = vpop.f32.mrf.mxu0
  %v11226 = vadd.f32 %v11057, %v11225
  %v11227 = vpop.f32.mrf.mxu0
  %v11228 = vadd.f32 %v11059, %v11227
  %11229 = vmatmul.bf16.gmra.mxu0 %v8428
  %v11230 = vpop.f32.mrf.mxu0
  %v11231 = vadd.f32 %v11062, %v11230
  %v11232 = vpop.f32.mrf.mxu0
  %v11233 = vadd.f32 %v11064, %v11232
  %11234 = vdwg.mxu0
  %11235 = vmatpush.bf16.msra.mxu0 %v8982
  %11236 = vmatpush.bf16.msra.mxu0 %v8978
  %11237 = vmatpush.bf16.msra.mxu0 %v8974
  %11238 = vmatpush.bf16.msra.mxu0 %v8970
  %11239 = vmatpush.bf16.msra.mxu0 %v8966
  %11240 = vmatpush.bf16.msra.mxu0 %v8962
  %11241 = vmatpush.bf16.msra.mxu0 %v8958
  %11242 = vmatpush.bf16.msra.mxu0 %v8954
  %11243 = vmatmul.bf16.gmra.mxu0 %v8301
  %v11244 = vpop.f32.mrf.mxu0
  %v11245 = vadd.f32 %v8562, %v11244
  %v11246 = vpop.f32.mrf.mxu0
  %v11247 = vadd.f32 %v8562, %v11246
  %11248 = vmatmul.bf16.gmra.mxu0 %v8305
  %v11249 = vpop.f32.mrf.mxu0
  %v11250 = vadd.f32 %v8562, %v11249
  %v11251 = vpop.f32.mrf.mxu0
  %v11252 = vadd.f32 %v8562, %v11251
  %11253 = vmatmul.bf16.gmra.mxu0 %v8309
  %v11254 = vpop.f32.mrf.mxu0
  %v11255 = vadd.f32 %v8562, %v11254
  %v11256 = vpop.f32.mrf.mxu0
  %v11257 = vadd.f32 %v8562, %v11256
  %11258 = vmatmul.bf16.gmra.mxu0 %v8313
  %v11259 = vpop.f32.mrf.mxu0
  %v11260 = vadd.f32 %v8562, %v11259
  %v11261 = vpop.f32.mrf.mxu0
  %v11262 = vadd.f32 %v8562, %v11261
  %11263 = vmatmul.bf16.gmra.mxu0 %v8317
  %v11264 = vpop.f32.mrf.mxu0
  %v11265 = vadd.f32 %v8562, %v11264
  %v11266 = vpop.f32.mrf.mxu0
  %v11267 = vadd.f32 %v8562, %v11266
  %11268 = vmatmul.bf16.gmra.mxu0 %v8321
  %v11269 = vpop.f32.mrf.mxu0
  %v11270 = vadd.f32 %v8562, %v11269
  %v11271 = vpop.f32.mrf.mxu0
  %v11272 = vadd.f32 %v8562, %v11271
  %11273 = vmatmul.bf16.gmra.mxu0 %v8325
  %v11274 = vpop.f32.mrf.mxu0
  %v11275 = vadd.f32 %v8562, %v11274
  %v11276 = vpop.f32.mrf.mxu0
  %v11277 = vadd.f32 %v8562, %v11276
  %11278 = vmatmul.bf16.gmra.mxu0 %v8329
  %v11279 = vpop.f32.mrf.mxu0
  %v11280 = vadd.f32 %v8562, %v11279
  %v11281 = vpop.f32.mrf.mxu0
  %v11282 = vadd.f32 %v8562, %v11281
  %11283 = vmatmul.bf16.gmra.mxu0 %v8333
  %v11284 = vpop.f32.mrf.mxu0
  %v11285 = vadd.f32 %v8562, %v11284
  %v11286 = vpop.f32.mrf.mxu0
  %v11287 = vadd.f32 %v8562, %v11286
  %11288 = vmatmul.bf16.gmra.mxu0 %v8337
  %v11289 = vpop.f32.mrf.mxu0
  %v11290 = vadd.f32 %v8562, %v11289
  %v11291 = vpop.f32.mrf.mxu0
  %v11292 = vadd.f32 %v8562, %v11291
  %11293 = vmatmul.bf16.gmra.mxu0 %v8341
  %v11294 = vpop.f32.mrf.mxu0
  %v11295 = vadd.f32 %v8562, %v11294
  %v11296 = vpop.f32.mrf.mxu0
  %v11297 = vadd.f32 %v8562, %v11296
  %11298 = vmatmul.bf16.gmra.mxu0 %v8345
  %v11299 = vpop.f32.mrf.mxu0
  %v11300 = vadd.f32 %v8562, %v11299
  %v11301 = vpop.f32.mrf.mxu0
  %v11302 = vadd.f32 %v8562, %v11301
  %11303 = vmatmul.bf16.gmra.mxu0 %v8349
  %v11304 = vpop.f32.mrf.mxu0
  %v11305 = vadd.f32 %v8562, %v11304
  %v11306 = vpop.f32.mrf.mxu0
  %v11307 = vadd.f32 %v8562, %v11306
  %11308 = vmatmul.bf16.gmra.mxu0 %v8353
  %v11309 = vpop.f32.mrf.mxu0
  %v11310 = vadd.f32 %v8562, %v11309
  %v11311 = vpop.f32.mrf.mxu0
  %v11312 = vadd.f32 %v8562, %v11311
  %11313 = vmatmul.bf16.gmra.mxu0 %v8357
  %v11314 = vpop.f32.mrf.mxu0
  %v11315 = vadd.f32 %v8562, %v11314
  %v11316 = vpop.f32.mrf.mxu0
  %v11317 = vadd.f32 %v8562, %v11316
  %11318 = vmatmul.bf16.gmra.mxu0 %v8361
  %v11319 = vpop.f32.mrf.mxu0
  %v11320 = vadd.f32 %v8562, %v11319
  %v11321 = vpop.f32.mrf.mxu0
  %v11322 = vadd.f32 %v8562, %v11321
  %11323 = vmatmul.bf16.gmra.mxu0 %v8365
  %v11324 = vpop.f32.mrf.mxu0
  %v11325 = vadd.f32 %v8562, %v11324
  %v11326 = vpop.f32.mrf.mxu0
  %v11327 = vadd.f32 %v8562, %v11326
  %11328 = vmatmul.bf16.gmra.mxu0 %v8369
  %v11329 = vpop.f32.mrf.mxu0
  %v11330 = vadd.f32 %v8562, %v11329
  %v11331 = vpop.f32.mrf.mxu0
  %v11332 = vadd.f32 %v8562, %v11331
  %11333 = vmatmul.bf16.gmra.mxu0 %v8373
  %v11334 = vpop.f32.mrf.mxu0
  %v11335 = vadd.f32 %v8562, %v11334
  %v11336 = vpop.f32.mrf.mxu0
  %v11337 = vadd.f32 %v8562, %v11336
  %11338 = vmatmul.bf16.gmra.mxu0 %v8377
  %v11339 = vpop.f32.mrf.mxu0
  %v11340 = vadd.f32 %v8562, %v11339
  %v11341 = vpop.f32.mrf.mxu0
  %v11342 = vadd.f32 %v8562, %v11341
  %11343 = vmatmul.bf16.gmra.mxu0 %v8381
  %v11344 = vpop.f32.mrf.mxu0
  %v11345 = vadd.f32 %v8562, %v11344
  %v11346 = vpop.f32.mrf.mxu0
  %v11347 = vadd.f32 %v8562, %v11346
  %11348 = vmatmul.bf16.gmra.mxu0 %v8385
  %v11349 = vpop.f32.mrf.mxu0
  %v11350 = vadd.f32 %v8562, %v11349
  %v11351 = vpop.f32.mrf.mxu0
  %v11352 = vadd.f32 %v8562, %v11351
  %11353 = vmatmul.bf16.gmra.mxu0 %v8389
  %v11354 = vpop.f32.mrf.mxu0
  %v11355 = vadd.f32 %v8562, %v11354
  %v11356 = vpop.f32.mrf.mxu0
  %v11357 = vadd.f32 %v8562, %v11356
  %11358 = vmatmul.bf16.gmra.mxu0 %v8393
  %v11359 = vpop.f32.mrf.mxu0
  %v11360 = vadd.f32 %v8562, %v11359
  %v11361 = vpop.f32.mrf.mxu0
  %v11362 = vadd.f32 %v8562, %v11361
  %11363 = vmatmul.bf16.gmra.mxu0 %v8397
  %v11364 = vpop.f32.mrf.mxu0
  %v11365 = vadd.f32 %v8562, %v11364
  %v11366 = vpop.f32.mrf.mxu0
  %v11367 = vadd.f32 %v8562, %v11366
  %11368 = vmatmul.bf16.gmra.mxu0 %v8401
  %v11369 = vpop.f32.mrf.mxu0
  %v11370 = vadd.f32 %v8562, %v11369
  %v11371 = vpop.f32.mrf.mxu0
  %v11372 = vadd.f32 %v8562, %v11371
  %11373 = vmatmul.bf16.gmra.mxu0 %v8405
  %v11374 = vpop.f32.mrf.mxu0
  %v11375 = vadd.f32 %v8562, %v11374
  %v11376 = vpop.f32.mrf.mxu0
  %v11377 = vadd.f32 %v8562, %v11376
  %11378 = vmatmul.bf16.gmra.mxu0 %v8409
  %v11379 = vpop.f32.mrf.mxu0
  %v11380 = vadd.f32 %v8562, %v11379
  %v11381 = vpop.f32.mrf.mxu0
  %v11382 = vadd.f32 %v8562, %v11381
  %11383 = vmatmul.bf16.gmra.mxu0 %v8413
  %v11384 = vpop.f32.mrf.mxu0
  %v11385 = vadd.f32 %v8562, %v11384
  %v11386 = vpop.f32.mrf.mxu0
  %v11387 = vadd.f32 %v8562, %v11386
  %11388 = vmatmul.bf16.gmra.mxu0 %v8417
  %v11389 = vpop.f32.mrf.mxu0
  %v11390 = vadd.f32 %v8562, %v11389
  %v11391 = vpop.f32.mrf.mxu0
  %v11392 = vadd.f32 %v8562, %v11391
  %11393 = vmatmul.bf16.gmra.mxu0 %v8421
  %v11394 = vpop.f32.mrf.mxu0
  %v11395 = vadd.f32 %v8562, %v11394
  %v11396 = vpop.f32.mrf.mxu0
  %v11397 = vadd.f32 %v8562, %v11396
  %11398 = vmatmul.bf16.gmra.mxu0 %v8425
  %v11399 = vpop.f32.mrf.mxu0
  %v11400 = vadd.f32 %v8562, %v11399
  %v11401 = vpop.f32.mrf.mxu0
  %v11402 = vadd.f32 %v8562, %v11401
  %11403 = vdwg.mxu0
  %11404 = vmatpush.bf16.msra.mxu0 %v9014
  %11405 = vmatpush.bf16.msra.mxu0 %v9010
  %11406 = vmatpush.bf16.msra.mxu0 %v9006
  %11407 = vmatpush.bf16.msra.mxu0 %v9002
  %11408 = vmatpush.bf16.msra.mxu0 %v8998
  %11409 = vmatpush.bf16.msra.mxu0 %v8994
  %11410 = vmatpush.bf16.msra.mxu0 %v8990
  %11411 = vmatpush.bf16.msra.mxu0 %v8986
  %11412 = vmatmul.bf16.gmra.mxu0 %v8302
  %v11413 = vpop.f32.mrf.mxu0
  %v11414 = vadd.f32 %v11245, %v11413
  %v11415 = vpop.f32.mrf.mxu0
  %v11416 = vadd.f32 %v11247, %v11415
  %11417 = vmatmul.bf16.gmra.mxu0 %v8306
  %v11418 = vpop.f32.mrf.mxu0
  %v11419 = vadd.f32 %v11250, %v11418
  %v11420 = vpop.f32.mrf.mxu0
  %v11421 = vadd.f32 %v11252, %v11420
  %11422 = vmatmul.bf16.gmra.mxu0 %v8310
  %v11423 = vpop.f32.mrf.mxu0
  %v11424 = vadd.f32 %v11255, %v11423
  %v11425 = vpop.f32.mrf.mxu0
  %v11426 = vadd.f32 %v11257, %v11425
  %11427 = vmatmul.bf16.gmra.mxu0 %v8314
  %v11428 = vpop.f32.mrf.mxu0
  %v11429 = vadd.f32 %v11260, %v11428
  %v11430 = vpop.f32.mrf.mxu0
  %v11431 = vadd.f32 %v11262, %v11430
  %11432 = vmatmul.bf16.gmra.mxu0 %v8318
  %v11433 = vpop.f32.mrf.mxu0
  %v11434 = vadd.f32 %v11265, %v11433
  %v11435 = vpop.f32.mrf.mxu0
  %v11436 = vadd.f32 %v11267, %v11435
  %11437 = vmatmul.bf16.gmra.mxu0 %v8322
  %v11438 = vpop.f32.mrf.mxu0
  %v11439 = vadd.f32 %v11270, %v11438
  %v11440 = vpop.f32.mrf.mxu0
  %v11441 = vadd.f32 %v11272, %v11440
  %11442 = vmatmul.bf16.gmra.mxu0 %v8326
  %v11443 = vpop.f32.mrf.mxu0
  %v11444 = vadd.f32 %v11275, %v11443
  %v11445 = vpop.f32.mrf.mxu0
  %v11446 = vadd.f32 %v11277, %v11445
  %11447 = vmatmul.bf16.gmra.mxu0 %v8330
  %v11448 = vpop.f32.mrf.mxu0
  %v11449 = vadd.f32 %v11280, %v11448
  %v11450 = vpop.f32.mrf.mxu0
  %v11451 = vadd.f32 %v11282, %v11450
  %11452 = vmatmul.bf16.gmra.mxu0 %v8334
  %v11453 = vpop.f32.mrf.mxu0
  %v11454 = vadd.f32 %v11285, %v11453
  %v11455 = vpop.f32.mrf.mxu0
  %v11456 = vadd.f32 %v11287, %v11455
  %11457 = vmatmul.bf16.gmra.mxu0 %v8338
  %v11458 = vpop.f32.mrf.mxu0
  %v11459 = vadd.f32 %v11290, %v11458
  %v11460 = vpop.f32.mrf.mxu0
  %v11461 = vadd.f32 %v11292, %v11460
  %11462 = vmatmul.bf16.gmra.mxu0 %v8342
  %v11463 = vpop.f32.mrf.mxu0
  %v11464 = vadd.f32 %v11295, %v11463
  %v11465 = vpop.f32.mrf.mxu0
  %v11466 = vadd.f32 %v11297, %v11465
  %11467 = vmatmul.bf16.gmra.mxu0 %v8346
  %v11468 = vpop.f32.mrf.mxu0
  %v11469 = vadd.f32 %v11300, %v11468
  %v11470 = vpop.f32.mrf.mxu0
  %v11471 = vadd.f32 %v11302, %v11470
  %11472 = vmatmul.bf16.gmra.mxu0 %v8350
  %v11473 = vpop.f32.mrf.mxu0
  %v11474 = vadd.f32 %v11305, %v11473
  %v11475 = vpop.f32.mrf.mxu0
  %v11476 = vadd.f32 %v11307, %v11475
  %11477 = vmatmul.bf16.gmra.mxu0 %v8354
  %v11478 = vpop.f32.mrf.mxu0
  %v11479 = vadd.f32 %v11310, %v11478
  %v11480 = vpop.f32.mrf.mxu0
  %v11481 = vadd.f32 %v11312, %v11480
  %11482 = vmatmul.bf16.gmra.mxu0 %v8358
  %v11483 = vpop.f32.mrf.mxu0
  %v11484 = vadd.f32 %v11315, %v11483
  %v11485 = vpop.f32.mrf.mxu0
  %v11486 = vadd.f32 %v11317, %v11485
  %11487 = vmatmul.bf16.gmra.mxu0 %v8362
  %v11488 = vpop.f32.mrf.mxu0
  %v11489 = vadd.f32 %v11320, %v11488
  %v11490 = vpop.f32.mrf.mxu0
  %v11491 = vadd.f32 %v11322, %v11490
  %11492 = vmatmul.bf16.gmra.mxu0 %v8366
  %v11493 = vpop.f32.mrf.mxu0
  %v11494 = vadd.f32 %v11325, %v11493
  %v11495 = vpop.f32.mrf.mxu0
  %v11496 = vadd.f32 %v11327, %v11495
  %11497 = vmatmul.bf16.gmra.mxu0 %v8370
  %v11498 = vpop.f32.mrf.mxu0
  %v11499 = vadd.f32 %v11330, %v11498
  %v11500 = vpop.f32.mrf.mxu0
  %v11501 = vadd.f32 %v11332, %v11500
  %11502 = vmatmul.bf16.gmra.mxu0 %v8374
  %v11503 = vpop.f32.mrf.mxu0
  %v11504 = vadd.f32 %v11335, %v11503
  %v11505 = vpop.f32.mrf.mxu0
  %v11506 = vadd.f32 %v11337, %v11505
  %11507 = vmatmul.bf16.gmra.mxu0 %v8378
  %v11508 = vpop.f32.mrf.mxu0
  %v11509 = vadd.f32 %v11340, %v11508
  %v11510 = vpop.f32.mrf.mxu0
  %v11511 = vadd.f32 %v11342, %v11510
  %11512 = vmatmul.bf16.gmra.mxu0 %v8382
  %v11513 = vpop.f32.mrf.mxu0
  %v11514 = vadd.f32 %v11345, %v11513
  %v11515 = vpop.f32.mrf.mxu0
  %v11516 = vadd.f32 %v11347, %v11515
  %11517 = vmatmul.bf16.gmra.mxu0 %v8386
  %v11518 = vpop.f32.mrf.mxu0
  %v11519 = vadd.f32 %v11350, %v11518
  %v11520 = vpop.f32.mrf.mxu0
  %v11521 = vadd.f32 %v11352, %v11520
  %11522 = vmatmul.bf16.gmra.mxu0 %v8390
  %v11523 = vpop.f32.mrf.mxu0
  %v11524 = vadd.f32 %v11355, %v11523
  %v11525 = vpop.f32.mrf.mxu0
  %v11526 = vadd.f32 %v11357, %v11525
  %11527 = vmatmul.bf16.gmra.mxu0 %v8394
  %v11528 = vpop.f32.mrf.mxu0
  %v11529 = vadd.f32 %v11360, %v11528
  %v11530 = vpop.f32.mrf.mxu0
  %v11531 = vadd.f32 %v11362, %v11530
  %11532 = vmatmul.bf16.gmra.mxu0 %v8398
  %v11533 = vpop.f32.mrf.mxu0
  %v11534 = vadd.f32 %v11365, %v11533
  %v11535 = vpop.f32.mrf.mxu0
  %v11536 = vadd.f32 %v11367, %v11535
  %11537 = vmatmul.bf16.gmra.mxu0 %v8402
  %v11538 = vpop.f32.mrf.mxu0
  %v11539 = vadd.f32 %v11370, %v11538
  %v11540 = vpop.f32.mrf.mxu0
  %v11541 = vadd.f32 %v11372, %v11540
  %11542 = vmatmul.bf16.gmra.mxu0 %v8406
  %v11543 = vpop.f32.mrf.mxu0
  %v11544 = vadd.f32 %v11375, %v11543
  %v11545 = vpop.f32.mrf.mxu0
  %v11546 = vadd.f32 %v11377, %v11545
  %11547 = vmatmul.bf16.gmra.mxu0 %v8410
  %v11548 = vpop.f32.mrf.mxu0
  %v11549 = vadd.f32 %v11380, %v11548
  %v11550 = vpop.f32.mrf.mxu0
  %v11551 = vadd.f32 %v11382, %v11550
  %11552 = vmatmul.bf16.gmra.mxu0 %v8414
  %v11553 = vpop.f32.mrf.mxu0
  %v11554 = vadd.f32 %v11385, %v11553
  %v11555 = vpop.f32.mrf.mxu0
  %v11556 = vadd.f32 %v11387, %v11555
  %11557 = vmatmul.bf16.gmra.mxu0 %v8418
  %v11558 = vpop.f32.mrf.mxu0
  %v11559 = vadd.f32 %v11390, %v11558
  %v11560 = vpop.f32.mrf.mxu0
  %v11561 = vadd.f32 %v11392, %v11560
  %11562 = vmatmul.bf16.gmra.mxu0 %v8422
  %v11563 = vpop.f32.mrf.mxu0
  %v11564 = vadd.f32 %v11395, %v11563
  %v11565 = vpop.f32.mrf.mxu0
  %v11566 = vadd.f32 %v11397, %v11565
  %11567 = vmatmul.bf16.gmra.mxu0 %v8426
  %v11568 = vpop.f32.mrf.mxu0
  %v11569 = vadd.f32 %v11400, %v11568
  %v11570 = vpop.f32.mrf.mxu0
  %v11571 = vadd.f32 %v11402, %v11570
  %11572 = vdwg.mxu0
  %11573 = vmatpush.bf16.msra.mxu0 %v9046
  %11574 = vmatpush.bf16.msra.mxu0 %v9042
  %11575 = vmatpush.bf16.msra.mxu0 %v9038
  %11576 = vmatpush.bf16.msra.mxu0 %v9034
  %11577 = vmatpush.bf16.msra.mxu0 %v9030
  %11578 = vmatpush.bf16.msra.mxu0 %v9026
  %11579 = vmatpush.bf16.msra.mxu0 %v9022
  %11580 = vmatpush.bf16.msra.mxu0 %v9018
  %11581 = vmatmul.bf16.gmra.mxu0 %v8303
  %v11582 = vpop.f32.mrf.mxu0
  %v11583 = vadd.f32 %v11414, %v11582
  %v11584 = vpop.f32.mrf.mxu0
  %v11585 = vadd.f32 %v11416, %v11584
  %11586 = vmatmul.bf16.gmra.mxu0 %v8307
  %v11587 = vpop.f32.mrf.mxu0
  %v11588 = vadd.f32 %v11419, %v11587
  %v11589 = vpop.f32.mrf.mxu0
  %v11590 = vadd.f32 %v11421, %v11589
  %11591 = vmatmul.bf16.gmra.mxu0 %v8311
  %v11592 = vpop.f32.mrf.mxu0
  %v11593 = vadd.f32 %v11424, %v11592
  %v11594 = vpop.f32.mrf.mxu0
  %v11595 = vadd.f32 %v11426, %v11594
  %11596 = vmatmul.bf16.gmra.mxu0 %v8315
  %v11597 = vpop.f32.mrf.mxu0
  %v11598 = vadd.f32 %v11429, %v11597
  %v11599 = vpop.f32.mrf.mxu0
  %v11600 = vadd.f32 %v11431, %v11599
  %11601 = vmatmul.bf16.gmra.mxu0 %v8319
  %v11602 = vpop.f32.mrf.mxu0
  %v11603 = vadd.f32 %v11434, %v11602
  %v11604 = vpop.f32.mrf.mxu0
  %v11605 = vadd.f32 %v11436, %v11604
  %11606 = vmatmul.bf16.gmra.mxu0 %v8323
  %v11607 = vpop.f32.mrf.mxu0
  %v11608 = vadd.f32 %v11439, %v11607
  %v11609 = vpop.f32.mrf.mxu0
  %v11610 = vadd.f32 %v11441, %v11609
  %11611 = vmatmul.bf16.gmra.mxu0 %v8327
  %v11612 = vpop.f32.mrf.mxu0
  %v11613 = vadd.f32 %v11444, %v11612
  %v11614 = vpop.f32.mrf.mxu0
  %v11615 = vadd.f32 %v11446, %v11614
  %11616 = vmatmul.bf16.gmra.mxu0 %v8331
  %v11617 = vpop.f32.mrf.mxu0
  %v11618 = vadd.f32 %v11449, %v11617
  %v11619 = vpop.f32.mrf.mxu0
  %v11620 = vadd.f32 %v11451, %v11619
  %11621 = vmatmul.bf16.gmra.mxu0 %v8335
  %v11622 = vpop.f32.mrf.mxu0
  %v11623 = vadd.f32 %v11454, %v11622
  %v11624 = vpop.f32.mrf.mxu0
  %v11625 = vadd.f32 %v11456, %v11624
  %11626 = vmatmul.bf16.gmra.mxu0 %v8339
  %v11627 = vpop.f32.mrf.mxu0
  %v11628 = vadd.f32 %v11459, %v11627
  %v11629 = vpop.f32.mrf.mxu0
  %v11630 = vadd.f32 %v11461, %v11629
  %11631 = vmatmul.bf16.gmra.mxu0 %v8343
  %v11632 = vpop.f32.mrf.mxu0
  %v11633 = vadd.f32 %v11464, %v11632
  %v11634 = vpop.f32.mrf.mxu0
  %v11635 = vadd.f32 %v11466, %v11634
  %11636 = vmatmul.bf16.gmra.mxu0 %v8347
  %v11637 = vpop.f32.mrf.mxu0
  %v11638 = vadd.f32 %v11469, %v11637
  %v11639 = vpop.f32.mrf.mxu0
  %v11640 = vadd.f32 %v11471, %v11639
  %11641 = vmatmul.bf16.gmra.mxu0 %v8351
  %v11642 = vpop.f32.mrf.mxu0
  %v11643 = vadd.f32 %v11474, %v11642
  %v11644 = vpop.f32.mrf.mxu0
  %v11645 = vadd.f32 %v11476, %v11644
  %11646 = vmatmul.bf16.gmra.mxu0 %v8355
  %v11647 = vpop.f32.mrf.mxu0
  %v11648 = vadd.f32 %v11479, %v11647
  %v11649 = vpop.f32.mrf.mxu0
  %v11650 = vadd.f32 %v11481, %v11649
  %11651 = vmatmul.bf16.gmra.mxu0 %v8359
  %v11652 = vpop.f32.mrf.mxu0
  %v11653 = vadd.f32 %v11484, %v11652
  %v11654 = vpop.f32.mrf.mxu0
  %v11655 = vadd.f32 %v11486, %v11654
  %11656 = vmatmul.bf16.gmra.mxu0 %v8363
  %v11657 = vpop.f32.mrf.mxu0
  %v11658 = vadd.f32 %v11489, %v11657
  %v11659 = vpop.f32.mrf.mxu0
  %v11660 = vadd.f32 %v11491, %v11659
  %11661 = vmatmul.bf16.gmra.mxu0 %v8367
  %v11662 = vpop.f32.mrf.mxu0
  %v11663 = vadd.f32 %v11494, %v11662
  %v11664 = vpop.f32.mrf.mxu0
  %v11665 = vadd.f32 %v11496, %v11664
  %11666 = vmatmul.bf16.gmra.mxu0 %v8371
  %v11667 = vpop.f32.mrf.mxu0
  %v11668 = vadd.f32 %v11499, %v11667
  %v11669 = vpop.f32.mrf.mxu0
  %v11670 = vadd.f32 %v11501, %v11669
  %11671 = vmatmul.bf16.gmra.mxu0 %v8375
  %v11672 = vpop.f32.mrf.mxu0
  %v11673 = vadd.f32 %v11504, %v11672
  %v11674 = vpop.f32.mrf.mxu0
  %v11675 = vadd.f32 %v11506, %v11674
  %11676 = vmatmul.bf16.gmra.mxu0 %v8379
  %v11677 = vpop.f32.mrf.mxu0
  %v11678 = vadd.f32 %v11509, %v11677
  %v11679 = vpop.f32.mrf.mxu0
  %v11680 = vadd.f32 %v11511, %v11679
  %11681 = vmatmul.bf16.gmra.mxu0 %v8383
  %v11682 = vpop.f32.mrf.mxu0
  %v11683 = vadd.f32 %v11514, %v11682
  %v11684 = vpop.f32.mrf.mxu0
  %v11685 = vadd.f32 %v11516, %v11684
  %11686 = vmatmul.bf16.gmra.mxu0 %v8387
  %v11687 = vpop.f32.mrf.mxu0
  %v11688 = vadd.f32 %v11519, %v11687
  %v11689 = vpop.f32.mrf.mxu0
  %v11690 = vadd.f32 %v11521, %v11689
  %11691 = vmatmul.bf16.gmra.mxu0 %v8391
  %v11692 = vpop.f32.mrf.mxu0
  %v11693 = vadd.f32 %v11524, %v11692
  %v11694 = vpop.f32.mrf.mxu0
  %v11695 = vadd.f32 %v11526, %v11694
  %11696 = vmatmul.bf16.gmra.mxu0 %v8395
  %v11697 = vpop.f32.mrf.mxu0
  %v11698 = vadd.f32 %v11529, %v11697
  %v11699 = vpop.f32.mrf.mxu0
  %v11700 = vadd.f32 %v11531, %v11699
  %11701 = vmatmul.bf16.gmra.mxu0 %v8399
  %v11702 = vpop.f32.mrf.mxu0
  %v11703 = vadd.f32 %v11534, %v11702
  %v11704 = vpop.f32.mrf.mxu0
  %v11705 = vadd.f32 %v11536, %v11704
  %11706 = vmatmul.bf16.gmra.mxu0 %v8403
  %v11707 = vpop.f32.mrf.mxu0
  %v11708 = vadd.f32 %v11539, %v11707
  %v11709 = vpop.f32.mrf.mxu0
  %v11710 = vadd.f32 %v11541, %v11709
  %11711 = vmatmul.bf16.gmra.mxu0 %v8407
  %v11712 = vpop.f32.mrf.mxu0
  %v11713 = vadd.f32 %v11544, %v11712
  %v11714 = vpop.f32.mrf.mxu0
  %v11715 = vadd.f32 %v11546, %v11714
  %11716 = vmatmul.bf16.gmra.mxu0 %v8411
  %v11717 = vpop.f32.mrf.mxu0
  %v11718 = vadd.f32 %v11549, %v11717
  %v11719 = vpop.f32.mrf.mxu0
  %v11720 = vadd.f32 %v11551, %v11719
  %11721 = vmatmul.bf16.gmra.mxu0 %v8415
  %v11722 = vpop.f32.mrf.mxu0
  %v11723 = vadd.f32 %v11554, %v11722
  %v11724 = vpop.f32.mrf.mxu0
  %v11725 = vadd.f32 %v11556, %v11724
  %11726 = vmatmul.bf16.gmra.mxu0 %v8419
  %v11727 = vpop.f32.mrf.mxu0
  %v11728 = vadd.f32 %v11559, %v11727
  %v11729 = vpop.f32.mrf.mxu0
  %v11730 = vadd.f32 %v11561, %v11729
  %11731 = vmatmul.bf16.gmra.mxu0 %v8423
  %v11732 = vpop.f32.mrf.mxu0
  %v11733 = vadd.f32 %v11564, %v11732
  %v11734 = vpop.f32.mrf.mxu0
  %v11735 = vadd.f32 %v11566, %v11734
  %11736 = vmatmul.bf16.gmra.mxu0 %v8427
  %v11737 = vpop.f32.mrf.mxu0
  %v11738 = vadd.f32 %v11569, %v11737
  %v11739 = vpop.f32.mrf.mxu0
  %v11740 = vadd.f32 %v11571, %v11739
  %11741 = vdwg.mxu0
  %11742 = vmatpush.bf16.msra.mxu0 %v9078
  %11743 = vmatpush.bf16.msra.mxu0 %v9074
  %11744 = vmatpush.bf16.msra.mxu0 %v9070
  %11745 = vmatpush.bf16.msra.mxu0 %v9066
  %11746 = vmatpush.bf16.msra.mxu0 %v9062
  %11747 = vmatpush.bf16.msra.mxu0 %v9058
  %11748 = vmatpush.bf16.msra.mxu0 %v9054
  %11749 = vmatpush.bf16.msra.mxu0 %v9050
  %11750 = vmatmul.bf16.gmra.mxu0 %v8304
  %v11751 = vpop.f32.mrf.mxu0
  %v11752 = vadd.f32 %v11583, %v11751
  %v11753 = vpop.f32.mrf.mxu0
  %v11754 = vadd.f32 %v11585, %v11753
  %11755 = vmatmul.bf16.gmra.mxu0 %v8308
  %v11756 = vpop.f32.mrf.mxu0
  %v11757 = vadd.f32 %v11588, %v11756
  %v11758 = vpop.f32.mrf.mxu0
  %v11759 = vadd.f32 %v11590, %v11758
  %11760 = vmatmul.bf16.gmra.mxu0 %v8312
  %v11761 = vpop.f32.mrf.mxu0
  %v11762 = vadd.f32 %v11593, %v11761
  %v11763 = vpop.f32.mrf.mxu0
  %v11764 = vadd.f32 %v11595, %v11763
  %11765 = vmatmul.bf16.gmra.mxu0 %v8316
  %v11766 = vpop.f32.mrf.mxu0
  %v11767 = vadd.f32 %v11598, %v11766
  %v11768 = vpop.f32.mrf.mxu0
  %v11769 = vadd.f32 %v11600, %v11768
  %11770 = vmatmul.bf16.gmra.mxu0 %v8320
  %v11771 = vpop.f32.mrf.mxu0
  %v11772 = vadd.f32 %v11603, %v11771
  %v11773 = vpop.f32.mrf.mxu0
  %v11774 = vadd.f32 %v11605, %v11773
  %11775 = vmatmul.bf16.gmra.mxu0 %v8324
  %v11776 = vpop.f32.mrf.mxu0
  %v11777 = vadd.f32 %v11608, %v11776
  %v11778 = vpop.f32.mrf.mxu0
  %v11779 = vadd.f32 %v11610, %v11778
  %11780 = vmatmul.bf16.gmra.mxu0 %v8328
  %v11781 = vpop.f32.mrf.mxu0
  %v11782 = vadd.f32 %v11613, %v11781
  %v11783 = vpop.f32.mrf.mxu0
  %v11784 = vadd.f32 %v11615, %v11783
  %11785 = vmatmul.bf16.gmra.mxu0 %v8332
  %v11786 = vpop.f32.mrf.mxu0
  %v11787 = vadd.f32 %v11618, %v11786
  %v11788 = vpop.f32.mrf.mxu0
  %v11789 = vadd.f32 %v11620, %v11788
  %11790 = vmatmul.bf16.gmra.mxu0 %v8336
  %v11791 = vpop.f32.mrf.mxu0
  %v11792 = vadd.f32 %v11623, %v11791
  %v11793 = vpop.f32.mrf.mxu0
  %v11794 = vadd.f32 %v11625, %v11793
  %11795 = vmatmul.bf16.gmra.mxu0 %v8340
  %v11796 = vpop.f32.mrf.mxu0
  %v11797 = vadd.f32 %v11628, %v11796
  %v11798 = vpop.f32.mrf.mxu0
  %v11799 = vadd.f32 %v11630, %v11798
  %11800 = vmatmul.bf16.gmra.mxu0 %v8344
  %v11801 = vpop.f32.mrf.mxu0
  %v11802 = vadd.f32 %v11633, %v11801
  %v11803 = vpop.f32.mrf.mxu0
  %v11804 = vadd.f32 %v11635, %v11803
  %11805 = vmatmul.bf16.gmra.mxu0 %v8348
  %v11806 = vpop.f32.mrf.mxu0
  %v11807 = vadd.f32 %v11638, %v11806
  %v11808 = vpop.f32.mrf.mxu0
  %v11809 = vadd.f32 %v11640, %v11808
  %11810 = vmatmul.bf16.gmra.mxu0 %v8352
  %v11811 = vpop.f32.mrf.mxu0
  %v11812 = vadd.f32 %v11643, %v11811
  %v11813 = vpop.f32.mrf.mxu0
  %v11814 = vadd.f32 %v11645, %v11813
  %11815 = vmatmul.bf16.gmra.mxu0 %v8356
  %v11816 = vpop.f32.mrf.mxu0
  %v11817 = vadd.f32 %v11648, %v11816
  %v11818 = vpop.f32.mrf.mxu0
  %v11819 = vadd.f32 %v11650, %v11818
  %11820 = vmatmul.bf16.gmra.mxu0 %v8360
  %v11821 = vpop.f32.mrf.mxu0
  %v11822 = vadd.f32 %v11653, %v11821
  %v11823 = vpop.f32.mrf.mxu0
  %v11824 = vadd.f32 %v11655, %v11823
  %11825 = vmatmul.bf16.gmra.mxu0 %v8364
  %v11826 = vpop.f32.mrf.mxu0
  %v11827 = vadd.f32 %v11658, %v11826
  %v11828 = vpop.f32.mrf.mxu0
  %v11829 = vadd.f32 %v11660, %v11828
  %11830 = vmatmul.bf16.gmra.mxu0 %v8368
  %v11831 = vpop.f32.mrf.mxu0
  %v11832 = vadd.f32 %v11663, %v11831
  %v11833 = vpop.f32.mrf.mxu0
  %v11834 = vadd.f32 %v11665, %v11833
  %11835 = vmatmul.bf16.gmra.mxu0 %v8372
  %v11836 = vpop.f32.mrf.mxu0
  %v11837 = vadd.f32 %v11668, %v11836
  %v11838 = vpop.f32.mrf.mxu0
  %v11839 = vadd.f32 %v11670, %v11838
  %11840 = vmatmul.bf16.gmra.mxu0 %v8376
  %v11841 = vpop.f32.mrf.mxu0
  %v11842 = vadd.f32 %v11673, %v11841
  %v11843 = vpop.f32.mrf.mxu0
  %v11844 = vadd.f32 %v11675, %v11843
  %11845 = vmatmul.bf16.gmra.mxu0 %v8380
  %v11846 = vpop.f32.mrf.mxu0
  %v11847 = vadd.f32 %v11678, %v11846
  %v11848 = vpop.f32.mrf.mxu0
  %v11849 = vadd.f32 %v11680, %v11848
  %11850 = vmatmul.bf16.gmra.mxu0 %v8384
  %v11851 = vpop.f32.mrf.mxu0
  %v11852 = vadd.f32 %v11683, %v11851
  %v11853 = vpop.f32.mrf.mxu0
  %v11854 = vadd.f32 %v11685, %v11853
  %11855 = vmatmul.bf16.gmra.mxu0 %v8388
  %v11856 = vpop.f32.mrf.mxu0
  %v11857 = vadd.f32 %v11688, %v11856
  %v11858 = vpop.f32.mrf.mxu0
  %v11859 = vadd.f32 %v11690, %v11858
  %11860 = vmatmul.bf16.gmra.mxu0 %v8392
  %v11861 = vpop.f32.mrf.mxu0
  %v11862 = vadd.f32 %v11693, %v11861
  %v11863 = vpop.f32.mrf.mxu0
  %v11864 = vadd.f32 %v11695, %v11863
  %11865 = vmatmul.bf16.gmra.mxu0 %v8396
  %v11866 = vpop.f32.mrf.mxu0
  %v11867 = vadd.f32 %v11698, %v11866
  %v11868 = vpop.f32.mrf.mxu0
  %v11869 = vadd.f32 %v11700, %v11868
  %11870 = vmatmul.bf16.gmra.mxu0 %v8400
  %v11871 = vpop.f32.mrf.mxu0
  %v11872 = vadd.f32 %v11703, %v11871
  %v11873 = vpop.f32.mrf.mxu0
  %v11874 = vadd.f32 %v11705, %v11873
  %11875 = vmatmul.bf16.gmra.mxu0 %v8404
  %v11876 = vpop.f32.mrf.mxu0
  %v11877 = vadd.f32 %v11708, %v11876
  %v11878 = vpop.f32.mrf.mxu0
  %v11879 = vadd.f32 %v11710, %v11878
  %11880 = vmatmul.bf16.gmra.mxu0 %v8408
  %v11881 = vpop.f32.mrf.mxu0
  %v11882 = vadd.f32 %v11713, %v11881
  %v11883 = vpop.f32.mrf.mxu0
  %v11884 = vadd.f32 %v11715, %v11883
  %11885 = vmatmul.bf16.gmra.mxu0 %v8412
  %v11886 = vpop.f32.mrf.mxu0
  %v11887 = vadd.f32 %v11718, %v11886
  %v11888 = vpop.f32.mrf.mxu0
  %v11889 = vadd.f32 %v11720, %v11888
  %11890 = vmatmul.bf16.gmra.mxu0 %v8416
  %v11891 = vpop.f32.mrf.mxu0
  %v11892 = vadd.f32 %v11723, %v11891
  %v11893 = vpop.f32.mrf.mxu0
  %v11894 = vadd.f32 %v11725, %v11893
  %11895 = vmatmul.bf16.gmra.mxu0 %v8420
  %v11896 = vpop.f32.mrf.mxu0
  %v11897 = vadd.f32 %v11728, %v11896
  %v11898 = vpop.f32.mrf.mxu0
  %v11899 = vadd.f32 %v11730, %v11898
  %11900 = vmatmul.bf16.gmra.mxu0 %v8424
  %v11901 = vpop.f32.mrf.mxu0
  %v11902 = vadd.f32 %v11733, %v11901
  %v11903 = vpop.f32.mrf.mxu0
  %v11904 = vadd.f32 %v11735, %v11903
  %11905 = vmatmul.bf16.gmra.mxu0 %v8428
  %v11906 = vpop.f32.mrf.mxu0
  %v11907 = vadd.f32 %v11738, %v11906
  %v11908 = vpop.f32.mrf.mxu0
  %v11909 = vadd.f32 %v11740, %v11908
  %11910 = vdwg.mxu0
  %11911 = vst [vmem:[%s9] sm:$0xff] %v9724
  %11912 = vst [vmem:[%s9 + $0x8] sm:$0xff] %v10400
  %11913 = vst [vmem:[%s9 + $0x10] sm:$0xff] %v11076
  %vm11914 = vcmask 785408
  %11915 = vst.msk [vmem:[%s9 + $0x18] sm:$0xff] %vm11914, %v11752
  %11916 = vst [vmem:[%s9 + $0x20] sm:$0xff] %v9726
  %11917 = vst [vmem:[%s9 + $0x28] sm:$0xff] %v10402
  %11918 = vst [vmem:[%s9 + $0x30] sm:$0xff] %v11078
  %11919 = vst.msk [vmem:[%s9 + $0x38] sm:$0xff] %vm11914, %v11754
  %11920 = vst [vmem:[%s9 + $0x40] sm:$0xff] %v9729
  %11921 = vst [vmem:[%s9 + $0x48] sm:$0xff] %v10405
  %11922 = vst [vmem:[%s9 + $0x50] sm:$0xff] %v11081
  %11923 = vst.msk [vmem:[%s9 + $0x58] sm:$0xff] %vm11914, %v11757
  %11924 = vst [vmem:[%s9 + $0x60] sm:$0xff] %v9731
  %11925 = vst [vmem:[%s9 + $0x68] sm:$0xff] %v10407
  %11926 = vst [vmem:[%s9 + $0x70] sm:$0xff] %v11083
  %11927 = vst.msk [vmem:[%s9 + $0x78] sm:$0xff] %vm11914, %v11759
  %11928 = vst [vmem:[%s9 + $0x80] sm:$0xff] %v9734
  %11929 = vst [vmem:[%s9 + $0x88] sm:$0xff] %v10410
  %11930 = vst [vmem:[%s9 + $0x90] sm:$0xff] %v11086
  %11931 = vst.msk [vmem:[%s9 + $0x98] sm:$0xff] %vm11914, %v11762
  %11932 = vst [vmem:[%s9 + $0xa0] sm:$0xff] %v9736
  %11933 = vst [vmem:[%s9 + $0xa8] sm:$0xff] %v10412
  %11934 = vst [vmem:[%s9 + $0xb0] sm:$0xff] %v11088
  %11935 = vst.msk [vmem:[%s9 + $0xb8] sm:$0xff] %vm11914, %v11764
  %11936 = vst [vmem:[%s9 + $0xc0] sm:$0xff] %v9739
  %11937 = vst [vmem:[%s9 + $0xc8] sm:$0xff] %v10415
  %11938 = vst [vmem:[%s9 + $0xd0] sm:$0xff] %v11091
  %11939 = vst.msk [vmem:[%s9 + $0xd8] sm:$0xff] %vm11914, %v11767
  %11940 = vst [vmem:[%s9 + $0xe0] sm:$0xff] %v9741
  %11941 = vst [vmem:[%s9 + $0xe8] sm:$0xff] %v10417
  %11942 = vst [vmem:[%s9 + $0xf0] sm:$0xff] %v11093
  %11943 = vst.msk [vmem:[%s9 + $0xf8] sm:$0xff] %vm11914, %v11769
  %11944 = vst [vmem:[%s9 + $0x100] sm:$0xff] %v9744
  %11945 = vst [vmem:[%s9 + $0x108] sm:$0xff] %v10420
  %11946 = vst [vmem:[%s9 + $0x110] sm:$0xff] %v11096
  %11947 = vst.msk [vmem:[%s9 + $0x118] sm:$0xff] %vm11914, %v11772
  %11948 = vst [vmem:[%s9 + $0x120] sm:$0xff] %v9746
  %11949 = vst [vmem:[%s9 + $0x128] sm:$0xff] %v10422
  %11950 = vst [vmem:[%s9 + $0x130] sm:$0xff] %v11098
  %11951 = vst.msk [vmem:[%s9 + $0x138] sm:$0xff] %vm11914, %v11774
  %11952 = vst [vmem:[%s9 + $0x140] sm:$0xff] %v9749
  %11953 = vst [vmem:[%s9 + $0x148] sm:$0xff] %v10425
  %11954 = vst [vmem:[%s9 + $0x150] sm:$0xff] %v11101
  %11955 = vst.msk [vmem:[%s9 + $0x158] sm:$0xff] %vm11914, %v11777
  %11956 = vst [vmem:[%s9 + $0x160] sm:$0xff] %v9751
  %11957 = vst [vmem:[%s9 + $0x168] sm:$0xff] %v10427
  %11958 = vst [vmem:[%s9 + $0x170] sm:$0xff] %v11103
  %11959 = vst.msk [vmem:[%s9 + $0x178] sm:$0xff] %vm11914, %v11779
  %11960 = vst [vmem:[%s9 + $0x180] sm:$0xff] %v9754
  %11961 = vst [vmem:[%s9 + $0x188] sm:$0xff] %v10430
  %11962 = vst [vmem:[%s9 + $0x190] sm:$0xff] %v11106
  %11963 = vst.msk [vmem:[%s9 + $0x198] sm:$0xff] %vm11914, %v11782
  %11964 = vst [vmem:[%s9 + $0x1a0] sm:$0xff] %v9756
  %11965 = vst [vmem:[%s9 + $0x1a8] sm:$0xff] %v10432
  %11966 = vst [vmem:[%s9 + $0x1b0] sm:$0xff] %v11108
  %11967 = vst.msk [vmem:[%s9 + $0x1b8] sm:$0xff] %vm11914, %v11784
  %11968 = vst [vmem:[%s9 + $0x1c0] sm:$0xff] %v9759
  %11969 = vst [vmem:[%s9 + $0x1c8] sm:$0xff] %v10435
  %11970 = vst [vmem:[%s9 + $0x1d0] sm:$0xff] %v11111
  %11971 = vst.msk [vmem:[%s9 + $0x1d8] sm:$0xff] %vm11914, %v11787
  %11972 = vst [vmem:[%s9 + $0x1e0] sm:$0xff] %v9761
  %11973 = vst [vmem:[%s9 + $0x1e8] sm:$0xff] %v10437
  %11974 = vst [vmem:[%s9 + $0x1f0] sm:$0xff] %v11113
  %11975 = vst.msk [vmem:[%s9 + $0x1f8] sm:$0xff] %vm11914, %v11789
  %11976 = vst [vmem:[%s9 + $0x200] sm:$0xff] %v9764
  %11977 = vst [vmem:[%s9 + $0x208] sm:$0xff] %v10440
  %11978 = vst [vmem:[%s9 + $0x210] sm:$0xff] %v11116
  %11979 = vst.msk [vmem:[%s9 + $0x218] sm:$0xff] %vm11914, %v11792
  %11980 = vst [vmem:[%s9 + $0x220] sm:$0xff] %v9766
  %11981 = vst [vmem:[%s9 + $0x228] sm:$0xff] %v10442
  %11982 = vst [vmem:[%s9 + $0x230] sm:$0xff] %v11118
  %11983 = vst.msk [vmem:[%s9 + $0x238] sm:$0xff] %vm11914, %v11794
  %11984 = vst [vmem:[%s9 + $0x240] sm:$0xff] %v9769
  %11985 = vst [vmem:[%s9 + $0x248] sm:$0xff] %v10445
  %11986 = vst [vmem:[%s9 + $0x250] sm:$0xff] %v11121
  %11987 = vst.msk [vmem:[%s9 + $0x258] sm:$0xff] %vm11914, %v11797
  %11988 = vst [vmem:[%s9 + $0x260] sm:$0xff] %v9771
  %11989 = vst [vmem:[%s9 + $0x268] sm:$0xff] %v10447
  %11990 = vst [vmem:[%s9 + $0x270] sm:$0xff] %v11123
  %11991 = vst.msk [vmem:[%s9 + $0x278] sm:$0xff] %vm11914, %v11799
  %11992 = vst [vmem:[%s9 + $0x280] sm:$0xff] %v9774
  %11993 = vst [vmem:[%s9 + $0x288] sm:$0xff] %v10450
  %11994 = vst [vmem:[%s9 + $0x290] sm:$0xff] %v11126
  %11995 = vst.msk [vmem:[%s9 + $0x298] sm:$0xff] %vm11914, %v11802
  %11996 = vst [vmem:[%s9 + $0x2a0] sm:$0xff] %v9776
  %11997 = vst [vmem:[%s9 + $0x2a8] sm:$0xff] %v10452
  %11998 = vst [vmem:[%s9 + $0x2b0] sm:$0xff] %v11128
  %11999 = vst.msk [vmem:[%s9 + $0x2b8] sm:$0xff] %vm11914, %v11804
  %12000 = vst [vmem:[%s9 + $0x2c0] sm:$0xff] %v9779
  %12001 = vst [vmem:[%s9 + $0x2c8] sm:$0xff] %v10455
  %12002 = vst [vmem:[%s9 + $0x2d0] sm:$0xff] %v11131
  %12003 = vst.msk [vmem:[%s9 + $0x2d8] sm:$0xff] %vm11914, %v11807
  %12004 = vst [vmem:[%s9 + $0x2e0] sm:$0xff] %v9781
  %12005 = vst [vmem:[%s9 + $0x2e8] sm:$0xff] %v10457
  %12006 = vst [vmem:[%s9 + $0x2f0] sm:$0xff] %v11133
  %12007 = vst.msk [vmem:[%s9 + $0x2f8] sm:$0xff] %vm11914, %v11809
  %12008 = vst [vmem:[%s9 + $0x300] sm:$0xff] %v9784
  %12009 = vst [vmem:[%s9 + $0x308] sm:$0xff] %v10460
  %12010 = vst [vmem:[%s9 + $0x310] sm:$0xff] %v11136
  %12011 = vst.msk [vmem:[%s9 + $0x318] sm:$0xff] %vm11914, %v11812
  %12012 = vst [vmem:[%s9 + $0x320] sm:$0xff] %v9786
  %12013 = vst [vmem:[%s9 + $0x328] sm:$0xff] %v10462
  %12014 = vst [vmem:[%s9 + $0x330] sm:$0xff] %v11138
  %12015 = vst.msk [vmem:[%s9 + $0x338] sm:$0xff] %vm11914, %v11814
  %12016 = vst [vmem:[%s9 + $0x340] sm:$0xff] %v9789
  %12017 = vst [vmem:[%s9 + $0x348] sm:$0xff] %v10465
  %12018 = vst [vmem:[%s9 + $0x350] sm:$0xff] %v11141
  %12019 = vst.msk [vmem:[%s9 + $0x358] sm:$0xff] %vm11914, %v11817
  %12020 = vst [vmem:[%s9 + $0x360] sm:$0xff] %v9791
  %12021 = vst [vmem:[%s9 + $0x368] sm:$0xff] %v10467
  %12022 = vst [vmem:[%s9 + $0x370] sm:$0xff] %v11143
  %12023 = vst.msk [vmem:[%s9 + $0x378] sm:$0xff] %vm11914, %v11819
  %12024 = vst [vmem:[%s9 + $0x380] sm:$0xff] %v9794
  %12025 = vst [vmem:[%s9 + $0x388] sm:$0xff] %v10470
  %12026 = vst [vmem:[%s9 + $0x390] sm:$0xff] %v11146
  %12027 = vst.msk [vmem:[%s9 + $0x398] sm:$0xff] %vm11914, %v11822
  %12028 = vst [vmem:[%s9 + $0x3a0] sm:$0xff] %v9796
  %12029 = vst [vmem:[%s9 + $0x3a8] sm:$0xff] %v10472
  %12030 = vst [vmem:[%s9 + $0x3b0] sm:$0xff] %v11148
  %12031 = vst.msk [vmem:[%s9 + $0x3b8] sm:$0xff] %vm11914, %v11824
  %12032 = vst [vmem:[%s9 + $0x3c0] sm:$0xff] %v9799
  %12033 = vst [vmem:[%s9 + $0x3c8] sm:$0xff] %v10475
  %12034 = vst [vmem:[%s9 + $0x3d0] sm:$0xff] %v11151
  %12035 = vst.msk [vmem:[%s9 + $0x3d8] sm:$0xff] %vm11914, %v11827
  %12036 = vst [vmem:[%s9 + $0x3e0] sm:$0xff] %v9801
  %12037 = vst [vmem:[%s9 + $0x3e8] sm:$0xff] %v10477
  %12038 = vst [vmem:[%s9 + $0x3f0] sm:$0xff] %v11153
  %12039 = vst.msk [vmem:[%s9 + $0x3f8] sm:$0xff] %vm11914, %v11829
  %12040 = vst [vmem:[%s9 + $0x400] sm:$0xff] %v9804
  %12041 = vst [vmem:[%s9 + $0x408] sm:$0xff] %v10480
  %12042 = vst [vmem:[%s9 + $0x410] sm:$0xff] %v11156
  %12043 = vst.msk [vmem:[%s9 + $0x418] sm:$0xff] %vm11914, %v11832
  %12044 = vst [vmem:[%s9 + $0x420] sm:$0xff] %v9806
  %12045 = vst [vmem:[%s9 + $0x428] sm:$0xff] %v10482
  %12046 = vst [vmem:[%s9 + $0x430] sm:$0xff] %v11158
  %12047 = vst.msk [vmem:[%s9 + $0x438] sm:$0xff] %vm11914, %v11834
  %12048 = vst [vmem:[%s9 + $0x440] sm:$0xff] %v9809
  %12049 = vst [vmem:[%s9 + $0x448] sm:$0xff] %v10485
  %12050 = vst [vmem:[%s9 + $0x450] sm:$0xff] %v11161
  %12051 = vst.msk [vmem:[%s9 + $0x458] sm:$0xff] %vm11914, %v11837
  %12052 = vst [vmem:[%s9 + $0x460] sm:$0xff] %v9811
  %12053 = vst [vmem:[%s9 + $0x468] sm:$0xff] %v10487
  %12054 = vst [vmem:[%s9 + $0x470] sm:$0xff] %v11163
  %12055 = vst.msk [vmem:[%s9 + $0x478] sm:$0xff] %vm11914, %v11839
  %12056 = vst [vmem:[%s9 + $0x480] sm:$0xff] %v9814
  %12057 = vst [vmem:[%s9 + $0x488] sm:$0xff] %v10490
  %12058 = vst [vmem:[%s9 + $0x490] sm:$0xff] %v11166
  %12059 = vst.msk [vmem:[%s9 + $0x498] sm:$0xff] %vm11914, %v11842
  %12060 = vst [vmem:[%s9 + $0x4a0] sm:$0xff] %v9816
  %12061 = vst [vmem:[%s9 + $0x4a8] sm:$0xff] %v10492
  %12062 = vst [vmem:[%s9 + $0x4b0] sm:$0xff] %v11168
  %12063 = vst.msk [vmem:[%s9 + $0x4b8] sm:$0xff] %vm11914, %v11844
  %12064 = vst [vmem:[%s9 + $0x4c0] sm:$0xff] %v9819
  %12065 = vst [vmem:[%s9 + $0x4c8] sm:$0xff] %v10495
  %12066 = vst [vmem:[%s9 + $0x4d0] sm:$0xff] %v11171
  %12067 = vst.msk [vmem:[%s9 + $0x4d8] sm:$0xff] %vm11914, %v11847
  %12068 = vst [vmem:[%s9 + $0x4e0] sm:$0xff] %v9821
  %12069 = vst [vmem:[%s9 + $0x4e8] sm:$0xff] %v10497
  %12070 = vst [vmem:[%s9 + $0x4f0] sm:$0xff] %v11173
  %12071 = vst.msk [vmem:[%s9 + $0x4f8] sm:$0xff] %vm11914, %v11849
  %12072 = vst [vmem:[%s9 + $0x500] sm:$0xff] %v9824
  %12073 = vst [vmem:[%s9 + $0x508] sm:$0xff] %v10500
  %12074 = vst [vmem:[%s9 + $0x510] sm:$0xff] %v11176
  %12075 = vst.msk [vmem:[%s9 + $0x518] sm:$0xff] %vm11914, %v11852
  %12076 = vst [vmem:[%s9 + $0x520] sm:$0xff] %v9826
  %12077 = vst [vmem:[%s9 + $0x528] sm:$0xff] %v10502
  %12078 = vst [vmem:[%s9 + $0x530] sm:$0xff] %v11178
  %12079 = vst.msk [vmem:[%s9 + $0x538] sm:$0xff] %vm11914, %v11854
  %12080 = vst [vmem:[%s9 + $0x540] sm:$0xff] %v9829
  %12081 = vst [vmem:[%s9 + $0x548] sm:$0xff] %v10505
  %12082 = vst [vmem:[%s9 + $0x550] sm:$0xff] %v11181
  %12083 = vst.msk [vmem:[%s9 + $0x558] sm:$0xff] %vm11914, %v11857
  %12084 = vst [vmem:[%s9 + $0x560] sm:$0xff] %v9831
  %12085 = vst [vmem:[%s9 + $0x568] sm:$0xff] %v10507
  %12086 = vst [vmem:[%s9 + $0x570] sm:$0xff] %v11183
  %12087 = vst.msk [vmem:[%s9 + $0x578] sm:$0xff] %vm11914, %v11859
  %12088 = vst [vmem:[%s9 + $0x580] sm:$0xff] %v9834
  %12089 = vst [vmem:[%s9 + $0x588] sm:$0xff] %v10510
  %12090 = vst [vmem:[%s9 + $0x590] sm:$0xff] %v11186
  %12091 = vst.msk [vmem:[%s9 + $0x598] sm:$0xff] %vm11914, %v11862
  %12092 = vst [vmem:[%s9 + $0x5a0] sm:$0xff] %v9836
  %12093 = vst [vmem:[%s9 + $0x5a8] sm:$0xff] %v10512
  %12094 = vst [vmem:[%s9 + $0x5b0] sm:$0xff] %v11188
  %12095 = vst.msk [vmem:[%s9 + $0x5b8] sm:$0xff] %vm11914, %v11864
  %12096 = vst [vmem:[%s9 + $0x5c0] sm:$0xff] %v9839
  %12097 = vst [vmem:[%s9 + $0x5c8] sm:$0xff] %v10515
  %12098 = vst [vmem:[%s9 + $0x5d0] sm:$0xff] %v11191
  %12099 = vst.msk [vmem:[%s9 + $0x5d8] sm:$0xff] %vm11914, %v11867
  %12100 = vst [vmem:[%s9 + $0x5e0] sm:$0xff] %v9841
  %12101 = vst [vmem:[%s9 + $0x5e8] sm:$0xff] %v10517
  %12102 = vst [vmem:[%s9 + $0x5f0] sm:$0xff] %v11193
  %12103 = vst.msk [vmem:[%s9 + $0x5f8] sm:$0xff] %vm11914, %v11869
  %12104 = vst [vmem:[%s9 + $0x600] sm:$0xff] %v9844
  %12105 = vst [vmem:[%s9 + $0x608] sm:$0xff] %v10520
  %12106 = vst [vmem:[%s9 + $0x610] sm:$0xff] %v11196
  %12107 = vst.msk [vmem:[%s9 + $0x618] sm:$0xff] %vm11914, %v11872
  %12108 = vst [vmem:[%s9 + $0x620] sm:$0xff] %v9846
  %12109 = vst [vmem:[%s9 + $0x628] sm:$0xff] %v10522
  %12110 = vst [vmem:[%s9 + $0x630] sm:$0xff] %v11198
  %12111 = vst.msk [vmem:[%s9 + $0x638] sm:$0xff] %vm11914, %v11874
  %12112 = vst [vmem:[%s9 + $0x640] sm:$0xff] %v9849
  %12113 = vst [vmem:[%s9 + $0x648] sm:$0xff] %v10525
  %12114 = vst [vmem:[%s9 + $0x650] sm:$0xff] %v11201
  %12115 = vst.msk [vmem:[%s9 + $0x658] sm:$0xff] %vm11914, %v11877
  %12116 = vst [vmem:[%s9 + $0x660] sm:$0xff] %v9851
  %12117 = vst [vmem:[%s9 + $0x668] sm:$0xff] %v10527
  %12118 = vst [vmem:[%s9 + $0x670] sm:$0xff] %v11203
  %12119 = vst.msk [vmem:[%s9 + $0x678] sm:$0xff] %vm11914, %v11879
  %12120 = vst [vmem:[%s9 + $0x680] sm:$0xff] %v9854
  %12121 = vst [vmem:[%s9 + $0x688] sm:$0xff] %v10530
  %12122 = vst [vmem:[%s9 + $0x690] sm:$0xff] %v11206
  %12123 = vst.msk [vmem:[%s9 + $0x698] sm:$0xff] %vm11914, %v11882
  %12124 = vst [vmem:[%s9 + $0x6a0] sm:$0xff] %v9856
  %12125 = vst [vmem:[%s9 + $0x6a8] sm:$0xff] %v10532
  %12126 = vst [vmem:[%s9 + $0x6b0] sm:$0xff] %v11208
  %12127 = vst.msk [vmem:[%s9 + $0x6b8] sm:$0xff] %vm11914, %v11884
  %12128 = vst [vmem:[%s9 + $0x6c0] sm:$0xff] %v9859
  %12129 = vst [vmem:[%s9 + $0x6c8] sm:$0xff] %v10535
  %12130 = vst [vmem:[%s9 + $0x6d0] sm:$0xff] %v11211
  %12131 = vst.msk [vmem:[%s9 + $0x6d8] sm:$0xff] %vm11914, %v11887
  %12132 = vst [vmem:[%s9 + $0x6e0] sm:$0xff] %v9861
  %12133 = vst [vmem:[%s9 + $0x6e8] sm:$0xff] %v10537
  %12134 = vst [vmem:[%s9 + $0x6f0] sm:$0xff] %v11213
  %12135 = vst.msk [vmem:[%s9 + $0x6f8] sm:$0xff] %vm11914, %v11889
  %12136 = vst [vmem:[%s9 + $0x700] sm:$0xff] %v9864
  %12137 = vst [vmem:[%s9 + $0x708] sm:$0xff] %v10540
  %12138 = vst [vmem:[%s9 + $0x710] sm:$0xff] %v11216
  %12139 = vst.msk [vmem:[%s9 + $0x718] sm:$0xff] %vm11914, %v11892
  %12140 = vst [vmem:[%s9 + $0x720] sm:$0xff] %v9866
  %12141 = vst [vmem:[%s9 + $0x728] sm:$0xff] %v10542
  %12142 = vst [vmem:[%s9 + $0x730] sm:$0xff] %v11218
  %12143 = vst.msk [vmem:[%s9 + $0x738] sm:$0xff] %vm11914, %v11894
  %12144 = vst [vmem:[%s9 + $0x740] sm:$0xff] %v9869
  %12145 = vst [vmem:[%s9 + $0x748] sm:$0xff] %v10545
  %12146 = vst [vmem:[%s9 + $0x750] sm:$0xff] %v11221
  %12147 = vst.msk [vmem:[%s9 + $0x758] sm:$0xff] %vm11914, %v11897
  %12148 = vst [vmem:[%s9 + $0x760] sm:$0xff] %v9871
  %12149 = vst [vmem:[%s9 + $0x768] sm:$0xff] %v10547
  %12150 = vst [vmem:[%s9 + $0x770] sm:$0xff] %v11223
  %12151 = vst.msk [vmem:[%s9 + $0x778] sm:$0xff] %vm11914, %v11899
  %12152 = vst [vmem:[%s9 + $0x780] sm:$0xff] %v9874
  %12153 = vst [vmem:[%s9 + $0x788] sm:$0xff] %v10550
  %12154 = vst [vmem:[%s9 + $0x790] sm:$0xff] %v11226
  %12155 = vst.msk [vmem:[%s9 + $0x798] sm:$0xff] %vm11914, %v11902
  %12156 = vst [vmem:[%s9 + $0x7a0] sm:$0xff] %v9876
  %12157 = vst [vmem:[%s9 + $0x7a8] sm:$0xff] %v10552
  %12158 = vst [vmem:[%s9 + $0x7b0] sm:$0xff] %v11228
  %12159 = vst.msk [vmem:[%s9 + $0x7b8] sm:$0xff] %vm11914, %v11904
  %12160 = vst [vmem:[%s9 + $0x7c0] sm:$0xff] %v9879
  %12161 = vst [vmem:[%s9 + $0x7c8] sm:$0xff] %v10555
  %12162 = vst [vmem:[%s9 + $0x7d0] sm:$0xff] %v11231
  %12163 = vst.msk [vmem:[%s9 + $0x7d8] sm:$0xff] %vm11914, %v11907
  %12164 = vst [vmem:[%s9 + $0x7e0] sm:$0xff] %v9881
  %12165 = vst [vmem:[%s9 + $0x7e8] sm:$0xff] %v10557
  %12166 = vst [vmem:[%s9 + $0x7f0] sm:$0xff] %v11233
  %12167 = vst.msk [vmem:[%s9 + $0x7f8] sm:$0xff] %vm11914, %v11909
  // Predicated region
  $region38: #{tpu_custom_call.1} parent=0 // pred_check
    _
  $region39: #{tpu_custom_call.1} parent=0 // pred_check_branch
    %12169 = sbr.rel (0) target = $region41
  $region40: #{tpu_custom_call.1} parent=0 // pred_region
    _
  $region41: #{tpu_custom_call.1} parent=0 // pred_fallthru
    _
  // Predicated region
  $region42: #{tpu_custom_call.1} parent=0 // pred_check
    _
  $region43: #{tpu_custom_call.1} parent=0 // pred_check_branch
    %12171 = sbr.rel (0) target = $region45
  $region44: #{tpu_custom_call.1} parent=0 // pred_region
    _
  $region45: #{tpu_custom_call.1} parent=0 // pred_fallthru
    _

</llo_original>
